<compile_context>
chip_gen: v6e
topology: v6e:2x2x1
jax: 0.10.0
libtpu: 0.0.40
codegen_flags: <defaults>
</compile_context>

<pallas_src>
import math

import jax
import jax.numpy as jnp
from jax.experimental import pallas as pl
from jax.experimental.pallas import tpu as pltpu

NMS_RADIUS = 2     # MagicPoint(nms=...) constructor arg used for the demo
GRID_SIZE = 8      # detector head grid size (fixed by the architecture)
NEG = -1e30        # finite stand-in for -inf (safe under * / max / ==)
_VMEM_LIMIT = 32 * 1024 * 1024      # explicit scoped-VMEM budget (fits v5e/v6e/v7x)
_DIRECT_CONV_VMEM_BUDGET = 6 * 1024 * 1024   # whole-image fused-conv block budget


def _ru(x, m):
    return (x + m - 1) // m * m


# --------------------------------------------------------------------------- #
# Fused activation helpers (epilogue runs in f32; exp/recip go to the EUP slot)
# --------------------------------------------------------------------------- #
def _silu(y):
    e = jnp.exp(-jnp.abs(y))
    inv = pl.reciprocal(1.0 + e, approx=True)
    sig = jnp.where(y >= 0, inv, e * inv)
    return y * sig


def _apply_act(y, act):
    if act == "silu":
        return _silu(y)
    if act == "relu":
        return jnp.maximum(y, 0.0)
    return y  # "none"


# --------------------------------------------------------------------------- #
# Generic fused matmul Pallas kernel (used for 1x1 convs, stride-2 im2col convs)
# --------------------------------------------------------------------------- #
def _make_matmul_kernel(act, order):
    if order == "act_bn":           # conv(+bias) -> act -> BN    (detector convPa path)
        def kernel(x_ref, w_ref, b_ref, s_ref, t_ref, o_ref):
            acc = jnp.dot(x_ref[...], w_ref[...],
                          preferred_element_type=jnp.float32)
            y = _apply_act(acc + b_ref[...], act)
            o_ref[...] = (y * s_ref[...] + t_ref[...]).astype(o_ref.dtype)
        return kernel

    def kernel(x_ref, w_ref, t_ref, o_ref):       # conv -> BN -> act, scale folded into W
        acc = jnp.dot(x_ref[...], w_ref[...],
                      preferred_element_type=jnp.float32)
        o_ref[...] = _apply_act(acc + t_ref[...], act).astype(o_ref.dtype)
    return kernel


def fused_matmul(x2d, w2d, bias, scale, shift, act, order,
                 out_dtype=jnp.bfloat16):
    """(M,K) @ (K,N) + fused epilogue on the MXU.  Single K step, minimal padding."""
    M, K = x2d.shape
    N = w2d.shape[1]

    if order == "bn_act":
        # (x@w + b)*s + t == x@(w*s) + (b*s + t): fold scale into W, bias into shift
        w2d = w2d * scale.reshape(1, -1)
        shift = shift + bias * scale

    Np = _ru(N, 128)
    tn = 256 if Np % 256 == 0 else 128   # NOTE v5e: 128-wide MXU; 128 also fine there
    Kp = _ru(K, 16)                      # bf16 sublane packing friendly; full-K block
    tm = min(_ru(M, 16), 1024)           # big M tiles for mem-bound layers, 16-aligned
    Mp = _ru(M, tm)
    # guarantee >= 2 grid steps where possible so both v7x TensorCores get work
    if Mp // tm == 1 and Np // tn == 1 and Mp % 32 == 0:
        tm = Mp // 2

    xp = jnp.pad(x2d.astype(jnp.bfloat16), ((0, Mp - M), (0, Kp - K)))
    wp = jnp.pad(w2d.astype(jnp.bfloat16), ((0, Kp - K), (0, Np - N)))
    tp = jnp.pad(shift.astype(jnp.float32).reshape(1, -1), ((0, 0), (0, Np - N)))

    in_specs = [pl.BlockSpec((tm, Kp), lambda i, j: (i, 0)),
                pl.BlockSpec((Kp, tn), lambda i, j: (0, j))]
    operands = [xp, wp]
    if order == "act_bn":
        bp = jnp.pad(bias.astype(jnp.float32).reshape(1, -1), ((0, 0), (0, Np - N)))
        sp = jnp.pad(scale.astype(jnp.float32).reshape(1, -1), ((0, 0), (0, Np - N)))
        in_specs += [pl.BlockSpec((1, tn), lambda i, j: (0, j)),
                     pl.BlockSpec((1, tn), lambda i, j: (0, j))]
        operands += [bp, sp]
    in_specs.append(pl.BlockSpec((1, tn), lambda i, j: (0, j)))
    operands.append(tp)

    out = pl.pallas_call(
        _make_matmul_kernel(act, order),
        out_shape=jax.ShapeDtypeStruct((Mp, Np), out_dtype),
        grid_spec=pltpu.PrefetchScalarGridSpec(
            num_scalar_prefetch=0,
            grid=(Mp // tm, Np // tn),
            in_specs=in_specs,
            out_specs=pl.BlockSpec((tm, tn), lambda i, j: (i, j)),
        ),
        compiler_params=pltpu.CompilerParams(
            dimension_semantics=("parallel", "parallel"),
            vmem_limit_bytes=_VMEM_LIMIT),
    )(*operands)
    return out[:M, :N]


# --------------------------------------------------------------------------- #
# Fused 3x3 stride-1 conv (implicit GEMM, no im2col in HBM)
# --------------------------------------------------------------------------- #
def _make_conv3x3_kernel(Ho, Wp, act, order, cout):
    """One image per grid step.  x is the padded image flattened to (Hp*Wp+2, Cin);
    for tap (dy,dx) the im2col rows are a contiguous row window at offset dy*Wp+dx
    (the 2 extra columns per row are garbage and sliced off on the host)."""
    Mi = Ho * Wp
    taps = [(dy, dx) for dy in range(3) for dx in range(3)]

    def body(x_ref, w_ref):
        xall = x_ref[0]                                        # (Hp*Wp+2, Cin) bf16
        acc = jnp.zeros((Mi, cout), jnp.float32)
        for ti, (dy, dx) in enumerate(taps):
            off = dy * Wp + dx
            acc = acc + jnp.dot(xall[off:off + Mi, :], w_ref[ti],
                                preferred_element_type=jnp.float32)
        return acc

    if order == "act_bn":                     # conv(+bias) -> act -> BN   (convPa)
        def kernel(x_ref, w_ref, b_ref, s_ref, t_ref, o_ref):
            acc = body(x_ref, w_ref)
            y = _apply_act(acc + b_ref[...], act)
            o_ref[0] = (y * s_ref[...] + t_ref[...]).astype(o_ref.dtype)
        return kernel

    def kernel(x_ref, w_ref, t_ref, o_ref):   # conv -> BN -> act, scale folded into W
        acc = body(x_ref, w_ref)
        o_ref[0] = _apply_act(acc + t_ref[...], act).astype(o_ref.dtype)
    return kernel


def conv3x3_s1_fused(x, p, *, act, order):
    N, H, W, Cin = x.shape
    Cout = p["w"].shape[-1]
    Hp, Wp = H + 2, W + 2
    Mi = H * Wp

    w = p["w"]                                  # (3,3,Cin,Cout)
    bias, scale, shift = p["b"], p["scale"], p["shift"]
    if order == "bn_act":
        w = w * scale.reshape(1, 1, 1, -1)
        shift = shift + bias * scale
    w9 = w.reshape(9, Cin, Cout).astype(jnp.bfloat16)

    # pad spatially once (zeros = conv padding), flatten rows, +2 guard rows so the
    # last tap's window stays in-bounds
    xpad = jnp.pad(x.astype(jnp.bfloat16), ((0, 0), (1, 1), (1, 1), (0, 0)))
    xflat = jnp.pad(xpad.reshape(N, Hp * Wp, Cin), ((0, 0), (0, 2), (0, 0)))
    Lx = Hp * Wp + 2

    in_specs = [pl.BlockSpec((1, Lx, Cin), lambda n: (n, 0, 0)),
                pl.BlockSpec((9, Cin, Cout), lambda n: (0, 0, 0))]
    operands = [xflat, w9]
    if order == "act_bn":
        in_specs += [pl.BlockSpec((1, Cout), lambda n: (0, 0)),
                     pl.BlockSpec((1, Cout), lambda n: (0, 0))]
        operands += [bias.astype(jnp.float32).reshape(1, -1),
                     scale.astype(jnp.float32).reshape(1, -1)]
    in_specs.append(pl.BlockSpec((1, Cout), lambda n: (0, 0)))
    operands.append(shift.astype(jnp.float32).reshape(1, -1))

    out_full = pl.pallas_call(
        _make_conv3x3_kernel(H, Wp, act, order, Cout),
        out_shape=jax.ShapeDtypeStruct((N, Mi, Cout), jnp.bfloat16),
        grid_spec=pltpu.PrefetchScalarGridSpec(
            num_scalar_prefetch=0,
            grid=(N,),
            in_specs=in_specs,
            out_specs=pl.BlockSpec((1, Mi, Cout), lambda n: (n, 0, 0)),
        ),
        compiler_params=pltpu.CompilerParams(
            dimension_semantics=("parallel",),
            vmem_limit_bytes=_VMEM_LIMIT),
    )(*operands)
    # drop the 2 garbage columns per output row (full-width compute, ~(W+2)/W overhead)
    return out_full.reshape(N, H, Wp, Cout)[:, :, :W, :]


# --------------------------------------------------------------------------- #
# convPb (1x1) + bnPb + channel softmax, fused
# --------------------------------------------------------------------------- #
def _make_pb_softmax_kernel():
    def kernel(x_ref, w_ref, t_ref, logit_ref, prob_ref):
        acc = jnp.dot(x_ref[...], w_ref[...], preferred_element_type=jnp.float32)
        logits = acc + t_ref[...]          # pad columns carry NEG via the shift row
        logit_ref[...] = logits
        m = jnp.max(logits, axis=-1, keepdims=True)
        e = jnp.exp(logits - m)
        s = jnp.sum(e, axis=-1, keepdims=True)
        prob_ref[...] = e * pl.reciprocal(s, approx=True)
    return kernel


def pb_softmax_matmul(x2d, p):
    """1x1 conv (as matmul) + folded BN + channel softmax in one kernel."""
    M, K = x2d.shape
    Cout = p["w"].shape[-1]                               # 65
    w2d = p["w"].reshape(K, Cout) * p["scale"].reshape(1, -1)   # fold BN scale into W
    shift = p["shift"] + p["b"] * p["scale"]              # fold conv bias into BN shift

    Np = _ru(Cout, 128)
    Kp = _ru(K, 16)
    tm = min(_ru(M, 16), 1024)
    Mp = _ru(M, tm)

    xp = jnp.pad(x2d.astype(jnp.bfloat16), ((0, Mp - M), (0, Kp - K)))
    wp = jnp.pad(w2d.astype(jnp.bfloat16), ((0, Kp - K), (0, Np - Cout)))
    # pad columns get NEG so the softmax mask is free (no iota/compare/select)
    tp = jnp.pad(shift.astype(jnp.float32).reshape(1, -1),
                 ((0, 0), (0, Np - Cout)), constant_values=NEG)

    logits, prob = pl.pallas_call(
        _make_pb_softmax_kernel(),
        out_shape=(jax.ShapeDtypeStruct((Mp, Np), jnp.float32),
                   jax.ShapeDtypeStruct((Mp, Np), jnp.float32)),
        grid_spec=pltpu.PrefetchScalarGridSpec(
            num_scalar_prefetch=0,
            grid=(Mp // tm,),
            in_specs=[pl.BlockSpec((tm, Kp), lambda i: (i, 0)),
                      pl.BlockSpec((Kp, Np), lambda i: (0, 0)),
                      pl.BlockSpec((1, Np), lambda i: (0, 0))],
            out_specs=[pl.BlockSpec((tm, Np), lambda i: (i, 0)),
                       pl.BlockSpec((tm, Np), lambda i: (i, 0))],
        ),
        compiler_params=pltpu.CompilerParams(
            dimension_semantics=("parallel",),
            vmem_limit_bytes=_VMEM_LIMIT),
    )(xp, wp, tp)
    return logits[:M], prob[:M]


# --------------------------------------------------------------------------- #
# simple_nms: five max-pools fused into one Pallas kernel (roll-based, fixed size)
# --------------------------------------------------------------------------- #
_NMS_DEPTH = 5     # number of sequential max-pool stages in simple_nms


def _make_nms_kernel(Hp, Wl, radius):
    r = radius

    def pool(x):
        # separable (2r+1)x(2r+1) max via XLU rolls; correct everywhere >= r from the
        # array edge (the image sits >= 5r from every edge, so the cascade is exact)
        if r == 0:
            return x
        m = x
        for s in range(1, r + 1):
            m = jnp.maximum(m, pltpu.roll(x, s, axis=0))
            m = jnp.maximum(m, pltpu.roll(x, Hp - s, axis=0))
        out = m
        for s in range(1, r + 1):
            out = jnp.maximum(out, pltpu.roll(m, s, axis=1))
            out = jnp.maximum(out, pltpu.roll(m, Wl - s, axis=1))
        return out

    def kernel(x_ref, o_ref):
        s0 = x_ref[...].reshape(Hp, Wl)                      # NEG-padded scores
        max_mask = s0 == pool(s0)
        for _ in range(2):
            mm = jnp.where(max_mask, 1.0, 0.0)
            supp = pool(mm) > 0.0
            supp_scores = jnp.where(supp, 0.0, s0)
            new_max = (supp_scores == pool(supp_scores)) & jnp.logical_not(supp)
            max_mask = max_mask | new_max
        out = jnp.where(max_mask, s0, 0.0)
        o_ref[...] = out.reshape(1, Hp, Wl)
    return kernel


def simple_nms_pallas(scores, radius):
    """torch simple_nms on an enlarged NEG-padded image (equivalent on the interior
    for non-negative softmax scores)."""
    N, H, W = scores.shape
    P = _NMS_DEPTH * radius
    Hp = _ru(H + 2 * P, 8)
    Wl = _ru(W + 2 * P, 128)          # lane-dense last dim (unmasked vld/vst)
    xp = jnp.pad(scores.astype(jnp.float32),
                 ((0, 0), (P, Hp - H - P), (P, Wl - W - P)),
                 constant_values=NEG)
    out = pl.pallas_call(
        _make_nms_kernel(Hp, Wl, radius),
        out_shape=jax.ShapeDtypeStruct((N, Hp, Wl), jnp.float32),
        grid=(N,),
        in_specs=[pl.BlockSpec((1, Hp, Wl), lambda b: (b, 0, 0))],
        out_specs=pl.BlockSpec((1, Hp, Wl), lambda b: (b, 0, 0)),
        compiler_params=pltpu.CompilerParams(
            dimension_semantics=("parallel",),
            vmem_limit_bytes=_VMEM_LIMIT),
    )(xp)
    return out[:, P:P + H, P:P + W]


# --------------------------------------------------------------------------- #
# Conv / network glue
# --------------------------------------------------------------------------- #
def _im2col(x, k, stride, pad):
    # Only used for the 3 stride-2 convs and the 1-channel first conv (small arrays).
    # TODO(synk): stride-2 convs could also use an in-kernel halo/stride gather.
    N, H, W, C = x.shape
    Ho = (H + 2 * pad - k) // stride + 1
    Wo = (W + 2 * pad - k) // stride + 1
    xp = jnp.pad(x, ((0, 0), (pad, pad), (pad, pad), (0, 0)))
    cols = []
    for dy in range(k):
        for dx in range(k):
            cols.append(xp[:, dy:dy + (Ho - 1) * stride + 1:stride,
                           dx:dx + (Wo - 1) * stride + 1:stride, :])
    patches = jnp.stack(cols, axis=3)                 # (N, Ho, Wo, k*k, C)
    return patches.reshape(N * Ho * Wo, k * k * C), (N, Ho, Wo)


def conv_bn_act(x, p, *, k, stride, act, order="bn_act"):
    N, H, W, cin = x.shape
    cout = p["w"].shape[-1]

    if k == 1 and stride == 1:
        y = fused_matmul(x.reshape(N * H * W, cin), p["w"].reshape(cin, cout),
                         p["b"], p["scale"], p["shift"], act, order)
        return y.reshape(N, H, W, cout)

    if k == 3 and stride == 1 and cin >= 8:
        Hp, Wp = H + 2, W + 2
        est = 2 * ((Hp * Wp + 2) * cin + H * Wp * cout) * 2 + H * Wp * cout * 4
        if est <= _DIRECT_CONV_VMEM_BUDGET:
            return conv3x3_s1_fused(x, p, act=act, order=order)
        # TODO(synk): row-tiled halo-DMA variant for large images; fall back to im2col.

    pad = (k - 1) // 2
    x2d, (Nb, Ho, Wo) = _im2col(x, k, stride, pad)
    w2d = p["w"].reshape(k * k * cin, cout)
    y = fused_matmul(x2d, w2d, p["b"], p["scale"], p["shift"], act, order)
    return y.reshape(Nb, Ho, Wo, cout)


def fused_mbconv(x, blk, *, stride, expand):
    cin = x.shape[-1]
    if expand == 1:
        out = conv_bn_act(x, blk["c0"], k=3, stride=stride, act="silu")
    else:
        out = conv_bn_act(x, blk["c0"], k=3, stride=stride, act="silu")
        out = conv_bn_act(out, blk["c1"], k=1, stride=1, act="none")
    if stride == 1 and cin == out.shape[-1]:
        out = out + x            # stochastic depth is identity in eval mode
    return out


def backbone(x, P):
    out = conv_bn_act(x, P["first_conv"], k=3, stride=1, act="silu")      # 1 -> 3
    out = conv_bn_act(out, P["stem"], k=3, stride=2, act="silu")          # 3 -> 24, /2
    for blk in P["stage1"]:                                               # 2x FusedMBConv e1
        out = fused_mbconv(out, blk, stride=1, expand=1)
    for i, blk in enumerate(P["stage2"]):                                 # 4x, 24->48, /2
        out = fused_mbconv(out, blk, stride=2 if i == 0 else 1, expand=4)
    for i, blk in enumerate(P["stage3"]):                                 # 4x, 48->64, /2
        out = fused_mbconv(out, blk, stride=2 if i == 0 else 1, expand=4)
    return out                                                            # (N, H/8, W/8, 64)


def detector_head(feat, P):
    # convPa -> ReLU -> bnPa   (fused implicit-GEMM conv kernel, act_bn order)
    out = conv_bn_act(feat, P["Pa"], k=3, stride=1, act="relu", order="act_bn")
    N, Hs, Ws, Ca = out.shape
    # convPb (1x1) -> bnPb -> channel softmax, all fused
    C = GRID_SIZE ** 2 + 1
    logits2d, prob2d = pb_softmax_matmul(out.reshape(N * Hs * Ws, Ca), P["Pb"])
    logits = logits2d[:, :C].reshape(N, Hs, Ws, C)
    prob = prob2d[:, :C - 1].reshape(N, Hs, Ws, C - 1)        # drop dustbin channel
    # pixel_shuffle (scale = GRID_SIZE), NHWC formulation of the torch reference
    r = GRID_SIZE
    prob = prob.reshape(N, Hs, Ws, r, r).transpose(0, 1, 3, 2, 4).reshape(N, Hs * r, Ws * r)
    logits_nchw = jnp.transpose(logits, (0, 3, 1, 2))
    return logits_nchw, prob


@jax.jit
def magic_point_forward(params, x_nchw):
    """Input: N x 1 x H x W (NCHW, like the torch module). Eval-mode forward."""
    x = jnp.transpose(x_nchw, (0, 2, 3, 1)).astype(jnp.bfloat16)   # NCHW -> NHWC, bf16
    feat = backbone(x, params)
    logits, prob = detector_head(feat, params)
    x_s8 = jnp.transpose(feat.astype(jnp.float32), (0, 3, 1, 2))   # back to NCHW, f32
    prob_nms = simple_nms_pallas(prob, NMS_RADIUS)
    return x_s8, logits, prob, prob_nms


# --------------------------------------------------------------------------- #
# Deterministic synthetic parameters
# --------------------------------------------------------------------------- #
def _make_conv_bn(key, cin, cout, k, eps, conv_bias=False):
    kw, kb = jax.random.split(key)
    std = math.sqrt(2.0 / (k * k * cout))
    w = std * jax.random.normal(kw, (k, k, cin, cout), jnp.float32)
    b = (0.01 * jax.random.normal(kb, (cout,), jnp.float32)) if conv_bias \
        else jnp.zeros((cout,), jnp.float32)
    # eval-mode BatchNorm with fresh-init stats (gamma=1, beta=0, mean=0, var=1)
    gamma = jnp.ones((cout,), jnp.float32)
    beta = jnp.zeros((cout,), jnp.float32)
    mean = jnp.zeros((cout,), jnp.float32)
    var = jnp.ones((cout,), jnp.float32)
    scale = gamma / jnp.sqrt(var + eps)
    shift = beta - mean * scale
    return dict(w=w, b=b, scale=scale, shift=shift)


def make_params(key):
    # TODO(synk): pretrained EfficientNetV2-S weights cannot be loaded; deterministic
    # synthetic init with the same shapes is used instead.
    keys = iter(jax.random.split(key, 32))
    nk = lambda: next(keys)
    eps_bb, eps_dh = 1e-3, 1e-5
    P = {}
    P["first_conv"] = _make_conv_bn(nk(), 1, 3, 3, eps_bb)
    P["stem"] = _make_conv_bn(nk(), 3, 24, 3, eps_bb)
    P["stage1"] = [dict(c0=_make_conv_bn(nk(), 24, 24, 3, eps_bb)) for _ in range(2)]

    def fused_block(cin, cexp, cout):
        return dict(c0=_make_conv_bn(nk(), cin, cexp, 3, eps_bb),
                    c1=_make_conv_bn(nk(), cexp, cout, 1, eps_bb))

    P["stage2"] = [fused_block(24, 96, 48)] + [fused_block(48, 192, 48) for _ in range(3)]
    P["stage3"] = [fused_block(48, 192, 64)] + [fused_block(64, 256, 64) for _ in range(3)]
    P["Pa"] = _make_conv_bn(nk(), 64, 256, 3, eps_dh, conv_bias=True)
    P["Pb"] = _make_conv_bn(nk(), 256, GRID_SIZE ** 2 + 1, 1, eps_dh, conv_bias=True)
    return P


# --------------------------------------------------------------------------- #
if __name__ == "__main__":
    params = make_params(jax.random.PRNGKey(1))
    x = jax.random.normal(jax.random.PRNGKey(0), (2, 1, 16, 16), jnp.float32)

    x_s8, logits, prob, prob_nms = magic_point_forward(params, x)
    jax.block_until_ready((x_s8, logits, prob, prob_nms))

    assert x_s8.shape == (2, 64, 2, 2)
    assert logits.shape == (2, 65, 2, 2)
    assert prob.shape == (2, 16, 16)
    assert prob_nms.shape == (2, 16, 16)
    assert bool(jnp.all(jnp.isfinite(prob)))
    assert bool(jnp.all(jnp.isfinite(prob_nms)))
    print("KERNEL_OK")
</pallas_src>

<mosaic_0001>
module attributes {stable_mosaic.version = 11 : i64} {
  func.func @kernel(%arg0: i32, %arg1: i32, %arg2: memref<256x16xbf16, #tpu.memory_space<vmem>>, %arg3: memref<16x128xbf16, #tpu.memory_space<vmem>>, %arg4: memref<1x128xf32, #tpu.memory_space<vmem>>, %arg5: memref<256x128xbf16, #tpu.memory_space<vmem>>) attributes {dimension_semantics = [#tpu.dimension_semantics<parallel>, #tpu.dimension_semantics<parallel>], iteration_bounds = array<i64: 2, 1>, scalar_prefetch = 0 : i64, scratch_operands = 0 : i64, tpu.core_type = #tpu.core_type<tc>, window_params = [{transform_indices = @transform_0, window_bounds = array<i64: 256, 16>}, {transform_indices = @transform_1, window_bounds = array<i64: 16, 128>}, {transform_indices = @transform_2, window_bounds = array<i64: 1, 128>}, {transform_indices = @transform_3, window_bounds = array<i64: 256, 128>}]} {
    %c0 = arith.constant 0 : index
    %c0_0 = arith.constant 0 : index
    %0 = vector.load %arg2[%c0, %c0_0] : memref<256x16xbf16, #tpu.memory_space<vmem>>, vector<256x16xbf16>
    %c0_1 = arith.constant 0 : index
    %c0_2 = arith.constant 0 : index
    %1 = vector.load %arg3[%c0_1, %c0_2] : memref<16x128xbf16, #tpu.memory_space<vmem>>, vector<16x128xbf16>
    %cst = arith.constant dense<0.000000e+00> : vector<256x128xf32>
    %2 = tpu.matmul %0, %1, %cst {dimension_numbers = #tpu.dot_dimension_numbers<[1], [0], [0], [1], [0, 0, 1, 1], [], []>} : vector<256x16xbf16>, vector<16x128xbf16>, vector<256x128xf32> -> vector<256x128xf32>
    %c0_3 = arith.constant 0 : index
    %c0_4 = arith.constant 0 : index
    %3 = vector.load %arg4[%c0_3, %c0_4] : memref<1x128xf32, #tpu.memory_space<vmem>>, vector<1x128xf32>
    %4 = vector.broadcast %3 : vector<1x128xf32> to vector<256x128xf32>
    %5 = arith.addf %2, %4 : vector<256x128xf32>
    %6 = math.absf %5 : vector<256x128xf32>
    %cst_5 = arith.constant 0.000000e+00 : f32
    %7 = vector.broadcast %cst_5 : f32 to vector<256x128xf32>
    %8 = arith.subf %7, %6 : vector<256x128xf32>
    %9 = math.exp %8 : vector<256x128xf32>
    %cst_6 = arith.constant 1.000000e+00 : f32
    %10 = vector.broadcast %cst_6 : f32 to vector<256x128xf32>
    %11 = arith.addf %10, %9 : vector<256x128xf32>
    %12 = tpu.reciprocal %11 {approx = true} : vector<256x128xf32> -> vector<256x128xf32>
    %cst_7 = arith.constant 0.000000e+00 : f32
    %13 = vector.broadcast %cst_7 : f32 to vector<256x128xf32>
    %14 = arith.cmpf oge, %5, %13 : vector<256x128xf32>
    %15 = arith.mulf %9, %12 : vector<256x128xf32>
    %16 = arith.select %14, %12, %15 : vector<256x128xi1>, vector<256x128xf32>
    %17 = arith.mulf %5, %16 : vector<256x128xf32>
    %18 = arith.truncf %17 : vector<256x128xf32> to vector<256x128xbf16>
    %c0_8 = arith.constant 0 : index
    %c0_9 = arith.constant 0 : index
    %19 = vector.load %arg5[%c0_8, %c0_9] : memref<256x128xbf16, #tpu.memory_space<vmem>>, vector<256x128xbf16>
    tpu.vector_store %arg5[%c0_8, %c0_9], %18 {strides = array<i32>} : memref<256x128xbf16, #tpu.memory_space<vmem>>, vector<256x128xbf16>,
    return
  }
  func.func @transform_0(%arg0: i32, %arg1: i32) -> (i32, i32) {
    %c0_i32 = arith.constant 0 : i32
    %c0_i32_0 = arith.constant 0 : i32
    return %arg0, %c0_i32 : i32, i32
  }
  func.func @transform_1(%arg0: i32, %arg1: i32) -> (i32, i32) {
    %c0_i32 = arith.constant 0 : i32
    %c0_i32_0 = arith.constant 0 : i32
    return %c0_i32, %arg1 : i32, i32
  }
  func.func @transform_2(%arg0: i32, %arg1: i32) -> (i32, i32) {
    %c0_i32 = arith.constant 0 : i32
    %c0_i32_0 = arith.constant 0 : i32
    return %c0_i32, %arg1 : i32, i32
  }
  func.func @transform_3(%arg0: i32, %arg1: i32) -> (i32, i32) {
    %c0_i32 = arith.constant 0 : i32
    return %arg0, %arg1 : i32, i32
  }
}

module attributes {stable_mosaic.version = 11 : i64} {
  func.func @kernel(%arg0: i32, %arg1: i32, %arg2: memref<64x32xbf16, #tpu.memory_space<vmem>>, %arg3: memref<32x128xbf16, #tpu.memory_space<vmem>>, %arg4: memref<1x128xf32, #tpu.memory_space<vmem>>, %arg5: memref<64x128xbf16, #tpu.memory_space<vmem>>) attributes {dimension_semantics = [#tpu.dimension_semantics<parallel>, #tpu.dimension_semantics<parallel>], iteration_bounds = array<i64: 2, 1>, scalar_prefetch = 0 : i64, scratch_operands = 0 : i64, tpu.core_type = #tpu.core_type<tc>, window_params = [{transform_indices = @transform_0, window_bounds = array<i64: 64, 32>}, {transform_indices = @transform_1, window_bounds = array<i64: 32, 128>}, {transform_indices = @transform_2, window_bounds = array<i64: 1, 128>}, {transform_indices = @transform_3, window_bounds = array<i64: 64, 128>}]} {
    %c0 = arith.constant 0 : index
    %c0_0 = arith.constant 0 : index
    %0 = vector.load %arg2[%c0, %c0_0] : memref<64x32xbf16, #tpu.memory_space<vmem>>, vector<64x32xbf16>
    %c0_1 = arith.constant 0 : index
    %c0_2 = arith.constant 0 : index
    %1 = vector.load %arg3[%c0_1, %c0_2] : memref<32x128xbf16, #tpu.memory_space<vmem>>, vector<32x128xbf16>
    %cst = arith.constant dense<0.000000e+00> : vector<64x128xf32>
    %2 = tpu.matmul %0, %1, %cst {dimension_numbers = #tpu.dot_dimension_numbers<[1], [0], [0], [1], [0, 0, 1, 1], [], []>} : vector<64x32xbf16>, vector<32x128xbf16>, vector<64x128xf32> -> vector<64x128xf32>
    %c0_3 = arith.constant 0 : index
    %c0_4 = arith.constant 0 : index
    %3 = vector.load %arg4[%c0_3, %c0_4] : memref<1x128xf32, #tpu.memory_space<vmem>>, vector<1x128xf32>
    %4 = vector.broadcast %3 : vector<1x128xf32> to vector<64x128xf32>
    %5 = arith.addf %2, %4 : vector<64x128xf32>
    %6 = math.absf %5 : vector<64x128xf32>
    %cst_5 = arith.constant 0.000000e+00 : f32
    %7 = vector.broadcast %cst_5 : f32 to vector<64x128xf32>
    %8 = arith.subf %7, %6 : vector<64x128xf32>
    %9 = math.exp %8 : vector<64x128xf32>
    %cst_6 = arith.constant 1.000000e+00 : f32
    %10 = vector.broadcast %cst_6 : f32 to vector<64x128xf32>
    %11 = arith.addf %10, %9 : vector<64x128xf32>
    %12 = tpu.reciprocal %11 {approx = true} : vector<64x128xf32> -> vector<64x128xf32>
    %cst_7 = arith.constant 0.000000e+00 : f32
    %13 = vector.broadcast %cst_7 : f32 to vector<64x128xf32>
    %14 = arith.cmpf oge, %5, %13 : vector<64x128xf32>
    %15 = arith.mulf %9, %12 : vector<64x128xf32>
    %16 = arith.select %14, %12, %15 : vector<64x128xi1>, vector<64x128xf32>
    %17 = arith.mulf %5, %16 : vector<64x128xf32>
    %18 = arith.truncf %17 : vector<64x128xf32> to vector<64x128xbf16>
    %c0_8 = arith.constant 0 : index
    %c0_9 = arith.constant 0 : index
    %19 = vector.load %arg5[%c0_8, %c0_9] : memref<64x128xbf16, #tpu.memory_space<vmem>>, vector<64x128xbf16>
    tpu.vector_store %arg5[%c0_8, %c0_9], %18 {strides = array<i32>} : memref<64x128xbf16, #tpu.memory_space<vmem>>, vector<64x128xbf16>,
    return
  }
  func.func @transform_0(%arg0: i32, %arg1: i32) -> (i32, i32) {
    %c0_i32 = arith.constant 0 : i32
    %c0_i32_0 = arith.constant 0 : i32
    return %arg0, %c0_i32 : i32, i32
  }
  func.func @transform_1(%arg0: i32, %arg1: i32) -> (i32, i32) {
    %c0_i32 = arith.constant 0 : i32
    %c0_i32_0 = arith.constant 0 : i32
    return %c0_i32, %arg1 : i32, i32
  }
  func.func @transform_2(%arg0: i32, %arg1: i32) -> (i32, i32) {
    %c0_i32 = arith.constant 0 : i32
    %c0_i32_0 = arith.constant 0 : i32
    return %c0_i32, %arg1 : i32, i32
  }
  func.func @transform_3(%arg0: i32, %arg1: i32) -> (i32, i32) {
    %c0_i32 = arith.constant 0 : i32
    return %arg0, %arg1 : i32, i32
  }
}

module attributes {stable_mosaic.version = 11 : i64} {
  func.func @kernel(%arg0: i32, %arg1: memref<1x102x24xbf16, #tpu.memory_space<vmem>>, %arg2: memref<9x24x24xbf16, #tpu.memory_space<vmem>>, %arg3: memref<1x24xf32, #tpu.memory_space<vmem>>, %arg4: memref<1x80x24xbf16, #tpu.memory_space<vmem>>) attributes {dimension_semantics = [#tpu.dimension_semantics<parallel>], iteration_bounds = array<i64: 2>, scalar_prefetch = 0 : i64, scratch_operands = 0 : i64, tpu.core_type = #tpu.core_type<tc>, window_params = [{transform_indices = @transform_0, window_bounds = array<i64: 1, 102, 24>}, {pipeline_mode = #tpu.pipeline_mode<synchronous>, transform_indices = @transform_1, window_bounds = array<i64: 9, 24, 24>}, {pipeline_mode = #tpu.pipeline_mode<synchronous>, transform_indices = @transform_2, window_bounds = array<i64: 1, 24>}, {transform_indices = @transform_3, window_bounds = array<i64: 1, 80, 24>}]} {
    %c0 = arith.constant 0 : index
    %c0_0 = arith.constant 0 : index
    %c0_1 = arith.constant 0 : index
    %0 = vector.load %arg1[%c0, %c0_0, %c0_1] : memref<1x102x24xbf16, #tpu.memory_space<vmem>>, vector<1x102x24xbf16>
    %1 = vector.shape_cast %0 : vector<1x102x24xbf16> to vector<102x24xbf16>
    %cst = arith.constant 0.000000e+00 : f32
    %2 = vector.broadcast %cst : f32 to vector<80x24xf32>
    %3 = vector.extract_strided_slice %1 {offsets = [0, 0], sizes = [80, 24], strides = [1, 1]} : vector<102x24xbf16> to vector<80x24xbf16>
    %c0_2 = arith.constant 0 : index
    %c0_3 = arith.constant 0 : index
    %c0_4 = arith.constant 0 : index
    %4 = vector.load %arg2[%c0_2, %c0_3, %c0_4] : memref<9x24x24xbf16, #tpu.memory_space<vmem>>, vector<1x24x24xbf16>
    %5 = vector.shape_cast %4 : vector<1x24x24xbf16> to vector<24x24xbf16>
    %cst_5 = arith.constant dense<0.000000e+00> : vector<80x24xf32>
    %6 = tpu.matmul %3, %5, %cst_5 {dimension_numbers = #tpu.dot_dimension_numbers<[1], [0], [0], [1], [0, 0, 1, 1], [], []>} : vector<80x24xbf16>, vector<24x24xbf16>, vector<80x24xf32> -> vector<80x24xf32>
    %7 = arith.addf %2, %6 : vector<80x24xf32>
    %8 = vector.extract_strided_slice %1 {offsets = [1, 0], sizes = [80, 24], strides = [1, 1]} : vector<102x24xbf16> to vector<80x24xbf16>
    %c1 = arith.constant 1 : index
    %c0_6 = arith.constant 0 : index
    %c0_7 = arith.constant 0 : index
    %9 = vector.load %arg2[%c1, %c0_6, %c0_7] : memref<9x24x24xbf16, #tpu.memory_space<vmem>>, vector<1x24x24xbf16>
    %10 = vector.shape_cast %9 : vector<1x24x24xbf16> to vector<24x24xbf16>
    %cst_8 = arith.constant dense<0.000000e+00> : vector<80x24xf32>
    %11 = tpu.matmul %8, %10, %cst_8 {dimension_numbers = #tpu.dot_dimension_numbers<[1], [0], [0], [1], [0, 0, 1, 1], [], []>} : vector<80x24xbf16>, vector<24x24xbf16>, vector<80x24xf32> -> vector<80x24xf32>
    %12 = arith.addf %7, %11 : vector<80x24xf32>
    %13 = vector.extract_strided_slice %1 {offsets = [2, 0], sizes = [80, 24], strides = [1, 1]} : vector<102x24xbf16> to vector<80x24xbf16>
    %c2 = arith.constant 2 : index
    %c0_9 = arith.constant 0 : index
    %c0_10 = arith.constant 0 : index
    %14 = vector.load %arg2[%c2, %c0_9, %c0_10] : memref<9x24x24xbf16, #tpu.memory_space<vmem>>, vector<1x24x24xbf16>
    %15 = vector.shape_cast %14 : vector<1x24x24xbf16> to vector<24x24xbf16>
    %cst_11 = arith.constant dense<0.000000e+00> : vector<80x24xf32>
    %16 = tpu.matmul %13, %15, %cst_11 {dimension_numbers = #tpu.dot_dimension_numbers<[1], [0], [0], [1], [0, 0, 1, 1], [], []>} : vector<80x24xbf16>, vector<24x24xbf16>, vector<80x24xf32> -> vector<80x24xf32>
    %17 = arith.addf %12, %16 : vector<80x24xf32>
    %18 = vector.extract_strided_slice %1 {offsets = [10, 0], sizes = [80, 24], strides = [1, 1]} : vector<102x24xbf16> to vector<80x24xbf16>
    %c3 = arith.constant 3 : index
    %c0_12 = arith.constant 0 : index
    %c0_13 = arith.constant 0 : index
    %19 = vector.load %arg2[%c3, %c0_12, %c0_13] : memref<9x24x24xbf16, #tpu.memory_space<vmem>>, vector<1x24x24xbf16>
    %20 = vector.shape_cast %19 : vector<1x24x24xbf16> to vector<24x24xbf16>
    %cst_14 = arith.constant dense<0.000000e+00> : vector<80x24xf32>
    %21 = tpu.matmul %18, %20, %cst_14 {dimension_numbers = #tpu.dot_dimension_numbers<[1], [0], [0], [1], [0, 0, 1, 1], [], []>} : vector<80x24xbf16>, vector<24x24xbf16>, vector<80x24xf32> -> vector<80x24xf32>
    %22 = arith.addf %17, %21 : vector<80x24xf32>
    %23 = vector.extract_strided_slice %1 {offsets = [11, 0], sizes = [80, 24], strides = [1, 1]} : vector<102x24xbf16> to vector<80x24xbf16>
    %c4 = arith.constant 4 : index
    %c0_15 = arith.constant 0 : index
    %c0_16 = arith.constant 0 : index
    %24 = vector.load %arg2[%c4, %c0_15, %c0_16] : memref<9x24x24xbf16, #tpu.memory_space<vmem>>, vector<1x24x24xbf16>
    %25 = vector.shape_cast %24 : vector<1x24x24xbf16> to vector<24x24xbf16>
    %cst_17 = arith.constant dense<0.000000e+00> : vector<80x24xf32>
    %26 = tpu.matmul %23, %25, %cst_17 {dimension_numbers = #tpu.dot_dimension_numbers<[1], [0], [0], [1], [0, 0, 1, 1], [], []>} : vector<80x24xbf16>, vector<24x24xbf16>, vector<80x24xf32> -> vector<80x24xf32>
    %27 = arith.addf %22, %26 : vector<80x24xf32>
    %28 = vector.extract_strided_slice %1 {offsets = [12, 0], sizes = [80, 24], strides = [1, 1]} : vector<102x24xbf16> to vector<80x24xbf16>
    %c5 = arith.constant 5 : index
    %c0_18 = arith.constant 0 : index
    %c0_19 = arith.constant 0 : index
    %29 = vector.load %arg2[%c5, %c0_18, %c0_19] : memref<9x24x24xbf16, #tpu.memory_space<vmem>>, vector<1x24x24xbf16>
    %30 = vector.shape_cast %29 : vector<1x24x24xbf16> to vector<24x24xbf16>
    %cst_20 = arith.constant dense<0.000000e+00> : vector<80x24xf32>
    %31 = tpu.matmul %28, %30, %cst_20 {dimension_numbers = #tpu.dot_dimension_numbers<[1], [0], [0], [1], [0, 0, 1, 1], [], []>} : vector<80x24xbf16>, vector<24x24xbf16>, vector<80x24xf32> -> vector<80x24xf32>
    %32 = arith.addf %27, %31 : vector<80x24xf32>
    %33 = vector.extract_strided_slice %1 {offsets = [20, 0], sizes = [80, 24], strides = [1, 1]} : vector<102x24xbf16> to vector<80x24xbf16>
    %c6 = arith.constant 6 : index
    %c0_21 = arith.constant 0 : index
    %c0_22 = arith.constant 0 : index
    %34 = vector.load %arg2[%c6, %c0_21, %c0_22] : memref<9x24x24xbf16, #tpu.memory_space<vmem>>, vector<1x24x24xbf16>
    %35 = vector.shape_cast %34 : vector<1x24x24xbf16> to vector<24x24xbf16>
    %cst_23 = arith.constant dense<0.000000e+00> : vector<80x24xf32>
    %36 = tpu.matmul %33, %35, %cst_23 {dimension_numbers = #tpu.dot_dimension_numbers<[1], [0], [0], [1], [0, 0, 1, 1], [], []>} : vector<80x24xbf16>, vector<24x24xbf16>, vector<80x24xf32> -> vector<80x24xf32>
    %37 = arith.addf %32, %36 : vector<80x24xf32>
    %38 = vector.extract_strided_slice %1 {offsets = [21, 0], sizes = [80, 24], strides = [1, 1]} : vector<102x24xbf16> to vector<80x24xbf16>
    %c7 = arith.constant 7 : index
    %c0_24 = arith.constant 0 : index
    %c0_25 = arith.constant 0 : index
    %39 = vector.load %arg2[%c7, %c0_24, %c0_25] : memref<9x24x24xbf16, #tpu.memory_space<vmem>>, vector<1x24x24xbf16>
    %40 = vector.shape_cast %39 : vector<1x24x24xbf16> to vector<24x24xbf16>
    %cst_26 = arith.constant dense<0.000000e+00> : vector<80x24xf32>
    %41 = tpu.matmul %38, %40, %cst_26 {dimension_numbers = #tpu.dot_dimension_numbers<[1], [0], [0], [1], [0, 0, 1, 1], [], []>} : vector<80x24xbf16>, vector<24x24xbf16>, vector<80x24xf32> -> vector<80x24xf32>
    %42 = arith.addf %37, %41 : vector<80x24xf32>
    %43 = vector.extract_strided_slice %1 {offsets = [22, 0], sizes = [80, 24], strides = [1, 1]} : vector<102x24xbf16> to vector<80x24xbf16>
    %c8 = arith.constant 8 : index
    %c0_27 = arith.constant 0 : index
    %c0_28 = arith.constant 0 : index
    %44 = vector.load %arg2[%c8, %c0_27, %c0_28] : memref<9x24x24xbf16, #tpu.memory_space<vmem>>, vector<1x24x24xbf16>
    %45 = vector.shape_cast %44 : vector<1x24x24xbf16> to vector<24x24xbf16>
    %cst_29 = arith.constant dense<0.000000e+00> : vector<80x24xf32>
    %46 = tpu.matmul %43, %45, %cst_29 {dimension_numbers = #tpu.dot_dimension_numbers<[1], [0], [0], [1], [0, 0, 1, 1], [], []>} : vector<80x24xbf16>, vector<24x24xbf16>, vector<80x24xf32> -> vector<80x24xf32>
    %47 = arith.addf %42, %46 : vector<80x24xf32>
    %c0_30 = arith.constant 0 : index
    %c0_31 = arith.constant 0 : index
    %48 = vector.load %arg3[%c0_30, %c0_31] : memref<1x24xf32, #tpu.memory_space<vmem>>, vector<1x24xf32>
    %49 = vector.broadcast %48 : vector<1x24xf32> to vector<80x24xf32>
    %50 = arith.addf %47, %49 : vector<80x24xf32>
    %51 = math.absf %50 : vector<80x24xf32>
    %cst_32 = arith.constant 0.000000e+00 : f32
    %52 = vector.broadcast %cst_32 : f32 to vector<80x24xf32>
    %53 = arith.subf %52, %51 : vector<80x24xf32>
    %54 = math.exp %53 : vector<80x24xf32>
    %cst_33 = arith.constant 1.000000e+00 : f32
    %55 = vector.broadcast %cst_33 : f32 to vector<80x24xf32>
    %56 = arith.addf %55, %54 : vector<80x24xf32>
    %57 = tpu.reciprocal %56 {approx = true} : vector<80x24xf32> -> vector<80x24xf32>
    %cst_34 = arith.constant 0.000000e+00 : f32
    %58 = vector.broadcast %cst_34 : f32 to vector<80x24xf32>
    %59 = arith.cmpf oge, %50, %58 : vector<80x24xf32>
    %60 = arith.mulf %54, %57 : vector<80x24xf32>
    %61 = arith.select %59, %57, %60 : vector<80x24xi1>, vector<80x24xf32>
    %62 = arith.mulf %50, %61 : vector<80x24xf32>
    %63 = arith.truncf %62 : vector<80x24xf32> to vector<80x24xbf16>
    %c0_35 = arith.constant 0 : index
    %c0_36 = arith.constant 0 : index
    %c0_37 = arith.constant 0 : index
    %64 = vector.load %arg4[%c0_35, %c0_36, %c0_37] : memref<1x80x24xbf16, #tpu.memory_space<vmem>>, vector<1x80x24xbf16>
    %65 = vector.shape_cast %64 : vector<1x80x24xbf16> to vector<80x24xbf16>
    %66 = vector.shape_cast %63 : vector<80x24xbf16> to vector<1x80x24xbf16>
    tpu.vector_store %arg4[%c0_35, %c0_36, %c0_37], %66 {strides = array<i32>} : memref<1x80x24xbf16, #tpu.memory_space<vmem>>, vector<1x80x24xbf16>,
    return
  }
  func.func @transform_0(%arg0: i32) -> (i32, i32, i32) {
    %c0_i32 = arith.constant 0 : i32
    %c0_i32_0 = arith.constant 0 : i32
    %c0_i32_1 = arith.constant 0 : i32
    return %arg0, %c0_i32, %c0_i32_0 : i32, i32, i32
  }
  func.func @transform_1(%arg0: i32) -> (i32, i32, i32) {
    %c0_i32 = arith.constant 0 : i32
    %c0_i32_0 = arith.constant 0 : i32
    %c0_i32_1 = arith.constant 0 : i32
    %c0_i32_2 = arith.constant 0 : i32
    return %c0_i32, %c0_i32_0, %c0_i32_1 : i32, i32, i32
  }
  func.func @transform_2(%arg0: i32) -> (i32, i32) {
    %c0_i32 = arith.constant 0 : i32
    %c0_i32_0 = arith.constant 0 : i32
    %c0_i32_1 = arith.constant 0 : i32
    return %c0_i32, %c0_i32_0 : i32, i32
  }
  func.func @transform_3(%arg0: i32) -> (i32, i32, i32) {
    %c0_i32 = arith.constant 0 : i32
    %c0_i32_0 = arith.constant 0 : i32
    %c0_i32_1 = arith.constant 0 : i32
    return %arg0, %c0_i32, %c0_i32_0 : i32, i32, i32
  }
}

module attributes {stable_mosaic.version = 11 : i64} {
  func.func @kernel(%arg0: i32, %arg1: i32, %arg2: memref<16x224xbf16, #tpu.memory_space<vmem>>, %arg3: memref<224x128xbf16, #tpu.memory_space<vmem>>, %arg4: memref<1x128xf32, #tpu.memory_space<vmem>>, %arg5: memref<16x128xbf16, #tpu.memory_space<vmem>>) attributes {dimension_semantics = [#tpu.dimension_semantics<parallel>, #tpu.dimension_semantics<parallel>], iteration_bounds = array<i64: 2, 1>, scalar_prefetch = 0 : i64, scratch_operands = 0 : i64, tpu.core_type = #tpu.core_type<tc>, window_params = [{transform_indices = @transform_0, window_bounds = array<i64: 16, 224>}, {transform_indices = @transform_1, window_bounds = array<i64: 224, 128>}, {transform_indices = @transform_2, window_bounds = array<i64: 1, 128>}, {transform_indices = @transform_3, window_bounds = array<i64: 16, 128>}]} {
    %c0 = arith.constant 0 : index
    %c0_0 = arith.constant 0 : index
    %0 = vector.load %arg2[%c0, %c0_0] : memref<16x224xbf16, #tpu.memory_space<vmem>>, vector<16x224xbf16>
    %c0_1 = arith.constant 0 : index
    %c0_2 = arith.constant 0 : index
    %1 = vector.load %arg3[%c0_1, %c0_2] : memref<224x128xbf16, #tpu.memory_space<vmem>>, vector<224x128xbf16>
    %cst = arith.constant dense<0.000000e+00> : vector<16x128xf32>
    %2 = tpu.matmul %0, %1, %cst {dimension_numbers = #tpu.dot_dimension_numbers<[1], [0], [0], [1], [0, 0, 1, 1], [], []>} : vector<16x224xbf16>, vector<224x128xbf16>, vector<16x128xf32> -> vector<16x128xf32>
    %c0_3 = arith.constant 0 : index
    %c0_4 = arith.constant 0 : index
    %3 = vector.load %arg4[%c0_3, %c0_4] : memref<1x128xf32, #tpu.memory_space<vmem>>, vector<1x128xf32>
    %4 = vector.broadcast %3 : vector<1x128xf32> to vector<16x128xf32>
    %5 = arith.addf %2, %4 : vector<16x128xf32>
    %6 = math.absf %5 : vector<16x128xf32>
    %cst_5 = arith.constant 0.000000e+00 : f32
    %7 = vector.broadcast %cst_5 : f32 to vector<16x128xf32>
    %8 = arith.subf %7, %6 : vector<16x128xf32>
    %9 = math.exp %8 : vector<16x128xf32>
    %cst_6 = arith.constant 1.000000e+00 : f32
    %10 = vector.broadcast %cst_6 : f32 to vector<16x128xf32>
    %11 = arith.addf %10, %9 : vector<16x128xf32>
    %12 = tpu.reciprocal %11 {approx = true} : vector<16x128xf32> -> vector<16x128xf32>
    %cst_7 = arith.constant 0.000000e+00 : f32
    %13 = vector.broadcast %cst_7 : f32 to vector<16x128xf32>
    %14 = arith.cmpf oge, %5, %13 : vector<16x128xf32>
    %15 = arith.mulf %9, %12 : vector<16x128xf32>
    %16 = arith.select %14, %12, %15 : vector<16x128xi1>, vector<16x128xf32>
    %17 = arith.mulf %5, %16 : vector<16x128xf32>
    %18 = arith.truncf %17 : vector<16x128xf32> to vector<16x128xbf16>
    %c0_8 = arith.constant 0 : index
    %c0_9 = arith.constant 0 : index
    %19 = vector.load %arg5[%c0_8, %c0_9] : memref<16x128xbf16, #tpu.memory_space<vmem>>, vector<16x128xbf16>
    tpu.vector_store %arg5[%c0_8, %c0_9], %18 {strides = array<i32>} : memref<16x128xbf16, #tpu.memory_space<vmem>>, vector<16x128xbf16>,
    return
  }
  func.func @transform_0(%arg0: i32, %arg1: i32) -> (i32, i32) {
    %c0_i32 = arith.constant 0 : i32
    %c0_i32_0 = arith.constant 0 : i32
    return %arg0, %c0_i32 : i32, i32
  }
  func.func @transform_1(%arg0: i32, %arg1: i32) -> (i32, i32) {
    %c0_i32 = arith.constant 0 : i32
    %c0_i32_0 = arith.constant 0 : i32
    return %c0_i32, %arg1 : i32, i32
  }
  func.func @transform_2(%arg0: i32, %arg1: i32) -> (i32, i32) {
    %c0_i32 = arith.constant 0 : i32
    %c0_i32_0 = arith.constant 0 : i32
    return %c0_i32, %arg1 : i32, i32
  }
  func.func @transform_3(%arg0: i32, %arg1: i32) -> (i32, i32) {
    %c0_i32 = arith.constant 0 : i32
    return %arg0, %arg1 : i32, i32
  }
}

module attributes {stable_mosaic.version = 11 : i64} {
  func.func @kernel(%arg0: i32, %arg1: i32, %arg2: memref<16x96xbf16, #tpu.memory_space<vmem>>, %arg3: memref<96x128xbf16, #tpu.memory_space<vmem>>, %arg4: memref<1x128xf32, #tpu.memory_space<vmem>>, %arg5: memref<16x128xbf16, #tpu.memory_space<vmem>>) attributes {dimension_semantics = [#tpu.dimension_semantics<parallel>, #tpu.dimension_semantics<parallel>], iteration_bounds = array<i64: 2, 1>, scalar_prefetch = 0 : i64, scratch_operands = 0 : i64, tpu.core_type = #tpu.core_type<tc>, window_params = [{transform_indices = @transform_0, window_bounds = array<i64: 16, 96>}, {transform_indices = @transform_1, window_bounds = array<i64: 96, 128>}, {transform_indices = @transform_2, window_bounds = array<i64: 1, 128>}, {transform_indices = @transform_3, window_bounds = array<i64: 16, 128>}]} {
    %c0 = arith.constant 0 : index
    %c0_0 = arith.constant 0 : index
    %0 = vector.load %arg2[%c0, %c0_0] : memref<16x96xbf16, #tpu.memory_space<vmem>>, vector<16x96xbf16>
    %c0_1 = arith.constant 0 : index
    %c0_2 = arith.constant 0 : index
    %1 = vector.load %arg3[%c0_1, %c0_2] : memref<96x128xbf16, #tpu.memory_space<vmem>>, vector<96x128xbf16>
    %cst = arith.constant dense<0.000000e+00> : vector<16x128xf32>
    %2 = tpu.matmul %0, %1, %cst {dimension_numbers = #tpu.dot_dimension_numbers<[1], [0], [0], [1], [0, 0, 1, 1], [], []>} : vector<16x96xbf16>, vector<96x128xbf16>, vector<16x128xf32> -> vector<16x128xf32>
    %c0_3 = arith.constant 0 : index
    %c0_4 = arith.constant 0 : index
    %3 = vector.load %arg4[%c0_3, %c0_4] : memref<1x128xf32, #tpu.memory_space<vmem>>, vector<1x128xf32>
    %4 = vector.broadcast %3 : vector<1x128xf32> to vector<16x128xf32>
    %5 = arith.addf %2, %4 : vector<16x128xf32>
    %6 = arith.truncf %5 : vector<16x128xf32> to vector<16x128xbf16>
    %c0_5 = arith.constant 0 : index
    %c0_6 = arith.constant 0 : index
    %7 = vector.load %arg5[%c0_5, %c0_6] : memref<16x128xbf16, #tpu.memory_space<vmem>>, vector<16x128xbf16>
    tpu.vector_store %arg5[%c0_5, %c0_6], %6 {strides = array<i32>} : memref<16x128xbf16, #tpu.memory_space<vmem>>, vector<16x128xbf16>,
    return
  }
  func.func @transform_0(%arg0: i32, %arg1: i32) -> (i32, i32) {
    %c0_i32 = arith.constant 0 : i32
    %c0_i32_0 = arith.constant 0 : i32
    return %arg0, %c0_i32 : i32, i32
  }
  func.func @transform_1(%arg0: i32, %arg1: i32) -> (i32, i32) {
    %c0_i32 = arith.constant 0 : i32
    %c0_i32_0 = arith.constant 0 : i32
    return %c0_i32, %arg1 : i32, i32
  }
  func.func @transform_2(%arg0: i32, %arg1: i32) -> (i32, i32) {
    %c0_i32 = arith.constant 0 : i32
    %c0_i32_0 = arith.constant 0 : i32
    return %c0_i32, %arg1 : i32, i32
  }
  func.func @transform_3(%arg0: i32, %arg1: i32) -> (i32, i32) {
    %c0_i32 = arith.constant 0 : i32
    return %arg0, %arg1 : i32, i32
  }
}

module attributes {stable_mosaic.version = 11 : i64} {
  func.func @kernel(%arg0: i32, %arg1: memref<1x38x48xbf16, #tpu.memory_space<vmem>>, %arg2: memref<9x48x192xbf16, #tpu.memory_space<vmem>>, %arg3: memref<1x192xf32, #tpu.memory_space<vmem>>, %arg4: memref<1x24x192xbf16, #tpu.memory_space<vmem>>) attributes {dimension_semantics = [#tpu.dimension_semantics<parallel>], iteration_bounds = array<i64: 2>, scalar_prefetch = 0 : i64, scratch_operands = 0 : i64, tpu.core_type = #tpu.core_type<tc>, window_params = [{transform_indices = @transform_0, window_bounds = array<i64: 1, 38, 48>}, {pipeline_mode = #tpu.pipeline_mode<synchronous>, transform_indices = @transform_1, window_bounds = array<i64: 9, 48, 192>}, {pipeline_mode = #tpu.pipeline_mode<synchronous>, transform_indices = @transform_2, window_bounds = array<i64: 1, 192>}, {transform_indices = @transform_3, window_bounds = array<i64: 1, 24, 192>}]} {
    %c0 = arith.constant 0 : index
    %c0_0 = arith.constant 0 : index
    %c0_1 = arith.constant 0 : index
    %0 = vector.load %arg1[%c0, %c0_0, %c0_1] : memref<1x38x48xbf16, #tpu.memory_space<vmem>>, vector<1x38x48xbf16>
    %1 = vector.shape_cast %0 : vector<1x38x48xbf16> to vector<38x48xbf16>
    %cst = arith.constant 0.000000e+00 : f32
    %2 = vector.broadcast %cst : f32 to vector<24x192xf32>
    %3 = vector.extract_strided_slice %1 {offsets = [0, 0], sizes = [24, 48], strides = [1, 1]} : vector<38x48xbf16> to vector<24x48xbf16>
    %c0_2 = arith.constant 0 : index
    %c0_3 = arith.constant 0 : index
    %c0_4 = arith.constant 0 : index
    %4 = vector.load %arg2[%c0_2, %c0_3, %c0_4] : memref<9x48x192xbf16, #tpu.memory_space<vmem>>, vector<1x48x192xbf16>
    %5 = vector.shape_cast %4 : vector<1x48x192xbf16> to vector<48x192xbf16>
    %cst_5 = arith.constant dense<0.000000e+00> : vector<24x192xf32>
    %6 = tpu.matmul %3, %5, %cst_5 {dimension_numbers = #tpu.dot_dimension_numbers<[1], [0], [0], [1], [0, 0, 1, 1], [], []>} : vector<24x48xbf16>, vector<48x192xbf16>, vector<24x192xf32> -> vector<24x192xf32>
    %7 = arith.addf %2, %6 : vector<24x192xf32>
    %8 = vector.extract_strided_slice %1 {offsets = [1, 0], sizes = [24, 48], strides = [1, 1]} : vector<38x48xbf16> to vector<24x48xbf16>
    %c1 = arith.constant 1 : index
    %c0_6 = arith.constant 0 : index
    %c0_7 = arith.constant 0 : index
    %9 = vector.load %arg2[%c1, %c0_6, %c0_7] : memref<9x48x192xbf16, #tpu.memory_space<vmem>>, vector<1x48x192xbf16>
    %10 = vector.shape_cast %9 : vector<1x48x192xbf16> to vector<48x192xbf16>
    %cst_8 = arith.constant dense<0.000000e+00> : vector<24x192xf32>
    %11 = tpu.matmul %8, %10, %cst_8 {dimension_numbers = #tpu.dot_dimension_numbers<[1], [0], [0], [1], [0, 0, 1, 1], [], []>} : vector<24x48xbf16>, vector<48x192xbf16>, vector<24x192xf32> -> vector<24x192xf32>
    %12 = arith.addf %7, %11 : vector<24x192xf32>
    %13 = vector.extract_strided_slice %1 {offsets = [2, 0], sizes = [24, 48], strides = [1, 1]} : vector<38x48xbf16> to vector<24x48xbf16>
    %c2 = arith.constant 2 : index
    %c0_9 = arith.constant 0 : index
    %c0_10 = arith.constant 0 : index
    %14 = vector.load %arg2[%c2, %c0_9, %c0_10] : memref<9x48x192xbf16, #tpu.memory_space<vmem>>, vector<1x48x192xbf16>
    %15 = vector.shape_cast %14 : vector<1x48x192xbf16> to vector<48x192xbf16>
    %cst_11 = arith.constant dense<0.000000e+00> : vector<24x192xf32>
    %16 = tpu.matmul %13, %15, %cst_11 {dimension_numbers = #tpu.dot_dimension_numbers<[1], [0], [0], [1], [0, 0, 1, 1], [], []>} : vector<24x48xbf16>, vector<48x192xbf16>, vector<24x192xf32> -> vector<24x192xf32>
    %17 = arith.addf %12, %16 : vector<24x192xf32>
    %18 = vector.extract_strided_slice %1 {offsets = [6, 0], sizes = [24, 48], strides = [1, 1]} : vector<38x48xbf16> to vector<24x48xbf16>
    %c3 = arith.constant 3 : index
    %c0_12 = arith.constant 0 : index
    %c0_13 = arith.constant 0 : index
    %19 = vector.load %arg2[%c3, %c0_12, %c0_13] : memref<9x48x192xbf16, #tpu.memory_space<vmem>>, vector<1x48x192xbf16>
    %20 = vector.shape_cast %19 : vector<1x48x192xbf16> to vector<48x192xbf16>
    %cst_14 = arith.constant dense<0.000000e+00> : vector<24x192xf32>
    %21 = tpu.matmul %18, %20, %cst_14 {dimension_numbers = #tpu.dot_dimension_numbers<[1], [0], [0], [1], [0, 0, 1, 1], [], []>} : vector<24x48xbf16>, vector<48x192xbf16>, vector<24x192xf32> -> vector<24x192xf32>
    %22 = arith.addf %17, %21 : vector<24x192xf32>
    %23 = vector.extract_strided_slice %1 {offsets = [7, 0], sizes = [24, 48], strides = [1, 1]} : vector<38x48xbf16> to vector<24x48xbf16>
    %c4 = arith.constant 4 : index
    %c0_15 = arith.constant 0 : index
    %c0_16 = arith.constant 0 : index
    %24 = vector.load %arg2[%c4, %c0_15, %c0_16] : memref<9x48x192xbf16, #tpu.memory_space<vmem>>, vector<1x48x192xbf16>
    %25 = vector.shape_cast %24 : vector<1x48x192xbf16> to vector<48x192xbf16>
    %cst_17 = arith.constant dense<0.000000e+00> : vector<24x192xf32>
    %26 = tpu.matmul %23, %25, %cst_17 {dimension_numbers = #tpu.dot_dimension_numbers<[1], [0], [0], [1], [0, 0, 1, 1], [], []>} : vector<24x48xbf16>, vector<48x192xbf16>, vector<24x192xf32> -> vector<24x192xf32>
    %27 = arith.addf %22, %26 : vector<24x192xf32>
    %28 = vector.extract_strided_slice %1 {offsets = [8, 0], sizes = [24, 48], strides = [1, 1]} : vector<38x48xbf16> to vector<24x48xbf16>
    %c5 = arith.constant 5 : index
    %c0_18 = arith.constant 0 : index
    %c0_19 = arith.constant 0 : index
    %29 = vector.load %arg2[%c5, %c0_18, %c0_19] : memref<9x48x192xbf16, #tpu.memory_space<vmem>>, vector<1x48x192xbf16>
    %30 = vector.shape_cast %29 : vector<1x48x192xbf16> to vector<48x192xbf16>
    %cst_20 = arith.constant dense<0.000000e+00> : vector<24x192xf32>
    %31 = tpu.matmul %28, %30, %cst_20 {dimension_numbers = #tpu.dot_dimension_numbers<[1], [0], [0], [1], [0, 0, 1, 1], [], []>} : vector<24x48xbf16>, vector<48x192xbf16>, vector<24x192xf32> -> vector<24x192xf32>
    %32 = arith.addf %27, %31 : vector<24x192xf32>
    %33 = vector.extract_strided_slice %1 {offsets = [12, 0], sizes = [24, 48], strides = [1, 1]} : vector<38x48xbf16> to vector<24x48xbf16>
    %c6 = arith.constant 6 : index
    %c0_21 = arith.constant 0 : index
    %c0_22 = arith.constant 0 : index
    %34 = vector.load %arg2[%c6, %c0_21, %c0_22] : memref<9x48x192xbf16, #tpu.memory_space<vmem>>, vector<1x48x192xbf16>
    %35 = vector.shape_cast %34 : vector<1x48x192xbf16> to vector<48x192xbf16>
    %cst_23 = arith.constant dense<0.000000e+00> : vector<24x192xf32>
    %36 = tpu.matmul %33, %35, %cst_23 {dimension_numbers = #tpu.dot_dimension_numbers<[1], [0], [0], [1], [0, 0, 1, 1], [], []>} : vector<24x48xbf16>, vector<48x192xbf16>, vector<24x192xf32> -> vector<24x192xf32>
    %37 = arith.addf %32, %36 : vector<24x192xf32>
    %38 = vector.extract_strided_slice %1 {offsets = [13, 0], sizes = [24, 48], strides = [1, 1]} : vector<38x48xbf16> to vector<24x48xbf16>
    %c7 = arith.constant 7 : index
    %c0_24 = arith.constant 0 : index
    %c0_25 = arith.constant 0 : index
    %39 = vector.load %arg2[%c7, %c0_24, %c0_25] : memref<9x48x192xbf16, #tpu.memory_space<vmem>>, vector<1x48x192xbf16>
    %40 = vector.shape_cast %39 : vector<1x48x192xbf16> to vector<48x192xbf16>
    %cst_26 = arith.constant dense<0.000000e+00> : vector<24x192xf32>
    %41 = tpu.matmul %38, %40, %cst_26 {dimension_numbers = #tpu.dot_dimension_numbers<[1], [0], [0], [1], [0, 0, 1, 1], [], []>} : vector<24x48xbf16>, vector<48x192xbf16>, vector<24x192xf32> -> vector<24x192xf32>
    %42 = arith.addf %37, %41 : vector<24x192xf32>
    %43 = vector.extract_strided_slice %1 {offsets = [14, 0], sizes = [24, 48], strides = [1, 1]} : vector<38x48xbf16> to vector<24x48xbf16>
    %c8 = arith.constant 8 : index
    %c0_27 = arith.constant 0 : index
    %c0_28 = arith.constant 0 : index
    %44 = vector.load %arg2[%c8, %c0_27, %c0_28] : memref<9x48x192xbf16, #tpu.memory_space<vmem>>, vector<1x48x192xbf16>
    %45 = vector.shape_cast %44 : vector<1x48x192xbf16> to vector<48x192xbf16>
    %cst_29 = arith.constant dense<0.000000e+00> : vector<24x192xf32>
    %46 = tpu.matmul %43, %45, %cst_29 {dimension_numbers = #tpu.dot_dimension_numbers<[1], [0], [0], [1], [0, 0, 1, 1], [], []>} : vector<24x48xbf16>, vector<48x192xbf16>, vector<24x192xf32> -> vector<24x192xf32>
    %47 = arith.addf %42, %46 : vector<24x192xf32>
    %c0_30 = arith.constant 0 : index
    %c0_31 = arith.constant 0 : index
    %48 = vector.load %arg3[%c0_30, %c0_31] : memref<1x192xf32, #tpu.memory_space<vmem>>, vector<1x192xf32>
    %49 = vector.broadcast %48 : vector<1x192xf32> to vector<24x192xf32>
    %50 = arith.addf %47, %49 : vector<24x192xf32>
    %51 = math.absf %50 : vector<24x192xf32>
    %cst_32 = arith.constant 0.000000e+00 : f32
    %52 = vector.broadcast %cst_32 : f32 to vector<24x192xf32>
    %53 = arith.subf %52, %51 : vector<24x192xf32>
    %54 = math.exp %53 : vector<24x192xf32>
    %cst_33 = arith.constant 1.000000e+00 : f32
    %55 = vector.broadcast %cst_33 : f32 to vector<24x192xf32>
    %56 = arith.addf %55, %54 : vector<24x192xf32>
    %57 = tpu.reciprocal %56 {approx = true} : vector<24x192xf32> -> vector<24x192xf32>
    %cst_34 = arith.constant 0.000000e+00 : f32
    %58 = vector.broadcast %cst_34 : f32 to vector<24x192xf32>
    %59 = arith.cmpf oge, %50, %58 : vector<24x192xf32>
    %60 = arith.mulf %54, %57 : vector<24x192xf32>
    %61 = arith.select %59, %57, %60 : vector<24x192xi1>, vector<24x192xf32>
    %62 = arith.mulf %50, %61 : vector<24x192xf32>
    %63 = arith.truncf %62 : vector<24x192xf32> to vector<24x192xbf16>
    %c0_35 = arith.constant 0 : index
    %c0_36 = arith.constant 0 : index
    %c0_37 = arith.constant 0 : index
    %64 = vector.load %arg4[%c0_35, %c0_36, %c0_37] : memref<1x24x192xbf16, #tpu.memory_space<vmem>>, vector<1x24x192xbf16>
    %65 = vector.shape_cast %64 : vector<1x24x192xbf16> to vector<24x192xbf16>
    %66 = vector.shape_cast %63 : vector<24x192xbf16> to vector<1x24x192xbf16>
    tpu.vector_store %arg4[%c0_35, %c0_36, %c0_37], %66 {strides = array<i32>} : memref<1x24x192xbf16, #tpu.memory_space<vmem>>, vector<1x24x192xbf16>,
    return
  }
  func.func @transform_0(%arg0: i32) -> (i32, i32, i32) {
    %c0_i32 = arith.constant 0 : i32
    %c0_i32_0 = arith.constant 0 : i32
    %c0_i32_1 = arith.constant 0 : i32
    return %arg0, %c0_i32, %c0_i32_0 : i32, i32, i32
  }
  func.func @transform_1(%arg0: i32) -> (i32, i32, i32) {
    %c0_i32 = arith.constant 0 : i32
    %c0_i32_0 = arith.constant 0 : i32
    %c0_i32_1 = arith.constant 0 : i32
    %c0_i32_2 = arith.constant 0 : i32
    return %c0_i32, %c0_i32_0, %c0_i32_1 : i32, i32, i32
  }
  func.func @transform_2(%arg0: i32) -> (i32, i32) {
    %c0_i32 = arith.constant 0 : i32
    %c0_i32_0 = arith.constant 0 : i32
    %c0_i32_1 = arith.constant 0 : i32
    return %c0_i32, %c0_i32_0 : i32, i32
  }
  func.func @transform_3(%arg0: i32) -> (i32, i32, i32) {
    %c0_i32 = arith.constant 0 : i32
    %c0_i32_0 = arith.constant 0 : i32
    %c0_i32_1 = arith.constant 0 : i32
    return %arg0, %c0_i32, %c0_i32_0 : i32, i32, i32
  }
}

module attributes {stable_mosaic.version = 11 : i64} {
  func.func @kernel(%arg0: i32, %arg1: i32, %arg2: memref<16x192xbf16, #tpu.memory_space<vmem>>, %arg3: memref<192x128xbf16, #tpu.memory_space<vmem>>, %arg4: memref<1x128xf32, #tpu.memory_space<vmem>>, %arg5: memref<16x128xbf16, #tpu.memory_space<vmem>>) attributes {dimension_semantics = [#tpu.dimension_semantics<parallel>, #tpu.dimension_semantics<parallel>], iteration_bounds = array<i64: 2, 1>, scalar_prefetch = 0 : i64, scratch_operands = 0 : i64, tpu.core_type = #tpu.core_type<tc>, window_params = [{transform_indices = @transform_0, window_bounds = array<i64: 16, 192>}, {transform_indices = @transform_1, window_bounds = array<i64: 192, 128>}, {transform_indices = @transform_2, window_bounds = array<i64: 1, 128>}, {transform_indices = @transform_3, window_bounds = array<i64: 16, 128>}]} {
    %c0 = arith.constant 0 : index
    %c0_0 = arith.constant 0 : index
    %0 = vector.load %arg2[%c0, %c0_0] : memref<16x192xbf16, #tpu.memory_space<vmem>>, vector<16x192xbf16>
    %c0_1 = arith.constant 0 : index
    %c0_2 = arith.constant 0 : index
    %1 = vector.load %arg3[%c0_1, %c0_2] : memref<192x128xbf16, #tpu.memory_space<vmem>>, vector<192x128xbf16>
    %cst = arith.constant dense<0.000000e+00> : vector<16x128xf32>
    %2 = tpu.matmul %0, %1, %cst {dimension_numbers = #tpu.dot_dimension_numbers<[1], [0], [0], [1], [0, 0, 1, 1], [], []>} : vector<16x192xbf16>, vector<192x128xbf16>, vector<16x128xf32> -> vector<16x128xf32>
    %c0_3 = arith.constant 0 : index
    %c0_4 = arith.constant 0 : index
    %3 = vector.load %arg4[%c0_3, %c0_4] : memref<1x128xf32, #tpu.memory_space<vmem>>, vector<1x128xf32>
    %4 = vector.broadcast %3 : vector<1x128xf32> to vector<16x128xf32>
    %5 = arith.addf %2, %4 : vector<16x128xf32>
    %6 = arith.truncf %5 : vector<16x128xf32> to vector<16x128xbf16>
    %c0_5 = arith.constant 0 : index
    %c0_6 = arith.constant 0 : index
    %7 = vector.load %arg5[%c0_5, %c0_6] : memref<16x128xbf16, #tpu.memory_space<vmem>>, vector<16x128xbf16>
    tpu.vector_store %arg5[%c0_5, %c0_6], %6 {strides = array<i32>} : memref<16x128xbf16, #tpu.memory_space<vmem>>, vector<16x128xbf16>,
    return
  }
  func.func @transform_0(%arg0: i32, %arg1: i32) -> (i32, i32) {
    %c0_i32 = arith.constant 0 : i32
    %c0_i32_0 = arith.constant 0 : i32
    return %arg0, %c0_i32 : i32, i32
  }
  func.func @transform_1(%arg0: i32, %arg1: i32) -> (i32, i32) {
    %c0_i32 = arith.constant 0 : i32
    %c0_i32_0 = arith.constant 0 : i32
    return %c0_i32, %arg1 : i32, i32
  }
  func.func @transform_2(%arg0: i32, %arg1: i32) -> (i32, i32) {
    %c0_i32 = arith.constant 0 : i32
    %c0_i32_0 = arith.constant 0 : i32
    return %c0_i32, %arg1 : i32, i32
  }
  func.func @transform_3(%arg0: i32, %arg1: i32) -> (i32, i32) {
    %c0_i32 = arith.constant 0 : i32
    return %arg0, %arg1 : i32, i32
  }
}

module attributes {stable_mosaic.version = 11 : i64} {
  func.func @kernel(%arg0: i32, %arg1: i32, %arg2: memref<16x432xbf16, #tpu.memory_space<vmem>>, %arg3: memref<432x256xbf16, #tpu.memory_space<vmem>>, %arg4: memref<1x256xf32, #tpu.memory_space<vmem>>, %arg5: memref<16x256xbf16, #tpu.memory_space<vmem>>) attributes {dimension_semantics = [#tpu.dimension_semantics<parallel>, #tpu.dimension_semantics<parallel>], iteration_bounds = array<i64: 1, 1>, scalar_prefetch = 0 : i64, scratch_operands = 0 : i64, tpu.core_type = #tpu.core_type<tc>, window_params = [{transform_indices = @transform_0, window_bounds = array<i64: 16, 432>}, {transform_indices = @transform_1, window_bounds = array<i64: 432, 256>}, {transform_indices = @transform_2, window_bounds = array<i64: 1, 256>}, {transform_indices = @transform_3, window_bounds = array<i64: 16, 256>}]} {
    %c0 = arith.constant 0 : index
    %c0_0 = arith.constant 0 : index
    %0 = vector.load %arg2[%c0, %c0_0] : memref<16x432xbf16, #tpu.memory_space<vmem>>, vector<16x432xbf16>
    %c0_1 = arith.constant 0 : index
    %c0_2 = arith.constant 0 : index
    %1 = vector.load %arg3[%c0_1, %c0_2] : memref<432x256xbf16, #tpu.memory_space<vmem>>, vector<432x256xbf16>
    %cst = arith.constant dense<0.000000e+00> : vector<16x256xf32>
    %2 = tpu.matmul %0, %1, %cst {dimension_numbers = #tpu.dot_dimension_numbers<[1], [0], [0], [1], [0, 0, 1, 1], [], []>} : vector<16x432xbf16>, vector<432x256xbf16>, vector<16x256xf32> -> vector<16x256xf32>
    %c0_3 = arith.constant 0 : index
    %c0_4 = arith.constant 0 : index
    %3 = vector.load %arg4[%c0_3, %c0_4] : memref<1x256xf32, #tpu.memory_space<vmem>>, vector<1x256xf32>
    %4 = vector.broadcast %3 : vector<1x256xf32> to vector<16x256xf32>
    %5 = arith.addf %2, %4 : vector<16x256xf32>
    %6 = math.absf %5 : vector<16x256xf32>
    %cst_5 = arith.constant 0.000000e+00 : f32
    %7 = vector.broadcast %cst_5 : f32 to vector<16x256xf32>
    %8 = arith.subf %7, %6 : vector<16x256xf32>
    %9 = math.exp %8 : vector<16x256xf32>
    %cst_6 = arith.constant 1.000000e+00 : f32
    %10 = vector.broadcast %cst_6 : f32 to vector<16x256xf32>
    %11 = arith.addf %10, %9 : vector<16x256xf32>
    %12 = tpu.reciprocal %11 {approx = true} : vector<16x256xf32> -> vector<16x256xf32>
    %cst_7 = arith.constant 0.000000e+00 : f32
    %13 = vector.broadcast %cst_7 : f32 to vector<16x256xf32>
    %14 = arith.cmpf oge, %5, %13 : vector<16x256xf32>
    %15 = arith.mulf %9, %12 : vector<16x256xf32>
    %16 = arith.select %14, %12, %15 : vector<16x256xi1>, vector<16x256xf32>
    %17 = arith.mulf %5, %16 : vector<16x256xf32>
    %18 = arith.truncf %17 : vector<16x256xf32> to vector<16x256xbf16>
    %c0_8 = arith.constant 0 : index
    %c0_9 = arith.constant 0 : index
    %19 = vector.load %arg5[%c0_8, %c0_9] : memref<16x256xbf16, #tpu.memory_space<vmem>>, vector<16x256xbf16>
    tpu.vector_store %arg5[%c0_8, %c0_9], %18 {strides = array<i32>} : memref<16x256xbf16, #tpu.memory_space<vmem>>, vector<16x256xbf16>,
    return
  }
  func.func @transform_0(%arg0: i32, %arg1: i32) -> (i32, i32) {
    %c0_i32 = arith.constant 0 : i32
    %c0_i32_0 = arith.constant 0 : i32
    return %arg0, %c0_i32 : i32, i32
  }
  func.func @transform_1(%arg0: i32, %arg1: i32) -> (i32, i32) {
    %c0_i32 = arith.constant 0 : i32
    %c0_i32_0 = arith.constant 0 : i32
    return %c0_i32, %arg1 : i32, i32
  }
  func.func @transform_2(%arg0: i32, %arg1: i32) -> (i32, i32) {
    %c0_i32 = arith.constant 0 : i32
    %c0_i32_0 = arith.constant 0 : i32
    return %c0_i32, %arg1 : i32, i32
  }
  func.func @transform_3(%arg0: i32, %arg1: i32) -> (i32, i32) {
    %c0_i32 = arith.constant 0 : i32
    return %arg0, %arg1 : i32, i32
  }
}

module attributes {stable_mosaic.version = 11 : i64} {
  func.func @kernel(%arg0: i32, %arg1: i32, %arg2: memref<16x192xbf16, #tpu.memory_space<vmem>>, %arg3: memref<192x128xbf16, #tpu.memory_space<vmem>>, %arg4: memref<1x128xf32, #tpu.memory_space<vmem>>, %arg5: memref<16x128xbf16, #tpu.memory_space<vmem>>) attributes {dimension_semantics = [#tpu.dimension_semantics<parallel>, #tpu.dimension_semantics<parallel>], iteration_bounds = array<i64: 1, 1>, scalar_prefetch = 0 : i64, scratch_operands = 0 : i64, tpu.core_type = #tpu.core_type<tc>, window_params = [{transform_indices = @transform_0, window_bounds = array<i64: 16, 192>}, {transform_indices = @transform_1, window_bounds = array<i64: 192, 128>}, {transform_indices = @transform_2, window_bounds = array<i64: 1, 128>}, {transform_indices = @transform_3, window_bounds = array<i64: 16, 128>}]} {
    %c0 = arith.constant 0 : index
    %c0_0 = arith.constant 0 : index
    %0 = vector.load %arg2[%c0, %c0_0] : memref<16x192xbf16, #tpu.memory_space<vmem>>, vector<16x192xbf16>
    %c0_1 = arith.constant 0 : index
    %c0_2 = arith.constant 0 : index
    %1 = vector.load %arg3[%c0_1, %c0_2] : memref<192x128xbf16, #tpu.memory_space<vmem>>, vector<192x128xbf16>
    %cst = arith.constant dense<0.000000e+00> : vector<16x128xf32>
    %2 = tpu.matmul %0, %1, %cst {dimension_numbers = #tpu.dot_dimension_numbers<[1], [0], [0], [1], [0, 0, 1, 1], [], []>} : vector<16x192xbf16>, vector<192x128xbf16>, vector<16x128xf32> -> vector<16x128xf32>
    %c0_3 = arith.constant 0 : index
    %c0_4 = arith.constant 0 : index
    %3 = vector.load %arg4[%c0_3, %c0_4] : memref<1x128xf32, #tpu.memory_space<vmem>>, vector<1x128xf32>
    %4 = vector.broadcast %3 : vector<1x128xf32> to vector<16x128xf32>
    %5 = arith.addf %2, %4 : vector<16x128xf32>
    %6 = arith.truncf %5 : vector<16x128xf32> to vector<16x128xbf16>
    %c0_5 = arith.constant 0 : index
    %c0_6 = arith.constant 0 : index
    %7 = vector.load %arg5[%c0_5, %c0_6] : memref<16x128xbf16, #tpu.memory_space<vmem>>, vector<16x128xbf16>
    tpu.vector_store %arg5[%c0_5, %c0_6], %6 {strides = array<i32>} : memref<16x128xbf16, #tpu.memory_space<vmem>>, vector<16x128xbf16>,
    return
  }
  func.func @transform_0(%arg0: i32, %arg1: i32) -> (i32, i32) {
    %c0_i32 = arith.constant 0 : i32
    %c0_i32_0 = arith.constant 0 : i32
    return %arg0, %c0_i32 : i32, i32
  }
  func.func @transform_1(%arg0: i32, %arg1: i32) -> (i32, i32) {
    %c0_i32 = arith.constant 0 : i32
    %c0_i32_0 = arith.constant 0 : i32
    return %c0_i32, %arg1 : i32, i32
  }
  func.func @transform_2(%arg0: i32, %arg1: i32) -> (i32, i32) {
    %c0_i32 = arith.constant 0 : i32
    %c0_i32_0 = arith.constant 0 : i32
    return %c0_i32, %arg1 : i32, i32
  }
  func.func @transform_3(%arg0: i32, %arg1: i32) -> (i32, i32) {
    %c0_i32 = arith.constant 0 : i32
    return %arg0, %arg1 : i32, i32
  }
}

module attributes {stable_mosaic.version = 11 : i64} {
  func.func @kernel(%arg0: i32, %arg1: memref<1x18x64xbf16, #tpu.memory_space<vmem>>, %arg2: memref<9x64x256xbf16, #tpu.memory_space<vmem>>, %arg3: memref<1x256xf32, #tpu.memory_space<vmem>>, %arg4: memref<1x8x256xbf16, #tpu.memory_space<vmem>>) attributes {dimension_semantics = [#tpu.dimension_semantics<parallel>], iteration_bounds = array<i64: 2>, scalar_prefetch = 0 : i64, scratch_operands = 0 : i64, tpu.core_type = #tpu.core_type<tc>, window_params = [{transform_indices = @transform_0, window_bounds = array<i64: 1, 18, 64>}, {pipeline_mode = #tpu.pipeline_mode<synchronous>, transform_indices = @transform_1, window_bounds = array<i64: 9, 64, 256>}, {pipeline_mode = #tpu.pipeline_mode<synchronous>, transform_indices = @transform_2, window_bounds = array<i64: 1, 256>}, {transform_indices = @transform_3, window_bounds = array<i64: 1, 8, 256>}]} {
    %c0 = arith.constant 0 : index
    %c0_0 = arith.constant 0 : index
    %c0_1 = arith.constant 0 : index
    %0 = vector.load %arg1[%c0, %c0_0, %c0_1] : memref<1x18x64xbf16, #tpu.memory_space<vmem>>, vector<1x18x64xbf16>
    %1 = vector.shape_cast %0 : vector<1x18x64xbf16> to vector<18x64xbf16>
    %cst = arith.constant 0.000000e+00 : f32
    %2 = vector.broadcast %cst : f32 to vector<8x256xf32>
    %3 = vector.extract_strided_slice %1 {offsets = [0, 0], sizes = [8, 64], strides = [1, 1]} : vector<18x64xbf16> to vector<8x64xbf16>
    %c0_2 = arith.constant 0 : index
    %c0_3 = arith.constant 0 : index
    %c0_4 = arith.constant 0 : index
    %4 = vector.load %arg2[%c0_2, %c0_3, %c0_4] : memref<9x64x256xbf16, #tpu.memory_space<vmem>>, vector<1x64x256xbf16>
    %5 = vector.shape_cast %4 : vector<1x64x256xbf16> to vector<64x256xbf16>
    %cst_5 = arith.constant dense<0.000000e+00> : vector<8x256xf32>
    %6 = tpu.matmul %3, %5, %cst_5 {dimension_numbers = #tpu.dot_dimension_numbers<[1], [0], [0], [1], [0, 0, 1, 1], [], []>} : vector<8x64xbf16>, vector<64x256xbf16>, vector<8x256xf32> -> vector<8x256xf32>
    %7 = arith.addf %2, %6 : vector<8x256xf32>
    %8 = vector.extract_strided_slice %1 {offsets = [1, 0], sizes = [8, 64], strides = [1, 1]} : vector<18x64xbf16> to vector<8x64xbf16>
    %c1 = arith.constant 1 : index
    %c0_6 = arith.constant 0 : index
    %c0_7 = arith.constant 0 : index
    %9 = vector.load %arg2[%c1, %c0_6, %c0_7] : memref<9x64x256xbf16, #tpu.memory_space<vmem>>, vector<1x64x256xbf16>
    %10 = vector.shape_cast %9 : vector<1x64x256xbf16> to vector<64x256xbf16>
    %cst_8 = arith.constant dense<0.000000e+00> : vector<8x256xf32>
    %11 = tpu.matmul %8, %10, %cst_8 {dimension_numbers = #tpu.dot_dimension_numbers<[1], [0], [0], [1], [0, 0, 1, 1], [], []>} : vector<8x64xbf16>, vector<64x256xbf16>, vector<8x256xf32> -> vector<8x256xf32>
    %12 = arith.addf %7, %11 : vector<8x256xf32>
    %13 = vector.extract_strided_slice %1 {offsets = [2, 0], sizes = [8, 64], strides = [1, 1]} : vector<18x64xbf16> to vector<8x64xbf16>
    %c2 = arith.constant 2 : index
    %c0_9 = arith.constant 0 : index
    %c0_10 = arith.constant 0 : index
    %14 = vector.load %arg2[%c2, %c0_9, %c0_10] : memref<9x64x256xbf16, #tpu.memory_space<vmem>>, vector<1x64x256xbf16>
    %15 = vector.shape_cast %14 : vector<1x64x256xbf16> to vector<64x256xbf16>
    %cst_11 = arith.constant dense<0.000000e+00> : vector<8x256xf32>
    %16 = tpu.matmul %13, %15, %cst_11 {dimension_numbers = #tpu.dot_dimension_numbers<[1], [0], [0], [1], [0, 0, 1, 1], [], []>} : vector<8x64xbf16>, vector<64x256xbf16>, vector<8x256xf32> -> vector<8x256xf32>
    %17 = arith.addf %12, %16 : vector<8x256xf32>
    %18 = vector.extract_strided_slice %1 {offsets = [4, 0], sizes = [8, 64], strides = [1, 1]} : vector<18x64xbf16> to vector<8x64xbf16>
    %c3 = arith.constant 3 : index
    %c0_12 = arith.constant 0 : index
    %c0_13 = arith.constant 0 : index
    %19 = vector.load %arg2[%c3, %c0_12, %c0_13] : memref<9x64x256xbf16, #tpu.memory_space<vmem>>, vector<1x64x256xbf16>
    %20 = vector.shape_cast %19 : vector<1x64x256xbf16> to vector<64x256xbf16>
    %cst_14 = arith.constant dense<0.000000e+00> : vector<8x256xf32>
    %21 = tpu.matmul %18, %20, %cst_14 {dimension_numbers = #tpu.dot_dimension_numbers<[1], [0], [0], [1], [0, 0, 1, 1], [], []>} : vector<8x64xbf16>, vector<64x256xbf16>, vector<8x256xf32> -> vector<8x256xf32>
    %22 = arith.addf %17, %21 : vector<8x256xf32>
    %23 = vector.extract_strided_slice %1 {offsets = [5, 0], sizes = [8, 64], strides = [1, 1]} : vector<18x64xbf16> to vector<8x64xbf16>
    %c4 = arith.constant 4 : index
    %c0_15 = arith.constant 0 : index
    %c0_16 = arith.constant 0 : index
    %24 = vector.load %arg2[%c4, %c0_15, %c0_16] : memref<9x64x256xbf16, #tpu.memory_space<vmem>>, vector<1x64x256xbf16>
    %25 = vector.shape_cast %24 : vector<1x64x256xbf16> to vector<64x256xbf16>
    %cst_17 = arith.constant dense<0.000000e+00> : vector<8x256xf32>
    %26 = tpu.matmul %23, %25, %cst_17 {dimension_numbers = #tpu.dot_dimension_numbers<[1], [0], [0], [1], [0, 0, 1, 1], [], []>} : vector<8x64xbf16>, vector<64x256xbf16>, vector<8x256xf32> -> vector<8x256xf32>
    %27 = arith.addf %22, %26 : vector<8x256xf32>
    %28 = vector.extract_strided_slice %1 {offsets = [6, 0], sizes = [8, 64], strides = [1, 1]} : vector<18x64xbf16> to vector<8x64xbf16>
    %c5 = arith.constant 5 : index
    %c0_18 = arith.constant 0 : index
    %c0_19 = arith.constant 0 : index
    %29 = vector.load %arg2[%c5, %c0_18, %c0_19] : memref<9x64x256xbf16, #tpu.memory_space<vmem>>, vector<1x64x256xbf16>
    %30 = vector.shape_cast %29 : vector<1x64x256xbf16> to vector<64x256xbf16>
    %cst_20 = arith.constant dense<0.000000e+00> : vector<8x256xf32>
    %31 = tpu.matmul %28, %30, %cst_20 {dimension_numbers = #tpu.dot_dimension_numbers<[1], [0], [0], [1], [0, 0, 1, 1], [], []>} : vector<8x64xbf16>, vector<64x256xbf16>, vector<8x256xf32> -> vector<8x256xf32>
    %32 = arith.addf %27, %31 : vector<8x256xf32>
    %33 = vector.extract_strided_slice %1 {offsets = [8, 0], sizes = [8, 64], strides = [1, 1]} : vector<18x64xbf16> to vector<8x64xbf16>
    %c6 = arith.constant 6 : index
    %c0_21 = arith.constant 0 : index
    %c0_22 = arith.constant 0 : index
    %34 = vector.load %arg2[%c6, %c0_21, %c0_22] : memref<9x64x256xbf16, #tpu.memory_space<vmem>>, vector<1x64x256xbf16>
    %35 = vector.shape_cast %34 : vector<1x64x256xbf16> to vector<64x256xbf16>
    %cst_23 = arith.constant dense<0.000000e+00> : vector<8x256xf32>
    %36 = tpu.matmul %33, %35, %cst_23 {dimension_numbers = #tpu.dot_dimension_numbers<[1], [0], [0], [1], [0, 0, 1, 1], [], []>} : vector<8x64xbf16>, vector<64x256xbf16>, vector<8x256xf32> -> vector<8x256xf32>
    %37 = arith.addf %32, %36 : vector<8x256xf32>
    %38 = vector.extract_strided_slice %1 {offsets = [9, 0], sizes = [8, 64], strides = [1, 1]} : vector<18x64xbf16> to vector<8x64xbf16>
    %c7 = arith.constant 7 : index
    %c0_24 = arith.constant 0 : index
    %c0_25 = arith.constant 0 : index
    %39 = vector.load %arg2[%c7, %c0_24, %c0_25] : memref<9x64x256xbf16, #tpu.memory_space<vmem>>, vector<1x64x256xbf16>
    %40 = vector.shape_cast %39 : vector<1x64x256xbf16> to vector<64x256xbf16>
    %cst_26 = arith.constant dense<0.000000e+00> : vector<8x256xf32>
    %41 = tpu.matmul %38, %40, %cst_26 {dimension_numbers = #tpu.dot_dimension_numbers<[1], [0], [0], [1], [0, 0, 1, 1], [], []>} : vector<8x64xbf16>, vector<64x256xbf16>, vector<8x256xf32> -> vector<8x256xf32>
    %42 = arith.addf %37, %41 : vector<8x256xf32>
    %43 = vector.extract_strided_slice %1 {offsets = [10, 0], sizes = [8, 64], strides = [1, 1]} : vector<18x64xbf16> to vector<8x64xbf16>
    %c8 = arith.constant 8 : index
    %c0_27 = arith.constant 0 : index
    %c0_28 = arith.constant 0 : index
    %44 = vector.load %arg2[%c8, %c0_27, %c0_28] : memref<9x64x256xbf16, #tpu.memory_space<vmem>>, vector<1x64x256xbf16>
    %45 = vector.shape_cast %44 : vector<1x64x256xbf16> to vector<64x256xbf16>
    %cst_29 = arith.constant dense<0.000000e+00> : vector<8x256xf32>
    %46 = tpu.matmul %43, %45, %cst_29 {dimension_numbers = #tpu.dot_dimension_numbers<[1], [0], [0], [1], [0, 0, 1, 1], [], []>} : vector<8x64xbf16>, vector<64x256xbf16>, vector<8x256xf32> -> vector<8x256xf32>
    %47 = arith.addf %42, %46 : vector<8x256xf32>
    %c0_30 = arith.constant 0 : index
    %c0_31 = arith.constant 0 : index
    %48 = vector.load %arg3[%c0_30, %c0_31] : memref<1x256xf32, #tpu.memory_space<vmem>>, vector<1x256xf32>
    %49 = vector.broadcast %48 : vector<1x256xf32> to vector<8x256xf32>
    %50 = arith.addf %47, %49 : vector<8x256xf32>
    %51 = math.absf %50 : vector<8x256xf32>
    %cst_32 = arith.constant 0.000000e+00 : f32
    %52 = vector.broadcast %cst_32 : f32 to vector<8x256xf32>
    %53 = arith.subf %52, %51 : vector<8x256xf32>
    %54 = math.exp %53 : vector<8x256xf32>
    %cst_33 = arith.constant 1.000000e+00 : f32
    %55 = vector.broadcast %cst_33 : f32 to vector<8x256xf32>
    %56 = arith.addf %55, %54 : vector<8x256xf32>
    %57 = tpu.reciprocal %56 {approx = true} : vector<8x256xf32> -> vector<8x256xf32>
    %cst_34 = arith.constant 0.000000e+00 : f32
    %58 = vector.broadcast %cst_34 : f32 to vector<8x256xf32>
    %59 = arith.cmpf oge, %50, %58 : vector<8x256xf32>
    %60 = arith.mulf %54, %57 : vector<8x256xf32>
    %61 = arith.select %59, %57, %60 : vector<8x256xi1>, vector<8x256xf32>
    %62 = arith.mulf %50, %61 : vector<8x256xf32>
    %63 = arith.truncf %62 : vector<8x256xf32> to vector<8x256xbf16>
    %c0_35 = arith.constant 0 : index
    %c0_36 = arith.constant 0 : index
    %c0_37 = arith.constant 0 : index
    %64 = vector.load %arg4[%c0_35, %c0_36, %c0_37] : memref<1x8x256xbf16, #tpu.memory_space<vmem>>, vector<1x8x256xbf16>
    %65 = vector.shape_cast %64 : vector<1x8x256xbf16> to vector<8x256xbf16>
    %66 = vector.shape_cast %63 : vector<8x256xbf16> to vector<1x8x256xbf16>
    tpu.vector_store %arg4[%c0_35, %c0_36, %c0_37], %66 {strides = array<i32>} : memref<1x8x256xbf16, #tpu.memory_space<vmem>>, vector<1x8x256xbf16>,
    return
  }
  func.func @transform_0(%arg0: i32) -> (i32, i32, i32) {
    %c0_i32 = arith.constant 0 : i32
    %c0_i32_0 = arith.constant 0 : i32
    %c0_i32_1 = arith.constant 0 : i32
    return %arg0, %c0_i32, %c0_i32_0 : i32, i32, i32
  }
  func.func @transform_1(%arg0: i32) -> (i32, i32, i32) {
    %c0_i32 = arith.constant 0 : i32
    %c0_i32_0 = arith.constant 0 : i32
    %c0_i32_1 = arith.constant 0 : i32
    %c0_i32_2 = arith.constant 0 : i32
    return %c0_i32, %c0_i32_0, %c0_i32_1 : i32, i32, i32
  }
  func.func @transform_2(%arg0: i32) -> (i32, i32) {
    %c0_i32 = arith.constant 0 : i32
    %c0_i32_0 = arith.constant 0 : i32
    %c0_i32_1 = arith.constant 0 : i32
    return %c0_i32, %c0_i32_0 : i32, i32
  }
  func.func @transform_3(%arg0: i32) -> (i32, i32, i32) {
    %c0_i32 = arith.constant 0 : i32
    %c0_i32_0 = arith.constant 0 : i32
    %c0_i32_1 = arith.constant 0 : i32
    return %arg0, %c0_i32, %c0_i32_0 : i32, i32, i32
  }
}

module attributes {stable_mosaic.version = 11 : i64} {
  func.func @kernel(%arg0: i32, %arg1: i32, %arg2: memref<16x256xbf16, #tpu.memory_space<vmem>>, %arg3: memref<256x128xbf16, #tpu.memory_space<vmem>>, %arg4: memref<1x128xf32, #tpu.memory_space<vmem>>, %arg5: memref<16x128xbf16, #tpu.memory_space<vmem>>) attributes {dimension_semantics = [#tpu.dimension_semantics<parallel>, #tpu.dimension_semantics<parallel>], iteration_bounds = array<i64: 1, 1>, scalar_prefetch = 0 : i64, scratch_operands = 0 : i64, tpu.core_type = #tpu.core_type<tc>, window_params = [{transform_indices = @transform_0, window_bounds = array<i64: 16, 256>}, {transform_indices = @transform_1, window_bounds = array<i64: 256, 128>}, {transform_indices = @transform_2, window_bounds = array<i64: 1, 128>}, {transform_indices = @transform_3, window_bounds = array<i64: 16, 128>}]} {
    %c0 = arith.constant 0 : index
    %c0_0 = arith.constant 0 : index
    %0 = vector.load %arg2[%c0, %c0_0] : memref<16x256xbf16, #tpu.memory_space<vmem>>, vector<16x256xbf16>
    %c0_1 = arith.constant 0 : index
    %c0_2 = arith.constant 0 : index
    %1 = vector.load %arg3[%c0_1, %c0_2] : memref<256x128xbf16, #tpu.memory_space<vmem>>, vector<256x128xbf16>
    %cst = arith.constant dense<0.000000e+00> : vector<16x128xf32>
    %2 = tpu.matmul %0, %1, %cst {dimension_numbers = #tpu.dot_dimension_numbers<[1], [0], [0], [1], [0, 0, 1, 1], [], []>} : vector<16x256xbf16>, vector<256x128xbf16>, vector<16x128xf32> -> vector<16x128xf32>
    %c0_3 = arith.constant 0 : index
    %c0_4 = arith.constant 0 : index
    %3 = vector.load %arg4[%c0_3, %c0_4] : memref<1x128xf32, #tpu.memory_space<vmem>>, vector<1x128xf32>
    %4 = vector.broadcast %3 : vector<1x128xf32> to vector<16x128xf32>
    %5 = arith.addf %2, %4 : vector<16x128xf32>
    %6 = arith.truncf %5 : vector<16x128xf32> to vector<16x128xbf16>
    %c0_5 = arith.constant 0 : index
    %c0_6 = arith.constant 0 : index
    %7 = vector.load %arg5[%c0_5, %c0_6] : memref<16x128xbf16, #tpu.memory_space<vmem>>, vector<16x128xbf16>
    tpu.vector_store %arg5[%c0_5, %c0_6], %6 {strides = array<i32>} : memref<16x128xbf16, #tpu.memory_space<vmem>>, vector<16x128xbf16>,
    return
  }
  func.func @transform_0(%arg0: i32, %arg1: i32) -> (i32, i32) {
    %c0_i32 = arith.constant 0 : i32
    %c0_i32_0 = arith.constant 0 : i32
    return %arg0, %c0_i32 : i32, i32
  }
  func.func @transform_1(%arg0: i32, %arg1: i32) -> (i32, i32) {
    %c0_i32 = arith.constant 0 : i32
    %c0_i32_0 = arith.constant 0 : i32
    return %c0_i32, %arg1 : i32, i32
  }
  func.func @transform_2(%arg0: i32, %arg1: i32) -> (i32, i32) {
    %c0_i32 = arith.constant 0 : i32
    %c0_i32_0 = arith.constant 0 : i32
    return %c0_i32, %arg1 : i32, i32
  }
  func.func @transform_3(%arg0: i32, %arg1: i32) -> (i32, i32) {
    %c0_i32 = arith.constant 0 : i32
    return %arg0, %arg1 : i32, i32
  }
}

module attributes {stable_mosaic.version = 11 : i64} {
  func.func @kernel(%arg0: i32, %arg1: memref<1x18x64xbf16, #tpu.memory_space<vmem>>, %arg2: memref<9x64x256xbf16, #tpu.memory_space<vmem>>, %arg3: memref<1x256xf32, #tpu.memory_space<vmem>>, %arg4: memref<1x256xf32, #tpu.memory_space<vmem>>, %arg5: memref<1x256xf32, #tpu.memory_space<vmem>>, %arg6: memref<1x8x256xbf16, #tpu.memory_space<vmem>>) attributes {dimension_semantics = [#tpu.dimension_semantics<parallel>], iteration_bounds = array<i64: 2>, scalar_prefetch = 0 : i64, scratch_operands = 0 : i64, tpu.core_type = #tpu.core_type<tc>, window_params = [{transform_indices = @transform_0, window_bounds = array<i64: 1, 18, 64>}, {pipeline_mode = #tpu.pipeline_mode<synchronous>, transform_indices = @transform_1, window_bounds = array<i64: 9, 64, 256>}, {pipeline_mode = #tpu.pipeline_mode<synchronous>, transform_indices = @transform_2, window_bounds = array<i64: 1, 256>}, {pipeline_mode = #tpu.pipeline_mode<synchronous>, transform_indices = @transform_3, window_bounds = array<i64: 1, 256>}, {pipeline_mode = #tpu.pipeline_mode<synchronous>, transform_indices = @transform_4, window_bounds = array<i64: 1, 256>}, {transform_indices = @transform_5, window_bounds = array<i64: 1, 8, 256>}]} {
    %c0 = arith.constant 0 : index
    %c0_0 = arith.constant 0 : index
    %c0_1 = arith.constant 0 : index
    %0 = vector.load %arg1[%c0, %c0_0, %c0_1] : memref<1x18x64xbf16, #tpu.memory_space<vmem>>, vector<1x18x64xbf16>
    %1 = vector.shape_cast %0 : vector<1x18x64xbf16> to vector<18x64xbf16>
    %cst = arith.constant 0.000000e+00 : f32
    %2 = vector.broadcast %cst : f32 to vector<8x256xf32>
    %3 = vector.extract_strided_slice %1 {offsets = [0, 0], sizes = [8, 64], strides = [1, 1]} : vector<18x64xbf16> to vector<8x64xbf16>
    %c0_2 = arith.constant 0 : index
    %c0_3 = arith.constant 0 : index
    %c0_4 = arith.constant 0 : index
    %4 = vector.load %arg2[%c0_2, %c0_3, %c0_4] : memref<9x64x256xbf16, #tpu.memory_space<vmem>>, vector<1x64x256xbf16>
    %5 = vector.shape_cast %4 : vector<1x64x256xbf16> to vector<64x256xbf16>
    %cst_5 = arith.constant dense<0.000000e+00> : vector<8x256xf32>
    %6 = tpu.matmul %3, %5, %cst_5 {dimension_numbers = #tpu.dot_dimension_numbers<[1], [0], [0], [1], [0, 0, 1, 1], [], []>} : vector<8x64xbf16>, vector<64x256xbf16>, vector<8x256xf32> -> vector<8x256xf32>
    %7 = arith.addf %2, %6 : vector<8x256xf32>
    %8 = vector.extract_strided_slice %1 {offsets = [1, 0], sizes = [8, 64], strides = [1, 1]} : vector<18x64xbf16> to vector<8x64xbf16>
    %c1 = arith.constant 1 : index
    %c0_6 = arith.constant 0 : index
    %c0_7 = arith.constant 0 : index
    %9 = vector.load %arg2[%c1, %c0_6, %c0_7] : memref<9x64x256xbf16, #tpu.memory_space<vmem>>, vector<1x64x256xbf16>
    %10 = vector.shape_cast %9 : vector<1x64x256xbf16> to vector<64x256xbf16>
    %cst_8 = arith.constant dense<0.000000e+00> : vector<8x256xf32>
    %11 = tpu.matmul %8, %10, %cst_8 {dimension_numbers = #tpu.dot_dimension_numbers<[1], [0], [0], [1], [0, 0, 1, 1], [], []>} : vector<8x64xbf16>, vector<64x256xbf16>, vector<8x256xf32> -> vector<8x256xf32>
    %12 = arith.addf %7, %11 : vector<8x256xf32>
    %13 = vector.extract_strided_slice %1 {offsets = [2, 0], sizes = [8, 64], strides = [1, 1]} : vector<18x64xbf16> to vector<8x64xbf16>
    %c2 = arith.constant 2 : index
    %c0_9 = arith.constant 0 : index
    %c0_10 = arith.constant 0 : index
    %14 = vector.load %arg2[%c2, %c0_9, %c0_10] : memref<9x64x256xbf16, #tpu.memory_space<vmem>>, vector<1x64x256xbf16>
    %15 = vector.shape_cast %14 : vector<1x64x256xbf16> to vector<64x256xbf16>
    %cst_11 = arith.constant dense<0.000000e+00> : vector<8x256xf32>
    %16 = tpu.matmul %13, %15, %cst_11 {dimension_numbers = #tpu.dot_dimension_numbers<[1], [0], [0], [1], [0, 0, 1, 1], [], []>} : vector<8x64xbf16>, vector<64x256xbf16>, vector<8x256xf32> -> vector<8x256xf32>
    %17 = arith.addf %12, %16 : vector<8x256xf32>
    %18 = vector.extract_strided_slice %1 {offsets = [4, 0], sizes = [8, 64], strides = [1, 1]} : vector<18x64xbf16> to vector<8x64xbf16>
    %c3 = arith.constant 3 : index
    %c0_12 = arith.constant 0 : index
    %c0_13 = arith.constant 0 : index
    %19 = vector.load %arg2[%c3, %c0_12, %c0_13] : memref<9x64x256xbf16, #tpu.memory_space<vmem>>, vector<1x64x256xbf16>
    %20 = vector.shape_cast %19 : vector<1x64x256xbf16> to vector<64x256xbf16>
    %cst_14 = arith.constant dense<0.000000e+00> : vector<8x256xf32>
    %21 = tpu.matmul %18, %20, %cst_14 {dimension_numbers = #tpu.dot_dimension_numbers<[1], [0], [0], [1], [0, 0, 1, 1], [], []>} : vector<8x64xbf16>, vector<64x256xbf16>, vector<8x256xf32> -> vector<8x256xf32>
    %22 = arith.addf %17, %21 : vector<8x256xf32>
    %23 = vector.extract_strided_slice %1 {offsets = [5, 0], sizes = [8, 64], strides = [1, 1]} : vector<18x64xbf16> to vector<8x64xbf16>
    %c4 = arith.constant 4 : index
    %c0_15 = arith.constant 0 : index
    %c0_16 = arith.constant 0 : index
    %24 = vector.load %arg2[%c4, %c0_15, %c0_16] : memref<9x64x256xbf16, #tpu.memory_space<vmem>>, vector<1x64x256xbf16>
    %25 = vector.shape_cast %24 : vector<1x64x256xbf16> to vector<64x256xbf16>
    %cst_17 = arith.constant dense<0.000000e+00> : vector<8x256xf32>
    %26 = tpu.matmul %23, %25, %cst_17 {dimension_numbers = #tpu.dot_dimension_numbers<[1], [0], [0], [1], [0, 0, 1, 1], [], []>} : vector<8x64xbf16>, vector<64x256xbf16>, vector<8x256xf32> -> vector<8x256xf32>
    %27 = arith.addf %22, %26 : vector<8x256xf32>
    %28 = vector.extract_strided_slice %1 {offsets = [6, 0], sizes = [8, 64], strides = [1, 1]} : vector<18x64xbf16> to vector<8x64xbf16>
    %c5 = arith.constant 5 : index
    %c0_18 = arith.constant 0 : index
    %c0_19 = arith.constant 0 : index
    %29 = vector.load %arg2[%c5, %c0_18, %c0_19] : memref<9x64x256xbf16, #tpu.memory_space<vmem>>, vector<1x64x256xbf16>
    %30 = vector.shape_cast %29 : vector<1x64x256xbf16> to vector<64x256xbf16>
    %cst_20 = arith.constant dense<0.000000e+00> : vector<8x256xf32>
    %31 = tpu.matmul %28, %30, %cst_20 {dimension_numbers = #tpu.dot_dimension_numbers<[1], [0], [0], [1], [0, 0, 1, 1], [], []>} : vector<8x64xbf16>, vector<64x256xbf16>, vector<8x256xf32> -> vector<8x256xf32>
    %32 = arith.addf %27, %31 : vector<8x256xf32>
    %33 = vector.extract_strided_slice %1 {offsets = [8, 0], sizes = [8, 64], strides = [1, 1]} : vector<18x64xbf16> to vector<8x64xbf16>
    %c6 = arith.constant 6 : index
    %c0_21 = arith.constant 0 : index
    %c0_22 = arith.constant 0 : index
    %34 = vector.load %arg2[%c6, %c0_21, %c0_22] : memref<9x64x256xbf16, #tpu.memory_space<vmem>>, vector<1x64x256xbf16>
    %35 = vector.shape_cast %34 : vector<1x64x256xbf16> to vector<64x256xbf16>
    %cst_23 = arith.constant dense<0.000000e+00> : vector<8x256xf32>
    %36 = tpu.matmul %33, %35, %cst_23 {dimension_numbers = #tpu.dot_dimension_numbers<[1], [0], [0], [1], [0, 0, 1, 1], [], []>} : vector<8x64xbf16>, vector<64x256xbf16>, vector<8x256xf32> -> vector<8x256xf32>
    %37 = arith.addf %32, %36 : vector<8x256xf32>
    %38 = vector.extract_strided_slice %1 {offsets = [9, 0], sizes = [8, 64], strides = [1, 1]} : vector<18x64xbf16> to vector<8x64xbf16>
    %c7 = arith.constant 7 : index
    %c0_24 = arith.constant 0 : index
    %c0_25 = arith.constant 0 : index
    %39 = vector.load %arg2[%c7, %c0_24, %c0_25] : memref<9x64x256xbf16, #tpu.memory_space<vmem>>, vector<1x64x256xbf16>
    %40 = vector.shape_cast %39 : vector<1x64x256xbf16> to vector<64x256xbf16>
    %cst_26 = arith.constant dense<0.000000e+00> : vector<8x256xf32>
    %41 = tpu.matmul %38, %40, %cst_26 {dimension_numbers = #tpu.dot_dimension_numbers<[1], [0], [0], [1], [0, 0, 1, 1], [], []>} : vector<8x64xbf16>, vector<64x256xbf16>, vector<8x256xf32> -> vector<8x256xf32>
    %42 = arith.addf %37, %41 : vector<8x256xf32>
    %43 = vector.extract_strided_slice %1 {offsets = [10, 0], sizes = [8, 64], strides = [1, 1]} : vector<18x64xbf16> to vector<8x64xbf16>
    %c8 = arith.constant 8 : index
    %c0_27 = arith.constant 0 : index
    %c0_28 = arith.constant 0 : index
    %44 = vector.load %arg2[%c8, %c0_27, %c0_28] : memref<9x64x256xbf16, #tpu.memory_space<vmem>>, vector<1x64x256xbf16>
    %45 = vector.shape_cast %44 : vector<1x64x256xbf16> to vector<64x256xbf16>
    %cst_29 = arith.constant dense<0.000000e+00> : vector<8x256xf32>
    %46 = tpu.matmul %43, %45, %cst_29 {dimension_numbers = #tpu.dot_dimension_numbers<[1], [0], [0], [1], [0, 0, 1, 1], [], []>} : vector<8x64xbf16>, vector<64x256xbf16>, vector<8x256xf32> -> vector<8x256xf32>
    %47 = arith.addf %42, %46 : vector<8x256xf32>
    %c0_30 = arith.constant 0 : index
    %c0_31 = arith.constant 0 : index
    %48 = vector.load %arg3[%c0_30, %c0_31] : memref<1x256xf32, #tpu.memory_space<vmem>>, vector<1x256xf32>
    %49 = vector.broadcast %48 : vector<1x256xf32> to vector<8x256xf32>
    %50 = arith.addf %47, %49 : vector<8x256xf32>
    %cst_32 = arith.constant 0.000000e+00 : f32
    %51 = vector.broadcast %cst_32 : f32 to vector<8x256xf32>
    %52 = arith.maximumf %50, %51 : vector<8x256xf32>
    %c0_33 = arith.constant 0 : index
    %c0_34 = arith.constant 0 : index
    %53 = vector.load %arg4[%c0_33, %c0_34] : memref<1x256xf32, #tpu.memory_space<vmem>>, vector<1x256xf32>
    %54 = vector.broadcast %53 : vector<1x256xf32> to vector<8x256xf32>
    %55 = arith.mulf %52, %54 : vector<8x256xf32>
    %c0_35 = arith.constant 0 : index
    %c0_36 = arith.constant 0 : index
    %56 = vector.load %arg5[%c0_35, %c0_36] : memref<1x256xf32, #tpu.memory_space<vmem>>, vector<1x256xf32>
    %57 = vector.broadcast %56 : vector<1x256xf32> to vector<8x256xf32>
    %58 = arith.addf %55, %57 : vector<8x256xf32>
    %59 = arith.truncf %58 : vector<8x256xf32> to vector<8x256xbf16>
    %c0_37 = arith.constant 0 : index
    %c0_38 = arith.constant 0 : index
    %c0_39 = arith.constant 0 : index
    %60 = vector.load %arg6[%c0_37, %c0_38, %c0_39] : memref<1x8x256xbf16, #tpu.memory_space<vmem>>, vector<1x8x256xbf16>
    %61 = vector.shape_cast %60 : vector<1x8x256xbf16> to vector<8x256xbf16>
    %62 = vector.shape_cast %59 : vector<8x256xbf16> to vector<1x8x256xbf16>
    tpu.vector_store %arg6[%c0_37, %c0_38, %c0_39], %62 {strides = array<i32>} : memref<1x8x256xbf16, #tpu.memory_space<vmem>>, vector<1x8x256xbf16>,
    return
  }
  func.func @transform_0(%arg0: i32) -> (i32, i32, i32) {
    %c0_i32 = arith.constant 0 : i32
    %c0_i32_0 = arith.constant 0 : i32
    %c0_i32_1 = arith.constant 0 : i32
    return %arg0, %c0_i32, %c0_i32_0 : i32, i32, i32
  }
  func.func @transform_1(%arg0: i32) -> (i32, i32, i32) {
    %c0_i32 = arith.constant 0 : i32
    %c0_i32_0 = arith.constant 0 : i32
    %c0_i32_1 = arith.constant 0 : i32
    %c0_i32_2 = arith.constant 0 : i32
    return %c0_i32, %c0_i32_0, %c0_i32_1 : i32, i32, i32
  }
  func.func @transform_2(%arg0: i32) -> (i32, i32) {
    %c0_i32 = arith.constant 0 : i32
    %c0_i32_0 = arith.constant 0 : i32
    %c0_i32_1 = arith.constant 0 : i32
    return %c0_i32, %c0_i32_0 : i32, i32
  }
  func.func @transform_3(%arg0: i32) -> (i32, i32) {
    %c0_i32 = arith.constant 0 : i32
    %c0_i32_0 = arith.constant 0 : i32
    %c0_i32_1 = arith.constant 0 : i32
    return %c0_i32, %c0_i32_0 : i32, i32
  }
  func.func @transform_4(%arg0: i32) -> (i32, i32) {
    %c0_i32 = arith.constant 0 : i32
    %c0_i32_0 = arith.constant 0 : i32
    %c0_i32_1 = arith.constant 0 : i32
    return %c0_i32, %c0_i32_0 : i32, i32
  }
  func.func @transform_5(%arg0: i32) -> (i32, i32, i32) {
    %c0_i32 = arith.constant 0 : i32
    %c0_i32_0 = arith.constant 0 : i32
    %c0_i32_1 = arith.constant 0 : i32
    return %arg0, %c0_i32, %c0_i32_0 : i32, i32, i32
  }
}

module attributes {stable_mosaic.version = 11 : i64} {
  func.func @kernel(%arg0: i32, %arg1: memref<16x256xbf16, #tpu.memory_space<vmem>>, %arg2: memref<256x128xbf16, #tpu.memory_space<vmem>>, %arg3: memref<1x128xf32, #tpu.memory_space<vmem>>, %arg4: memref<16x128xf32, #tpu.memory_space<vmem>>, %arg5: memref<16x128xf32, #tpu.memory_space<vmem>>) attributes {dimension_semantics = [#tpu.dimension_semantics<parallel>], iteration_bounds = array<i64: 1>, scalar_prefetch = 0 : i64, scratch_operands = 0 : i64, tpu.core_type = #tpu.core_type<tc>, window_params = [{transform_indices = @transform_0, window_bounds = array<i64: 16, 256>}, {pipeline_mode = #tpu.pipeline_mode<synchronous>, transform_indices = @transform_1, window_bounds = array<i64: 256, 128>}, {pipeline_mode = #tpu.pipeline_mode<synchronous>, transform_indices = @transform_2, window_bounds = array<i64: 1, 128>}, {transform_indices = @transform_3, window_bounds = array<i64: 16, 128>}, {transform_indices = @transform_4, window_bounds = array<i64: 16, 128>}]} {
    %c0 = arith.constant 0 : index
    %c0_0 = arith.constant 0 : index
    %0 = vector.load %arg1[%c0, %c0_0] : memref<16x256xbf16, #tpu.memory_space<vmem>>, vector<16x256xbf16>
    %c0_1 = arith.constant 0 : index
    %c0_2 = arith.constant 0 : index
    %1 = vector.load %arg2[%c0_1, %c0_2] : memref<256x128xbf16, #tpu.memory_space<vmem>>, vector<256x128xbf16>
    %cst = arith.constant dense<0.000000e+00> : vector<16x128xf32>
    %2 = tpu.matmul %0, %1, %cst {dimension_numbers = #tpu.dot_dimension_numbers<[1], [0], [0], [1], [0, 0, 1, 1], [], []>} : vector<16x256xbf16>, vector<256x128xbf16>, vector<16x128xf32> -> vector<16x128xf32>
    %c0_3 = arith.constant 0 : index
    %c0_4 = arith.constant 0 : index
    %3 = vector.load %arg3[%c0_3, %c0_4] : memref<1x128xf32, #tpu.memory_space<vmem>>, vector<1x128xf32>
    %4 = vector.broadcast %3 : vector<1x128xf32> to vector<16x128xf32>
    %5 = arith.addf %2, %4 : vector<16x128xf32>
    %c0_5 = arith.constant 0 : index
    %c0_6 = arith.constant 0 : index
    %6 = vector.load %arg4[%c0_5, %c0_6] : memref<16x128xf32, #tpu.memory_space<vmem>>, vector<16x128xf32>
    tpu.vector_store %arg4[%c0_5, %c0_6], %5 {strides = array<i32>} : memref<16x128xf32, #tpu.memory_space<vmem>>, vector<16x128xf32>,
    %cst_7 = arith.constant dense<0xFF800000> : vector<16xf32>
    %7 = vector.multi_reduction <maximumf>, %5, %cst_7 [1] : vector<16x128xf32> to vector<16xf32>
    %8 = vector.shape_cast %7 : vector<16xf32> to vector<16x1xf32>
    %9 = vector.broadcast %8 : vector<16x1xf32> to vector<16x128xf32>
    %10 = arith.subf %5, %9 : vector<16x128xf32>
    %11 = math.exp %10 : vector<16x128xf32>
    %cst_8 = arith.constant dense<0.000000e+00> : vector<16xf32>
    %12 = vector.multi_reduction <add>, %11, %cst_8 [1] : vector<16x128xf32> to vector<16xf32>
    %13 = vector.shape_cast %12 : vector<16xf32> to vector<16x1xf32>
    %14 = tpu.reciprocal %13 {approx = true} : vector<16x1xf32> -> vector<16x1xf32>
    %15 = vector.broadcast %14 : vector<16x1xf32> to vector<16x128xf32>
    %16 = arith.mulf %11, %15 : vector<16x128xf32>
    %c0_9 = arith.constant 0 : index
    %c0_10 = arith.constant 0 : index
    %17 = vector.load %arg5[%c0_9, %c0_10] : memref<16x128xf32, #tpu.memory_space<vmem>>, vector<16x128xf32>
    tpu.vector_store %arg5[%c0_9, %c0_10], %16 {strides = array<i32>} : memref<16x128xf32, #tpu.memory_space<vmem>>, vector<16x128xf32>,
    return
  }
  func.func @transform_0(%arg0: i32) -> (i32, i32) {
    %c0_i32 = arith.constant 0 : i32
    %c0_i32_0 = arith.constant 0 : i32
    return %arg0, %c0_i32 : i32, i32
  }
  func.func @transform_1(%arg0: i32) -> (i32, i32) {
    %c0_i32 = arith.constant 0 : i32
    %c0_i32_0 = arith.constant 0 : i32
    %c0_i32_1 = arith.constant 0 : i32
    return %c0_i32, %c0_i32_0 : i32, i32
  }
  func.func @transform_2(%arg0: i32) -> (i32, i32) {
    %c0_i32 = arith.constant 0 : i32
    %c0_i32_0 = arith.constant 0 : i32
    %c0_i32_1 = arith.constant 0 : i32
    return %c0_i32, %c0_i32_0 : i32, i32
  }
  func.func @transform_3(%arg0: i32) -> (i32, i32) {
    %c0_i32 = arith.constant 0 : i32
    %c0_i32_0 = arith.constant 0 : i32
    return %arg0, %c0_i32 : i32, i32
  }
  func.func @transform_4(%arg0: i32) -> (i32, i32) {
    %c0_i32 = arith.constant 0 : i32
    %c0_i32_0 = arith.constant 0 : i32
    return %arg0, %c0_i32 : i32, i32
  }
}

module attributes {stable_mosaic.version = 11 : i64} {
  func.func @kernel(%arg0: i32, %arg1: memref<1x40x128xf32, #tpu.memory_space<vmem>>, %arg2: memref<1x40x128xf32, #tpu.memory_space<vmem>>) attributes {dimension_semantics = [#tpu.dimension_semantics<parallel>], iteration_bounds = array<i64: 2>, scalar_prefetch = 0 : i64, scratch_operands = 0 : i64, tpu.core_type = #tpu.core_type<tc>, window_params = [{transform_indices = @transform_0, window_bounds = array<i64: 1, 40, 128>}, {transform_indices = @transform_1, window_bounds = array<i64: 1, 40, 128>}]} {
    %c0 = arith.constant 0 : index
    %c0_0 = arith.constant 0 : index
    %c0_1 = arith.constant 0 : index
    %0 = vector.load %arg1[%c0, %c0_0, %c0_1] : memref<1x40x128xf32, #tpu.memory_space<vmem>>, vector<1x40x128xf32>
    %1 = vector.shape_cast %0 : vector<1x40x128xf32> to vector<40x128xf32>
    %c1_i32 = arith.constant 1 : i32
    %2 = tpu.dynamic_rotate %1 by %c1_i32 dim 0 : vector<40x128xf32>, i32 -> vector<40x128xf32>
    %3 = arith.maximumf %1, %2 : vector<40x128xf32>
    %c39_i32 = arith.constant 39 : i32
    %4 = tpu.dynamic_rotate %1 by %c39_i32 dim 0 : vector<40x128xf32>, i32 -> vector<40x128xf32>
    %5 = arith.maximumf %3, %4 : vector<40x128xf32>
    %c2_i32 = arith.constant 2 : i32
    %6 = tpu.dynamic_rotate %1 by %c2_i32 dim 0 : vector<40x128xf32>, i32 -> vector<40x128xf32>
    %7 = arith.maximumf %5, %6 : vector<40x128xf32>
    %c38_i32 = arith.constant 38 : i32
    %8 = tpu.dynamic_rotate %1 by %c38_i32 dim 0 : vector<40x128xf32>, i32 -> vector<40x128xf32>
    %9 = arith.maximumf %7, %8 : vector<40x128xf32>
    %c1_i32_2 = arith.constant 1 : i32
    %10 = tpu.dynamic_rotate %9 by %c1_i32_2 dim 1 : vector<40x128xf32>, i32 -> vector<40x128xf32>
    %11 = arith.maximumf %9, %10 : vector<40x128xf32>
    %c127_i32 = arith.constant 127 : i32
    %12 = tpu.dynamic_rotate %9 by %c127_i32 dim 1 : vector<40x128xf32>, i32 -> vector<40x128xf32>
    %13 = arith.maximumf %11, %12 : vector<40x128xf32>
    %c2_i32_3 = arith.constant 2 : i32
    %14 = tpu.dynamic_rotate %9 by %c2_i32_3 dim 1 : vector<40x128xf32>, i32 -> vector<40x128xf32>
    %15 = arith.maximumf %13, %14 : vector<40x128xf32>
    %c126_i32 = arith.constant 126 : i32
    %16 = tpu.dynamic_rotate %9 by %c126_i32 dim 1 : vector<40x128xf32>, i32 -> vector<40x128xf32>
    %17 = arith.maximumf %15, %16 : vector<40x128xf32>
    %18 = arith.cmpf oeq, %1, %17 : vector<40x128xf32>
    %cst = arith.constant 1.000000e+00 : f32
    %cst_4 = arith.constant 0.000000e+00 : f32
    %19 = vector.broadcast %cst : f32 to vector<40x128xf32>
    %20 = vector.broadcast %cst_4 : f32 to vector<40x128xf32>
    %21 = arith.select %18, %19, %20 : vector<40x128xi1>, vector<40x128xf32>
    %c1_i32_5 = arith.constant 1 : i32
    %22 = tpu.dynamic_rotate %21 by %c1_i32_5 dim 0 : vector<40x128xf32>, i32 -> vector<40x128xf32>
    %23 = arith.maximumf %21, %22 : vector<40x128xf32>
    %c39_i32_6 = arith.constant 39 : i32
    %24 = tpu.dynamic_rotate %21 by %c39_i32_6 dim 0 : vector<40x128xf32>, i32 -> vector<40x128xf32>
    %25 = arith.maximumf %23, %24 : vector<40x128xf32>
    %c2_i32_7 = arith.constant 2 : i32
    %26 = tpu.dynamic_rotate %21 by %c2_i32_7 dim 0 : vector<40x128xf32>, i32 -> vector<40x128xf32>
    %27 = arith.maximumf %25, %26 : vector<40x128xf32>
    %c38_i32_8 = arith.constant 38 : i32
    %28 = tpu.dynamic_rotate %21 by %c38_i32_8 dim 0 : vector<40x128xf32>, i32 -> vector<40x128xf32>
    %29 = arith.maximumf %27, %28 : vector<40x128xf32>
    %c1_i32_9 = arith.constant 1 : i32
    %30 = tpu.dynamic_rotate %29 by %c1_i32_9 dim 1 : vector<40x128xf32>, i32 -> vector<40x128xf32>
    %31 = arith.maximumf %29, %30 : vector<40x128xf32>
    %c127_i32_10 = arith.constant 127 : i32
    %32 = tpu.dynamic_rotate %29 by %c127_i32_10 dim 1 : vector<40x128xf32>, i32 -> vector<40x128xf32>
    %33 = arith.maximumf %31, %32 : vector<40x128xf32>
    %c2_i32_11 = arith.constant 2 : i32
    %34 = tpu.dynamic_rotate %29 by %c2_i32_11 dim 1 : vector<40x128xf32>, i32 -> vector<40x128xf32>
    %35 = arith.maximumf %33, %34 : vector<40x128xf32>
    %c126_i32_12 = arith.constant 126 : i32
    %36 = tpu.dynamic_rotate %29 by %c126_i32_12 dim 1 : vector<40x128xf32>, i32 -> vector<40x128xf32>
    %37 = arith.maximumf %35, %36 : vector<40x128xf32>
    %cst_13 = arith.constant 0.000000e+00 : f32
    %38 = vector.broadcast %cst_13 : f32 to vector<40x128xf32>
    %39 = arith.cmpf ogt, %37, %38 : vector<40x128xf32>
    %cst_14 = arith.constant 0.000000e+00 : f32
    %40 = vector.broadcast %cst_14 : f32 to vector<40x128xf32>
    %41 = arith.select %39, %40, %1 : vector<40x128xi1>, vector<40x128xf32>
    %c1_i32_15 = arith.constant 1 : i32
    %42 = tpu.dynamic_rotate %41 by %c1_i32_15 dim 0 : vector<40x128xf32>, i32 -> vector<40x128xf32>
    %43 = arith.maximumf %41, %42 : vector<40x128xf32>
    %c39_i32_16 = arith.constant 39 : i32
    %44 = tpu.dynamic_rotate %41 by %c39_i32_16 dim 0 : vector<40x128xf32>, i32 -> vector<40x128xf32>
    %45 = arith.maximumf %43, %44 : vector<40x128xf32>
    %c2_i32_17 = arith.constant 2 : i32
    %46 = tpu.dynamic_rotate %41 by %c2_i32_17 dim 0 : vector<40x128xf32>, i32 -> vector<40x128xf32>
    %47 = arith.maximumf %45, %46 : vector<40x128xf32>
    %c38_i32_18 = arith.constant 38 : i32
    %48 = tpu.dynamic_rotate %41 by %c38_i32_18 dim 0 : vector<40x128xf32>, i32 -> vector<40x128xf32>
    %49 = arith.maximumf %47, %48 : vector<40x128xf32>
    %c1_i32_19 = arith.constant 1 : i32
    %50 = tpu.dynamic_rotate %49 by %c1_i32_19 dim 1 : vector<40x128xf32>, i32 -> vector<40x128xf32>
    %51 = arith.maximumf %49, %50 : vector<40x128xf32>
    %c127_i32_20 = arith.constant 127 : i32
    %52 = tpu.dynamic_rotate %49 by %c127_i32_20 dim 1 : vector<40x128xf32>, i32 -> vector<40x128xf32>
    %53 = arith.maximumf %51, %52 : vector<40x128xf32>
    %c2_i32_21 = arith.constant 2 : i32
    %54 = tpu.dynamic_rotate %49 by %c2_i32_21 dim 1 : vector<40x128xf32>, i32 -> vector<40x128xf32>
    %55 = arith.maximumf %53, %54 : vector<40x128xf32>
    %c126_i32_22 = arith.constant 126 : i32
    %56 = tpu.dynamic_rotate %49 by %c126_i32_22 dim 1 : vector<40x128xf32>, i32 -> vector<40x128xf32>
    %57 = arith.maximumf %55, %56 : vector<40x128xf32>
    %58 = arith.cmpf oeq, %41, %57 : vector<40x128xf32>
    %cst_23 = arith.constant dense<true> : vector<40x128xi1>
    %59 = arith.xori %39, %cst_23 : vector<40x128xi1>
    %60 = arith.andi %58, %59 : vector<40x128xi1>
    %61 = arith.ori %18, %60 : vector<40x128xi1>
    %cst_24 = arith.constant 1.000000e+00 : f32
    %cst_25 = arith.constant 0.000000e+00 : f32
    %62 = vector.broadcast %cst_24 : f32 to vector<40x128xf32>
    %63 = vector.broadcast %cst_25 : f32 to vector<40x128xf32>
    %64 = arith.select %61, %62, %63 : vector<40x128xi1>, vector<40x128xf32>
    %c1_i32_26 = arith.constant 1 : i32
    %65 = tpu.dynamic_rotate %64 by %c1_i32_26 dim 0 : vector<40x128xf32>, i32 -> vector<40x128xf32>
    %66 = arith.maximumf %64, %65 : vector<40x128xf32>
    %c39_i32_27 = arith.constant 39 : i32
    %67 = tpu.dynamic_rotate %64 by %c39_i32_27 dim 0 : vector<40x128xf32>, i32 -> vector<40x128xf32>
    %68 = arith.maximumf %66, %67 : vector<40x128xf32>
    %c2_i32_28 = arith.constant 2 : i32
    %69 = tpu.dynamic_rotate %64 by %c2_i32_28 dim 0 : vector<40x128xf32>, i32 -> vector<40x128xf32>
    %70 = arith.maximumf %68, %69 : vector<40x128xf32>
    %c38_i32_29 = arith.constant 38 : i32
    %71 = tpu.dynamic_rotate %64 by %c38_i32_29 dim 0 : vector<40x128xf32>, i32 -> vector<40x128xf32>
    %72 = arith.maximumf %70, %71 : vector<40x128xf32>
    %c1_i32_30 = arith.constant 1 : i32
    %73 = tpu.dynamic_rotate %72 by %c1_i32_30 dim 1 : vector<40x128xf32>, i32 -> vector<40x128xf32>
    %74 = arith.maximumf %72, %73 : vector<40x128xf32>
    %c127_i32_31 = arith.constant 127 : i32
    %75 = tpu.dynamic_rotate %72 by %c127_i32_31 dim 1 : vector<40x128xf32>, i32 -> vector<40x128xf32>
    %76 = arith.maximumf %74, %75 : vector<40x128xf32>
    %c2_i32_32 = arith.constant 2 : i32
    %77 = tpu.dynamic_rotate %72 by %c2_i32_32 dim 1 : vector<40x128xf32>, i32 -> vector<40x128xf32>
    %78 = arith.maximumf %76, %77 : vector<40x128xf32>
    %c126_i32_33 = arith.constant 126 : i32
    %79 = tpu.dynamic_rotate %72 by %c126_i32_33 dim 1 : vector<40x128xf32>, i32 -> vector<40x128xf32>
    %80 = arith.maximumf %78, %79 : vector<40x128xf32>
    %cst_34 = arith.constant 0.000000e+00 : f32
    %81 = vector.broadcast %cst_34 : f32 to vector<40x128xf32>
    %82 = arith.cmpf ogt, %80, %81 : vector<40x128xf32>
    %cst_35 = arith.constant 0.000000e+00 : f32
    %83 = vector.broadcast %cst_35 : f32 to vector<40x128xf32>
    %84 = arith.select %82, %83, %1 : vector<40x128xi1>, vector<40x128xf32>
    %c1_i32_36 = arith.constant 1 : i32
    %85 = tpu.dynamic_rotate %84 by %c1_i32_36 dim 0 : vector<40x128xf32>, i32 -> vector<40x128xf32>
    %86 = arith.maximumf %84, %85 : vector<40x128xf32>
    %c39_i32_37 = arith.constant 39 : i32
    %87 = tpu.dynamic_rotate %84 by %c39_i32_37 dim 0 : vector<40x128xf32>, i32 -> vector<40x128xf32>
    %88 = arith.maximumf %86, %87 : vector<40x128xf32>
    %c2_i32_38 = arith.constant 2 : i32
    %89 = tpu.dynamic_rotate %84 by %c2_i32_38 dim 0 : vector<40x128xf32>, i32 -> vector<40x128xf32>
    %90 = arith.maximumf %88, %89 : vector<40x128xf32>
    %c38_i32_39 = arith.constant 38 : i32
    %91 = tpu.dynamic_rotate %84 by %c38_i32_39 dim 0 : vector<40x128xf32>, i32 -> vector<40x128xf32>
    %92 = arith.maximumf %90, %91 : vector<40x128xf32>
    %c1_i32_40 = arith.constant 1 : i32
    %93 = tpu.dynamic_rotate %92 by %c1_i32_40 dim 1 : vector<40x128xf32>, i32 -> vector<40x128xf32>
    %94 = arith.maximumf %92, %93 : vector<40x128xf32>
    %c127_i32_41 = arith.constant 127 : i32
    %95 = tpu.dynamic_rotate %92 by %c127_i32_41 dim 1 : vector<40x128xf32>, i32 -> vector<40x128xf32>
    %96 = arith.maximumf %94, %95 : vector<40x128xf32>
    %c2_i32_42 = arith.constant 2 : i32
    %97 = tpu.dynamic_rotate %92 by %c2_i32_42 dim 1 : vector<40x128xf32>, i32 -> vector<40x128xf32>
    %98 = arith.maximumf %96, %97 : vector<40x128xf32>
    %c126_i32_43 = arith.constant 126 : i32
    %99 = tpu.dynamic_rotate %92 by %c126_i32_43 dim 1 : vector<40x128xf32>, i32 -> vector<40x128xf32>
    %100 = arith.maximumf %98, %99 : vector<40x128xf32>
    %101 = arith.cmpf oeq, %84, %100 : vector<40x128xf32>
    %cst_44 = arith.constant dense<true> : vector<40x128xi1>
    %102 = arith.xori %82, %cst_44 : vector<40x128xi1>
    %103 = arith.andi %101, %102 : vector<40x128xi1>
    %104 = arith.ori %61, %103 : vector<40x128xi1>
    %cst_45 = arith.constant 0.000000e+00 : f32
    %105 = vector.broadcast %cst_45 : f32 to vector<40x128xf32>
    %106 = arith.select %104, %1, %105 : vector<40x128xi1>, vector<40x128xf32>
    %107 = vector.shape_cast %106 : vector<40x128xf32> to vector<1x40x128xf32>
    %c0_46 = arith.constant 0 : index
    %c0_47 = arith.constant 0 : index
    %c0_48 = arith.constant 0 : index
    %108 = vector.load %arg2[%c0_46, %c0_47, %c0_48] : memref<1x40x128xf32, #tpu.memory_space<vmem>>, vector<1x40x128xf32>
    tpu.vector_store %arg2[%c0_46, %c0_47, %c0_48], %107 {strides = array<i32>} : memref<1x40x128xf32, #tpu.memory_space<vmem>>, vector<1x40x128xf32>,
    return
  }
  func.func @transform_0(%arg0: i32) -> (i32, i32, i32) {
    %c0_i32 = arith.constant 0 : i32
    %c0_i32_0 = arith.constant 0 : i32
    %c0_i32_1 = arith.constant 0 : i32
    return %arg0, %c0_i32, %c0_i32_0 : i32, i32, i32
  }
  func.func @transform_1(%arg0: i32) -> (i32, i32, i32) {
    %c0_i32 = arith.constant 0 : i32
    %c0_i32_0 = arith.constant 0 : i32
    %c0_i32_1 = arith.constant 0 : i32
    return %arg0, %c0_i32, %c0_i32_0 : i32, i32, i32
  }
}

</mosaic_0001>

<llo_original>
// kernel: magic_point_forward.23
$region0: #{magic_point_forward.23}
  #allocation0 [shape = 'u32[]', space=smem, size = 0x4, offset = 0x4, fixed_abs, tag = 'smem constant byte address 0x4 - core index']
  #allocation1 [shape = 'u32[144,128]{1,0:T(1,128)}', space=vmem, size = 0x12000, scoped, tag = 'internal scratch']
  %s0 = inlined_call_operand.vmem [shape: bf16[512,16], index: 0, kind: input, shape index: {}]
  %s1 = inlined_call_operand.vmem [shape: bf16[16,128], index: 1, kind: input, shape index: {}]
  %s2 = inlined_call_operand.vmem [shape: f32[1,128], index: 2, kind: input, shape index: {}]
  %s3 = inlined_call_operand.vmem [shape: bf16[512,128], index: 3, kind: output, shape index: {}]
  %s4 = sld [smem:[#allocation0]]
  $region45: #{magic_point_forward.23} parent=0
    _
  %s6 = ssub.s32 1, %s4
  %s7 = scalar_select 0, %s6, %s4
  loop: start=0, step=1, limit=4
  $region2: #{magic_point_forward.23} parent=0 // loop_pre_header
    _
  $region3: #{magic_point_forward.23} parent=0 // loop_header
    %s9 = sphi 0, %s13
    %p10 = scmp.ge.s32.totalorder %s9, 4
    %s16 = sphi 0, %s28
    %s17 = sphi 0, %s24
    %s18 = sphi 0, %s16
    %s19 = sphi 0, %s17
    %s20 = sphi 0, %s18
    %s21 = sphi 0, %s19
    %s31 = sphi 0, %s33
    %s34 = sphi 0, %s31
    %s35 = sphi 0, %s34
    %s51 = sphi 0, %s35
    %s57 = sphi 0, %s59
    %s60 = sphi 0, %s57
    %s61 = sphi 0, %s60
    %s77 = sphi 0, %s61
    %s83 = sphi 0, %s85
    %s86 = sphi 0, %s83
    %s87 = sphi 0, %s86
    %s103 = sphi 0, %s87
    %s111 = sphi 0, %s113
    %s114 = sphi 0, %s111
    %s115 = sphi 0, %s114
    %s131 = sphi 0, %s115
  $region4: #{magic_point_forward.23} parent=0 // loop_header_branch
    %12 = sbr.rel (%p10) target = $region8
  $region5: #{magic_point_forward.23} parent=0 // loop_body
    %s14 = ssub.s32 %s9, 1
    %s15 = ssub.s32 %s9, 2
    %s22 = sadd.s32 1, %s17
    %p23 = scmp.ge.s32.totalorder %s22, 1
    %s24 = scalar_select %p23, 0, %s22
    %s25 = sadd.s32 1, %s16
    %s26 = scalar_select %p23, %s25, %s16
    %p27 = scmp.ge.s32.totalorder %s26, 2
    %s28 = scalar_select %p27, 0, %s26
    %s29 = ssub.s32 %s16, %s28
    %p30 = scmp.eq.s32.totalorder %s29, 0
    %s32 = sadd.s32 %s31, 1
    %s33 = scalar_select %p30, %s31, %s32
    %p36 = pneg %p30
    %p37 = scmp.eq.s32.totalorder %s9, 1
    %p38 = por %p36, %p37
    %p39 = scmp.ne.s32.totalorder %s31, %s34
    %p40 = scmp.eq.s32.totalorder %s9, 0
    %p41 = por %p39, %p40
    %p42 = scmp.ne.s32.totalorder %s31, %s34
    %p43 = scmp.eq.s32.totalorder %s14, 1
    %p44 = por %p42, %p43
    %p45 = scmp.ne.s32.totalorder %s34, %s35
    %p46 = scmp.eq.s32.totalorder %s14, 0
    %p47 = por %p45, %p46
    %p48 = scmp.ne.s32.totalorder %s34, %s35
    %p49 = scmp.eq.s32.totalorder %s15, 1
    %p50 = por %p48, %p49
    %p52 = scmp.ne.s32.totalorder %s35, %s51
    %p53 = scmp.eq.s32.totalorder %s15, 0
    %p54 = por %p52, %p53
    %s55 = ssub.s32 %s17, %s24
    %p56 = scmp.eq.s32.totalorder %s55, 0
    %s58 = sadd.s32 %s57, 1
    %s59 = scalar_select %p56, %s57, %s58
    %p62 = pneg %p56
    %p63 = scmp.eq.s32.totalorder %s9, 1
    %p64 = por %p62, %p63
    %p65 = scmp.ne.s32.totalorder %s57, %s60
    %p66 = scmp.eq.s32.totalorder %s9, 0
    %p67 = por %p65, %p66
    %p68 = scmp.ne.s32.totalorder %s57, %s60
    %p69 = scmp.eq.s32.totalorder %s14, 1
    %p70 = por %p68, %p69
    %p71 = scmp.ne.s32.totalorder %s60, %s61
    %p72 = scmp.eq.s32.totalorder %s14, 0
    %p73 = por %p71, %p72
    %p74 = scmp.ne.s32.totalorder %s60, %s61
    %p75 = scmp.eq.s32.totalorder %s15, 1
    %p76 = por %p74, %p75
    %p78 = scmp.ne.s32.totalorder %s61, %s77
    %p79 = scmp.eq.s32.totalorder %s15, 0
    %p80 = por %p78, %p79
    %s81 = ssub.s32 %s17, %s24
    %p82 = scmp.eq.s32.totalorder %s81, 0
    %s84 = sadd.s32 %s83, 1
    %s85 = scalar_select %p82, %s83, %s84
    %p88 = pneg %p82
    %p89 = scmp.eq.s32.totalorder %s9, 1
    %p90 = por %p88, %p89
    %p91 = scmp.ne.s32.totalorder %s83, %s86
    %p92 = scmp.eq.s32.totalorder %s9, 0
    %p93 = por %p91, %p92
    %p94 = scmp.ne.s32.totalorder %s83, %s86
    %p95 = scmp.eq.s32.totalorder %s14, 1
    %p96 = por %p94, %p95
    %p97 = scmp.ne.s32.totalorder %s86, %s87
    %p98 = scmp.eq.s32.totalorder %s14, 0
    %p99 = por %p97, %p98
    %p100 = scmp.ne.s32.totalorder %s86, %s87
    %p101 = scmp.eq.s32.totalorder %s15, 1
    %p102 = por %p100, %p101
    %p104 = scmp.ne.s32.totalorder %s87, %s103
    %p105 = scmp.eq.s32.totalorder %s15, 0
    %p106 = por %p104, %p105
    %s107 = ssub.s32 %s16, %s28
    %s108 = ssub.s32 %s17, %s24
    %s109 = sor.u32 %s107, %s108
    %p110 = scmp.eq.s32.totalorder %s109, 0
    %s112 = sadd.s32 %s111, 1
    %s113 = scalar_select %p110, %s111, %s112
    %p116 = pneg %p110
    %p117 = scmp.eq.s32.totalorder %s9, 1
    %p118 = por %p116, %p117
    %p119 = scmp.ne.s32.totalorder %s111, %s114
    %p120 = scmp.eq.s32.totalorder %s9, 0
    %p121 = por %p119, %p120
    %p122 = scmp.ne.s32.totalorder %s111, %s114
    %p123 = scmp.eq.s32.totalorder %s14, 1
    %p124 = por %p122, %p123
    %p125 = scmp.ne.s32.totalorder %s114, %s115
    %p126 = scmp.eq.s32.totalorder %s14, 0
    %p127 = por %p125, %p126
    %p128 = scmp.ne.s32.totalorder %s114, %s115
    %p129 = scmp.eq.s32.totalorder %s15, 1
    %p130 = por %p128, %p129
    %p132 = scmp.ne.s32.totalorder %s115, %s131
    %p133 = scmp.eq.s32.totalorder %s15, 0
    %p134 = por %p132, %p133
    %p135 = scmp.le.s32.totalorder 1, %s9
    %p136 = scmp.lt.s32.totalorder %s9, 3
    %p137 = pnand %p135, %p136
    %p138 = pneg %p137
    // Predicated region
    $region9: #{magic_point_forward.23} parent=5 // pred_check
      _
    $region10: #{magic_point_forward.23} parent=5 // pred_check_branch
      %140 = sbr.rel (%p137) target = $region12
    $region11: #{magic_point_forward.23} parent=5 // pred_region
      %s141 = ssub.s32 %s9, 1
      // Predicated region
      $region13: #{magic_point_forward.23} parent=11 // pred_check
        %p142 = pneg %p73
      $region14: #{magic_point_forward.23} parent=11 // pred_check_branch
        %144 = sbr.rel (%p142) target = $region16
      $region15: #{magic_point_forward.23} parent=11 // pred_region
        %p145 = scmp.lt.s32.totalorder %s19, 0
        %s146 = scalar_select %p145, %s19, 0
        %s147 = smul.addr %s146, 4
        %s148 = scalar_lea.vmem %s1, %s147
      $region16: #{magic_point_forward.23} parent=11 // pred_fallthru
        _
      // Predicated region
      $region17: #{magic_point_forward.23} parent=11 // pred_check
        %p149 = pneg %p99
      $region18: #{magic_point_forward.23} parent=11 // pred_check_branch
        %151 = sbr.rel (%p149) target = $region20
      $region19: #{magic_point_forward.23} parent=11 // pred_region
        %p152 = scmp.lt.s32.totalorder %s19, 0
        %s153 = scalar_select %p152, %s19, 0
        %s154 = scalar_lea.vmem %s2, %s153
      $region20: #{magic_point_forward.23} parent=11 // pred_fallthru
        _
    $region12: #{magic_point_forward.23} parent=5 // pred_fallthru
      _
    %p155 = scmp.lt.s32.totalorder %s9, 2
    // Predicated region
    $region21: #{magic_point_forward.23} parent=5 // pred_check
      %p156 = pneg %p155
    $region22: #{magic_point_forward.23} parent=5 // pred_check_branch
      %158 = sbr.rel (%p156) target = $region24
    $region23: #{magic_point_forward.23} parent=5 // pred_region
      // Predicated region
      $region25: #{magic_point_forward.23} parent=23 // pred_check
        %p159 = pneg %p41
      $region26: #{magic_point_forward.23} parent=23 // pred_check_branch
        %161 = sbr.rel (%p159) target = $region28
      $region27: #{magic_point_forward.23} parent=23 // pred_region
        %s162 = smul.u32 32, %s16
        %p163 = scmp.lt.s32.totalorder %s162, 63
        %s164 = scalar_select %p163, %s162, 63
        %s165 = smul.addr %s164, 4
        %s166 = scalar_lea.vmem %s0, %s165
        %s167 = smul.u32 32, %s16
      $region28: #{magic_point_forward.23} parent=23 // pred_fallthru
        _
    $region24: #{magic_point_forward.23} parent=5 // pred_fallthru
      _
    %p168 = scmp.le.s32.totalorder 1, %s9
    %p169 = scmp.lt.s32.totalorder %s9, 3
    %p170 = pnand %p168, %p169
    %p171 = pneg %p170
    // Predicated region
    $region29: #{magic_point_forward.23} parent=5 // pred_check
      _
    $region30: #{magic_point_forward.23} parent=5 // pred_check_branch
      %173 = sbr.rel (%p170) target = $region32
    $region31: #{magic_point_forward.23} parent=5 // pred_region
      %s174 = ssub.s32 %s9, 1
      %s175 = smul.u32 32, %s18
      %p176 = scmp.lt.s32.totalorder %s175, 63
      %s177 = scalar_select %p176, %s175, 63
      %s178 = smul.addr %s177, 4
      %s179 = scalar_lea.vmem %s0, %s178
      %p180 = pneg %p47
      %p181 = pneg %p44
      %p182 = scmp.lt.s32.totalorder %s19, 0
      %s183 = scalar_select %p182, %s19, 0
      %s184 = smul.addr %s183, 4
      %s185 = scalar_lea.vmem %s1, %s184
      %p186 = pneg %p73
      %p187 = pneg %p70
      %p188 = scmp.lt.s32.totalorder %s19, 0
      %s189 = scalar_select %p188, %s19, 0
      %s190 = scalar_lea.vmem %s2, %s189
      %p191 = pneg %p99
      %p192 = pneg %p96
      %p193 = pneg %p127
      %p194 = pneg %p124
      %s195 = smul.u32 32, %s18
      %p196 = scmp.lt.s32.totalorder %s195, 63
      %s197 = scalar_select %p196, %s195, 63
      %p198 = scmp.lt.s32.totalorder %s19, 0
      %s199 = scalar_select %p198, %s19, 0
      %s200 = sadd.s32 %s199, %s197
      %s201 = smul.addr %s200, 4
      %s202 = scalar_lea.vmem %s3, %s201
      %s203 = smul.u32 32, %s18
      %p204 = scmp.lt.s32.totalorder %s203, 63
      %s205 = scalar_select %p204, %s203, 63
      %s206 = smul.addr %s205, 4
      %s207 = scalar_lea.vmem %s0, %s206
      %s208 = smul.u32 32, %s18
      %p209 = scmp.lt.s32.totalorder %s19, 0
      %s210 = scalar_select %p209, %s19, 0
      %s211 = smul.addr %s210, 4
      %s212 = scalar_lea.vmem %s1, %s211
      %p213 = scmp.lt.s32.totalorder %s19, 0
      %s214 = scalar_select %p213, %s19, 0
      %s215 = scalar_lea.vmem %s2, %s214
      %s216 = smul.u32 32, %s18
      %p217 = scmp.lt.s32.totalorder %s216, 63
      %s218 = scalar_select %p217, %s216, 63
      %p219 = scmp.lt.s32.totalorder %s19, 0
      %s220 = scalar_select %p219, %s19, 0
      %s221 = sadd.s32 %s220, %s218
      %s222 = smul.addr %s221, 4
      %s223 = scalar_lea.vmem %s3, %s222
      %s224 = smul.u32 32, %s18
      %v226 = vld [vmem:[%s207] sm:$0xf]
      %v227 = vld [vmem:[%s207 + $0x4] sm:$0xf]
      %v228 = vld [vmem:[%s207 + $0x8] sm:$0xf]
      %v229 = vld [vmem:[%s207 + $0xc] sm:$0xf]
      %v230 = vld [vmem:[%s207 + $0x10] sm:$0xf]
      %v231 = vld [vmem:[%s207 + $0x14] sm:$0xf]
      %v232 = vld [vmem:[%s207 + $0x18] sm:$0xf]
      %v233 = vld [vmem:[%s207 + $0x1c] sm:$0xf]
      %v234 = vld [vmem:[%s207 + $0x20] sm:$0xf]
      %v235 = vld [vmem:[%s207 + $0x24] sm:$0xf]
      %v236 = vld [vmem:[%s207 + $0x28] sm:$0xf]
      %v237 = vld [vmem:[%s207 + $0x2c] sm:$0xf]
      %v238 = vld [vmem:[%s207 + $0x30] sm:$0xf]
      %v239 = vld [vmem:[%s207 + $0x34] sm:$0xf]
      %v240 = vld [vmem:[%s207 + $0x38] sm:$0xf]
      %v241 = vld [vmem:[%s207 + $0x3c] sm:$0xf]
      %v242 = vld [vmem:[%s207 + $0x40] sm:$0xf]
      %v243 = vld [vmem:[%s207 + $0x44] sm:$0xf]
      %v244 = vld [vmem:[%s207 + $0x48] sm:$0xf]
      %v245 = vld [vmem:[%s207 + $0x4c] sm:$0xf]
      %v246 = vld [vmem:[%s207 + $0x50] sm:$0xf]
      %v247 = vld [vmem:[%s207 + $0x54] sm:$0xf]
      %v248 = vld [vmem:[%s207 + $0x58] sm:$0xf]
      %v249 = vld [vmem:[%s207 + $0x5c] sm:$0xf]
      %v250 = vld [vmem:[%s207 + $0x60] sm:$0xf]
      %v251 = vld [vmem:[%s207 + $0x64] sm:$0xf]
      %v252 = vld [vmem:[%s207 + $0x68] sm:$0xf]
      %v253 = vld [vmem:[%s207 + $0x6c] sm:$0xf]
      %v254 = vld [vmem:[%s207 + $0x70] sm:$0xf]
      %v255 = vld [vmem:[%s207 + $0x74] sm:$0xf]
      %v256 = vld [vmem:[%s207 + $0x78] sm:$0xf]
      %v257 = vld [vmem:[%s207 + $0x7c] sm:$0xf]
      %v258 = vld [vmem:[%s212] sm:$0xf]
      %v259 = vld [vmem:[%s212 + $0x4] sm:$0xf]
      %v260 = vld [vmem:[%s215] sm:$0x1]
      %v262 = vlaneseq
      %v263 = vshrl.u32 %v262, 7
      %v264 = vsub.s32 0, %v263
      %v265 = vrot.slane %v260, %v264
      %v299 = vunpack.c.l.b16 %v226
      %v300 = vunpack.c.l.b16 %v227
      %v301 = vunpack.c.l.b16 %v228
      %v302 = vunpack.c.l.b16 %v229
      %v303 = vunpack.c.l.b16 %v230
      %v304 = vunpack.c.l.b16 %v231
      %v305 = vunpack.c.l.b16 %v232
      %v306 = vunpack.c.l.b16 %v233
      %v307 = vunpack.c.l.b16 %v234
      %v308 = vunpack.c.l.b16 %v235
      %v309 = vunpack.c.l.b16 %v236
      %v310 = vunpack.c.l.b16 %v237
      %v311 = vunpack.c.l.b16 %v238
      %v312 = vunpack.c.l.b16 %v239
      %v313 = vunpack.c.l.b16 %v240
      %v314 = vunpack.c.l.b16 %v241
      %v315 = vunpack.c.l.b16 %v242
      %v316 = vunpack.c.l.b16 %v243
      %v317 = vunpack.c.l.b16 %v244
      %v318 = vunpack.c.l.b16 %v245
      %v319 = vunpack.c.l.b16 %v246
      %v320 = vunpack.c.l.b16 %v247
      %v321 = vunpack.c.l.b16 %v248
      %v322 = vunpack.c.l.b16 %v249
      %v323 = vunpack.c.l.b16 %v250
      %v324 = vunpack.c.l.b16 %v251
      %v325 = vunpack.c.l.b16 %v252
      %v326 = vunpack.c.l.b16 %v253
      %v327 = vunpack.c.l.b16 %v254
      %v328 = vunpack.c.l.b16 %v255
      %v329 = vunpack.c.l.b16 %v256
      %v330 = vunpack.c.l.b16 %v257
      %v331 = vpack.c.b16 %v300, %v299
      %v332 = vpack.c.b16 %v302, %v301
      %v333 = vpack.c.b16 %v304, %v303
      %v334 = vpack.c.b16 %v306, %v305
      %v335 = vpack.c.b16 %v308, %v307
      %v336 = vpack.c.b16 %v310, %v309
      %v337 = vpack.c.b16 %v312, %v311
      %v338 = vpack.c.b16 %v314, %v313
      %v339 = vpack.c.b16 %v316, %v315
      %v340 = vpack.c.b16 %v318, %v317
      %v341 = vpack.c.b16 %v320, %v319
      %v342 = vpack.c.b16 %v322, %v321
      %v343 = vpack.c.b16 %v324, %v323
      %v344 = vpack.c.b16 %v326, %v325
      %v345 = vpack.c.b16 %v328, %v327
      %v346 = vpack.c.b16 %v330, %v329
      %v349 = vunpack.c.l.b16 %v258
      %v350 = vunpack.c.l.b16 %v259
      %v351 = vpack.c.b16 %v350, %v349
      %vm353 = vcmask 130048
      %v355 = vsel %vm353, %v331, 0
      %v358 = vsel %vm353, %v332, 0
      %v361 = vsel %vm353, %v333, 0
      %v364 = vsel %vm353, %v334, 0
      %v367 = vsel %vm353, %v335, 0
      %v370 = vsel %vm353, %v336, 0
      %v373 = vsel %vm353, %v337, 0
      %v376 = vsel %vm353, %v338, 0
      %v379 = vsel %vm353, %v339, 0
      %v382 = vsel %vm353, %v340, 0
      %v385 = vsel %vm353, %v341, 0
      %v388 = vsel %vm353, %v342, 0
      %v391 = vsel %vm353, %v343, 0
      %v394 = vsel %vm353, %v344, 0
      %v397 = vsel %vm353, %v345, 0
      %v400 = vsel %vm353, %v346, 0
      %402 = vmatprep.subr.bf16.mxu0 0
      %403 = vmatpush1.bf16.msra.mxu0 0
      %404 = vmatprep.subr.bf16.mxu0 0
      %405 = vmatpush1.bf16.msra.mxu0 0
      %406 = vmatprep.subr.bf16.mxu0 0
      %407 = vmatpush1.bf16.msra.mxu0 0
      %408 = vmatprep.subr.bf16.mxu0 0
      %409 = vmatpush1.bf16.msra.mxu0 0
      %410 = vmatprep.subr.bf16.mxu0 0
      %411 = vmatpush1.bf16.msra.mxu0 0
      %412 = vmatprep.subr.bf16.mxu0 0
      %413 = vmatpush1.bf16.msra.mxu0 0
      %414 = vmatprep.subr.bf16.mxu0 0
      %415 = vmatpush1.bf16.msra.mxu0 0
      %416 = vmatprep.subr.bf16.mxu0 0
      %417 = vmatpush1.bf16.msra.mxu0 %v351
      %418 = vmatprep.subr.bf16.mxu0 0
      %419 = vmatpush2.bf16.msra.mxu0 0
      %420 = vmatprep.subr.bf16.mxu0 0
      %421 = vmatpush2.bf16.msra.mxu0 0
      %422 = vmatprep.subr.bf16.mxu0 0
      %423 = vmatpush2.bf16.msra.mxu0 0
      %424 = vmatprep.subr.bf16.mxu0 0
      %425 = vmatpush2.bf16.msra.mxu0 0
      %426 = vmatprep.subr.bf16.mxu0 0
      %427 = vmatpush2.bf16.msra.mxu0 0
      %428 = vmatprep.subr.bf16.mxu0 0
      %429 = vmatpush2.bf16.msra.mxu0 0
      %430 = vmatprep.subr.bf16.mxu0 0
      %431 = vmatpush2.bf16.msra.mxu0 0
      %432 = vmatprep.subr.bf16.mxu0 0
      %433 = vmatpush2.bf16.msra.mxu0 0
      %434 = vmatprep.mubr.bf16.mxu0 0
      %435 = vmatmul.mubr.bf16.gmra.mxu0 %v355
      %v436 = vpop.f32.mrf.mxu0
      %v437 = vadd.f32 %v265, %v436
      %v438 = vpop.f32.mrf.mxu0
      %v439 = vpop.f32.mrf.mxu0
      %v440 = vadd.f32 %v265, %v439
      %v441 = vpop.f32.mrf.mxu0
      %442 = vmatprep.mubr.bf16.mxu0 0
      %443 = vmatmul.mubr.bf16.gmra.mxu0 %v358
      %v444 = vpop.f32.mrf.mxu0
      %v445 = vadd.f32 %v265, %v444
      %v446 = vpop.f32.mrf.mxu0
      %v447 = vpop.f32.mrf.mxu0
      %v448 = vadd.f32 %v265, %v447
      %v449 = vpop.f32.mrf.mxu0
      %450 = vmatprep.mubr.bf16.mxu0 0
      %451 = vmatmul.mubr.bf16.gmra.mxu0 %v361
      %v452 = vpop.f32.mrf.mxu0
      %v453 = vadd.f32 %v265, %v452
      %v454 = vpop.f32.mrf.mxu0
      %v455 = vpop.f32.mrf.mxu0
      %v456 = vadd.f32 %v265, %v455
      %v457 = vpop.f32.mrf.mxu0
      %458 = vmatprep.mubr.bf16.mxu0 0
      %459 = vmatmul.mubr.bf16.gmra.mxu0 %v364
      %v460 = vpop.f32.mrf.mxu0
      %v461 = vadd.f32 %v265, %v460
      %v462 = vpop.f32.mrf.mxu0
      %v463 = vpop.f32.mrf.mxu0
      %v464 = vadd.f32 %v265, %v463
      %v465 = vpop.f32.mrf.mxu0
      %466 = vmatprep.mubr.bf16.mxu0 0
      %467 = vmatmul.mubr.bf16.gmra.mxu0 %v367
      %v468 = vpop.f32.mrf.mxu0
      %v469 = vadd.f32 %v265, %v468
      %v470 = vpop.f32.mrf.mxu0
      %v471 = vpop.f32.mrf.mxu0
      %v472 = vadd.f32 %v265, %v471
      %v473 = vpop.f32.mrf.mxu0
      %474 = vmatprep.mubr.bf16.mxu0 0
      %475 = vmatmul.mubr.bf16.gmra.mxu0 %v370
      %v476 = vpop.f32.mrf.mxu0
      %v477 = vadd.f32 %v265, %v476
      %v478 = vpop.f32.mrf.mxu0
      %v479 = vpop.f32.mrf.mxu0
      %v480 = vadd.f32 %v265, %v479
      %v481 = vpop.f32.mrf.mxu0
      %482 = vmatprep.mubr.bf16.mxu0 0
      %483 = vmatmul.mubr.bf16.gmra.mxu0 %v373
      %v484 = vpop.f32.mrf.mxu0
      %v485 = vadd.f32 %v265, %v484
      %v486 = vpop.f32.mrf.mxu0
      %v487 = vpop.f32.mrf.mxu0
      %v488 = vadd.f32 %v265, %v487
      %v489 = vpop.f32.mrf.mxu0
      %490 = vmatprep.mubr.bf16.mxu0 0
      %491 = vmatmul.mubr.bf16.gmra.mxu0 %v376
      %v492 = vpop.f32.mrf.mxu0
      %v493 = vadd.f32 %v265, %v492
      %v494 = vpop.f32.mrf.mxu0
      %v495 = vpop.f32.mrf.mxu0
      %v496 = vadd.f32 %v265, %v495
      %v497 = vpop.f32.mrf.mxu0
      %498 = vmatprep.mubr.bf16.mxu0 0
      %499 = vmatmul.mubr.bf16.gmra.mxu0 %v379
      %v500 = vpop.f32.mrf.mxu0
      %v501 = vadd.f32 %v265, %v500
      %v502 = vpop.f32.mrf.mxu0
      %v503 = vpop.f32.mrf.mxu0
      %v504 = vadd.f32 %v265, %v503
      %v505 = vpop.f32.mrf.mxu0
      %506 = vmatprep.mubr.bf16.mxu0 0
      %507 = vmatmul.mubr.bf16.gmra.mxu0 %v382
      %v508 = vpop.f32.mrf.mxu0
      %v509 = vadd.f32 %v265, %v508
      %v510 = vpop.f32.mrf.mxu0
      %v511 = vpop.f32.mrf.mxu0
      %v512 = vadd.f32 %v265, %v511
      %v513 = vpop.f32.mrf.mxu0
      %514 = vmatprep.mubr.bf16.mxu0 0
      %515 = vmatmul.mubr.bf16.gmra.mxu0 %v385
      %v516 = vpop.f32.mrf.mxu0
      %v517 = vadd.f32 %v265, %v516
      %v518 = vpop.f32.mrf.mxu0
      %v519 = vpop.f32.mrf.mxu0
      %v520 = vadd.f32 %v265, %v519
      %v521 = vpop.f32.mrf.mxu0
      %522 = vmatprep.mubr.bf16.mxu0 0
      %523 = vmatmul.mubr.bf16.gmra.mxu0 %v388
      %v524 = vpop.f32.mrf.mxu0
      %v525 = vadd.f32 %v265, %v524
      %v526 = vpop.f32.mrf.mxu0
      %v527 = vpop.f32.mrf.mxu0
      %v528 = vadd.f32 %v265, %v527
      %v529 = vpop.f32.mrf.mxu0
      %530 = vmatprep.mubr.bf16.mxu0 0
      %531 = vmatmul.mubr.bf16.gmra.mxu0 %v391
      %v532 = vpop.f32.mrf.mxu0
      %v533 = vadd.f32 %v265, %v532
      %v534 = vpop.f32.mrf.mxu0
      %v535 = vpop.f32.mrf.mxu0
      %v536 = vadd.f32 %v265, %v535
      %v537 = vpop.f32.mrf.mxu0
      %538 = vmatprep.mubr.bf16.mxu0 0
      %539 = vmatmul.mubr.bf16.gmra.mxu0 %v394
      %v540 = vpop.f32.mrf.mxu0
      %v541 = vadd.f32 %v265, %v540
      %v542 = vpop.f32.mrf.mxu0
      %v543 = vpop.f32.mrf.mxu0
      %v544 = vadd.f32 %v265, %v543
      %v545 = vpop.f32.mrf.mxu0
      %546 = vmatprep.mubr.bf16.mxu0 0
      %547 = vmatmul.mubr.bf16.gmra.mxu0 %v397
      %v548 = vpop.f32.mrf.mxu0
      %v549 = vadd.f32 %v265, %v548
      %v550 = vpop.f32.mrf.mxu0
      %v551 = vpop.f32.mrf.mxu0
      %v552 = vadd.f32 %v265, %v551
      %v553 = vpop.f32.mrf.mxu0
      %554 = vmatprep.mubr.bf16.mxu0 0
      %555 = vmatmul.mubr.bf16.gmra.mxu0 %v400
      %v556 = vpop.f32.mrf.mxu0
      %v557 = vadd.f32 %v265, %v556
      %v558 = vpop.f32.mrf.mxu0
      %v559 = vpop.f32.mrf.mxu0
      %v560 = vadd.f32 %v265, %v559
      %v561 = vpop.f32.mrf.mxu0
      %562 = vdwg.mxu0
      %v563 = vand.u32 2147483647, %v437
      %v564 = vand.u32 2147483647, %v440
      %v565 = vand.u32 2147483647, %v445
      %v566 = vand.u32 2147483647, %v448
      %v567 = vand.u32 2147483647, %v453
      %v568 = vand.u32 2147483647, %v456
      %v569 = vand.u32 2147483647, %v461
      %v570 = vand.u32 2147483647, %v464
      %v571 = vand.u32 2147483647, %v469
      %v572 = vand.u32 2147483647, %v472
      %v573 = vand.u32 2147483647, %v477
      %v574 = vand.u32 2147483647, %v480
      %v575 = vand.u32 2147483647, %v485
      %v576 = vand.u32 2147483647, %v488
      %v577 = vand.u32 2147483647, %v493
      %v578 = vand.u32 2147483647, %v496
      %v579 = vand.u32 2147483647, %v501
      %v580 = vand.u32 2147483647, %v504
      %v581 = vand.u32 2147483647, %v509
      %v582 = vand.u32 2147483647, %v512
      %v583 = vand.u32 2147483647, %v517
      %v584 = vand.u32 2147483647, %v520
      %v585 = vand.u32 2147483647, %v525
      %v586 = vand.u32 2147483647, %v528
      %v587 = vand.u32 2147483647, %v533
      %v588 = vand.u32 2147483647, %v536
      %v589 = vand.u32 2147483647, %v541
      %v590 = vand.u32 2147483647, %v544
      %v591 = vand.u32 2147483647, %v549
      %v592 = vand.u32 2147483647, %v552
      %v593 = vand.u32 2147483647, %v557
      %v594 = vand.u32 2147483647, %v560
      %v595 = vsub.f32 0.0, %v563
      %v596 = vsub.f32 0.0, %v564
      %v597 = vsub.f32 0.0, %v565
      %v598 = vsub.f32 0.0, %v566
      %v599 = vsub.f32 0.0, %v567
      %v600 = vsub.f32 0.0, %v568
      %v601 = vsub.f32 0.0, %v569
      %v602 = vsub.f32 0.0, %v570
      %v603 = vsub.f32 0.0, %v571
      %v604 = vsub.f32 0.0, %v572
      %v605 = vsub.f32 0.0, %v573
      %v606 = vsub.f32 0.0, %v574
      %v607 = vsub.f32 0.0, %v575
      %v608 = vsub.f32 0.0, %v576
      %v609 = vsub.f32 0.0, %v577
      %v610 = vsub.f32 0.0, %v578
      %v611 = vsub.f32 0.0, %v579
      %v612 = vsub.f32 0.0, %v580
      %v613 = vsub.f32 0.0, %v581
      %v614 = vsub.f32 0.0, %v582
      %v615 = vsub.f32 0.0, %v583
      %v616 = vsub.f32 0.0, %v584
      %v617 = vsub.f32 0.0, %v585
      %v618 = vsub.f32 0.0, %v586
      %v619 = vsub.f32 0.0, %v587
      %v620 = vsub.f32 0.0, %v588
      %v621 = vsub.f32 0.0, %v589
      %v622 = vsub.f32 0.0, %v590
      %v623 = vsub.f32 0.0, %v591
      %v624 = vsub.f32 0.0, %v592
      %v625 = vsub.f32 0.0, %v593
      %v626 = vsub.f32 0.0, %v594
      %v627 = vmul.f32 %v595, 1.442695
      %v628 = vpow.pop %v627
      %v629 = vmul.f32 %v596, 1.442695
      %v630 = vpow.pop %v629
      %v631 = vmul.f32 %v597, 1.442695
      %v632 = vpow.pop %v631
      %v633 = vmul.f32 %v598, 1.442695
      %v634 = vpow.pop %v633
      %v635 = vmul.f32 %v599, 1.442695
      %v636 = vpow.pop %v635
      %v637 = vmul.f32 %v600, 1.442695
      %v638 = vpow.pop %v637
      %v639 = vmul.f32 %v601, 1.442695
      %v640 = vpow.pop %v639
      %v641 = vmul.f32 %v602, 1.442695
      %v642 = vpow.pop %v641
      %v643 = vmul.f32 %v603, 1.442695
      %v644 = vpow.pop %v643
      %v645 = vmul.f32 %v604, 1.442695
      %v646 = vpow.pop %v645
      %v647 = vmul.f32 %v605, 1.442695
      %v648 = vpow.pop %v647
      %v649 = vmul.f32 %v606, 1.442695
      %v650 = vpow.pop %v649
      %v651 = vmul.f32 %v607, 1.442695
      %v652 = vpow.pop %v651
      %v653 = vmul.f32 %v608, 1.442695
      %v654 = vpow.pop %v653
      %v655 = vmul.f32 %v609, 1.442695
      %v656 = vpow.pop %v655
      %v657 = vmul.f32 %v610, 1.442695
      %v658 = vpow.pop %v657
      %v659 = vmul.f32 %v611, 1.442695
      %v660 = vpow.pop %v659
      %v661 = vmul.f32 %v612, 1.442695
      %v662 = vpow.pop %v661
      %v663 = vmul.f32 %v613, 1.442695
      %v664 = vpow.pop %v663
      %v665 = vmul.f32 %v614, 1.442695
      %v666 = vpow.pop %v665
      %v667 = vmul.f32 %v615, 1.442695
      %v668 = vpow.pop %v667
      %v669 = vmul.f32 %v616, 1.442695
      %v670 = vpow.pop %v669
      %v671 = vmul.f32 %v617, 1.442695
      %v672 = vpow.pop %v671
      %v673 = vmul.f32 %v618, 1.442695
      %v674 = vpow.pop %v673
      %v675 = vmul.f32 %v619, 1.442695
      %v676 = vpow.pop %v675
      %v677 = vmul.f32 %v620, 1.442695
      %v678 = vpow.pop %v677
      %v679 = vmul.f32 %v621, 1.442695
      %v680 = vpow.pop %v679
      %v681 = vmul.f32 %v622, 1.442695
      %v682 = vpow.pop %v681
      %v683 = vmul.f32 %v623, 1.442695
      %v684 = vpow.pop %v683
      %v685 = vmul.f32 %v624, 1.442695
      %v686 = vpow.pop %v685
      %v687 = vmul.f32 %v625, 1.442695
      %v688 = vpow.pop %v687
      %v689 = vmul.f32 %v626, 1.442695
      %v690 = vpow.pop %v689
      %v691 = vadd.f32 %v628, 1.0
      %v692 = vadd.f32 %v630, 1.0
      %v693 = vadd.f32 %v632, 1.0
      %v694 = vadd.f32 %v634, 1.0
      %v695 = vadd.f32 %v636, 1.0
      %v696 = vadd.f32 %v638, 1.0
      %v697 = vadd.f32 %v640, 1.0
      %v698 = vadd.f32 %v642, 1.0
      %v699 = vadd.f32 %v644, 1.0
      %v700 = vadd.f32 %v646, 1.0
      %v701 = vadd.f32 %v648, 1.0
      %v702 = vadd.f32 %v650, 1.0
      %v703 = vadd.f32 %v652, 1.0
      %v704 = vadd.f32 %v654, 1.0
      %v705 = vadd.f32 %v656, 1.0
      %v706 = vadd.f32 %v658, 1.0
      %v707 = vadd.f32 %v660, 1.0
      %v708 = vadd.f32 %v662, 1.0
      %v709 = vadd.f32 %v664, 1.0
      %v710 = vadd.f32 %v666, 1.0
      %v711 = vadd.f32 %v668, 1.0
      %v712 = vadd.f32 %v670, 1.0
      %v713 = vadd.f32 %v672, 1.0
      %v714 = vadd.f32 %v674, 1.0
      %v715 = vadd.f32 %v676, 1.0
      %v716 = vadd.f32 %v678, 1.0
      %v717 = vadd.f32 %v680, 1.0
      %v718 = vadd.f32 %v682, 1.0
      %v719 = vadd.f32 %v684, 1.0
      %v720 = vadd.f32 %v686, 1.0
      %v721 = vadd.f32 %v688, 1.0
      %v722 = vadd.f32 %v690, 1.0
      %v723 = vrcp.pop %v691
      %v724 = vrcp.pop %v692
      %v725 = vrcp.pop %v693
      %v726 = vrcp.pop %v694
      %v727 = vrcp.pop %v695
      %v728 = vrcp.pop %v696
      %v729 = vrcp.pop %v697
      %v730 = vrcp.pop %v698
      %v731 = vrcp.pop %v699
      %v732 = vrcp.pop %v700
      %v733 = vrcp.pop %v701
      %v734 = vrcp.pop %v702
      %v735 = vrcp.pop %v703
      %v736 = vrcp.pop %v704
      %v737 = vrcp.pop %v705
      %v738 = vrcp.pop %v706
      %v739 = vrcp.pop %v707
      %v740 = vrcp.pop %v708
      %v741 = vrcp.pop %v709
      %v742 = vrcp.pop %v710
      %v743 = vrcp.pop %v711
      %v744 = vrcp.pop %v712
      %v745 = vrcp.pop %v713
      %v746 = vrcp.pop %v714
      %v747 = vrcp.pop %v715
      %v748 = vrcp.pop %v716
      %v749 = vrcp.pop %v717
      %v750 = vrcp.pop %v718
      %v751 = vrcp.pop %v719
      %v752 = vrcp.pop %v720
      %v753 = vrcp.pop %v721
      %v754 = vrcp.pop %v722
      %vm755 = vcmp.ge.f32.partialorder %v437, 0.0
      %vm756 = vcmp.ge.f32.partialorder %v440, 0.0
      %vm757 = vcmp.ge.f32.partialorder %v445, 0.0
      %vm758 = vcmp.ge.f32.partialorder %v448, 0.0
      %vm759 = vcmp.ge.f32.partialorder %v453, 0.0
      %vm760 = vcmp.ge.f32.partialorder %v456, 0.0
      %vm761 = vcmp.ge.f32.partialorder %v461, 0.0
      %vm762 = vcmp.ge.f32.partialorder %v464, 0.0
      %vm763 = vcmp.ge.f32.partialorder %v469, 0.0
      %vm764 = vcmp.ge.f32.partialorder %v472, 0.0
      %vm765 = vcmp.ge.f32.partialorder %v477, 0.0
      %vm766 = vcmp.ge.f32.partialorder %v480, 0.0
      %vm767 = vcmp.ge.f32.partialorder %v485, 0.0
      %vm768 = vcmp.ge.f32.partialorder %v488, 0.0
      %vm769 = vcmp.ge.f32.partialorder %v493, 0.0
      %vm770 = vcmp.ge.f32.partialorder %v496, 0.0
      %vm771 = vcmp.ge.f32.partialorder %v501, 0.0
      %vm772 = vcmp.ge.f32.partialorder %v504, 0.0
      %vm773 = vcmp.ge.f32.partialorder %v509, 0.0
      %vm774 = vcmp.ge.f32.partialorder %v512, 0.0
      %vm775 = vcmp.ge.f32.partialorder %v517, 0.0
      %vm776 = vcmp.ge.f32.partialorder %v520, 0.0
      %vm777 = vcmp.ge.f32.partialorder %v525, 0.0
      %vm778 = vcmp.ge.f32.partialorder %v528, 0.0
      %vm779 = vcmp.ge.f32.partialorder %v533, 0.0
      %vm780 = vcmp.ge.f32.partialorder %v536, 0.0
      %vm781 = vcmp.ge.f32.partialorder %v541, 0.0
      %vm782 = vcmp.ge.f32.partialorder %v544, 0.0
      %vm783 = vcmp.ge.f32.partialorder %v549, 0.0
      %vm784 = vcmp.ge.f32.partialorder %v552, 0.0
      %vm785 = vcmp.ge.f32.partialorder %v557, 0.0
      %vm786 = vcmp.ge.f32.partialorder %v560, 0.0
      %v787 = vmul.f32 %v628, %v723
      %v788 = vmul.f32 %v630, %v724
      %v789 = vmul.f32 %v632, %v725
      %v790 = vmul.f32 %v634, %v726
      %v791 = vmul.f32 %v636, %v727
      %v792 = vmul.f32 %v638, %v728
      %v793 = vmul.f32 %v640, %v729
      %v794 = vmul.f32 %v642, %v730
      %v795 = vmul.f32 %v644, %v731
      %v796 = vmul.f32 %v646, %v732
      %v797 = vmul.f32 %v648, %v733
      %v798 = vmul.f32 %v650, %v734
      %v799 = vmul.f32 %v652, %v735
      %v800 = vmul.f32 %v654, %v736
      %v801 = vmul.f32 %v656, %v737
      %v802 = vmul.f32 %v658, %v738
      %v803 = vmul.f32 %v660, %v739
      %v804 = vmul.f32 %v662, %v740
      %v805 = vmul.f32 %v664, %v741
      %v806 = vmul.f32 %v666, %v742
      %v807 = vmul.f32 %v668, %v743
      %v808 = vmul.f32 %v670, %v744
      %v809 = vmul.f32 %v672, %v745
      %v810 = vmul.f32 %v674, %v746
      %v811 = vmul.f32 %v676, %v747
      %v812 = vmul.f32 %v678, %v748
      %v813 = vmul.f32 %v680, %v749
      %v814 = vmul.f32 %v682, %v750
      %v815 = vmul.f32 %v684, %v751
      %v816 = vmul.f32 %v686, %v752
      %v817 = vmul.f32 %v688, %v753
      %v818 = vmul.f32 %v690, %v754
      %v819 = vsel %vm755, %v723, %v787
      %v820 = vsel %vm756, %v724, %v788
      %v821 = vsel %vm757, %v725, %v789
      %v822 = vsel %vm758, %v726, %v790
      %v823 = vsel %vm759, %v727, %v791
      %v824 = vsel %vm760, %v728, %v792
      %v825 = vsel %vm761, %v729, %v793
      %v826 = vsel %vm762, %v730, %v794
      %v827 = vsel %vm763, %v731, %v795
      %v828 = vsel %vm764, %v732, %v796
      %v829 = vsel %vm765, %v733, %v797
      %v830 = vsel %vm766, %v734, %v798
      %v831 = vsel %vm767, %v735, %v799
      %v832 = vsel %vm768, %v736, %v800
      %v833 = vsel %vm769, %v737, %v801
      %v834 = vsel %vm770, %v738, %v802
      %v835 = vsel %vm771, %v739, %v803
      %v836 = vsel %vm772, %v740, %v804
      %v837 = vsel %vm773, %v741, %v805
      %v838 = vsel %vm774, %v742, %v806
      %v839 = vsel %vm775, %v743, %v807
      %v840 = vsel %vm776, %v744, %v808
      %v841 = vsel %vm777, %v745, %v809
      %v842 = vsel %vm778, %v746, %v810
      %v843 = vsel %vm779, %v747, %v811
      %v844 = vsel %vm780, %v748, %v812
      %v845 = vsel %vm781, %v749, %v813
      %v846 = vsel %vm782, %v750, %v814
      %v847 = vsel %vm783, %v751, %v815
      %v848 = vsel %vm784, %v752, %v816
      %v849 = vsel %vm785, %v753, %v817
      %v850 = vsel %vm786, %v754, %v818
      %v851 = vmul.f32 %v437, %v819
      %v852 = vmul.f32 %v440, %v820
      %v853 = vmul.f32 %v445, %v821
      %v854 = vmul.f32 %v448, %v822
      %v855 = vmul.f32 %v453, %v823
      %v856 = vmul.f32 %v456, %v824
      %v857 = vmul.f32 %v461, %v825
      %v858 = vmul.f32 %v464, %v826
      %v859 = vmul.f32 %v469, %v827
      %v860 = vmul.f32 %v472, %v828
      %v861 = vmul.f32 %v477, %v829
      %v862 = vmul.f32 %v480, %v830
      %v863 = vmul.f32 %v485, %v831
      %v864 = vmul.f32 %v488, %v832
      %v865 = vmul.f32 %v493, %v833
      %v866 = vmul.f32 %v496, %v834
      %v867 = vmul.f32 %v501, %v835
      %v868 = vmul.f32 %v504, %v836
      %v869 = vmul.f32 %v509, %v837
      %v870 = vmul.f32 %v512, %v838
      %v871 = vmul.f32 %v517, %v839
      %v872 = vmul.f32 %v520, %v840
      %v873 = vmul.f32 %v525, %v841
      %v874 = vmul.f32 %v528, %v842
      %v875 = vmul.f32 %v533, %v843
      %v876 = vmul.f32 %v536, %v844
      %v877 = vmul.f32 %v541, %v845
      %v878 = vmul.f32 %v544, %v846
      %v879 = vmul.f32 %v549, %v847
      %v880 = vmul.f32 %v552, %v848
      %v881 = vmul.f32 %v557, %v849
      %v882 = vmul.f32 %v560, %v850
      %v883 = vpack.c.bf16 %v852, %v851
      %v884 = vpack.c.bf16 %v854, %v853
      %v885 = vpack.c.bf16 %v856, %v855
      %v886 = vpack.c.bf16 %v858, %v857
      %v887 = vpack.c.bf16 %v860, %v859
      %v888 = vpack.c.bf16 %v862, %v861
      %v889 = vpack.c.bf16 %v864, %v863
      %v890 = vpack.c.bf16 %v866, %v865
      %v891 = vpack.c.bf16 %v868, %v867
      %v892 = vpack.c.bf16 %v870, %v869
      %v893 = vpack.c.bf16 %v872, %v871
      %v894 = vpack.c.bf16 %v874, %v873
      %v895 = vpack.c.bf16 %v876, %v875
      %v896 = vpack.c.bf16 %v878, %v877
      %v897 = vpack.c.bf16 %v880, %v879
      %v898 = vpack.c.bf16 %v882, %v881
      %v915 = vunpack.c.l.b16 %v883
      %v916 = vunpack.c.h.b16 %v883
      %v917 = vunpack.c.l.b16 %v884
      %v918 = vunpack.c.h.b16 %v884
      %v919 = vunpack.c.l.b16 %v885
      %v920 = vunpack.c.h.b16 %v885
      %v921 = vunpack.c.l.b16 %v886
      %v922 = vunpack.c.h.b16 %v886
      %v923 = vunpack.c.l.b16 %v887
      %v924 = vunpack.c.h.b16 %v887
      %v925 = vunpack.c.l.b16 %v888
      %v926 = vunpack.c.h.b16 %v888
      %v927 = vunpack.c.l.b16 %v889
      %v928 = vunpack.c.h.b16 %v889
      %v929 = vunpack.c.l.b16 %v890
      %v930 = vunpack.c.h.b16 %v890
      %v931 = vunpack.c.l.b16 %v891
      %v932 = vunpack.c.h.b16 %v891
      %v933 = vunpack.c.l.b16 %v892
      %v934 = vunpack.c.h.b16 %v892
      %v935 = vunpack.c.l.b16 %v893
      %v936 = vunpack.c.h.b16 %v893
      %v937 = vunpack.c.l.b16 %v894
      %v938 = vunpack.c.h.b16 %v894
      %v939 = vunpack.c.l.b16 %v895
      %v940 = vunpack.c.h.b16 %v895
      %v941 = vunpack.c.l.b16 %v896
      %v942 = vunpack.c.h.b16 %v896
      %v943 = vunpack.c.l.b16 %v897
      %v944 = vunpack.c.h.b16 %v897
      %v945 = vunpack.c.l.b16 %v898
      %v946 = vunpack.c.h.b16 %v898
      %v947 = vpack.c.b16 %v915, %v915
      %v948 = vpack.c.b16 %v916, %v916
      %v949 = vpack.c.b16 %v917, %v917
      %v950 = vpack.c.b16 %v918, %v918
      %v951 = vpack.c.b16 %v919, %v919
      %v952 = vpack.c.b16 %v920, %v920
      %v953 = vpack.c.b16 %v921, %v921
      %v954 = vpack.c.b16 %v922, %v922
      %v955 = vpack.c.b16 %v923, %v923
      %v956 = vpack.c.b16 %v924, %v924
      %v957 = vpack.c.b16 %v925, %v925
      %v958 = vpack.c.b16 %v926, %v926
      %v959 = vpack.c.b16 %v927, %v927
      %v960 = vpack.c.b16 %v928, %v928
      %v961 = vpack.c.b16 %v929, %v929
      %v962 = vpack.c.b16 %v930, %v930
      %v963 = vpack.c.b16 %v931, %v931
      %v964 = vpack.c.b16 %v932, %v932
      %v965 = vpack.c.b16 %v933, %v933
      %v966 = vpack.c.b16 %v934, %v934
      %v967 = vpack.c.b16 %v935, %v935
      %v968 = vpack.c.b16 %v936, %v936
      %v969 = vpack.c.b16 %v937, %v937
      %v970 = vpack.c.b16 %v938, %v938
      %v971 = vpack.c.b16 %v939, %v939
      %v972 = vpack.c.b16 %v940, %v940
      %v973 = vpack.c.b16 %v941, %v941
      %v974 = vpack.c.b16 %v942, %v942
      %v975 = vpack.c.b16 %v943, %v943
      %v976 = vpack.c.b16 %v944, %v944
      %v977 = vpack.c.b16 %v945, %v945
      %v978 = vpack.c.b16 %v946, %v946
      %1011 = vst [vmem:[%s223] sm:$0xf] %v947
      %1012 = vst [vmem:[%s223 + $0x4] sm:$0xf] %v948
      %1013 = vst [vmem:[%s223 + $0x8] sm:$0xf] %v949
      %1014 = vst [vmem:[%s223 + $0xc] sm:$0xf] %v950
      %1015 = vst [vmem:[%s223 + $0x10] sm:$0xf] %v951
      %1016 = vst [vmem:[%s223 + $0x14] sm:$0xf] %v952
      %1017 = vst [vmem:[%s223 + $0x18] sm:$0xf] %v953
      %1018 = vst [vmem:[%s223 + $0x1c] sm:$0xf] %v954
      %1019 = vst [vmem:[%s223 + $0x20] sm:$0xf] %v955
      %1020 = vst [vmem:[%s223 + $0x24] sm:$0xf] %v956
      %1021 = vst [vmem:[%s223 + $0x28] sm:$0xf] %v957
      %1022 = vst [vmem:[%s223 + $0x2c] sm:$0xf] %v958
      %1023 = vst [vmem:[%s223 + $0x30] sm:$0xf] %v959
      %1024 = vst [vmem:[%s223 + $0x34] sm:$0xf] %v960
      %1025 = vst [vmem:[%s223 + $0x38] sm:$0xf] %v961
      %1026 = vst [vmem:[%s223 + $0x3c] sm:$0xf] %v962
      %1027 = vst [vmem:[%s223 + $0x40] sm:$0xf] %v963
      %1028 = vst [vmem:[%s223 + $0x44] sm:$0xf] %v964
      %1029 = vst [vmem:[%s223 + $0x48] sm:$0xf] %v965
      %1030 = vst [vmem:[%s223 + $0x4c] sm:$0xf] %v966
      %1031 = vst [vmem:[%s223 + $0x50] sm:$0xf] %v967
      %1032 = vst [vmem:[%s223 + $0x54] sm:$0xf] %v968
      %1033 = vst [vmem:[%s223 + $0x58] sm:$0xf] %v969
      %1034 = vst [vmem:[%s223 + $0x5c] sm:$0xf] %v970
      %1035 = vst [vmem:[%s223 + $0x60] sm:$0xf] %v971
      %1036 = vst [vmem:[%s223 + $0x64] sm:$0xf] %v972
      %1037 = vst [vmem:[%s223 + $0x68] sm:$0xf] %v973
      %1038 = vst [vmem:[%s223 + $0x6c] sm:$0xf] %v974
      %1039 = vst [vmem:[%s223 + $0x70] sm:$0xf] %v975
      %1040 = vst [vmem:[%s223 + $0x74] sm:$0xf] %v976
      %1041 = vst [vmem:[%s223 + $0x78] sm:$0xf] %v977
      %1042 = vst [vmem:[%s223 + $0x7c] sm:$0xf] %v978
      %s1043 = smul.u32 32, %s18
      %p1044 = scmp.lt.s32.totalorder %s1043, 63
      %s1045 = scalar_select %p1044, %s1043, 63
      %p1046 = scmp.lt.s32.totalorder %s19, 0
      %s1047 = scalar_select %p1046, %s19, 0
      %s1048 = sadd.s32 %s1047, %s1045
      %s1049 = smul.addr %s1048, 4
      %s1050 = scalar_lea.vmem %s3, %s1049
      // Predicated region
      $region33: #{magic_point_forward.23} parent=31 // pred_check
        %p1051 = pneg %p124
      $region34: #{magic_point_forward.23} parent=31 // pred_check_branch
        %1053 = sbr.rel (%p1051) target = $region36
      $region35: #{magic_point_forward.23} parent=31 // pred_region
        %s1054 = smul.u32 32, %s18
      $region36: #{magic_point_forward.23} parent=31 // pred_fallthru
        _
    $region32: #{magic_point_forward.23} parent=5 // pred_fallthru
      _
    %p1055 = scmp.le.s32.totalorder 2, %s9
    // Predicated region
    $region37: #{magic_point_forward.23} parent=5 // pred_check
      %p1056 = pneg %p1055
    $region38: #{magic_point_forward.23} parent=5 // pred_check_branch
      %1058 = sbr.rel (%p1056) target = $region40
    $region39: #{magic_point_forward.23} parent=5 // pred_region
      %s1059 = ssub.s32 %s9, 2
      // Predicated region
      $region41: #{magic_point_forward.23} parent=39 // pred_check
        %p1060 = pneg %p130
      $region42: #{magic_point_forward.23} parent=39 // pred_check_branch
        %1062 = sbr.rel (%p1060) target = $region44
      $region43: #{magic_point_forward.23} parent=39 // pred_region
        %s1063 = smul.u32 32, %s20
        %p1064 = scmp.lt.s32.totalorder %s1063, 63
        %s1065 = scalar_select %p1064, %s1063, 63
        %p1066 = scmp.lt.s32.totalorder %s21, 0
        %s1067 = scalar_select %p1066, %s21, 0
        %s1068 = sadd.s32 %s1067, %s1065
        %s1069 = smul.addr %s1068, 4
        %s1070 = scalar_lea.vmem %s3, %s1069
      $region44: #{magic_point_forward.23} parent=39 // pred_fallthru
        _
    $region40: #{magic_point_forward.23} parent=5 // pred_fallthru
      _
  $region6: #{magic_point_forward.23} parent=0 // loop_footer
    %s13 = sadd.s32 1, %s9
  $region7: #{magic_point_forward.23} parent=0 // loop_footer_branch
    %8 = sbr.rel target = $region3
  $region8: #{magic_point_forward.23} parent=0 // loop_exit
    _

// kernel: magic_point_forward.24
$region0: #{magic_point_forward.24}
  #allocation0 [shape = 'u32[]', space=smem, size = 0x4, offset = 0x4, fixed_abs, tag = 'smem constant byte address 0x4 - core index']
  #allocation1 [shape = 'u32[144,128]{1,0:T(1,128)}', space=vmem, size = 0x12000, scoped, tag = 'internal scratch']
  %s0 = inlined_call_operand.vmem [shape: bf16[128,32], index: 0, kind: input, shape index: {}]
  %s1 = inlined_call_operand.vmem [shape: bf16[32,128], index: 1, kind: input, shape index: {}]
  %s2 = inlined_call_operand.vmem [shape: f32[1,128], index: 2, kind: input, shape index: {}]
  %s3 = inlined_call_operand.vmem [shape: bf16[128,128], index: 3, kind: output, shape index: {}]
  %s4 = sld [smem:[#allocation0]]
  $region45: #{magic_point_forward.24} parent=0
    _
  %s6 = ssub.s32 1, %s4
  %s7 = scalar_select 0, %s6, %s4
  loop: start=0, step=1, limit=4
  $region2: #{magic_point_forward.24} parent=0 // loop_pre_header
    _
  $region3: #{magic_point_forward.24} parent=0 // loop_header
    %s9 = sphi 0, %s13
    %p10 = scmp.ge.s32.totalorder %s9, 4
    %s16 = sphi 0, %s28
    %s17 = sphi 0, %s24
    %s18 = sphi 0, %s16
    %s19 = sphi 0, %s17
    %s20 = sphi 0, %s18
    %s21 = sphi 0, %s19
    %s31 = sphi 0, %s33
    %s34 = sphi 0, %s31
    %s35 = sphi 0, %s34
    %s51 = sphi 0, %s35
    %s57 = sphi 0, %s59
    %s60 = sphi 0, %s57
    %s61 = sphi 0, %s60
    %s77 = sphi 0, %s61
    %s83 = sphi 0, %s85
    %s86 = sphi 0, %s83
    %s87 = sphi 0, %s86
    %s103 = sphi 0, %s87
    %s111 = sphi 0, %s113
    %s114 = sphi 0, %s111
    %s115 = sphi 0, %s114
    %s131 = sphi 0, %s115
  $region4: #{magic_point_forward.24} parent=0 // loop_header_branch
    %12 = sbr.rel (%p10) target = $region8
  $region5: #{magic_point_forward.24} parent=0 // loop_body
    %s14 = ssub.s32 %s9, 1
    %s15 = ssub.s32 %s9, 2
    %s22 = sadd.s32 1, %s17
    %p23 = scmp.ge.s32.totalorder %s22, 1
    %s24 = scalar_select %p23, 0, %s22
    %s25 = sadd.s32 1, %s16
    %s26 = scalar_select %p23, %s25, %s16
    %p27 = scmp.ge.s32.totalorder %s26, 2
    %s28 = scalar_select %p27, 0, %s26
    %s29 = ssub.s32 %s16, %s28
    %p30 = scmp.eq.s32.totalorder %s29, 0
    %s32 = sadd.s32 %s31, 1
    %s33 = scalar_select %p30, %s31, %s32
    %p36 = pneg %p30
    %p37 = scmp.eq.s32.totalorder %s9, 1
    %p38 = por %p36, %p37
    %p39 = scmp.ne.s32.totalorder %s31, %s34
    %p40 = scmp.eq.s32.totalorder %s9, 0
    %p41 = por %p39, %p40
    %p42 = scmp.ne.s32.totalorder %s31, %s34
    %p43 = scmp.eq.s32.totalorder %s14, 1
    %p44 = por %p42, %p43
    %p45 = scmp.ne.s32.totalorder %s34, %s35
    %p46 = scmp.eq.s32.totalorder %s14, 0
    %p47 = por %p45, %p46
    %p48 = scmp.ne.s32.totalorder %s34, %s35
    %p49 = scmp.eq.s32.totalorder %s15, 1
    %p50 = por %p48, %p49
    %p52 = scmp.ne.s32.totalorder %s35, %s51
    %p53 = scmp.eq.s32.totalorder %s15, 0
    %p54 = por %p52, %p53
    %s55 = ssub.s32 %s17, %s24
    %p56 = scmp.eq.s32.totalorder %s55, 0
    %s58 = sadd.s32 %s57, 1
    %s59 = scalar_select %p56, %s57, %s58
    %p62 = pneg %p56
    %p63 = scmp.eq.s32.totalorder %s9, 1
    %p64 = por %p62, %p63
    %p65 = scmp.ne.s32.totalorder %s57, %s60
    %p66 = scmp.eq.s32.totalorder %s9, 0
    %p67 = por %p65, %p66
    %p68 = scmp.ne.s32.totalorder %s57, %s60
    %p69 = scmp.eq.s32.totalorder %s14, 1
    %p70 = por %p68, %p69
    %p71 = scmp.ne.s32.totalorder %s60, %s61
    %p72 = scmp.eq.s32.totalorder %s14, 0
    %p73 = por %p71, %p72
    %p74 = scmp.ne.s32.totalorder %s60, %s61
    %p75 = scmp.eq.s32.totalorder %s15, 1
    %p76 = por %p74, %p75
    %p78 = scmp.ne.s32.totalorder %s61, %s77
    %p79 = scmp.eq.s32.totalorder %s15, 0
    %p80 = por %p78, %p79
    %s81 = ssub.s32 %s17, %s24
    %p82 = scmp.eq.s32.totalorder %s81, 0
    %s84 = sadd.s32 %s83, 1
    %s85 = scalar_select %p82, %s83, %s84
    %p88 = pneg %p82
    %p89 = scmp.eq.s32.totalorder %s9, 1
    %p90 = por %p88, %p89
    %p91 = scmp.ne.s32.totalorder %s83, %s86
    %p92 = scmp.eq.s32.totalorder %s9, 0
    %p93 = por %p91, %p92
    %p94 = scmp.ne.s32.totalorder %s83, %s86
    %p95 = scmp.eq.s32.totalorder %s14, 1
    %p96 = por %p94, %p95
    %p97 = scmp.ne.s32.totalorder %s86, %s87
    %p98 = scmp.eq.s32.totalorder %s14, 0
    %p99 = por %p97, %p98
    %p100 = scmp.ne.s32.totalorder %s86, %s87
    %p101 = scmp.eq.s32.totalorder %s15, 1
    %p102 = por %p100, %p101
    %p104 = scmp.ne.s32.totalorder %s87, %s103
    %p105 = scmp.eq.s32.totalorder %s15, 0
    %p106 = por %p104, %p105
    %s107 = ssub.s32 %s16, %s28
    %s108 = ssub.s32 %s17, %s24
    %s109 = sor.u32 %s107, %s108
    %p110 = scmp.eq.s32.totalorder %s109, 0
    %s112 = sadd.s32 %s111, 1
    %s113 = scalar_select %p110, %s111, %s112
    %p116 = pneg %p110
    %p117 = scmp.eq.s32.totalorder %s9, 1
    %p118 = por %p116, %p117
    %p119 = scmp.ne.s32.totalorder %s111, %s114
    %p120 = scmp.eq.s32.totalorder %s9, 0
    %p121 = por %p119, %p120
    %p122 = scmp.ne.s32.totalorder %s111, %s114
    %p123 = scmp.eq.s32.totalorder %s14, 1
    %p124 = por %p122, %p123
    %p125 = scmp.ne.s32.totalorder %s114, %s115
    %p126 = scmp.eq.s32.totalorder %s14, 0
    %p127 = por %p125, %p126
    %p128 = scmp.ne.s32.totalorder %s114, %s115
    %p129 = scmp.eq.s32.totalorder %s15, 1
    %p130 = por %p128, %p129
    %p132 = scmp.ne.s32.totalorder %s115, %s131
    %p133 = scmp.eq.s32.totalorder %s15, 0
    %p134 = por %p132, %p133
    %p135 = scmp.le.s32.totalorder 1, %s9
    %p136 = scmp.lt.s32.totalorder %s9, 3
    %p137 = pnand %p135, %p136
    %p138 = pneg %p137
    // Predicated region
    $region9: #{magic_point_forward.24} parent=5 // pred_check
      _
    $region10: #{magic_point_forward.24} parent=5 // pred_check_branch
      %140 = sbr.rel (%p137) target = $region12
    $region11: #{magic_point_forward.24} parent=5 // pred_region
      %s141 = ssub.s32 %s9, 1
      // Predicated region
      $region13: #{magic_point_forward.24} parent=11 // pred_check
        %p142 = pneg %p73
      $region14: #{magic_point_forward.24} parent=11 // pred_check_branch
        %144 = sbr.rel (%p142) target = $region16
      $region15: #{magic_point_forward.24} parent=11 // pred_region
        %p145 = scmp.lt.s32.totalorder %s19, 0
        %s146 = scalar_select %p145, %s19, 0
        %s147 = smul.addr %s146, 4
        %s148 = scalar_lea.vmem %s1, %s147
      $region16: #{magic_point_forward.24} parent=11 // pred_fallthru
        _
      // Predicated region
      $region17: #{magic_point_forward.24} parent=11 // pred_check
        %p149 = pneg %p99
      $region18: #{magic_point_forward.24} parent=11 // pred_check_branch
        %151 = sbr.rel (%p149) target = $region20
      $region19: #{magic_point_forward.24} parent=11 // pred_region
        %p152 = scmp.lt.s32.totalorder %s19, 0
        %s153 = scalar_select %p152, %s19, 0
        %s154 = scalar_lea.vmem %s2, %s153
      $region20: #{magic_point_forward.24} parent=11 // pred_fallthru
        _
    $region12: #{magic_point_forward.24} parent=5 // pred_fallthru
      _
    %p155 = scmp.lt.s32.totalorder %s9, 2
    // Predicated region
    $region21: #{magic_point_forward.24} parent=5 // pred_check
      %p156 = pneg %p155
    $region22: #{magic_point_forward.24} parent=5 // pred_check_branch
      %158 = sbr.rel (%p156) target = $region24
    $region23: #{magic_point_forward.24} parent=5 // pred_region
      // Predicated region
      $region25: #{magic_point_forward.24} parent=23 // pred_check
        %p159 = pneg %p41
      $region26: #{magic_point_forward.24} parent=23 // pred_check_branch
        %161 = sbr.rel (%p159) target = $region28
      $region27: #{magic_point_forward.24} parent=23 // pred_region
        %s162 = smul.u32 8, %s16
        %p163 = scmp.lt.s32.totalorder %s162, 15
        %s164 = scalar_select %p163, %s162, 15
        %s165 = smul.addr %s164, 4
        %s166 = scalar_lea.vmem %s0, %s165
        %s167 = smul.u32 8, %s16
      $region28: #{magic_point_forward.24} parent=23 // pred_fallthru
        _
    $region24: #{magic_point_forward.24} parent=5 // pred_fallthru
      _
    %p168 = scmp.le.s32.totalorder 1, %s9
    %p169 = scmp.lt.s32.totalorder %s9, 3
    %p170 = pnand %p168, %p169
    %p171 = pneg %p170
    // Predicated region
    $region29: #{magic_point_forward.24} parent=5 // pred_check
      _
    $region30: #{magic_point_forward.24} parent=5 // pred_check_branch
      %173 = sbr.rel (%p170) target = $region32
    $region31: #{magic_point_forward.24} parent=5 // pred_region
      %s174 = ssub.s32 %s9, 1
      %s175 = smul.u32 8, %s18
      %p176 = scmp.lt.s32.totalorder %s175, 15
      %s177 = scalar_select %p176, %s175, 15
      %s178 = smul.addr %s177, 4
      %s179 = scalar_lea.vmem %s0, %s178
      %p180 = pneg %p47
      %p181 = pneg %p44
      %p182 = scmp.lt.s32.totalorder %s19, 0
      %s183 = scalar_select %p182, %s19, 0
      %s184 = smul.addr %s183, 4
      %s185 = scalar_lea.vmem %s1, %s184
      %p186 = pneg %p73
      %p187 = pneg %p70
      %p188 = scmp.lt.s32.totalorder %s19, 0
      %s189 = scalar_select %p188, %s19, 0
      %s190 = scalar_lea.vmem %s2, %s189
      %p191 = pneg %p99
      %p192 = pneg %p96
      %p193 = pneg %p127
      %p194 = pneg %p124
      %s195 = smul.u32 8, %s18
      %p196 = scmp.lt.s32.totalorder %s195, 15
      %s197 = scalar_select %p196, %s195, 15
      %p198 = scmp.lt.s32.totalorder %s19, 0
      %s199 = scalar_select %p198, %s19, 0
      %s200 = sadd.s32 %s199, %s197
      %s201 = smul.addr %s200, 4
      %s202 = scalar_lea.vmem %s3, %s201
      %s203 = smul.u32 8, %s18
      %p204 = scmp.lt.s32.totalorder %s203, 15
      %s205 = scalar_select %p204, %s203, 15
      %s206 = smul.addr %s205, 4
      %s207 = scalar_lea.vmem %s0, %s206
      %s208 = smul.u32 8, %s18
      %p209 = scmp.lt.s32.totalorder %s19, 0
      %s210 = scalar_select %p209, %s19, 0
      %s211 = smul.addr %s210, 4
      %s212 = scalar_lea.vmem %s1, %s211
      %p213 = scmp.lt.s32.totalorder %s19, 0
      %s214 = scalar_select %p213, %s19, 0
      %s215 = scalar_lea.vmem %s2, %s214
      %s216 = smul.u32 8, %s18
      %p217 = scmp.lt.s32.totalorder %s216, 15
      %s218 = scalar_select %p217, %s216, 15
      %p219 = scmp.lt.s32.totalorder %s19, 0
      %s220 = scalar_select %p219, %s19, 0
      %s221 = sadd.s32 %s220, %s218
      %s222 = smul.addr %s221, 4
      %s223 = scalar_lea.vmem %s3, %s222
      %s224 = smul.u32 8, %s18
      %v226 = vld [vmem:[%s207] sm:$0xf]
      %v227 = vld [vmem:[%s207 + $0x4] sm:$0xf]
      %v228 = vld [vmem:[%s207 + $0x8] sm:$0xf]
      %v229 = vld [vmem:[%s207 + $0xc] sm:$0xf]
      %v230 = vld [vmem:[%s207 + $0x10] sm:$0xf]
      %v231 = vld [vmem:[%s207 + $0x14] sm:$0xf]
      %v232 = vld [vmem:[%s207 + $0x18] sm:$0xf]
      %v233 = vld [vmem:[%s207 + $0x1c] sm:$0xf]
      %v234 = vld [vmem:[%s212] sm:$0xf]
      %v235 = vld [vmem:[%s212 + $0x4] sm:$0xf]
      %v236 = vld [vmem:[%s212 + $0x8] sm:$0xf]
      %v237 = vld [vmem:[%s212 + $0xc] sm:$0xf]
      %v238 = vld [vmem:[%s215] sm:$0x1]
      %v240 = vlaneseq
      %v241 = vshrl.u32 %v240, 7
      %v242 = vsub.s32 0, %v241
      %v243 = vrot.slane %v238, %v242
      %v253 = vunpack.c.l.b16 %v226
      %v254 = vunpack.c.l.b16 %v227
      %v255 = vunpack.c.l.b16 %v228
      %v256 = vunpack.c.l.b16 %v229
      %v257 = vunpack.c.l.b16 %v230
      %v258 = vunpack.c.l.b16 %v231
      %v259 = vunpack.c.l.b16 %v232
      %v260 = vunpack.c.l.b16 %v233
      %v261 = vpack.c.b16 %v254, %v253
      %v262 = vpack.c.b16 %v256, %v255
      %v263 = vpack.c.b16 %v258, %v257
      %v264 = vpack.c.b16 %v260, %v259
      %v269 = vunpack.c.l.b16 %v234
      %v270 = vunpack.c.l.b16 %v235
      %v271 = vunpack.c.l.b16 %v236
      %v272 = vunpack.c.l.b16 %v237
      %v273 = vpack.c.b16 %v270, %v269
      %v274 = vpack.c.b16 %v272, %v271
      %vm277 = vcmask 261120
      %v279 = vsel %vm277, %v261, 0
      %v282 = vsel %vm277, %v262, 0
      %v285 = vsel %vm277, %v263, 0
      %v288 = vsel %vm277, %v264, 0
      %290 = vmatprep.subr.bf16.mxu0 0
      %291 = vmatpush1.bf16.msra.mxu0 0
      %292 = vmatprep.subr.bf16.mxu0 0
      %293 = vmatpush1.bf16.msra.mxu0 0
      %294 = vmatprep.subr.bf16.mxu0 0
      %295 = vmatpush1.bf16.msra.mxu0 0
      %296 = vmatprep.subr.bf16.mxu0 0
      %297 = vmatpush1.bf16.msra.mxu0 0
      %298 = vmatprep.subr.bf16.mxu0 0
      %299 = vmatpush1.bf16.msra.mxu0 0
      %300 = vmatprep.subr.bf16.mxu0 0
      %301 = vmatpush1.bf16.msra.mxu0 0
      %302 = vmatprep.subr.bf16.mxu0 0
      %303 = vmatpush1.bf16.msra.mxu0 %v274
      %304 = vmatprep.subr.bf16.mxu0 0
      %305 = vmatpush1.bf16.msra.mxu0 %v273
      %306 = vmatprep.subr.bf16.mxu0 0
      %307 = vmatpush2.bf16.msra.mxu0 0
      %308 = vmatprep.subr.bf16.mxu0 0
      %309 = vmatpush2.bf16.msra.mxu0 0
      %310 = vmatprep.subr.bf16.mxu0 0
      %311 = vmatpush2.bf16.msra.mxu0 0
      %312 = vmatprep.subr.bf16.mxu0 0
      %313 = vmatpush2.bf16.msra.mxu0 0
      %314 = vmatprep.subr.bf16.mxu0 0
      %315 = vmatpush2.bf16.msra.mxu0 0
      %316 = vmatprep.subr.bf16.mxu0 0
      %317 = vmatpush2.bf16.msra.mxu0 0
      %318 = vmatprep.subr.bf16.mxu0 0
      %319 = vmatpush2.bf16.msra.mxu0 0
      %320 = vmatprep.subr.bf16.mxu0 0
      %321 = vmatpush2.bf16.msra.mxu0 0
      %322 = vmatprep.mubr.bf16.mxu0 0
      %323 = vmatmul.mubr.bf16.gmra.mxu0 %v279
      %v324 = vpop.f32.mrf.mxu0
      %v325 = vadd.f32 %v243, %v324
      %v326 = vpop.f32.mrf.mxu0
      %v327 = vpop.f32.mrf.mxu0
      %v328 = vadd.f32 %v243, %v327
      %v329 = vpop.f32.mrf.mxu0
      %330 = vmatprep.mubr.bf16.mxu0 0
      %331 = vmatmul.mubr.bf16.gmra.mxu0 %v282
      %v332 = vpop.f32.mrf.mxu0
      %v333 = vadd.f32 %v243, %v332
      %v334 = vpop.f32.mrf.mxu0
      %v335 = vpop.f32.mrf.mxu0
      %v336 = vadd.f32 %v243, %v335
      %v337 = vpop.f32.mrf.mxu0
      %338 = vmatprep.mubr.bf16.mxu0 0
      %339 = vmatmul.mubr.bf16.gmra.mxu0 %v285
      %v340 = vpop.f32.mrf.mxu0
      %v341 = vadd.f32 %v243, %v340
      %v342 = vpop.f32.mrf.mxu0
      %v343 = vpop.f32.mrf.mxu0
      %v344 = vadd.f32 %v243, %v343
      %v345 = vpop.f32.mrf.mxu0
      %346 = vmatprep.mubr.bf16.mxu0 0
      %347 = vmatmul.mubr.bf16.gmra.mxu0 %v288
      %v348 = vpop.f32.mrf.mxu0
      %v349 = vadd.f32 %v243, %v348
      %v350 = vpop.f32.mrf.mxu0
      %v351 = vpop.f32.mrf.mxu0
      %v352 = vadd.f32 %v243, %v351
      %v353 = vpop.f32.mrf.mxu0
      %354 = vdwg.mxu0
      %v355 = vand.u32 2147483647, %v325
      %v356 = vand.u32 2147483647, %v328
      %v357 = vand.u32 2147483647, %v333
      %v358 = vand.u32 2147483647, %v336
      %v359 = vand.u32 2147483647, %v341
      %v360 = vand.u32 2147483647, %v344
      %v361 = vand.u32 2147483647, %v349
      %v362 = vand.u32 2147483647, %v352
      %v363 = vsub.f32 0.0, %v355
      %v364 = vsub.f32 0.0, %v356
      %v365 = vsub.f32 0.0, %v357
      %v366 = vsub.f32 0.0, %v358
      %v367 = vsub.f32 0.0, %v359
      %v368 = vsub.f32 0.0, %v360
      %v369 = vsub.f32 0.0, %v361
      %v370 = vsub.f32 0.0, %v362
      %v371 = vmul.f32 %v363, 1.442695
      %v372 = vpow.pop %v371
      %v373 = vmul.f32 %v364, 1.442695
      %v374 = vpow.pop %v373
      %v375 = vmul.f32 %v365, 1.442695
      %v376 = vpow.pop %v375
      %v377 = vmul.f32 %v366, 1.442695
      %v378 = vpow.pop %v377
      %v379 = vmul.f32 %v367, 1.442695
      %v380 = vpow.pop %v379
      %v381 = vmul.f32 %v368, 1.442695
      %v382 = vpow.pop %v381
      %v383 = vmul.f32 %v369, 1.442695
      %v384 = vpow.pop %v383
      %v385 = vmul.f32 %v370, 1.442695
      %v386 = vpow.pop %v385
      %v387 = vadd.f32 %v372, 1.0
      %v388 = vadd.f32 %v374, 1.0
      %v389 = vadd.f32 %v376, 1.0
      %v390 = vadd.f32 %v378, 1.0
      %v391 = vadd.f32 %v380, 1.0
      %v392 = vadd.f32 %v382, 1.0
      %v393 = vadd.f32 %v384, 1.0
      %v394 = vadd.f32 %v386, 1.0
      %v395 = vrcp.pop %v387
      %v396 = vrcp.pop %v388
      %v397 = vrcp.pop %v389
      %v398 = vrcp.pop %v390
      %v399 = vrcp.pop %v391
      %v400 = vrcp.pop %v392
      %v401 = vrcp.pop %v393
      %v402 = vrcp.pop %v394
      %vm403 = vcmp.ge.f32.partialorder %v325, 0.0
      %vm404 = vcmp.ge.f32.partialorder %v328, 0.0
      %vm405 = vcmp.ge.f32.partialorder %v333, 0.0
      %vm406 = vcmp.ge.f32.partialorder %v336, 0.0
      %vm407 = vcmp.ge.f32.partialorder %v341, 0.0
      %vm408 = vcmp.ge.f32.partialorder %v344, 0.0
      %vm409 = vcmp.ge.f32.partialorder %v349, 0.0
      %vm410 = vcmp.ge.f32.partialorder %v352, 0.0
      %v411 = vmul.f32 %v372, %v395
      %v412 = vmul.f32 %v374, %v396
      %v413 = vmul.f32 %v376, %v397
      %v414 = vmul.f32 %v378, %v398
      %v415 = vmul.f32 %v380, %v399
      %v416 = vmul.f32 %v382, %v400
      %v417 = vmul.f32 %v384, %v401
      %v418 = vmul.f32 %v386, %v402
      %v419 = vsel %vm403, %v395, %v411
      %v420 = vsel %vm404, %v396, %v412
      %v421 = vsel %vm405, %v397, %v413
      %v422 = vsel %vm406, %v398, %v414
      %v423 = vsel %vm407, %v399, %v415
      %v424 = vsel %vm408, %v400, %v416
      %v425 = vsel %vm409, %v401, %v417
      %v426 = vsel %vm410, %v402, %v418
      %v427 = vmul.f32 %v325, %v419
      %v428 = vmul.f32 %v328, %v420
      %v429 = vmul.f32 %v333, %v421
      %v430 = vmul.f32 %v336, %v422
      %v431 = vmul.f32 %v341, %v423
      %v432 = vmul.f32 %v344, %v424
      %v433 = vmul.f32 %v349, %v425
      %v434 = vmul.f32 %v352, %v426
      %v435 = vpack.c.bf16 %v428, %v427
      %v436 = vpack.c.bf16 %v430, %v429
      %v437 = vpack.c.bf16 %v432, %v431
      %v438 = vpack.c.bf16 %v434, %v433
      %v443 = vunpack.c.l.b16 %v435
      %v444 = vunpack.c.h.b16 %v435
      %v445 = vunpack.c.l.b16 %v436
      %v446 = vunpack.c.h.b16 %v436
      %v447 = vunpack.c.l.b16 %v437
      %v448 = vunpack.c.h.b16 %v437
      %v449 = vunpack.c.l.b16 %v438
      %v450 = vunpack.c.h.b16 %v438
      %v451 = vpack.c.b16 %v443, %v443
      %v452 = vpack.c.b16 %v444, %v444
      %v453 = vpack.c.b16 %v445, %v445
      %v454 = vpack.c.b16 %v446, %v446
      %v455 = vpack.c.b16 %v447, %v447
      %v456 = vpack.c.b16 %v448, %v448
      %v457 = vpack.c.b16 %v449, %v449
      %v458 = vpack.c.b16 %v450, %v450
      %467 = vst [vmem:[%s223] sm:$0xf] %v451
      %468 = vst [vmem:[%s223 + $0x4] sm:$0xf] %v452
      %469 = vst [vmem:[%s223 + $0x8] sm:$0xf] %v453
      %470 = vst [vmem:[%s223 + $0xc] sm:$0xf] %v454
      %471 = vst [vmem:[%s223 + $0x10] sm:$0xf] %v455
      %472 = vst [vmem:[%s223 + $0x14] sm:$0xf] %v456
      %473 = vst [vmem:[%s223 + $0x18] sm:$0xf] %v457
      %474 = vst [vmem:[%s223 + $0x1c] sm:$0xf] %v458
      %s475 = smul.u32 8, %s18
      %p476 = scmp.lt.s32.totalorder %s475, 15
      %s477 = scalar_select %p476, %s475, 15
      %p478 = scmp.lt.s32.totalorder %s19, 0
      %s479 = scalar_select %p478, %s19, 0
      %s480 = sadd.s32 %s479, %s477
      %s481 = smul.addr %s480, 4
      %s482 = scalar_lea.vmem %s3, %s481
      // Predicated region
      $region33: #{magic_point_forward.24} parent=31 // pred_check
        %p483 = pneg %p124
      $region34: #{magic_point_forward.24} parent=31 // pred_check_branch
        %485 = sbr.rel (%p483) target = $region36
      $region35: #{magic_point_forward.24} parent=31 // pred_region
        %s486 = smul.u32 8, %s18
      $region36: #{magic_point_forward.24} parent=31 // pred_fallthru
        _
    $region32: #{magic_point_forward.24} parent=5 // pred_fallthru
      _
    %p487 = scmp.le.s32.totalorder 2, %s9
    // Predicated region
    $region37: #{magic_point_forward.24} parent=5 // pred_check
      %p488 = pneg %p487
    $region38: #{magic_point_forward.24} parent=5 // pred_check_branch
      %490 = sbr.rel (%p488) target = $region40
    $region39: #{magic_point_forward.24} parent=5 // pred_region
      %s491 = ssub.s32 %s9, 2
      // Predicated region
      $region41: #{magic_point_forward.24} parent=39 // pred_check
        %p492 = pneg %p130
      $region42: #{magic_point_forward.24} parent=39 // pred_check_branch
        %494 = sbr.rel (%p492) target = $region44
      $region43: #{magic_point_forward.24} parent=39 // pred_region
        %s495 = smul.u32 8, %s20
        %p496 = scmp.lt.s32.totalorder %s495, 15
        %s497 = scalar_select %p496, %s495, 15
        %p498 = scmp.lt.s32.totalorder %s21, 0
        %s499 = scalar_select %p498, %s21, 0
        %s500 = sadd.s32 %s499, %s497
        %s501 = smul.addr %s500, 4
        %s502 = scalar_lea.vmem %s3, %s501
      $region44: #{magic_point_forward.24} parent=39 // pred_fallthru
        _
    $region40: #{magic_point_forward.24} parent=5 // pred_fallthru
      _
  $region6: #{magic_point_forward.24} parent=0 // loop_footer
    %s13 = sadd.s32 1, %s9
  $region7: #{magic_point_forward.24} parent=0 // loop_footer_branch
    %8 = sbr.rel target = $region3
  $region8: #{magic_point_forward.24} parent=0 // loop_exit
    _

// kernel: magic_point_forward.25
$region0: #{magic_point_forward.25}
  #allocation0 [shape = 'u32[]', space=smem, size = 0x4, offset = 0x4, fixed_abs, tag = 'smem constant byte address 0x4 - core index']
  #allocation1 [shape = 'u32[144,128]{1,0:T(1,128)}', space=vmem, size = 0x12000, scoped, tag = 'internal scratch']
  %s0 = inlined_call_operand.vmem [shape: bf16[2,102,24], index: 0, kind: input, shape index: {}]
  %s1 = inlined_call_operand.vmem [shape: bf16[9,24,24], index: 1, kind: input, shape index: {}]
  %s2 = inlined_call_operand.vmem [shape: f32[1,24], index: 2, kind: input, shape index: {}]
  %s3 = inlined_call_operand.vmem [shape: bf16[2,80,24], index: 3, kind: output, shape index: {}]
  %s4 = sld [smem:[#allocation0]]
  $region45: #{magic_point_forward.25} parent=0
    _
  %s6 = ssub.s32 1, %s4
  %s7 = scalar_select 0, %s6, %s4
  loop: start=0, step=1, limit=4
  $region2: #{magic_point_forward.25} parent=0 // loop_pre_header
    _
  $region3: #{magic_point_forward.25} parent=0 // loop_header
    %s9 = sphi 0, %s13
    %p10 = scmp.ge.s32.totalorder %s9, 4
    %s19 = sphi 0, %s21
    %s22 = sphi 0, %s19
    %s23 = sphi 0, %s22
    %s39 = sphi 0, %s23
    %s43 = sphi 0, %s43
    %s45 = sphi 0, %s43
    %s46 = sphi 0, %s45
    %s60 = sphi 0, %s46
    %s64 = sphi 0, %s64
    %s66 = sphi 0, %s64
    %s67 = sphi 0, %s66
    %s81 = sphi 0, %s67
    %s87 = sphi 0, %s89
    %s90 = sphi 0, %s87
    %s91 = sphi 0, %s90
    %s107 = sphi 0, %s91
  $region4: #{magic_point_forward.25} parent=0 // loop_header_branch
    %12 = sbr.rel (%p10) target = $region8
  $region5: #{magic_point_forward.25} parent=0 // loop_body
    %s14 = ssub.s32 %s9, 1
    %s15 = ssub.s32 %s9, 2
    %s16 = sadd.s32 %s9, 1
    %s17 = ssub.s32 %s9, %s16
    %p18 = scmp.eq.s32.totalorder %s17, 0
    %s20 = sadd.s32 %s19, 1
    %s21 = scalar_select %p18, %s19, %s20
    %p24 = pneg %p18
    %p25 = scmp.eq.s32.totalorder %s9, 1
    %p26 = por %p24, %p25
    %p27 = scmp.ne.s32.totalorder %s19, %s22
    %p28 = scmp.eq.s32.totalorder %s9, 0
    %p29 = por %p27, %p28
    %p30 = scmp.ne.s32.totalorder %s19, %s22
    %p31 = scmp.eq.s32.totalorder %s14, 1
    %p32 = por %p30, %p31
    %p33 = scmp.ne.s32.totalorder %s22, %s23
    %p34 = scmp.eq.s32.totalorder %s14, 0
    %p35 = por %p33, %p34
    %p36 = scmp.ne.s32.totalorder %s22, %s23
    %p37 = scmp.eq.s32.totalorder %s15, 1
    %p38 = por %p36, %p37
    %p40 = scmp.ne.s32.totalorder %s23, %s39
    %p41 = scmp.eq.s32.totalorder %s15, 0
    %p42 = por %p40, %p41
    %s44 = sadd.s32 %s43, 1
    %p47 = scmp.eq.s32.totalorder %s9, 1
    %p48 = scmp.ne.s32.totalorder %s43, %s45
    %p49 = scmp.eq.s32.totalorder %s9, 0
    %p50 = por %p48, %p49
    %p51 = scmp.ne.s32.totalorder %s43, %s45
    %p52 = scmp.eq.s32.totalorder %s14, 1
    %p53 = por %p51, %p52
    %p54 = scmp.ne.s32.totalorder %s45, %s46
    %p55 = scmp.eq.s32.totalorder %s14, 0
    %p56 = por %p54, %p55
    %p57 = scmp.ne.s32.totalorder %s45, %s46
    %p58 = scmp.eq.s32.totalorder %s15, 1
    %p59 = por %p57, %p58
    %p61 = scmp.ne.s32.totalorder %s46, %s60
    %p62 = scmp.eq.s32.totalorder %s15, 0
    %p63 = por %p61, %p62
    %s65 = sadd.s32 %s64, 1
    %p68 = scmp.eq.s32.totalorder %s9, 1
    %p69 = scmp.ne.s32.totalorder %s64, %s66
    %p70 = scmp.eq.s32.totalorder %s9, 0
    %p71 = por %p69, %p70
    %p72 = scmp.ne.s32.totalorder %s64, %s66
    %p73 = scmp.eq.s32.totalorder %s14, 1
    %p74 = por %p72, %p73
    %p75 = scmp.ne.s32.totalorder %s66, %s67
    %p76 = scmp.eq.s32.totalorder %s14, 0
    %p77 = por %p75, %p76
    %p78 = scmp.ne.s32.totalorder %s66, %s67
    %p79 = scmp.eq.s32.totalorder %s15, 1
    %p80 = por %p78, %p79
    %p82 = scmp.ne.s32.totalorder %s67, %s81
    %p83 = scmp.eq.s32.totalorder %s15, 0
    %p84 = por %p82, %p83
    %s85 = ssub.s32 %s9, %s16
    %p86 = scmp.eq.s32.totalorder %s85, 0
    %s88 = sadd.s32 %s87, 1
    %s89 = scalar_select %p86, %s87, %s88
    %p92 = pneg %p86
    %p93 = scmp.eq.s32.totalorder %s9, 1
    %p94 = por %p92, %p93
    %p95 = scmp.ne.s32.totalorder %s87, %s90
    %p96 = scmp.eq.s32.totalorder %s9, 0
    %p97 = por %p95, %p96
    %p98 = scmp.ne.s32.totalorder %s87, %s90
    %p99 = scmp.eq.s32.totalorder %s14, 1
    %p100 = por %p98, %p99
    %p101 = scmp.ne.s32.totalorder %s90, %s91
    %p102 = scmp.eq.s32.totalorder %s14, 0
    %p103 = por %p101, %p102
    %p104 = scmp.ne.s32.totalorder %s90, %s91
    %p105 = scmp.eq.s32.totalorder %s15, 1
    %p106 = por %p104, %p105
    %p108 = scmp.ne.s32.totalorder %s91, %s107
    %p109 = scmp.eq.s32.totalorder %s15, 0
    %p110 = por %p108, %p109
    %p111 = scmp.le.s32.totalorder 1, %s9
    %p112 = scmp.lt.s32.totalorder %s9, 3
    %p113 = pnand %p111, %p112
    %p114 = pneg %p113
    // Predicated region
    $region9: #{magic_point_forward.25} parent=5 // pred_check
      _
    $region10: #{magic_point_forward.25} parent=5 // pred_check_branch
      %116 = sbr.rel (%p113) target = $region12
    $region11: #{magic_point_forward.25} parent=5 // pred_region
      %s117 = ssub.s32 %s9, 1
      // Predicated region
      $region13: #{magic_point_forward.25} parent=11 // pred_check
        %p118 = pneg %p56
      $region14: #{magic_point_forward.25} parent=11 // pred_check_branch
        %120 = sbr.rel (%p118) target = $region16
      $region15: #{magic_point_forward.25} parent=11 // pred_region
        _
      $region16: #{magic_point_forward.25} parent=11 // pred_fallthru
        _
      // Predicated region
      $region17: #{magic_point_forward.25} parent=11 // pred_check
        %p121 = pneg %p77
      $region18: #{magic_point_forward.25} parent=11 // pred_check_branch
        %123 = sbr.rel (%p121) target = $region20
      $region19: #{magic_point_forward.25} parent=11 // pred_region
        _
      $region20: #{magic_point_forward.25} parent=11 // pred_fallthru
        _
    $region12: #{magic_point_forward.25} parent=5 // pred_fallthru
      _
    %p124 = scmp.lt.s32.totalorder %s9, 2
    // Predicated region
    $region21: #{magic_point_forward.25} parent=5 // pred_check
      %p125 = pneg %p124
    $region22: #{magic_point_forward.25} parent=5 // pred_check_branch
      %127 = sbr.rel (%p125) target = $region24
    $region23: #{magic_point_forward.25} parent=5 // pred_region
      // Predicated region
      $region25: #{magic_point_forward.25} parent=23 // pred_check
        %p128 = pneg %p29
      $region26: #{magic_point_forward.25} parent=23 // pred_check_branch
        %130 = sbr.rel (%p128) target = $region28
      $region27: #{magic_point_forward.25} parent=23 // pred_region
        %p131 = scmp.lt.s32.totalorder %s9, 1
        %s132 = scalar_select %p131, %s9, 1
        %s133 = smul.addr %s132, 13
        %s134 = smul.addr %s133, 4
        %s135 = scalar_lea.vmem %s0, %s134
      $region28: #{magic_point_forward.25} parent=23 // pred_fallthru
        _
    $region24: #{magic_point_forward.25} parent=5 // pred_fallthru
      _
    %p136 = scmp.le.s32.totalorder 1, %s9
    %p137 = scmp.lt.s32.totalorder %s9, 3
    %p138 = pnand %p136, %p137
    %p139 = pneg %p138
    // Predicated region
    $region29: #{magic_point_forward.25} parent=5 // pred_check
      _
    $region30: #{magic_point_forward.25} parent=5 // pred_check_branch
      %141 = sbr.rel (%p138) target = $region32
    $region31: #{magic_point_forward.25} parent=5 // pred_region
      %s142 = ssub.s32 %s9, 1
      %p143 = scmp.lt.s32.totalorder %s14, 1
      %s144 = scalar_select %p143, %s14, 1
      %s145 = smul.addr %s144, 13
      %s146 = smul.addr %s145, 4
      %s147 = scalar_lea.vmem %s0, %s146
      %p148 = pneg %p35
      %p149 = pneg %p32
      %p150 = pneg %p56
      %p151 = pneg %p53
      %p152 = pneg %p77
      %p153 = pneg %p74
      %p154 = pneg %p103
      %p155 = pneg %p100
      %p156 = scmp.lt.s32.totalorder %s14, 1
      %s157 = scalar_select %p156, %s14, 1
      %s158 = smul.addr %s157, 10
      %s159 = smul.addr %s158, 4
      %s160 = scalar_lea.vmem %s3, %s159
      %p161 = scmp.lt.s32.totalorder %s14, 1
      %s162 = scalar_select %p161, %s14, 1
      %s163 = smul.addr %s162, 13
      %s164 = smul.addr %s163, 4
      %s165 = scalar_lea.vmem %s0, %s164
      %p166 = scmp.lt.s32.totalorder %s14, 1
      %s167 = scalar_select %p166, %s14, 1
      %s168 = smul.addr %s167, 10
      %s169 = smul.addr %s168, 4
      %s170 = scalar_lea.vmem %s3, %s169
      %v172 = vld [vmem:[%s165] sm:$0xf]
      %v173 = vld [vmem:[%s165 + $0x4] sm:$0xf]
      %v174 = vld [vmem:[%s165 + $0x8] sm:$0xf]
      %v175 = vld [vmem:[%s165 + $0xc] sm:$0xf]
      %v176 = vld [vmem:[%s165 + $0x10] sm:$0xf]
      %v177 = vld [vmem:[%s165 + $0x14] sm:$0xf]
      %v178 = vld [vmem:[%s165 + $0x18] sm:$0xf]
      %v179 = vld [vmem:[%s165 + $0x1c] sm:$0xf]
      %v180 = vld [vmem:[%s165 + $0x20] sm:$0xf]
      %v181 = vld [vmem:[%s165 + $0x24] sm:$0xf]
      %v182 = vld [vmem:[%s165 + $0x28] sm:$0xf]
      %v183 = vld [vmem:[%s165 + $0x2c] sm:$0xf]
      %v184 = vld [vmem:[%s165 + $0x30] sm:$0x7]
      %v185 = vld [vmem:[%s1] sm:$0xf]
      %v186 = vld [vmem:[%s1 + $0x4] sm:$0xf]
      %v187 = vld [vmem:[%s1 + $0x8] sm:$0xf]
      %s188 = scalar_lea.vmem %s1, 12
      %v189 = vld [vmem:[%s188] sm:$0xf]
      %v190 = vld [vmem:[%s188 + $0x4] sm:$0xf]
      %v191 = vld [vmem:[%s188 + $0x8] sm:$0xf]
      %v203 = vunpack.c.l.b16 %v172
      %v204 = vunpack.c.l.b16 %v173
      %v205 = vunpack.c.l.b16 %v174
      %v206 = vunpack.c.l.b16 %v175
      %v207 = vunpack.c.l.b16 %v176
      %v208 = vunpack.c.l.b16 %v177
      %v209 = vunpack.c.l.b16 %v178
      %v210 = vunpack.c.l.b16 %v179
      %v211 = vunpack.c.l.b16 %v180
      %v212 = vunpack.c.l.b16 %v181
      %v213 = vunpack.c.l.b16 %v182
      %v214 = vpack.c.b16 %v204, %v203
      %v215 = vpack.c.b16 %v206, %v205
      %v216 = vpack.c.b16 %v208, %v207
      %v217 = vpack.c.b16 %v210, %v209
      %v218 = vpack.c.b16 %v212, %v211
      %v219 = vpack.c.b16 %v213, %v213
      %vm220 = vsmask.f32 7424
      %v222 = vshrl.u32 %v214, 16
      %v224 = vshll.u32 %v214, 16
      %v226 = vrot.slane %v224, 1
      %v227 = vor.u32 %v222, %v226
      %v229 = vshll.u32 %v215, 16
      %v231 = vrot.slane %v229, 1
      %v232 = vsel %vm220, %v227, %v231
      %v233 = vshrl.u32 %v215, 16
      %v235 = vor.u32 %v233, %v231
      %v237 = vshll.u32 %v216, 16
      %v239 = vrot.slane %v237, 1
      %v240 = vsel %vm220, %v235, %v239
      %v241 = vshrl.u32 %v216, 16
      %v243 = vor.u32 %v241, %v239
      %v245 = vshll.u32 %v217, 16
      %v247 = vrot.slane %v245, 1
      %v248 = vsel %vm220, %v243, %v247
      %v249 = vshrl.u32 %v217, 16
      %v251 = vor.u32 %v249, %v247
      %v253 = vshll.u32 %v218, 16
      %v255 = vrot.slane %v253, 1
      %v256 = vsel %vm220, %v251, %v255
      %v257 = vshrl.u32 %v218, 16
      %v259 = vor.u32 %v257, %v255
      %v261 = vshll.u32 %v219, 16
      %v263 = vrot.slane %v261, 1
      %v264 = vsel %vm220, %v259, %v263
      %v268 = vunpack.c.l.b16 %v189
      %v269 = vunpack.c.l.b16 %v190
      %v270 = vunpack.c.l.b16 %v191
      %v271 = vpack.c.b16 %v269, %v268
      %v272 = vpack.c.b16 %v270, %v270
      %vm274 = vcmask 195584
      %v276 = vsel %vm274, %v232, 0
      %v279 = vsel %vm274, %v240, 0
      %v282 = vsel %vm274, %v248, 0
      %v285 = vsel %vm274, %v256, 0
      %v288 = vsel %vm274, %v264, 0
      %vm290 = vcmask 1043456
      %v292 = vsel %vm290, %v272, 0
      %294 = vmatprep.subr.bf16.mxu0 0
      %295 = vmatpush1.bf16.msra.mxu0 0
      %296 = vmatprep.subr.bf16.mxu0 0
      %297 = vmatpush1.bf16.msra.mxu0 0
      %298 = vmatprep.subr.bf16.mxu0 0
      %299 = vmatpush1.bf16.msra.mxu0 0
      %300 = vmatprep.subr.bf16.mxu0 0
      %301 = vmatpush1.bf16.msra.mxu0 0
      %302 = vmatprep.subr.bf16.mxu0 0
      %303 = vmatpush1.bf16.msra.mxu0 0
      %304 = vmatprep.subr.bf16.mxu0 0
      %305 = vmatpush1.bf16.msra.mxu0 0
      %306 = vmatprep.subr.bf16.mxu0 0
      %307 = vmatpush1.bf16.msra.mxu0 %v292
      %308 = vmatprep.subr.bf16.mxu0 0
      %309 = vmatpush1.bf16.msra.mxu0 %v271
      %310 = vmatprep.subr.bf16.mxu0 0
      %311 = vmatpush2.bf16.msra.mxu0 0
      %312 = vmatprep.subr.bf16.mxu0 0
      %313 = vmatpush2.bf16.msra.mxu0 0
      %314 = vmatprep.subr.bf16.mxu0 0
      %315 = vmatpush2.bf16.msra.mxu0 0
      %316 = vmatprep.subr.bf16.mxu0 0
      %317 = vmatpush2.bf16.msra.mxu0 0
      %318 = vmatprep.subr.bf16.mxu0 0
      %319 = vmatpush2.bf16.msra.mxu0 0
      %320 = vmatprep.subr.bf16.mxu0 0
      %321 = vmatpush2.bf16.msra.mxu0 0
      %322 = vmatprep.subr.bf16.mxu0 0
      %323 = vmatpush2.bf16.msra.mxu0 0
      %324 = vmatprep.subr.bf16.mxu0 0
      %325 = vmatpush2.bf16.msra.mxu0 0
      %326 = vmatprep.mubr.bf16.mxu0 0
      %327 = vmatmul.mubr.bf16.gmra.mxu0 %v276
      %v328 = vpop.f32.mrf.mxu0
      %v329 = vadd.f32 0.0, %v328
      %v330 = vpop.f32.mrf.mxu0
      %v331 = vpop.f32.mrf.mxu0
      %v332 = vadd.f32 0.0, %v331
      %v333 = vpop.f32.mrf.mxu0
      %334 = vmatprep.mubr.bf16.mxu0 0
      %335 = vmatmul.mubr.bf16.gmra.mxu0 %v279
      %v336 = vpop.f32.mrf.mxu0
      %v337 = vadd.f32 0.0, %v336
      %v338 = vpop.f32.mrf.mxu0
      %v339 = vpop.f32.mrf.mxu0
      %v340 = vadd.f32 0.0, %v339
      %v341 = vpop.f32.mrf.mxu0
      %342 = vmatprep.mubr.bf16.mxu0 0
      %343 = vmatmul.mubr.bf16.gmra.mxu0 %v282
      %v344 = vpop.f32.mrf.mxu0
      %v345 = vadd.f32 0.0, %v344
      %v346 = vpop.f32.mrf.mxu0
      %v347 = vpop.f32.mrf.mxu0
      %v348 = vadd.f32 0.0, %v347
      %v349 = vpop.f32.mrf.mxu0
      %350 = vmatprep.mubr.bf16.mxu0 0
      %351 = vmatmul.mubr.bf16.gmra.mxu0 %v285
      %v352 = vpop.f32.mrf.mxu0
      %v353 = vadd.f32 0.0, %v352
      %v354 = vpop.f32.mrf.mxu0
      %v355 = vpop.f32.mrf.mxu0
      %v356 = vadd.f32 0.0, %v355
      %v357 = vpop.f32.mrf.mxu0
      %358 = vmatprep.mubr.bf16.mxu0 0
      %359 = vmatmul.mubr.bf16.gmra.mxu0 %v288
      %v360 = vpop.f32.mrf.mxu0
      %v361 = vadd.f32 0.0, %v360
      %v362 = vpop.f32.mrf.mxu0
      %v363 = vpop.f32.mrf.mxu0
      %v364 = vadd.f32 0.0, %v363
      %v365 = vpop.f32.mrf.mxu0
      %366 = vdwg.mxu0
      %v370 = vunpack.c.l.b16 %v185
      %v371 = vunpack.c.l.b16 %v186
      %v372 = vunpack.c.l.b16 %v187
      %v373 = vpack.c.b16 %v371, %v370
      %v374 = vpack.c.b16 %v372, %v372
      %v376 = vsel %vm274, %v214, 0
      %v378 = vsel %vm274, %v215, 0
      %v380 = vsel %vm274, %v216, 0
      %v382 = vsel %vm274, %v217, 0
      %v384 = vsel %vm274, %v218, 0
      %v387 = vsel %vm290, %v374, 0
      %389 = vmatprep.subr.bf16.mxu0 0
      %390 = vmatpush1.bf16.msra.mxu0 0
      %391 = vmatprep.subr.bf16.mxu0 0
      %392 = vmatpush1.bf16.msra.mxu0 0
      %393 = vmatprep.subr.bf16.mxu0 0
      %394 = vmatpush1.bf16.msra.mxu0 0
      %395 = vmatprep.subr.bf16.mxu0 0
      %396 = vmatpush1.bf16.msra.mxu0 0
      %397 = vmatprep.subr.bf16.mxu0 0
      %398 = vmatpush1.bf16.msra.mxu0 0
      %399 = vmatprep.subr.bf16.mxu0 0
      %400 = vmatpush1.bf16.msra.mxu0 0
      %401 = vmatprep.subr.bf16.mxu0 0
      %402 = vmatpush1.bf16.msra.mxu0 %v387
      %403 = vmatprep.subr.bf16.mxu0 0
      %404 = vmatpush1.bf16.msra.mxu0 %v373
      %405 = vmatprep.subr.bf16.mxu0 0
      %406 = vmatpush2.bf16.msra.mxu0 0
      %407 = vmatprep.subr.bf16.mxu0 0
      %408 = vmatpush2.bf16.msra.mxu0 0
      %409 = vmatprep.subr.bf16.mxu0 0
      %410 = vmatpush2.bf16.msra.mxu0 0
      %411 = vmatprep.subr.bf16.mxu0 0
      %412 = vmatpush2.bf16.msra.mxu0 0
      %413 = vmatprep.subr.bf16.mxu0 0
      %414 = vmatpush2.bf16.msra.mxu0 0
      %415 = vmatprep.subr.bf16.mxu0 0
      %416 = vmatpush2.bf16.msra.mxu0 0
      %417 = vmatprep.subr.bf16.mxu0 0
      %418 = vmatpush2.bf16.msra.mxu0 0
      %419 = vmatprep.subr.bf16.mxu0 0
      %420 = vmatpush2.bf16.msra.mxu0 0
      %421 = vmatprep.mubr.bf16.mxu0 0
      %422 = vmatmul.mubr.bf16.gmra.mxu0 %v376
      %v423 = vpop.f32.mrf.mxu0
      %v424 = vadd.f32 %v329, %v423
      %v425 = vpop.f32.mrf.mxu0
      %v426 = vpop.f32.mrf.mxu0
      %v427 = vadd.f32 %v332, %v426
      %v428 = vpop.f32.mrf.mxu0
      %429 = vmatprep.mubr.bf16.mxu0 0
      %430 = vmatmul.mubr.bf16.gmra.mxu0 %v378
      %v431 = vpop.f32.mrf.mxu0
      %v432 = vadd.f32 %v337, %v431
      %v433 = vpop.f32.mrf.mxu0
      %v434 = vpop.f32.mrf.mxu0
      %v435 = vadd.f32 %v340, %v434
      %v436 = vpop.f32.mrf.mxu0
      %437 = vmatprep.mubr.bf16.mxu0 0
      %438 = vmatmul.mubr.bf16.gmra.mxu0 %v380
      %v439 = vpop.f32.mrf.mxu0
      %v440 = vadd.f32 %v345, %v439
      %v441 = vpop.f32.mrf.mxu0
      %v442 = vpop.f32.mrf.mxu0
      %v443 = vadd.f32 %v348, %v442
      %v444 = vpop.f32.mrf.mxu0
      %445 = vmatprep.mubr.bf16.mxu0 0
      %446 = vmatmul.mubr.bf16.gmra.mxu0 %v382
      %v447 = vpop.f32.mrf.mxu0
      %v448 = vadd.f32 %v353, %v447
      %v449 = vpop.f32.mrf.mxu0
      %v450 = vpop.f32.mrf.mxu0
      %v451 = vadd.f32 %v356, %v450
      %v452 = vpop.f32.mrf.mxu0
      %453 = vmatprep.mubr.bf16.mxu0 0
      %454 = vmatmul.mubr.bf16.gmra.mxu0 %v384
      %v455 = vpop.f32.mrf.mxu0
      %v456 = vadd.f32 %v361, %v455
      %v457 = vpop.f32.mrf.mxu0
      %v458 = vpop.f32.mrf.mxu0
      %v459 = vadd.f32 %v364, %v458
      %v460 = vpop.f32.mrf.mxu0
      %461 = vdwg.mxu0
      %s462 = scalar_lea.vmem %s1, 24
      %v463 = vld [vmem:[%s462] sm:$0xf]
      %v464 = vld [vmem:[%s462 + $0x4] sm:$0xf]
      %v465 = vld [vmem:[%s462 + $0x8] sm:$0xf]
      %vm466 = vcmask 1046528
      %v467 = vrot.slane %v214, 1
      %v468 = vrot.slane %v215, 1
      %v469 = vsel %vm466, %v467, %v468
      %v470 = vrot.slane %v216, 1
      %v471 = vsel %vm466, %v468, %v470
      %v472 = vrot.slane %v217, 1
      %v473 = vsel %vm466, %v470, %v472
      %v474 = vrot.slane %v218, 1
      %v475 = vsel %vm466, %v472, %v474
      %v476 = vrot.slane %v219, 1
      %v477 = vsel %vm466, %v474, %v476
      %v481 = vunpack.c.l.b16 %v463
      %v482 = vunpack.c.l.b16 %v464
      %v483 = vunpack.c.l.b16 %v465
      %v484 = vpack.c.b16 %v482, %v481
      %v485 = vpack.c.b16 %v483, %v483
      %v488 = vsel %vm274, %v469, 0
      %v491 = vsel %vm274, %v471, 0
      %v494 = vsel %vm274, %v473, 0
      %v497 = vsel %vm274, %v475, 0
      %v500 = vsel %vm274, %v477, 0
      %v503 = vsel %vm290, %v485, 0
      %505 = vmatprep.subr.bf16.mxu0 0
      %506 = vmatpush1.bf16.msra.mxu0 0
      %507 = vmatprep.subr.bf16.mxu0 0
      %508 = vmatpush1.bf16.msra.mxu0 0
      %509 = vmatprep.subr.bf16.mxu0 0
      %510 = vmatpush1.bf16.msra.mxu0 0
      %511 = vmatprep.subr.bf16.mxu0 0
      %512 = vmatpush1.bf16.msra.mxu0 0
      %513 = vmatprep.subr.bf16.mxu0 0
      %514 = vmatpush1.bf16.msra.mxu0 0
      %515 = vmatprep.subr.bf16.mxu0 0
      %516 = vmatpush1.bf16.msra.mxu0 0
      %517 = vmatprep.subr.bf16.mxu0 0
      %518 = vmatpush1.bf16.msra.mxu0 %v503
      %519 = vmatprep.subr.bf16.mxu0 0
      %520 = vmatpush1.bf16.msra.mxu0 %v484
      %521 = vmatprep.subr.bf16.mxu0 0
      %522 = vmatpush2.bf16.msra.mxu0 0
      %523 = vmatprep.subr.bf16.mxu0 0
      %524 = vmatpush2.bf16.msra.mxu0 0
      %525 = vmatprep.subr.bf16.mxu0 0
      %526 = vmatpush2.bf16.msra.mxu0 0
      %527 = vmatprep.subr.bf16.mxu0 0
      %528 = vmatpush2.bf16.msra.mxu0 0
      %529 = vmatprep.subr.bf16.mxu0 0
      %530 = vmatpush2.bf16.msra.mxu0 0
      %531 = vmatprep.subr.bf16.mxu0 0
      %532 = vmatpush2.bf16.msra.mxu0 0
      %533 = vmatprep.subr.bf16.mxu0 0
      %534 = vmatpush2.bf16.msra.mxu0 0
      %535 = vmatprep.subr.bf16.mxu0 0
      %536 = vmatpush2.bf16.msra.mxu0 0
      %537 = vmatprep.mubr.bf16.mxu0 0
      %538 = vmatmul.mubr.bf16.gmra.mxu0 %v488
      %v539 = vpop.f32.mrf.mxu0
      %v540 = vadd.f32 0.0, %v539
      %v541 = vpop.f32.mrf.mxu0
      %v542 = vpop.f32.mrf.mxu0
      %v543 = vadd.f32 0.0, %v542
      %v544 = vpop.f32.mrf.mxu0
      %545 = vmatprep.mubr.bf16.mxu0 0
      %546 = vmatmul.mubr.bf16.gmra.mxu0 %v491
      %v547 = vpop.f32.mrf.mxu0
      %v548 = vadd.f32 0.0, %v547
      %v549 = vpop.f32.mrf.mxu0
      %v550 = vpop.f32.mrf.mxu0
      %v551 = vadd.f32 0.0, %v550
      %v552 = vpop.f32.mrf.mxu0
      %553 = vmatprep.mubr.bf16.mxu0 0
      %554 = vmatmul.mubr.bf16.gmra.mxu0 %v494
      %v555 = vpop.f32.mrf.mxu0
      %v556 = vadd.f32 0.0, %v555
      %v557 = vpop.f32.mrf.mxu0
      %v558 = vpop.f32.mrf.mxu0
      %v559 = vadd.f32 0.0, %v558
      %v560 = vpop.f32.mrf.mxu0
      %561 = vmatprep.mubr.bf16.mxu0 0
      %562 = vmatmul.mubr.bf16.gmra.mxu0 %v497
      %v563 = vpop.f32.mrf.mxu0
      %v564 = vadd.f32 0.0, %v563
      %v565 = vpop.f32.mrf.mxu0
      %v566 = vpop.f32.mrf.mxu0
      %v567 = vadd.f32 0.0, %v566
      %v568 = vpop.f32.mrf.mxu0
      %569 = vmatprep.mubr.bf16.mxu0 0
      %570 = vmatmul.mubr.bf16.gmra.mxu0 %v500
      %v571 = vpop.f32.mrf.mxu0
      %v572 = vadd.f32 0.0, %v571
      %v573 = vpop.f32.mrf.mxu0
      %v574 = vpop.f32.mrf.mxu0
      %v575 = vadd.f32 0.0, %v574
      %v576 = vpop.f32.mrf.mxu0
      %577 = vdwg.mxu0
      %v578 = vadd.f32 %v424, %v540
      %v579 = vadd.f32 %v427, %v543
      %v580 = vadd.f32 %v432, %v548
      %v581 = vadd.f32 %v435, %v551
      %v582 = vadd.f32 %v440, %v556
      %v583 = vadd.f32 %v443, %v559
      %v584 = vadd.f32 %v448, %v564
      %v585 = vadd.f32 %v451, %v567
      %v586 = vadd.f32 %v456, %v572
      %v587 = vadd.f32 %v459, %v575
      %s588 = scalar_lea.vmem %s1, 36
      %v589 = vld [vmem:[%s588] sm:$0xf]
      %v590 = vld [vmem:[%s588 + $0x4] sm:$0xf]
      %v591 = vld [vmem:[%s588 + $0x8] sm:$0xf]
      %v593 = vunpack.c.l.b16 %v183
      %v594 = vpack.c.b16 %v205, %v204
      %v595 = vpack.c.b16 %v207, %v206
      %v596 = vpack.c.b16 %v209, %v208
      %v597 = vpack.c.b16 %v211, %v210
      %v598 = vpack.c.b16 %v213, %v212
      %v599 = vpack.c.b16 %v593, %v593
      %v600 = vrot.slane %v594, 1
      %v601 = vrot.slane %v595, 1
      %v602 = vsel %vm466, %v600, %v601
      %v603 = vrot.slane %v596, 1
      %v604 = vsel %vm466, %v601, %v603
      %v605 = vrot.slane %v597, 1
      %v606 = vsel %vm466, %v603, %v605
      %v607 = vrot.slane %v598, 1
      %v608 = vsel %vm466, %v605, %v607
      %v609 = vrot.slane %v599, 1
      %v610 = vsel %vm466, %v607, %v609
      %v614 = vunpack.c.l.b16 %v589
      %v615 = vunpack.c.l.b16 %v590
      %v616 = vunpack.c.l.b16 %v591
      %v617 = vpack.c.b16 %v615, %v614
      %v618 = vpack.c.b16 %v616, %v616
      %v621 = vsel %vm274, %v602, 0
      %v624 = vsel %vm274, %v604, 0
      %v627 = vsel %vm274, %v606, 0
      %v630 = vsel %vm274, %v608, 0
      %v633 = vsel %vm274, %v610, 0
      %v636 = vsel %vm290, %v618, 0
      %638 = vmatprep.subr.bf16.mxu0 0
      %639 = vmatpush1.bf16.msra.mxu0 0
      %640 = vmatprep.subr.bf16.mxu0 0
      %641 = vmatpush1.bf16.msra.mxu0 0
      %642 = vmatprep.subr.bf16.mxu0 0
      %643 = vmatpush1.bf16.msra.mxu0 0
      %644 = vmatprep.subr.bf16.mxu0 0
      %645 = vmatpush1.bf16.msra.mxu0 0
      %646 = vmatprep.subr.bf16.mxu0 0
      %647 = vmatpush1.bf16.msra.mxu0 0
      %648 = vmatprep.subr.bf16.mxu0 0
      %649 = vmatpush1.bf16.msra.mxu0 0
      %650 = vmatprep.subr.bf16.mxu0 0
      %651 = vmatpush1.bf16.msra.mxu0 %v636
      %652 = vmatprep.subr.bf16.mxu0 0
      %653 = vmatpush1.bf16.msra.mxu0 %v617
      %654 = vmatprep.subr.bf16.mxu0 0
      %655 = vmatpush2.bf16.msra.mxu0 0
      %656 = vmatprep.subr.bf16.mxu0 0
      %657 = vmatpush2.bf16.msra.mxu0 0
      %658 = vmatprep.subr.bf16.mxu0 0
      %659 = vmatpush2.bf16.msra.mxu0 0
      %660 = vmatprep.subr.bf16.mxu0 0
      %661 = vmatpush2.bf16.msra.mxu0 0
      %662 = vmatprep.subr.bf16.mxu0 0
      %663 = vmatpush2.bf16.msra.mxu0 0
      %664 = vmatprep.subr.bf16.mxu0 0
      %665 = vmatpush2.bf16.msra.mxu0 0
      %666 = vmatprep.subr.bf16.mxu0 0
      %667 = vmatpush2.bf16.msra.mxu0 0
      %668 = vmatprep.subr.bf16.mxu0 0
      %669 = vmatpush2.bf16.msra.mxu0 0
      %670 = vmatprep.mubr.bf16.mxu0 0
      %671 = vmatmul.mubr.bf16.gmra.mxu0 %v621
      %v672 = vpop.f32.mrf.mxu0
      %v673 = vadd.f32 0.0, %v672
      %v674 = vpop.f32.mrf.mxu0
      %v675 = vpop.f32.mrf.mxu0
      %v676 = vadd.f32 0.0, %v675
      %v677 = vpop.f32.mrf.mxu0
      %678 = vmatprep.mubr.bf16.mxu0 0
      %679 = vmatmul.mubr.bf16.gmra.mxu0 %v624
      %v680 = vpop.f32.mrf.mxu0
      %v681 = vadd.f32 0.0, %v680
      %v682 = vpop.f32.mrf.mxu0
      %v683 = vpop.f32.mrf.mxu0
      %v684 = vadd.f32 0.0, %v683
      %v685 = vpop.f32.mrf.mxu0
      %686 = vmatprep.mubr.bf16.mxu0 0
      %687 = vmatmul.mubr.bf16.gmra.mxu0 %v627
      %v688 = vpop.f32.mrf.mxu0
      %v689 = vadd.f32 0.0, %v688
      %v690 = vpop.f32.mrf.mxu0
      %v691 = vpop.f32.mrf.mxu0
      %v692 = vadd.f32 0.0, %v691
      %v693 = vpop.f32.mrf.mxu0
      %694 = vmatprep.mubr.bf16.mxu0 0
      %695 = vmatmul.mubr.bf16.gmra.mxu0 %v630
      %v696 = vpop.f32.mrf.mxu0
      %v697 = vadd.f32 0.0, %v696
      %v698 = vpop.f32.mrf.mxu0
      %v699 = vpop.f32.mrf.mxu0
      %v700 = vadd.f32 0.0, %v699
      %v701 = vpop.f32.mrf.mxu0
      %702 = vmatprep.mubr.bf16.mxu0 0
      %703 = vmatmul.mubr.bf16.gmra.mxu0 %v633
      %v704 = vpop.f32.mrf.mxu0
      %v705 = vadd.f32 0.0, %v704
      %v706 = vpop.f32.mrf.mxu0
      %v707 = vpop.f32.mrf.mxu0
      %v708 = vadd.f32 0.0, %v707
      %v709 = vpop.f32.mrf.mxu0
      %710 = vdwg.mxu0
      %v711 = vadd.f32 %v578, %v673
      %v712 = vadd.f32 %v579, %v676
      %v713 = vadd.f32 %v580, %v681
      %v714 = vadd.f32 %v581, %v684
      %v715 = vadd.f32 %v582, %v689
      %v716 = vadd.f32 %v583, %v692
      %v717 = vadd.f32 %v584, %v697
      %v718 = vadd.f32 %v585, %v700
      %v719 = vadd.f32 %v586, %v705
      %v720 = vadd.f32 %v587, %v708
      %s721 = scalar_lea.vmem %s1, 48
      %v722 = vld [vmem:[%s721] sm:$0xf]
      %v723 = vld [vmem:[%s721 + $0x4] sm:$0xf]
      %v724 = vld [vmem:[%s721 + $0x8] sm:$0xf]
      %vm725 = vsmask.f32 6400
      %v727 = vshrl.u32 %v594, 16
      %v729 = vrot.slane %v727, 1
      %v730 = vshll.u32 %v594, 16
      %v732 = vrot.slane %v730, 2
      %v733 = vor.u32 %v729, %v732
      %v735 = vshrl.u32 %v595, 16
      %v737 = vrot.slane %v735, 1
      %v738 = vshll.u32 %v595, 16
      %v740 = vrot.slane %v738, 2
      %v741 = vor.u32 %v737, %v740
      %v742 = vsel %vm725, %v733, %v741
      %v744 = vshrl.u32 %v596, 16
      %v746 = vrot.slane %v744, 1
      %v747 = vshll.u32 %v596, 16
      %v749 = vrot.slane %v747, 2
      %v750 = vor.u32 %v746, %v749
      %v751 = vsel %vm725, %v741, %v750
      %v753 = vshrl.u32 %v597, 16
      %v755 = vrot.slane %v753, 1
      %v756 = vshll.u32 %v597, 16
      %v758 = vrot.slane %v756, 2
      %v759 = vor.u32 %v755, %v758
      %v760 = vsel %vm725, %v750, %v759
      %v762 = vshrl.u32 %v598, 16
      %v764 = vrot.slane %v762, 1
      %v765 = vshll.u32 %v598, 16
      %v767 = vrot.slane %v765, 2
      %v768 = vor.u32 %v764, %v767
      %v769 = vsel %vm725, %v759, %v768
      %v771 = vshrl.u32 %v599, 16
      %v773 = vrot.slane %v771, 1
      %v774 = vshll.u32 %v599, 16
      %v776 = vrot.slane %v774, 2
      %v777 = vor.u32 %v773, %v776
      %v778 = vsel %vm725, %v768, %v777
      %v782 = vunpack.c.l.b16 %v722
      %v783 = vunpack.c.l.b16 %v723
      %v784 = vunpack.c.l.b16 %v724
      %v785 = vpack.c.b16 %v783, %v782
      %v786 = vpack.c.b16 %v784, %v784
      %v789 = vsel %vm274, %v742, 0
      %v792 = vsel %vm274, %v751, 0
      %v795 = vsel %vm274, %v760, 0
      %v798 = vsel %vm274, %v769, 0
      %v801 = vsel %vm274, %v778, 0
      %v804 = vsel %vm290, %v786, 0
      %806 = vmatprep.subr.bf16.mxu0 0
      %807 = vmatpush1.bf16.msra.mxu0 0
      %808 = vmatprep.subr.bf16.mxu0 0
      %809 = vmatpush1.bf16.msra.mxu0 0
      %810 = vmatprep.subr.bf16.mxu0 0
      %811 = vmatpush1.bf16.msra.mxu0 0
      %812 = vmatprep.subr.bf16.mxu0 0
      %813 = vmatpush1.bf16.msra.mxu0 0
      %814 = vmatprep.subr.bf16.mxu0 0
      %815 = vmatpush1.bf16.msra.mxu0 0
      %816 = vmatprep.subr.bf16.mxu0 0
      %817 = vmatpush1.bf16.msra.mxu0 0
      %818 = vmatprep.subr.bf16.mxu0 0
      %819 = vmatpush1.bf16.msra.mxu0 %v804
      %820 = vmatprep.subr.bf16.mxu0 0
      %821 = vmatpush1.bf16.msra.mxu0 %v785
      %822 = vmatprep.subr.bf16.mxu0 0
      %823 = vmatpush2.bf16.msra.mxu0 0
      %824 = vmatprep.subr.bf16.mxu0 0
      %825 = vmatpush2.bf16.msra.mxu0 0
      %826 = vmatprep.subr.bf16.mxu0 0
      %827 = vmatpush2.bf16.msra.mxu0 0
      %828 = vmatprep.subr.bf16.mxu0 0
      %829 = vmatpush2.bf16.msra.mxu0 0
      %830 = vmatprep.subr.bf16.mxu0 0
      %831 = vmatpush2.bf16.msra.mxu0 0
      %832 = vmatprep.subr.bf16.mxu0 0
      %833 = vmatpush2.bf16.msra.mxu0 0
      %834 = vmatprep.subr.bf16.mxu0 0
      %835 = vmatpush2.bf16.msra.mxu0 0
      %836 = vmatprep.subr.bf16.mxu0 0
      %837 = vmatpush2.bf16.msra.mxu0 0
      %838 = vmatprep.mubr.bf16.mxu0 0
      %839 = vmatmul.mubr.bf16.gmra.mxu0 %v789
      %v840 = vpop.f32.mrf.mxu0
      %v841 = vadd.f32 0.0, %v840
      %v842 = vpop.f32.mrf.mxu0
      %v843 = vpop.f32.mrf.mxu0
      %v844 = vadd.f32 0.0, %v843
      %v845 = vpop.f32.mrf.mxu0
      %846 = vmatprep.mubr.bf16.mxu0 0
      %847 = vmatmul.mubr.bf16.gmra.mxu0 %v792
      %v848 = vpop.f32.mrf.mxu0
      %v849 = vadd.f32 0.0, %v848
      %v850 = vpop.f32.mrf.mxu0
      %v851 = vpop.f32.mrf.mxu0
      %v852 = vadd.f32 0.0, %v851
      %v853 = vpop.f32.mrf.mxu0
      %854 = vmatprep.mubr.bf16.mxu0 0
      %855 = vmatmul.mubr.bf16.gmra.mxu0 %v795
      %v856 = vpop.f32.mrf.mxu0
      %v857 = vadd.f32 0.0, %v856
      %v858 = vpop.f32.mrf.mxu0
      %v859 = vpop.f32.mrf.mxu0
      %v860 = vadd.f32 0.0, %v859
      %v861 = vpop.f32.mrf.mxu0
      %862 = vmatprep.mubr.bf16.mxu0 0
      %863 = vmatmul.mubr.bf16.gmra.mxu0 %v798
      %v864 = vpop.f32.mrf.mxu0
      %v865 = vadd.f32 0.0, %v864
      %v866 = vpop.f32.mrf.mxu0
      %v867 = vpop.f32.mrf.mxu0
      %v868 = vadd.f32 0.0, %v867
      %v869 = vpop.f32.mrf.mxu0
      %870 = vmatprep.mubr.bf16.mxu0 0
      %871 = vmatmul.mubr.bf16.gmra.mxu0 %v801
      %v872 = vpop.f32.mrf.mxu0
      %v873 = vadd.f32 0.0, %v872
      %v874 = vpop.f32.mrf.mxu0
      %v875 = vpop.f32.mrf.mxu0
      %v876 = vadd.f32 0.0, %v875
      %v877 = vpop.f32.mrf.mxu0
      %878 = vdwg.mxu0
      %v879 = vadd.f32 %v711, %v841
      %v880 = vadd.f32 %v712, %v844
      %v881 = vadd.f32 %v713, %v849
      %v882 = vadd.f32 %v714, %v852
      %v883 = vadd.f32 %v715, %v857
      %v884 = vadd.f32 %v716, %v860
      %v885 = vadd.f32 %v717, %v865
      %v886 = vadd.f32 %v718, %v868
      %v887 = vadd.f32 %v719, %v873
      %v888 = vadd.f32 %v720, %v876
      %s889 = scalar_lea.vmem %s1, 60
      %v890 = vld [vmem:[%s889] sm:$0xf]
      %v891 = vld [vmem:[%s889 + $0x4] sm:$0xf]
      %v892 = vld [vmem:[%s889 + $0x8] sm:$0xf]
      %vm893 = vcmask 1045504
      %v894 = vrot.slane %v594, 2
      %v895 = vrot.slane %v595, 2
      %v896 = vsel %vm893, %v894, %v895
      %v897 = vrot.slane %v596, 2
      %v898 = vsel %vm893, %v895, %v897
      %v899 = vrot.slane %v597, 2
      %v900 = vsel %vm893, %v897, %v899
      %v901 = vrot.slane %v598, 2
      %v902 = vsel %vm893, %v899, %v901
      %v903 = vrot.slane %v599, 2
      %v904 = vsel %vm893, %v901, %v903
      %v908 = vunpack.c.l.b16 %v890
      %v909 = vunpack.c.l.b16 %v891
      %v910 = vunpack.c.l.b16 %v892
      %v911 = vpack.c.b16 %v909, %v908
      %v912 = vpack.c.b16 %v910, %v910
      %v915 = vsel %vm274, %v896, 0
      %v918 = vsel %vm274, %v898, 0
      %v921 = vsel %vm274, %v900, 0
      %v924 = vsel %vm274, %v902, 0
      %v927 = vsel %vm274, %v904, 0
      %v930 = vsel %vm290, %v912, 0
      %932 = vmatprep.subr.bf16.mxu0 0
      %933 = vmatpush1.bf16.msra.mxu0 0
      %934 = vmatprep.subr.bf16.mxu0 0
      %935 = vmatpush1.bf16.msra.mxu0 0
      %936 = vmatprep.subr.bf16.mxu0 0
      %937 = vmatpush1.bf16.msra.mxu0 0
      %938 = vmatprep.subr.bf16.mxu0 0
      %939 = vmatpush1.bf16.msra.mxu0 0
      %940 = vmatprep.subr.bf16.mxu0 0
      %941 = vmatpush1.bf16.msra.mxu0 0
      %942 = vmatprep.subr.bf16.mxu0 0
      %943 = vmatpush1.bf16.msra.mxu0 0
      %944 = vmatprep.subr.bf16.mxu0 0
      %945 = vmatpush1.bf16.msra.mxu0 %v930
      %946 = vmatprep.subr.bf16.mxu0 0
      %947 = vmatpush1.bf16.msra.mxu0 %v911
      %948 = vmatprep.subr.bf16.mxu0 0
      %949 = vmatpush2.bf16.msra.mxu0 0
      %950 = vmatprep.subr.bf16.mxu0 0
      %951 = vmatpush2.bf16.msra.mxu0 0
      %952 = vmatprep.subr.bf16.mxu0 0
      %953 = vmatpush2.bf16.msra.mxu0 0
      %954 = vmatprep.subr.bf16.mxu0 0
      %955 = vmatpush2.bf16.msra.mxu0 0
      %956 = vmatprep.subr.bf16.mxu0 0
      %957 = vmatpush2.bf16.msra.mxu0 0
      %958 = vmatprep.subr.bf16.mxu0 0
      %959 = vmatpush2.bf16.msra.mxu0 0
      %960 = vmatprep.subr.bf16.mxu0 0
      %961 = vmatpush2.bf16.msra.mxu0 0
      %962 = vmatprep.subr.bf16.mxu0 0
      %963 = vmatpush2.bf16.msra.mxu0 0
      %964 = vmatprep.mubr.bf16.mxu0 0
      %965 = vmatmul.mubr.bf16.gmra.mxu0 %v915
      %v966 = vpop.f32.mrf.mxu0
      %v967 = vadd.f32 0.0, %v966
      %v968 = vpop.f32.mrf.mxu0
      %v969 = vpop.f32.mrf.mxu0
      %v970 = vadd.f32 0.0, %v969
      %v971 = vpop.f32.mrf.mxu0
      %972 = vmatprep.mubr.bf16.mxu0 0
      %973 = vmatmul.mubr.bf16.gmra.mxu0 %v918
      %v974 = vpop.f32.mrf.mxu0
      %v975 = vadd.f32 0.0, %v974
      %v976 = vpop.f32.mrf.mxu0
      %v977 = vpop.f32.mrf.mxu0
      %v978 = vadd.f32 0.0, %v977
      %v979 = vpop.f32.mrf.mxu0
      %980 = vmatprep.mubr.bf16.mxu0 0
      %981 = vmatmul.mubr.bf16.gmra.mxu0 %v921
      %v982 = vpop.f32.mrf.mxu0
      %v983 = vadd.f32 0.0, %v982
      %v984 = vpop.f32.mrf.mxu0
      %v985 = vpop.f32.mrf.mxu0
      %v986 = vadd.f32 0.0, %v985
      %v987 = vpop.f32.mrf.mxu0
      %988 = vmatprep.mubr.bf16.mxu0 0
      %989 = vmatmul.mubr.bf16.gmra.mxu0 %v924
      %v990 = vpop.f32.mrf.mxu0
      %v991 = vadd.f32 0.0, %v990
      %v992 = vpop.f32.mrf.mxu0
      %v993 = vpop.f32.mrf.mxu0
      %v994 = vadd.f32 0.0, %v993
      %v995 = vpop.f32.mrf.mxu0
      %996 = vmatprep.mubr.bf16.mxu0 0
      %997 = vmatmul.mubr.bf16.gmra.mxu0 %v927
      %v998 = vpop.f32.mrf.mxu0
      %v999 = vadd.f32 0.0, %v998
      %v1000 = vpop.f32.mrf.mxu0
      %v1001 = vpop.f32.mrf.mxu0
      %v1002 = vadd.f32 0.0, %v1001
      %v1003 = vpop.f32.mrf.mxu0
      %1004 = vdwg.mxu0
      %v1005 = vadd.f32 %v879, %v967
      %v1006 = vadd.f32 %v880, %v970
      %v1007 = vadd.f32 %v881, %v975
      %v1008 = vadd.f32 %v882, %v978
      %v1009 = vadd.f32 %v883, %v983
      %v1010 = vadd.f32 %v884, %v986
      %v1011 = vadd.f32 %v885, %v991
      %v1012 = vadd.f32 %v886, %v994
      %v1013 = vadd.f32 %v887, %v999
      %v1014 = vadd.f32 %v888, %v1002
      %s1015 = scalar_lea.vmem %s1, 72
      %v1016 = vld [vmem:[%s1015] sm:$0xf]
      %v1017 = vld [vmem:[%s1015 + $0x4] sm:$0xf]
      %v1018 = vld [vmem:[%s1015 + $0x8] sm:$0xf]
      %v1020 = vunpack.c.l.b16 %v184
      %v1021 = vpack.c.b16 %v593, %v213
      %v1022 = vpack.c.b16 %v1020, %v1020
      %v1023 = vrot.slane %v215, 2
      %v1024 = vrot.slane %v216, 2
      %v1025 = vsel %vm893, %v1023, %v1024
      %v1026 = vrot.slane %v217, 2
      %v1027 = vsel %vm893, %v1024, %v1026
      %v1028 = vrot.slane %v218, 2
      %v1029 = vsel %vm893, %v1026, %v1028
      %v1030 = vrot.slane %v1021, 2
      %v1031 = vsel %vm893, %v1028, %v1030
      %v1032 = vrot.slane %v1022, 2
      %v1033 = vsel %vm893, %v1030, %v1032
      %v1037 = vunpack.c.l.b16 %v1016
      %v1038 = vunpack.c.l.b16 %v1017
      %v1039 = vunpack.c.l.b16 %v1018
      %v1040 = vpack.c.b16 %v1038, %v1037
      %v1041 = vpack.c.b16 %v1039, %v1039
      %v1044 = vsel %vm274, %v1025, 0
      %v1047 = vsel %vm274, %v1027, 0
      %v1050 = vsel %vm274, %v1029, 0
      %v1053 = vsel %vm274, %v1031, 0
      %v1056 = vsel %vm274, %v1033, 0
      %v1059 = vsel %vm290, %v1041, 0
      %1061 = vmatprep.subr.bf16.mxu0 0
      %1062 = vmatpush1.bf16.msra.mxu0 0
      %1063 = vmatprep.subr.bf16.mxu0 0
      %1064 = vmatpush1.bf16.msra.mxu0 0
      %1065 = vmatprep.subr.bf16.mxu0 0
      %1066 = vmatpush1.bf16.msra.mxu0 0
      %1067 = vmatprep.subr.bf16.mxu0 0
      %1068 = vmatpush1.bf16.msra.mxu0 0
      %1069 = vmatprep.subr.bf16.mxu0 0
      %1070 = vmatpush1.bf16.msra.mxu0 0
      %1071 = vmatprep.subr.bf16.mxu0 0
      %1072 = vmatpush1.bf16.msra.mxu0 0
      %1073 = vmatprep.subr.bf16.mxu0 0
      %1074 = vmatpush1.bf16.msra.mxu0 %v1059
      %1075 = vmatprep.subr.bf16.mxu0 0
      %1076 = vmatpush1.bf16.msra.mxu0 %v1040
      %1077 = vmatprep.subr.bf16.mxu0 0
      %1078 = vmatpush2.bf16.msra.mxu0 0
      %1079 = vmatprep.subr.bf16.mxu0 0
      %1080 = vmatpush2.bf16.msra.mxu0 0
      %1081 = vmatprep.subr.bf16.mxu0 0
      %1082 = vmatpush2.bf16.msra.mxu0 0
      %1083 = vmatprep.subr.bf16.mxu0 0
      %1084 = vmatpush2.bf16.msra.mxu0 0
      %1085 = vmatprep.subr.bf16.mxu0 0
      %1086 = vmatpush2.bf16.msra.mxu0 0
      %1087 = vmatprep.subr.bf16.mxu0 0
      %1088 = vmatpush2.bf16.msra.mxu0 0
      %1089 = vmatprep.subr.bf16.mxu0 0
      %1090 = vmatpush2.bf16.msra.mxu0 0
      %1091 = vmatprep.subr.bf16.mxu0 0
      %1092 = vmatpush2.bf16.msra.mxu0 0
      %1093 = vmatprep.mubr.bf16.mxu0 0
      %1094 = vmatmul.mubr.bf16.gmra.mxu0 %v1044
      %v1095 = vpop.f32.mrf.mxu0
      %v1096 = vadd.f32 0.0, %v1095
      %v1097 = vpop.f32.mrf.mxu0
      %v1098 = vpop.f32.mrf.mxu0
      %v1099 = vadd.f32 0.0, %v1098
      %v1100 = vpop.f32.mrf.mxu0
      %1101 = vmatprep.mubr.bf16.mxu0 0
      %1102 = vmatmul.mubr.bf16.gmra.mxu0 %v1047
      %v1103 = vpop.f32.mrf.mxu0
      %v1104 = vadd.f32 0.0, %v1103
      %v1105 = vpop.f32.mrf.mxu0
      %v1106 = vpop.f32.mrf.mxu0
      %v1107 = vadd.f32 0.0, %v1106
      %v1108 = vpop.f32.mrf.mxu0
      %1109 = vmatprep.mubr.bf16.mxu0 0
      %1110 = vmatmul.mubr.bf16.gmra.mxu0 %v1050
      %v1111 = vpop.f32.mrf.mxu0
      %v1112 = vadd.f32 0.0, %v1111
      %v1113 = vpop.f32.mrf.mxu0
      %v1114 = vpop.f32.mrf.mxu0
      %v1115 = vadd.f32 0.0, %v1114
      %v1116 = vpop.f32.mrf.mxu0
      %1117 = vmatprep.mubr.bf16.mxu0 0
      %1118 = vmatmul.mubr.bf16.gmra.mxu0 %v1053
      %v1119 = vpop.f32.mrf.mxu0
      %v1120 = vadd.f32 0.0, %v1119
      %v1121 = vpop.f32.mrf.mxu0
      %v1122 = vpop.f32.mrf.mxu0
      %v1123 = vadd.f32 0.0, %v1122
      %v1124 = vpop.f32.mrf.mxu0
      %1125 = vmatprep.mubr.bf16.mxu0 0
      %1126 = vmatmul.mubr.bf16.gmra.mxu0 %v1056
      %v1127 = vpop.f32.mrf.mxu0
      %v1128 = vadd.f32 0.0, %v1127
      %v1129 = vpop.f32.mrf.mxu0
      %v1130 = vpop.f32.mrf.mxu0
      %v1131 = vadd.f32 0.0, %v1130
      %v1132 = vpop.f32.mrf.mxu0
      %1133 = vdwg.mxu0
      %v1134 = vadd.f32 %v1005, %v1096
      %v1135 = vadd.f32 %v1006, %v1099
      %v1136 = vadd.f32 %v1007, %v1104
      %v1137 = vadd.f32 %v1008, %v1107
      %v1138 = vadd.f32 %v1009, %v1112
      %v1139 = vadd.f32 %v1010, %v1115
      %v1140 = vadd.f32 %v1011, %v1120
      %v1141 = vadd.f32 %v1012, %v1123
      %v1142 = vadd.f32 %v1013, %v1128
      %v1143 = vadd.f32 %v1014, %v1131
      %s1144 = scalar_lea.vmem %s1, 84
      %v1145 = vld [vmem:[%s1144] sm:$0xf]
      %v1146 = vld [vmem:[%s1144 + $0x4] sm:$0xf]
      %v1147 = vld [vmem:[%s1144 + $0x8] sm:$0xf]
      %vm1148 = vsmask.f32 5376
      %v1149 = vrot.slane %v233, 2
      %v1150 = vrot.slane %v229, 3
      %v1151 = vor.u32 %v1149, %v1150
      %v1152 = vrot.slane %v241, 2
      %v1153 = vrot.slane %v237, 3
      %v1154 = vor.u32 %v1152, %v1153
      %v1155 = vsel %vm1148, %v1151, %v1154
      %v1156 = vrot.slane %v249, 2
      %v1157 = vrot.slane %v245, 3
      %v1158 = vor.u32 %v1156, %v1157
      %v1159 = vsel %vm1148, %v1154, %v1158
      %v1160 = vrot.slane %v257, 2
      %v1161 = vrot.slane %v253, 3
      %v1162 = vor.u32 %v1160, %v1161
      %v1163 = vsel %vm1148, %v1158, %v1162
      %v1165 = vshrl.u32 %v1021, 16
      %v1167 = vrot.slane %v1165, 2
      %v1168 = vshll.u32 %v1021, 16
      %v1170 = vrot.slane %v1168, 3
      %v1171 = vor.u32 %v1167, %v1170
      %v1172 = vsel %vm1148, %v1162, %v1171
      %v1174 = vshrl.u32 %v1022, 16
      %v1176 = vrot.slane %v1174, 2
      %v1177 = vshll.u32 %v1022, 16
      %v1179 = vrot.slane %v1177, 3
      %v1180 = vor.u32 %v1176, %v1179
      %v1181 = vsel %vm1148, %v1171, %v1180
      %v1185 = vunpack.c.l.b16 %v1145
      %v1186 = vunpack.c.l.b16 %v1146
      %v1187 = vunpack.c.l.b16 %v1147
      %v1188 = vpack.c.b16 %v1186, %v1185
      %v1189 = vpack.c.b16 %v1187, %v1187
      %v1192 = vsel %vm274, %v1155, 0
      %v1195 = vsel %vm274, %v1159, 0
      %v1198 = vsel %vm274, %v1163, 0
      %v1201 = vsel %vm274, %v1172, 0
      %v1204 = vsel %vm274, %v1181, 0
      %v1207 = vsel %vm290, %v1189, 0
      %1209 = vmatprep.subr.bf16.mxu0 0
      %1210 = vmatpush1.bf16.msra.mxu0 0
      %1211 = vmatprep.subr.bf16.mxu0 0
      %1212 = vmatpush1.bf16.msra.mxu0 0
      %1213 = vmatprep.subr.bf16.mxu0 0
      %1214 = vmatpush1.bf16.msra.mxu0 0
      %1215 = vmatprep.subr.bf16.mxu0 0
      %1216 = vmatpush1.bf16.msra.mxu0 0
      %1217 = vmatprep.subr.bf16.mxu0 0
      %1218 = vmatpush1.bf16.msra.mxu0 0
      %1219 = vmatprep.subr.bf16.mxu0 0
      %1220 = vmatpush1.bf16.msra.mxu0 0
      %1221 = vmatprep.subr.bf16.mxu0 0
      %1222 = vmatpush1.bf16.msra.mxu0 %v1207
      %1223 = vmatprep.subr.bf16.mxu0 0
      %1224 = vmatpush1.bf16.msra.mxu0 %v1188
      %1225 = vmatprep.subr.bf16.mxu0 0
      %1226 = vmatpush2.bf16.msra.mxu0 0
      %1227 = vmatprep.subr.bf16.mxu0 0
      %1228 = vmatpush2.bf16.msra.mxu0 0
      %1229 = vmatprep.subr.bf16.mxu0 0
      %1230 = vmatpush2.bf16.msra.mxu0 0
      %1231 = vmatprep.subr.bf16.mxu0 0
      %1232 = vmatpush2.bf16.msra.mxu0 0
      %1233 = vmatprep.subr.bf16.mxu0 0
      %1234 = vmatpush2.bf16.msra.mxu0 0
      %1235 = vmatprep.subr.bf16.mxu0 0
      %1236 = vmatpush2.bf16.msra.mxu0 0
      %1237 = vmatprep.subr.bf16.mxu0 0
      %1238 = vmatpush2.bf16.msra.mxu0 0
      %1239 = vmatprep.subr.bf16.mxu0 0
      %1240 = vmatpush2.bf16.msra.mxu0 0
      %1241 = vmatprep.mubr.bf16.mxu0 0
      %1242 = vmatmul.mubr.bf16.gmra.mxu0 %v1192
      %v1243 = vpop.f32.mrf.mxu0
      %v1244 = vadd.f32 0.0, %v1243
      %v1245 = vpop.f32.mrf.mxu0
      %v1246 = vpop.f32.mrf.mxu0
      %v1247 = vadd.f32 0.0, %v1246
      %v1248 = vpop.f32.mrf.mxu0
      %1249 = vmatprep.mubr.bf16.mxu0 0
      %1250 = vmatmul.mubr.bf16.gmra.mxu0 %v1195
      %v1251 = vpop.f32.mrf.mxu0
      %v1252 = vadd.f32 0.0, %v1251
      %v1253 = vpop.f32.mrf.mxu0
      %v1254 = vpop.f32.mrf.mxu0
      %v1255 = vadd.f32 0.0, %v1254
      %v1256 = vpop.f32.mrf.mxu0
      %1257 = vmatprep.mubr.bf16.mxu0 0
      %1258 = vmatmul.mubr.bf16.gmra.mxu0 %v1198
      %v1259 = vpop.f32.mrf.mxu0
      %v1260 = vadd.f32 0.0, %v1259
      %v1261 = vpop.f32.mrf.mxu0
      %v1262 = vpop.f32.mrf.mxu0
      %v1263 = vadd.f32 0.0, %v1262
      %v1264 = vpop.f32.mrf.mxu0
      %1265 = vmatprep.mubr.bf16.mxu0 0
      %1266 = vmatmul.mubr.bf16.gmra.mxu0 %v1201
      %v1267 = vpop.f32.mrf.mxu0
      %v1268 = vadd.f32 0.0, %v1267
      %v1269 = vpop.f32.mrf.mxu0
      %v1270 = vpop.f32.mrf.mxu0
      %v1271 = vadd.f32 0.0, %v1270
      %v1272 = vpop.f32.mrf.mxu0
      %1273 = vmatprep.mubr.bf16.mxu0 0
      %1274 = vmatmul.mubr.bf16.gmra.mxu0 %v1204
      %v1275 = vpop.f32.mrf.mxu0
      %v1276 = vadd.f32 0.0, %v1275
      %v1277 = vpop.f32.mrf.mxu0
      %v1278 = vpop.f32.mrf.mxu0
      %v1279 = vadd.f32 0.0, %v1278
      %v1280 = vpop.f32.mrf.mxu0
      %1281 = vdwg.mxu0
      %v1282 = vadd.f32 %v1134, %v1244
      %v1283 = vadd.f32 %v1135, %v1247
      %v1284 = vadd.f32 %v1136, %v1252
      %v1285 = vadd.f32 %v1137, %v1255
      %v1286 = vadd.f32 %v1138, %v1260
      %v1287 = vadd.f32 %v1139, %v1263
      %v1288 = vadd.f32 %v1140, %v1268
      %v1289 = vadd.f32 %v1141, %v1271
      %v1290 = vadd.f32 %v1142, %v1276
      %v1291 = vadd.f32 %v1143, %v1279
      %s1292 = scalar_lea.vmem %s1, 96
      %v1293 = vld [vmem:[%s1292] sm:$0xf]
      %v1294 = vld [vmem:[%s1292 + $0x4] sm:$0xf]
      %v1295 = vld [vmem:[%s1292 + $0x8] sm:$0xf]
      %vm1296 = vcmask 1044480
      %v1297 = vrot.slane %v215, 3
      %v1298 = vrot.slane %v216, 3
      %v1299 = vsel %vm1296, %v1297, %v1298
      %v1300 = vrot.slane %v217, 3
      %v1301 = vsel %vm1296, %v1298, %v1300
      %v1302 = vrot.slane %v218, 3
      %v1303 = vsel %vm1296, %v1300, %v1302
      %v1304 = vrot.slane %v1021, 3
      %v1305 = vsel %vm1296, %v1302, %v1304
      %v1306 = vrot.slane %v1022, 3
      %v1307 = vsel %vm1296, %v1304, %v1306
      %v1311 = vunpack.c.l.b16 %v1293
      %v1312 = vunpack.c.l.b16 %v1294
      %v1313 = vunpack.c.l.b16 %v1295
      %v1314 = vpack.c.b16 %v1312, %v1311
      %v1315 = vpack.c.b16 %v1313, %v1313
      %v1318 = vsel %vm274, %v1299, 0
      %v1321 = vsel %vm274, %v1301, 0
      %v1324 = vsel %vm274, %v1303, 0
      %v1327 = vsel %vm274, %v1305, 0
      %v1330 = vsel %vm274, %v1307, 0
      %v1333 = vsel %vm290, %v1315, 0
      %1335 = vmatprep.subr.bf16.mxu0 0
      %1336 = vmatpush1.bf16.msra.mxu0 0
      %1337 = vmatprep.subr.bf16.mxu0 0
      %1338 = vmatpush1.bf16.msra.mxu0 0
      %1339 = vmatprep.subr.bf16.mxu0 0
      %1340 = vmatpush1.bf16.msra.mxu0 0
      %1341 = vmatprep.subr.bf16.mxu0 0
      %1342 = vmatpush1.bf16.msra.mxu0 0
      %1343 = vmatprep.subr.bf16.mxu0 0
      %1344 = vmatpush1.bf16.msra.mxu0 0
      %1345 = vmatprep.subr.bf16.mxu0 0
      %1346 = vmatpush1.bf16.msra.mxu0 0
      %1347 = vmatprep.subr.bf16.mxu0 0
      %1348 = vmatpush1.bf16.msra.mxu0 %v1333
      %1349 = vmatprep.subr.bf16.mxu0 0
      %1350 = vmatpush1.bf16.msra.mxu0 %v1314
      %1351 = vmatprep.subr.bf16.mxu0 0
      %1352 = vmatpush2.bf16.msra.mxu0 0
      %1353 = vmatprep.subr.bf16.mxu0 0
      %1354 = vmatpush2.bf16.msra.mxu0 0
      %1355 = vmatprep.subr.bf16.mxu0 0
      %1356 = vmatpush2.bf16.msra.mxu0 0
      %1357 = vmatprep.subr.bf16.mxu0 0
      %1358 = vmatpush2.bf16.msra.mxu0 0
      %1359 = vmatprep.subr.bf16.mxu0 0
      %1360 = vmatpush2.bf16.msra.mxu0 0
      %1361 = vmatprep.subr.bf16.mxu0 0
      %1362 = vmatpush2.bf16.msra.mxu0 0
      %1363 = vmatprep.subr.bf16.mxu0 0
      %1364 = vmatpush2.bf16.msra.mxu0 0
      %1365 = vmatprep.subr.bf16.mxu0 0
      %1366 = vmatpush2.bf16.msra.mxu0 0
      %1367 = vmatprep.mubr.bf16.mxu0 0
      %1368 = vmatmul.mubr.bf16.gmra.mxu0 %v1318
      %v1369 = vpop.f32.mrf.mxu0
      %v1370 = vadd.f32 0.0, %v1369
      %v1371 = vpop.f32.mrf.mxu0
      %v1372 = vpop.f32.mrf.mxu0
      %v1373 = vadd.f32 0.0, %v1372
      %v1374 = vpop.f32.mrf.mxu0
      %1375 = vmatprep.mubr.bf16.mxu0 0
      %1376 = vmatmul.mubr.bf16.gmra.mxu0 %v1321
      %v1377 = vpop.f32.mrf.mxu0
      %v1378 = vadd.f32 0.0, %v1377
      %v1379 = vpop.f32.mrf.mxu0
      %v1380 = vpop.f32.mrf.mxu0
      %v1381 = vadd.f32 0.0, %v1380
      %v1382 = vpop.f32.mrf.mxu0
      %1383 = vmatprep.mubr.bf16.mxu0 0
      %1384 = vmatmul.mubr.bf16.gmra.mxu0 %v1324
      %v1385 = vpop.f32.mrf.mxu0
      %v1386 = vadd.f32 0.0, %v1385
      %v1387 = vpop.f32.mrf.mxu0
      %v1388 = vpop.f32.mrf.mxu0
      %v1389 = vadd.f32 0.0, %v1388
      %v1390 = vpop.f32.mrf.mxu0
      %1391 = vmatprep.mubr.bf16.mxu0 0
      %1392 = vmatmul.mubr.bf16.gmra.mxu0 %v1327
      %v1393 = vpop.f32.mrf.mxu0
      %v1394 = vadd.f32 0.0, %v1393
      %v1395 = vpop.f32.mrf.mxu0
      %v1396 = vpop.f32.mrf.mxu0
      %v1397 = vadd.f32 0.0, %v1396
      %v1398 = vpop.f32.mrf.mxu0
      %1399 = vmatprep.mubr.bf16.mxu0 0
      %1400 = vmatmul.mubr.bf16.gmra.mxu0 %v1330
      %v1401 = vpop.f32.mrf.mxu0
      %v1402 = vadd.f32 0.0, %v1401
      %v1403 = vpop.f32.mrf.mxu0
      %v1404 = vpop.f32.mrf.mxu0
      %v1405 = vadd.f32 0.0, %v1404
      %v1406 = vpop.f32.mrf.mxu0
      %1407 = vdwg.mxu0
      %v1408 = vadd.f32 %v1282, %v1370
      %v1409 = vadd.f32 %v1283, %v1373
      %v1410 = vadd.f32 %v1284, %v1378
      %v1411 = vadd.f32 %v1285, %v1381
      %v1412 = vadd.f32 %v1286, %v1386
      %v1413 = vadd.f32 %v1287, %v1389
      %v1414 = vadd.f32 %v1288, %v1394
      %v1415 = vadd.f32 %v1289, %v1397
      %v1416 = vadd.f32 %v1290, %v1402
      %v1417 = vadd.f32 %v1291, %v1405
      %v1418 = vld [vmem:[%s2] sm:$0x1]
      %v1420 = vlaneseq
      %v1421 = vshrl.u32 %v1420, 7
      %v1422 = vsub.s32 0, %v1421
      %v1423 = vrot.slane %v1418, %v1422
      %v1425 = vadd.f32 %v1408, %v1423
      %v1426 = vadd.f32 %v1409, %v1423
      %v1427 = vadd.f32 %v1410, %v1423
      %v1428 = vadd.f32 %v1411, %v1423
      %v1429 = vadd.f32 %v1412, %v1423
      %v1430 = vadd.f32 %v1413, %v1423
      %v1431 = vadd.f32 %v1414, %v1423
      %v1432 = vadd.f32 %v1415, %v1423
      %v1433 = vadd.f32 %v1416, %v1423
      %v1434 = vadd.f32 %v1417, %v1423
      %v1435 = vand.u32 2147483647, %v1425
      %v1436 = vand.u32 2147483647, %v1426
      %v1437 = vand.u32 2147483647, %v1427
      %v1438 = vand.u32 2147483647, %v1428
      %v1439 = vand.u32 2147483647, %v1429
      %v1440 = vand.u32 2147483647, %v1430
      %v1441 = vand.u32 2147483647, %v1431
      %v1442 = vand.u32 2147483647, %v1432
      %v1443 = vand.u32 2147483647, %v1433
      %v1444 = vand.u32 2147483647, %v1434
      %v1445 = vsub.f32 0.0, %v1435
      %v1446 = vsub.f32 0.0, %v1436
      %v1447 = vsub.f32 0.0, %v1437
      %v1448 = vsub.f32 0.0, %v1438
      %v1449 = vsub.f32 0.0, %v1439
      %v1450 = vsub.f32 0.0, %v1440
      %v1451 = vsub.f32 0.0, %v1441
      %v1452 = vsub.f32 0.0, %v1442
      %v1453 = vsub.f32 0.0, %v1443
      %v1454 = vsub.f32 0.0, %v1444
      %v1455 = vmul.f32 %v1445, 1.442695
      %v1456 = vpow.pop %v1455
      %v1457 = vmul.f32 %v1446, 1.442695
      %v1458 = vpow.pop %v1457
      %v1459 = vmul.f32 %v1447, 1.442695
      %v1460 = vpow.pop %v1459
      %v1461 = vmul.f32 %v1448, 1.442695
      %v1462 = vpow.pop %v1461
      %v1463 = vmul.f32 %v1449, 1.442695
      %v1464 = vpow.pop %v1463
      %v1465 = vmul.f32 %v1450, 1.442695
      %v1466 = vpow.pop %v1465
      %v1467 = vmul.f32 %v1451, 1.442695
      %v1468 = vpow.pop %v1467
      %v1469 = vmul.f32 %v1452, 1.442695
      %v1470 = vpow.pop %v1469
      %v1471 = vmul.f32 %v1453, 1.442695
      %v1472 = vpow.pop %v1471
      %v1473 = vmul.f32 %v1454, 1.442695
      %v1474 = vpow.pop %v1473
      %v1475 = vadd.f32 %v1456, 1.0
      %v1476 = vadd.f32 %v1458, 1.0
      %v1477 = vadd.f32 %v1460, 1.0
      %v1478 = vadd.f32 %v1462, 1.0
      %v1479 = vadd.f32 %v1464, 1.0
      %v1480 = vadd.f32 %v1466, 1.0
      %v1481 = vadd.f32 %v1468, 1.0
      %v1482 = vadd.f32 %v1470, 1.0
      %v1483 = vadd.f32 %v1472, 1.0
      %v1484 = vadd.f32 %v1474, 1.0
      %v1485 = vrcp.pop %v1475
      %v1486 = vrcp.pop %v1476
      %v1487 = vrcp.pop %v1477
      %v1488 = vrcp.pop %v1478
      %v1489 = vrcp.pop %v1479
      %v1490 = vrcp.pop %v1480
      %v1491 = vrcp.pop %v1481
      %v1492 = vrcp.pop %v1482
      %v1493 = vrcp.pop %v1483
      %v1494 = vrcp.pop %v1484
      %vm1495 = vcmp.ge.f32.partialorder %v1425, 0.0
      %vm1496 = vcmp.ge.f32.partialorder %v1426, 0.0
      %vm1497 = vcmp.ge.f32.partialorder %v1427, 0.0
      %vm1498 = vcmp.ge.f32.partialorder %v1428, 0.0
      %vm1499 = vcmp.ge.f32.partialorder %v1429, 0.0
      %vm1500 = vcmp.ge.f32.partialorder %v1430, 0.0
      %vm1501 = vcmp.ge.f32.partialorder %v1431, 0.0
      %vm1502 = vcmp.ge.f32.partialorder %v1432, 0.0
      %vm1503 = vcmp.ge.f32.partialorder %v1433, 0.0
      %vm1504 = vcmp.ge.f32.partialorder %v1434, 0.0
      %v1505 = vmul.f32 %v1456, %v1485
      %v1506 = vmul.f32 %v1458, %v1486
      %v1507 = vmul.f32 %v1460, %v1487
      %v1508 = vmul.f32 %v1462, %v1488
      %v1509 = vmul.f32 %v1464, %v1489
      %v1510 = vmul.f32 %v1466, %v1490
      %v1511 = vmul.f32 %v1468, %v1491
      %v1512 = vmul.f32 %v1470, %v1492
      %v1513 = vmul.f32 %v1472, %v1493
      %v1514 = vmul.f32 %v1474, %v1494
      %v1515 = vsel %vm1495, %v1485, %v1505
      %v1516 = vsel %vm1496, %v1486, %v1506
      %v1517 = vsel %vm1497, %v1487, %v1507
      %v1518 = vsel %vm1498, %v1488, %v1508
      %v1519 = vsel %vm1499, %v1489, %v1509
      %v1520 = vsel %vm1500, %v1490, %v1510
      %v1521 = vsel %vm1501, %v1491, %v1511
      %v1522 = vsel %vm1502, %v1492, %v1512
      %v1523 = vsel %vm1503, %v1493, %v1513
      %v1524 = vsel %vm1504, %v1494, %v1514
      %v1525 = vmul.f32 %v1425, %v1515
      %v1526 = vmul.f32 %v1426, %v1516
      %v1527 = vmul.f32 %v1427, %v1517
      %v1528 = vmul.f32 %v1428, %v1518
      %v1529 = vmul.f32 %v1429, %v1519
      %v1530 = vmul.f32 %v1430, %v1520
      %v1531 = vmul.f32 %v1431, %v1521
      %v1532 = vmul.f32 %v1432, %v1522
      %v1533 = vmul.f32 %v1433, %v1523
      %v1534 = vmul.f32 %v1434, %v1524
      %v1535 = vpack.c.bf16 %v1526, %v1525
      %v1536 = vpack.c.bf16 %v1528, %v1527
      %v1537 = vpack.c.bf16 %v1530, %v1529
      %v1538 = vpack.c.bf16 %v1532, %v1531
      %v1539 = vpack.c.bf16 %v1534, %v1533
      %v1545 = vunpack.c.l.b16 %v1535
      %v1546 = vunpack.c.h.b16 %v1535
      %v1547 = vunpack.c.l.b16 %v1536
      %v1548 = vunpack.c.h.b16 %v1536
      %v1549 = vunpack.c.l.b16 %v1537
      %v1550 = vunpack.c.h.b16 %v1537
      %v1551 = vunpack.c.l.b16 %v1538
      %v1552 = vunpack.c.h.b16 %v1538
      %v1553 = vunpack.c.l.b16 %v1539
      %v1554 = vunpack.c.h.b16 %v1539
      %v1555 = vpack.c.b16 %v1545, %v1545
      %v1556 = vpack.c.b16 %v1546, %v1546
      %v1557 = vpack.c.b16 %v1547, %v1547
      %v1558 = vpack.c.b16 %v1548, %v1548
      %v1559 = vpack.c.b16 %v1549, %v1549
      %v1560 = vpack.c.b16 %v1550, %v1550
      %v1561 = vpack.c.b16 %v1551, %v1551
      %v1562 = vpack.c.b16 %v1552, %v1552
      %v1563 = vpack.c.b16 %v1553, %v1553
      %v1564 = vpack.c.b16 %v1554, %v1554
      %vm1575 = vcmask 191488
      %1576 = vst.msk [vmem:[%s170] sm:$0xf] %vm1575, %v1555
      %1577 = vst.msk [vmem:[%s170 + $0x4] sm:$0xf] %vm1575, %v1556
      %1578 = vst.msk [vmem:[%s170 + $0x8] sm:$0xf] %vm1575, %v1557
      %1579 = vst.msk [vmem:[%s170 + $0xc] sm:$0xf] %vm1575, %v1558
      %1580 = vst.msk [vmem:[%s170 + $0x10] sm:$0xf] %vm1575, %v1559
      %1581 = vst.msk [vmem:[%s170 + $0x14] sm:$0xf] %vm1575, %v1560
      %1582 = vst.msk [vmem:[%s170 + $0x18] sm:$0xf] %vm1575, %v1561
      %1583 = vst.msk [vmem:[%s170 + $0x1c] sm:$0xf] %vm1575, %v1562
      %1584 = vst.msk [vmem:[%s170 + $0x20] sm:$0xf] %vm1575, %v1563
      %1585 = vst.msk [vmem:[%s170 + $0x24] sm:$0xf] %vm1575, %v1564
      %p1586 = scmp.lt.s32.totalorder %s14, 1
      %s1587 = scalar_select %p1586, %s14, 1
      %s1588 = smul.addr %s1587, 10
      %s1589 = smul.addr %s1588, 4
      %s1590 = scalar_lea.vmem %s3, %s1589
      // Predicated region
      $region33: #{magic_point_forward.25} parent=31 // pred_check
        %p1591 = pneg %p100
      $region34: #{magic_point_forward.25} parent=31 // pred_check_branch
        %1593 = sbr.rel (%p1591) target = $region36
      $region35: #{magic_point_forward.25} parent=31 // pred_region
        _
      $region36: #{magic_point_forward.25} parent=31 // pred_fallthru
        _
    $region32: #{magic_point_forward.25} parent=5 // pred_fallthru
      _
    %p1594 = scmp.le.s32.totalorder 2, %s9
    // Predicated region
    $region37: #{magic_point_forward.25} parent=5 // pred_check
      %p1595 = pneg %p1594
    $region38: #{magic_point_forward.25} parent=5 // pred_check_branch
      %1597 = sbr.rel (%p1595) target = $region40
    $region39: #{magic_point_forward.25} parent=5 // pred_region
      %s1598 = ssub.s32 %s9, 2
      // Predicated region
      $region41: #{magic_point_forward.25} parent=39 // pred_check
        %p1599 = pneg %p106
      $region42: #{magic_point_forward.25} parent=39 // pred_check_branch
        %1601 = sbr.rel (%p1599) target = $region44
      $region43: #{magic_point_forward.25} parent=39 // pred_region
        %p1602 = scmp.lt.s32.totalorder %s15, 1
        %s1603 = scalar_select %p1602, %s15, 1
        %s1604 = smul.addr %s1603, 10
        %s1605 = smul.addr %s1604, 4
        %s1606 = scalar_lea.vmem %s3, %s1605
      $region44: #{magic_point_forward.25} parent=39 // pred_fallthru
        _
    $region40: #{magic_point_forward.25} parent=5 // pred_fallthru
      _
  $region6: #{magic_point_forward.25} parent=0 // loop_footer
    %s13 = sadd.s32 1, %s9
  $region7: #{magic_point_forward.25} parent=0 // loop_footer_branch
    %8 = sbr.rel target = $region3
  $region8: #{magic_point_forward.25} parent=0 // loop_exit
    _

// kernel: magic_point_forward.27
$region0: #{magic_point_forward.27}
  #allocation0 [shape = 'u32[]', space=smem, size = 0x4, offset = 0x4, fixed_abs, tag = 'smem constant byte address 0x4 - core index']
  #allocation1 [shape = 'u32[144,128]{1,0:T(1,128)}', space=vmem, size = 0x12000, scoped, tag = 'internal scratch']
  %s0 = inlined_call_operand.vmem [shape: bf16[32,224], index: 0, kind: input, shape index: {}]
  %s1 = inlined_call_operand.vmem [shape: bf16[224,128], index: 1, kind: input, shape index: {}]
  %s2 = inlined_call_operand.vmem [shape: f32[1,128], index: 2, kind: input, shape index: {}]
  %s3 = inlined_call_operand.vmem [shape: bf16[32,128], index: 3, kind: output, shape index: {}]
  %s4 = sld [smem:[#allocation0]]
  $region45: #{magic_point_forward.27} parent=0
    _
  %s6 = ssub.s32 1, %s4
  %s7 = scalar_select 0, %s6, %s4
  loop: start=0, step=1, limit=4
  $region2: #{magic_point_forward.27} parent=0 // loop_pre_header
    _
  $region3: #{magic_point_forward.27} parent=0 // loop_header
    %s9 = sphi 0, %s13
    %p10 = scmp.ge.s32.totalorder %s9, 4
    %s16 = sphi 0, %s28
    %s17 = sphi 0, %s24
    %s18 = sphi 0, %s16
    %s19 = sphi 0, %s17
    %s20 = sphi 0, %s18
    %s21 = sphi 0, %s19
    %s31 = sphi 0, %s33
    %s34 = sphi 0, %s31
    %s35 = sphi 0, %s34
    %s51 = sphi 0, %s35
    %s57 = sphi 0, %s59
    %s60 = sphi 0, %s57
    %s61 = sphi 0, %s60
    %s77 = sphi 0, %s61
    %s83 = sphi 0, %s85
    %s86 = sphi 0, %s83
    %s87 = sphi 0, %s86
    %s103 = sphi 0, %s87
    %s111 = sphi 0, %s113
    %s114 = sphi 0, %s111
    %s115 = sphi 0, %s114
    %s131 = sphi 0, %s115
  $region4: #{magic_point_forward.27} parent=0 // loop_header_branch
    %12 = sbr.rel (%p10) target = $region8
  $region5: #{magic_point_forward.27} parent=0 // loop_body
    %s14 = ssub.s32 %s9, 1
    %s15 = ssub.s32 %s9, 2
    %s22 = sadd.s32 1, %s17
    %p23 = scmp.ge.s32.totalorder %s22, 1
    %s24 = scalar_select %p23, 0, %s22
    %s25 = sadd.s32 1, %s16
    %s26 = scalar_select %p23, %s25, %s16
    %p27 = scmp.ge.s32.totalorder %s26, 2
    %s28 = scalar_select %p27, 0, %s26
    %s29 = ssub.s32 %s16, %s28
    %p30 = scmp.eq.s32.totalorder %s29, 0
    %s32 = sadd.s32 %s31, 1
    %s33 = scalar_select %p30, %s31, %s32
    %p36 = pneg %p30
    %p37 = scmp.eq.s32.totalorder %s9, 1
    %p38 = por %p36, %p37
    %p39 = scmp.ne.s32.totalorder %s31, %s34
    %p40 = scmp.eq.s32.totalorder %s9, 0
    %p41 = por %p39, %p40
    %p42 = scmp.ne.s32.totalorder %s31, %s34
    %p43 = scmp.eq.s32.totalorder %s14, 1
    %p44 = por %p42, %p43
    %p45 = scmp.ne.s32.totalorder %s34, %s35
    %p46 = scmp.eq.s32.totalorder %s14, 0
    %p47 = por %p45, %p46
    %p48 = scmp.ne.s32.totalorder %s34, %s35
    %p49 = scmp.eq.s32.totalorder %s15, 1
    %p50 = por %p48, %p49
    %p52 = scmp.ne.s32.totalorder %s35, %s51
    %p53 = scmp.eq.s32.totalorder %s15, 0
    %p54 = por %p52, %p53
    %s55 = ssub.s32 %s17, %s24
    %p56 = scmp.eq.s32.totalorder %s55, 0
    %s58 = sadd.s32 %s57, 1
    %s59 = scalar_select %p56, %s57, %s58
    %p62 = pneg %p56
    %p63 = scmp.eq.s32.totalorder %s9, 1
    %p64 = por %p62, %p63
    %p65 = scmp.ne.s32.totalorder %s57, %s60
    %p66 = scmp.eq.s32.totalorder %s9, 0
    %p67 = por %p65, %p66
    %p68 = scmp.ne.s32.totalorder %s57, %s60
    %p69 = scmp.eq.s32.totalorder %s14, 1
    %p70 = por %p68, %p69
    %p71 = scmp.ne.s32.totalorder %s60, %s61
    %p72 = scmp.eq.s32.totalorder %s14, 0
    %p73 = por %p71, %p72
    %p74 = scmp.ne.s32.totalorder %s60, %s61
    %p75 = scmp.eq.s32.totalorder %s15, 1
    %p76 = por %p74, %p75
    %p78 = scmp.ne.s32.totalorder %s61, %s77
    %p79 = scmp.eq.s32.totalorder %s15, 0
    %p80 = por %p78, %p79
    %s81 = ssub.s32 %s17, %s24
    %p82 = scmp.eq.s32.totalorder %s81, 0
    %s84 = sadd.s32 %s83, 1
    %s85 = scalar_select %p82, %s83, %s84
    %p88 = pneg %p82
    %p89 = scmp.eq.s32.totalorder %s9, 1
    %p90 = por %p88, %p89
    %p91 = scmp.ne.s32.totalorder %s83, %s86
    %p92 = scmp.eq.s32.totalorder %s9, 0
    %p93 = por %p91, %p92
    %p94 = scmp.ne.s32.totalorder %s83, %s86
    %p95 = scmp.eq.s32.totalorder %s14, 1
    %p96 = por %p94, %p95
    %p97 = scmp.ne.s32.totalorder %s86, %s87
    %p98 = scmp.eq.s32.totalorder %s14, 0
    %p99 = por %p97, %p98
    %p100 = scmp.ne.s32.totalorder %s86, %s87
    %p101 = scmp.eq.s32.totalorder %s15, 1
    %p102 = por %p100, %p101
    %p104 = scmp.ne.s32.totalorder %s87, %s103
    %p105 = scmp.eq.s32.totalorder %s15, 0
    %p106 = por %p104, %p105
    %s107 = ssub.s32 %s16, %s28
    %s108 = ssub.s32 %s17, %s24
    %s109 = sor.u32 %s107, %s108
    %p110 = scmp.eq.s32.totalorder %s109, 0
    %s112 = sadd.s32 %s111, 1
    %s113 = scalar_select %p110, %s111, %s112
    %p116 = pneg %p110
    %p117 = scmp.eq.s32.totalorder %s9, 1
    %p118 = por %p116, %p117
    %p119 = scmp.ne.s32.totalorder %s111, %s114
    %p120 = scmp.eq.s32.totalorder %s9, 0
    %p121 = por %p119, %p120
    %p122 = scmp.ne.s32.totalorder %s111, %s114
    %p123 = scmp.eq.s32.totalorder %s14, 1
    %p124 = por %p122, %p123
    %p125 = scmp.ne.s32.totalorder %s114, %s115
    %p126 = scmp.eq.s32.totalorder %s14, 0
    %p127 = por %p125, %p126
    %p128 = scmp.ne.s32.totalorder %s114, %s115
    %p129 = scmp.eq.s32.totalorder %s15, 1
    %p130 = por %p128, %p129
    %p132 = scmp.ne.s32.totalorder %s115, %s131
    %p133 = scmp.eq.s32.totalorder %s15, 0
    %p134 = por %p132, %p133
    %p135 = scmp.le.s32.totalorder 1, %s9
    %p136 = scmp.lt.s32.totalorder %s9, 3
    %p137 = pnand %p135, %p136
    %p138 = pneg %p137
    // Predicated region
    $region9: #{magic_point_forward.27} parent=5 // pred_check
      _
    $region10: #{magic_point_forward.27} parent=5 // pred_check_branch
      %140 = sbr.rel (%p137) target = $region12
    $region11: #{magic_point_forward.27} parent=5 // pred_region
      %s141 = ssub.s32 %s9, 1
      // Predicated region
      $region13: #{magic_point_forward.27} parent=11 // pred_check
        %p142 = pneg %p73
      $region14: #{magic_point_forward.27} parent=11 // pred_check_branch
        %144 = sbr.rel (%p142) target = $region16
      $region15: #{magic_point_forward.27} parent=11 // pred_region
        %p145 = scmp.lt.s32.totalorder %s19, 0
        %s146 = scalar_select %p145, %s19, 0
        %s147 = smul.addr %s146, 4
        %s148 = scalar_lea.vmem %s1, %s147
      $region16: #{magic_point_forward.27} parent=11 // pred_fallthru
        _
      // Predicated region
      $region17: #{magic_point_forward.27} parent=11 // pred_check
        %p149 = pneg %p99
      $region18: #{magic_point_forward.27} parent=11 // pred_check_branch
        %151 = sbr.rel (%p149) target = $region20
      $region19: #{magic_point_forward.27} parent=11 // pred_region
        %p152 = scmp.lt.s32.totalorder %s19, 0
        %s153 = scalar_select %p152, %s19, 0
        %s154 = scalar_lea.vmem %s2, %s153
      $region20: #{magic_point_forward.27} parent=11 // pred_fallthru
        _
    $region12: #{magic_point_forward.27} parent=5 // pred_fallthru
      _
    %p155 = scmp.lt.s32.totalorder %s9, 2
    // Predicated region
    $region21: #{magic_point_forward.27} parent=5 // pred_check
      %p156 = pneg %p155
    $region22: #{magic_point_forward.27} parent=5 // pred_check_branch
      %158 = sbr.rel (%p156) target = $region24
    $region23: #{magic_point_forward.27} parent=5 // pred_region
      // Predicated region
      $region25: #{magic_point_forward.27} parent=23 // pred_check
        %p159 = pneg %p41
      $region26: #{magic_point_forward.27} parent=23 // pred_check_branch
        %161 = sbr.rel (%p159) target = $region28
      $region27: #{magic_point_forward.27} parent=23 // pred_region
        %s162 = smul.u32 2, %s16
        %p163 = scmp.lt.s32.totalorder %s162, 3
        %s164 = scalar_select %p163, %s162, 3
        %s165 = smul.addr %s164, 2
        %s166 = smul.addr %s165, 4
        %s167 = scalar_lea.vmem %s0, %s166
        %s168 = smul.u32 2, %s16
      $region28: #{magic_point_forward.27} parent=23 // pred_fallthru
        _
    $region24: #{magic_point_forward.27} parent=5 // pred_fallthru
      _
    %p169 = scmp.le.s32.totalorder 1, %s9
    %p170 = scmp.lt.s32.totalorder %s9, 3
    %p171 = pnand %p169, %p170
    %p172 = pneg %p171
    // Predicated region
    $region29: #{magic_point_forward.27} parent=5 // pred_check
      _
    $region30: #{magic_point_forward.27} parent=5 // pred_check_branch
      %174 = sbr.rel (%p171) target = $region32
    $region31: #{magic_point_forward.27} parent=5 // pred_region
      %s175 = ssub.s32 %s9, 1
      %s176 = smul.u32 2, %s18
      %p177 = scmp.lt.s32.totalorder %s176, 3
      %s178 = scalar_select %p177, %s176, 3
      %s179 = smul.addr %s178, 2
      %s180 = smul.addr %s179, 4
      %s181 = scalar_lea.vmem %s0, %s180
      %p182 = pneg %p47
      %p183 = pneg %p44
      %p184 = scmp.lt.s32.totalorder %s19, 0
      %s185 = scalar_select %p184, %s19, 0
      %s186 = smul.addr %s185, 4
      %s187 = scalar_lea.vmem %s1, %s186
      %p188 = pneg %p73
      %p189 = pneg %p70
      %p190 = scmp.lt.s32.totalorder %s19, 0
      %s191 = scalar_select %p190, %s19, 0
      %s192 = scalar_lea.vmem %s2, %s191
      %p193 = pneg %p99
      %p194 = pneg %p96
      %p195 = pneg %p127
      %p196 = pneg %p124
      %s197 = smul.u32 2, %s18
      %p198 = scmp.lt.s32.totalorder %s197, 3
      %s199 = scalar_select %p198, %s197, 3
      %p200 = scmp.lt.s32.totalorder %s19, 0
      %s201 = scalar_select %p200, %s19, 0
      %s202 = sadd.s32 %s201, %s199
      %s203 = smul.addr %s202, 4
      %s204 = scalar_lea.vmem %s3, %s203
      %s205 = smul.u32 2, %s18
      %p206 = scmp.lt.s32.totalorder %s205, 3
      %s207 = scalar_select %p206, %s205, 3
      %s208 = smul.addr %s207, 2
      %s209 = smul.addr %s208, 4
      %s210 = scalar_lea.vmem %s0, %s209
      %s211 = smul.u32 2, %s18
      %p212 = scmp.lt.s32.totalorder %s19, 0
      %s213 = scalar_select %p212, %s19, 0
      %s214 = smul.addr %s213, 4
      %s215 = scalar_lea.vmem %s1, %s214
      %p216 = scmp.lt.s32.totalorder %s19, 0
      %s217 = scalar_select %p216, %s19, 0
      %s218 = scalar_lea.vmem %s2, %s217
      %s219 = smul.u32 2, %s18
      %p220 = scmp.lt.s32.totalorder %s219, 3
      %s221 = scalar_select %p220, %s219, 3
      %p222 = scmp.lt.s32.totalorder %s19, 0
      %s223 = scalar_select %p222, %s19, 0
      %s224 = sadd.s32 %s223, %s221
      %s225 = smul.addr %s224, 4
      %s226 = scalar_lea.vmem %s3, %s225
      %s227 = smul.u32 2, %s18
      %v229 = vld [vmem:[%s210] sm:$0xff]
      %v230 = vld [vmem:[%s210 + $0x8] sm:$0xff]
      %v231 = vld [vmem:[%s215] sm:$0xf]
      %v232 = vld [vmem:[%s215 + $0x4] sm:$0xf]
      %v233 = vld [vmem:[%s215 + $0x8] sm:$0xf]
      %v234 = vld [vmem:[%s215 + $0xc] sm:$0xf]
      %v235 = vld [vmem:[%s215 + $0x10] sm:$0xf]
      %v236 = vld [vmem:[%s215 + $0x14] sm:$0xf]
      %v237 = vld [vmem:[%s215 + $0x18] sm:$0xf]
      %v238 = vld [vmem:[%s215 + $0x1c] sm:$0xf]
      %v239 = vld [vmem:[%s215 + $0x20] sm:$0xf]
      %v240 = vld [vmem:[%s215 + $0x24] sm:$0xf]
      %v241 = vld [vmem:[%s215 + $0x28] sm:$0xf]
      %v242 = vld [vmem:[%s215 + $0x2c] sm:$0xf]
      %v243 = vld [vmem:[%s215 + $0x30] sm:$0xf]
      %v244 = vld [vmem:[%s215 + $0x34] sm:$0xf]
      %v245 = vld [vmem:[%s215 + $0x38] sm:$0xf]
      %v246 = vld [vmem:[%s215 + $0x3c] sm:$0xf]
      %v247 = vld [vmem:[%s215 + $0x40] sm:$0xf]
      %v248 = vld [vmem:[%s215 + $0x44] sm:$0xf]
      %v249 = vld [vmem:[%s215 + $0x48] sm:$0xf]
      %v250 = vld [vmem:[%s215 + $0x4c] sm:$0xf]
      %v251 = vld [vmem:[%s215 + $0x50] sm:$0xf]
      %v252 = vld [vmem:[%s215 + $0x54] sm:$0xf]
      %v253 = vld [vmem:[%s215 + $0x58] sm:$0xf]
      %v254 = vld [vmem:[%s215 + $0x5c] sm:$0xf]
      %v255 = vld [vmem:[%s215 + $0x60] sm:$0xf]
      %v256 = vld [vmem:[%s215 + $0x64] sm:$0xf]
      %v257 = vld [vmem:[%s215 + $0x68] sm:$0xf]
      %v258 = vld [vmem:[%s215 + $0x6c] sm:$0xf]
      %v259 = vld [vmem:[%s218] sm:$0x1]
      %v261 = vlaneseq
      %v262 = vshrl.u32 %v261, 7
      %v263 = vsub.s32 0, %v262
      %v264 = vrot.slane %v259, %v263
      %v268 = vunpack.c.l.b16 %v229
      %v269 = vunpack.c.h.b16 %v229
      %v270 = vunpack.c.l.b16 %v230
      %v271 = vunpack.c.h.b16 %v230
      %v272 = vpack.c.b16 %v270, %v268
      %v273 = vpack.c.b16 %v271, %v269
      %v303 = vunpack.c.l.b16 %v231
      %v304 = vunpack.c.l.b16 %v232
      %v305 = vunpack.c.l.b16 %v233
      %v306 = vunpack.c.l.b16 %v234
      %v307 = vunpack.c.l.b16 %v235
      %v308 = vunpack.c.l.b16 %v236
      %v309 = vunpack.c.l.b16 %v237
      %v310 = vunpack.c.l.b16 %v238
      %v311 = vunpack.c.l.b16 %v239
      %v312 = vunpack.c.l.b16 %v240
      %v313 = vunpack.c.l.b16 %v241
      %v314 = vunpack.c.l.b16 %v242
      %v315 = vunpack.c.l.b16 %v243
      %v316 = vunpack.c.l.b16 %v244
      %v317 = vunpack.c.l.b16 %v245
      %v318 = vunpack.c.l.b16 %v246
      %v319 = vunpack.c.l.b16 %v247
      %v320 = vunpack.c.l.b16 %v248
      %v321 = vunpack.c.l.b16 %v249
      %v322 = vunpack.c.l.b16 %v250
      %v323 = vunpack.c.l.b16 %v251
      %v324 = vunpack.c.l.b16 %v252
      %v325 = vunpack.c.l.b16 %v253
      %v326 = vunpack.c.l.b16 %v254
      %v327 = vunpack.c.l.b16 %v255
      %v328 = vunpack.c.l.b16 %v256
      %v329 = vunpack.c.l.b16 %v257
      %v330 = vunpack.c.l.b16 %v258
      %v331 = vpack.c.b16 %v304, %v303
      %v332 = vpack.c.b16 %v306, %v305
      %v333 = vpack.c.b16 %v308, %v307
      %v334 = vpack.c.b16 %v310, %v309
      %v335 = vpack.c.b16 %v312, %v311
      %v336 = vpack.c.b16 %v314, %v313
      %v337 = vpack.c.b16 %v316, %v315
      %v338 = vpack.c.b16 %v318, %v317
      %v339 = vpack.c.b16 %v320, %v319
      %v340 = vpack.c.b16 %v322, %v321
      %v341 = vpack.c.b16 %v324, %v323
      %v342 = vpack.c.b16 %v326, %v325
      %v343 = vpack.c.b16 %v328, %v327
      %v344 = vpack.c.b16 %v330, %v329
      %vm359 = vcmask 785408
      %v361 = vsel %vm359, %v273, 0
      %363 = vmatprep.subr.bf16.mxu0 0
      %364 = vmatpush1.bf16.msra.mxu0 %v338
      %365 = vmatprep.subr.bf16.mxu0 0
      %366 = vmatpush1.bf16.msra.mxu0 %v337
      %367 = vmatprep.subr.bf16.mxu0 0
      %368 = vmatpush1.bf16.msra.mxu0 %v336
      %369 = vmatprep.subr.bf16.mxu0 0
      %370 = vmatpush1.bf16.msra.mxu0 %v335
      %371 = vmatprep.subr.bf16.mxu0 0
      %372 = vmatpush1.bf16.msra.mxu0 %v334
      %373 = vmatprep.subr.bf16.mxu0 0
      %374 = vmatpush1.bf16.msra.mxu0 %v333
      %375 = vmatprep.subr.bf16.mxu0 0
      %376 = vmatpush1.bf16.msra.mxu0 %v332
      %377 = vmatprep.subr.bf16.mxu0 0
      %378 = vmatpush1.bf16.msra.mxu0 %v331
      %379 = vmatprep.subr.bf16.mxu0 0
      %380 = vmatpush2.bf16.msra.mxu0 0
      %381 = vmatprep.subr.bf16.mxu0 0
      %382 = vmatpush2.bf16.msra.mxu0 0
      %383 = vmatprep.subr.bf16.mxu0 0
      %384 = vmatpush2.bf16.msra.mxu0 %v344
      %385 = vmatprep.subr.bf16.mxu0 0
      %386 = vmatpush2.bf16.msra.mxu0 %v343
      %387 = vmatprep.subr.bf16.mxu0 0
      %388 = vmatpush2.bf16.msra.mxu0 %v342
      %389 = vmatprep.subr.bf16.mxu0 0
      %390 = vmatpush2.bf16.msra.mxu0 %v341
      %391 = vmatprep.subr.bf16.mxu0 0
      %392 = vmatpush2.bf16.msra.mxu0 %v340
      %393 = vmatprep.subr.bf16.mxu0 0
      %394 = vmatpush2.bf16.msra.mxu0 %v339
      %395 = vmatprep.mubr.bf16.mxu0 %v361
      %396 = vmatmul.mubr.bf16.gmra.mxu0 %v272
      %v397 = vpop.f32.mrf.mxu0
      %v398 = vadd.f32 %v264, %v397
      %v399 = vpop.f32.mrf.mxu0
      %v400 = vpop.f32.mrf.mxu0
      %v401 = vadd.f32 %v264, %v400
      %v402 = vpop.f32.mrf.mxu0
      %403 = vdwg.mxu0
      %v404 = vand.u32 2147483647, %v398
      %v405 = vand.u32 2147483647, %v401
      %v406 = vsub.f32 0.0, %v404
      %v407 = vsub.f32 0.0, %v405
      %v408 = vmul.f32 %v406, 1.442695
      %v409 = vpow.pop %v408
      %v410 = vmul.f32 %v407, 1.442695
      %v411 = vpow.pop %v410
      %v412 = vadd.f32 %v409, 1.0
      %v413 = vadd.f32 %v411, 1.0
      %v414 = vrcp.pop %v412
      %v415 = vrcp.pop %v413
      %vm416 = vcmp.ge.f32.partialorder %v398, 0.0
      %vm417 = vcmp.ge.f32.partialorder %v401, 0.0
      %v418 = vmul.f32 %v409, %v414
      %v419 = vmul.f32 %v411, %v415
      %v420 = vsel %vm416, %v414, %v418
      %v421 = vsel %vm417, %v415, %v419
      %v422 = vmul.f32 %v398, %v420
      %v423 = vmul.f32 %v401, %v421
      %v424 = vpack.c.bf16 %v423, %v422
      %v426 = vunpack.c.l.b16 %v424
      %v427 = vunpack.c.h.b16 %v424
      %v428 = vpack.c.b16 %v426, %v426
      %v429 = vpack.c.b16 %v427, %v427
      %432 = vst [vmem:[%s226] sm:$0xf] %v428
      %433 = vst [vmem:[%s226 + $0x4] sm:$0xf] %v429
      %s434 = smul.u32 2, %s18
      %p435 = scmp.lt.s32.totalorder %s434, 3
      %s436 = scalar_select %p435, %s434, 3
      %p437 = scmp.lt.s32.totalorder %s19, 0
      %s438 = scalar_select %p437, %s19, 0
      %s439 = sadd.s32 %s438, %s436
      %s440 = smul.addr %s439, 4
      %s441 = scalar_lea.vmem %s3, %s440
      // Predicated region
      $region33: #{magic_point_forward.27} parent=31 // pred_check
        %p442 = pneg %p124
      $region34: #{magic_point_forward.27} parent=31 // pred_check_branch
        %444 = sbr.rel (%p442) target = $region36
      $region35: #{magic_point_forward.27} parent=31 // pred_region
        %s445 = smul.u32 2, %s18
      $region36: #{magic_point_forward.27} parent=31 // pred_fallthru
        _
    $region32: #{magic_point_forward.27} parent=5 // pred_fallthru
      _
    %p446 = scmp.le.s32.totalorder 2, %s9
    // Predicated region
    $region37: #{magic_point_forward.27} parent=5 // pred_check
      %p447 = pneg %p446
    $region38: #{magic_point_forward.27} parent=5 // pred_check_branch
      %449 = sbr.rel (%p447) target = $region40
    $region39: #{magic_point_forward.27} parent=5 // pred_region
      %s450 = ssub.s32 %s9, 2
      // Predicated region
      $region41: #{magic_point_forward.27} parent=39 // pred_check
        %p451 = pneg %p130
      $region42: #{magic_point_forward.27} parent=39 // pred_check_branch
        %453 = sbr.rel (%p451) target = $region44
      $region43: #{magic_point_forward.27} parent=39 // pred_region
        %s454 = smul.u32 2, %s20
        %p455 = scmp.lt.s32.totalorder %s454, 3
        %s456 = scalar_select %p455, %s454, 3
        %p457 = scmp.lt.s32.totalorder %s21, 0
        %s458 = scalar_select %p457, %s21, 0
        %s459 = sadd.s32 %s458, %s456
        %s460 = smul.addr %s459, 4
        %s461 = scalar_lea.vmem %s3, %s460
      $region44: #{magic_point_forward.27} parent=39 // pred_fallthru
        _
    $region40: #{magic_point_forward.27} parent=5 // pred_fallthru
      _
  $region6: #{magic_point_forward.27} parent=0 // loop_footer
    %s13 = sadd.s32 1, %s9
  $region7: #{magic_point_forward.27} parent=0 // loop_footer_branch
    %8 = sbr.rel target = $region3
  $region8: #{magic_point_forward.27} parent=0 // loop_exit
    _

// kernel: magic_point_forward.28
$region0: #{magic_point_forward.28}
  #allocation0 [shape = 'u32[]', space=smem, size = 0x4, offset = 0x4, fixed_abs, tag = 'smem constant byte address 0x4 - core index']
  #allocation1 [shape = 'u32[144,128]{1,0:T(1,128)}', space=vmem, size = 0x12000, scoped, tag = 'internal scratch']
  %s0 = inlined_call_operand.vmem [shape: bf16[32,96], index: 0, kind: input, shape index: {}]
  %s1 = inlined_call_operand.vmem [shape: bf16[96,128], index: 1, kind: input, shape index: {}]
  %s2 = inlined_call_operand.vmem [shape: f32[1,128], index: 2, kind: input, shape index: {}]
  %s3 = inlined_call_operand.vmem [shape: bf16[32,128], index: 3, kind: output, shape index: {}]
  %s4 = sld [smem:[#allocation0]]
  $region45: #{magic_point_forward.28} parent=0
    _
  %s6 = ssub.s32 1, %s4
  %s7 = scalar_select 0, %s6, %s4
  loop: start=0, step=1, limit=4
  $region2: #{magic_point_forward.28} parent=0 // loop_pre_header
    _
  $region3: #{magic_point_forward.28} parent=0 // loop_header
    %s9 = sphi 0, %s13
    %p10 = scmp.ge.s32.totalorder %s9, 4
    %s16 = sphi 0, %s28
    %s17 = sphi 0, %s24
    %s18 = sphi 0, %s16
    %s19 = sphi 0, %s17
    %s20 = sphi 0, %s18
    %s21 = sphi 0, %s19
    %s31 = sphi 0, %s33
    %s34 = sphi 0, %s31
    %s35 = sphi 0, %s34
    %s51 = sphi 0, %s35
    %s57 = sphi 0, %s59
    %s60 = sphi 0, %s57
    %s61 = sphi 0, %s60
    %s77 = sphi 0, %s61
    %s83 = sphi 0, %s85
    %s86 = sphi 0, %s83
    %s87 = sphi 0, %s86
    %s103 = sphi 0, %s87
    %s111 = sphi 0, %s113
    %s114 = sphi 0, %s111
    %s115 = sphi 0, %s114
    %s131 = sphi 0, %s115
  $region4: #{magic_point_forward.28} parent=0 // loop_header_branch
    %12 = sbr.rel (%p10) target = $region8
  $region5: #{magic_point_forward.28} parent=0 // loop_body
    %s14 = ssub.s32 %s9, 1
    %s15 = ssub.s32 %s9, 2
    %s22 = sadd.s32 1, %s17
    %p23 = scmp.ge.s32.totalorder %s22, 1
    %s24 = scalar_select %p23, 0, %s22
    %s25 = sadd.s32 1, %s16
    %s26 = scalar_select %p23, %s25, %s16
    %p27 = scmp.ge.s32.totalorder %s26, 2
    %s28 = scalar_select %p27, 0, %s26
    %s29 = ssub.s32 %s16, %s28
    %p30 = scmp.eq.s32.totalorder %s29, 0
    %s32 = sadd.s32 %s31, 1
    %s33 = scalar_select %p30, %s31, %s32
    %p36 = pneg %p30
    %p37 = scmp.eq.s32.totalorder %s9, 1
    %p38 = por %p36, %p37
    %p39 = scmp.ne.s32.totalorder %s31, %s34
    %p40 = scmp.eq.s32.totalorder %s9, 0
    %p41 = por %p39, %p40
    %p42 = scmp.ne.s32.totalorder %s31, %s34
    %p43 = scmp.eq.s32.totalorder %s14, 1
    %p44 = por %p42, %p43
    %p45 = scmp.ne.s32.totalorder %s34, %s35
    %p46 = scmp.eq.s32.totalorder %s14, 0
    %p47 = por %p45, %p46
    %p48 = scmp.ne.s32.totalorder %s34, %s35
    %p49 = scmp.eq.s32.totalorder %s15, 1
    %p50 = por %p48, %p49
    %p52 = scmp.ne.s32.totalorder %s35, %s51
    %p53 = scmp.eq.s32.totalorder %s15, 0
    %p54 = por %p52, %p53
    %s55 = ssub.s32 %s17, %s24
    %p56 = scmp.eq.s32.totalorder %s55, 0
    %s58 = sadd.s32 %s57, 1
    %s59 = scalar_select %p56, %s57, %s58
    %p62 = pneg %p56
    %p63 = scmp.eq.s32.totalorder %s9, 1
    %p64 = por %p62, %p63
    %p65 = scmp.ne.s32.totalorder %s57, %s60
    %p66 = scmp.eq.s32.totalorder %s9, 0
    %p67 = por %p65, %p66
    %p68 = scmp.ne.s32.totalorder %s57, %s60
    %p69 = scmp.eq.s32.totalorder %s14, 1
    %p70 = por %p68, %p69
    %p71 = scmp.ne.s32.totalorder %s60, %s61
    %p72 = scmp.eq.s32.totalorder %s14, 0
    %p73 = por %p71, %p72
    %p74 = scmp.ne.s32.totalorder %s60, %s61
    %p75 = scmp.eq.s32.totalorder %s15, 1
    %p76 = por %p74, %p75
    %p78 = scmp.ne.s32.totalorder %s61, %s77
    %p79 = scmp.eq.s32.totalorder %s15, 0
    %p80 = por %p78, %p79
    %s81 = ssub.s32 %s17, %s24
    %p82 = scmp.eq.s32.totalorder %s81, 0
    %s84 = sadd.s32 %s83, 1
    %s85 = scalar_select %p82, %s83, %s84
    %p88 = pneg %p82
    %p89 = scmp.eq.s32.totalorder %s9, 1
    %p90 = por %p88, %p89
    %p91 = scmp.ne.s32.totalorder %s83, %s86
    %p92 = scmp.eq.s32.totalorder %s9, 0
    %p93 = por %p91, %p92
    %p94 = scmp.ne.s32.totalorder %s83, %s86
    %p95 = scmp.eq.s32.totalorder %s14, 1
    %p96 = por %p94, %p95
    %p97 = scmp.ne.s32.totalorder %s86, %s87
    %p98 = scmp.eq.s32.totalorder %s14, 0
    %p99 = por %p97, %p98
    %p100 = scmp.ne.s32.totalorder %s86, %s87
    %p101 = scmp.eq.s32.totalorder %s15, 1
    %p102 = por %p100, %p101
    %p104 = scmp.ne.s32.totalorder %s87, %s103
    %p105 = scmp.eq.s32.totalorder %s15, 0
    %p106 = por %p104, %p105
    %s107 = ssub.s32 %s16, %s28
    %s108 = ssub.s32 %s17, %s24
    %s109 = sor.u32 %s107, %s108
    %p110 = scmp.eq.s32.totalorder %s109, 0
    %s112 = sadd.s32 %s111, 1
    %s113 = scalar_select %p110, %s111, %s112
    %p116 = pneg %p110
    %p117 = scmp.eq.s32.totalorder %s9, 1
    %p118 = por %p116, %p117
    %p119 = scmp.ne.s32.totalorder %s111, %s114
    %p120 = scmp.eq.s32.totalorder %s9, 0
    %p121 = por %p119, %p120
    %p122 = scmp.ne.s32.totalorder %s111, %s114
    %p123 = scmp.eq.s32.totalorder %s14, 1
    %p124 = por %p122, %p123
    %p125 = scmp.ne.s32.totalorder %s114, %s115
    %p126 = scmp.eq.s32.totalorder %s14, 0
    %p127 = por %p125, %p126
    %p128 = scmp.ne.s32.totalorder %s114, %s115
    %p129 = scmp.eq.s32.totalorder %s15, 1
    %p130 = por %p128, %p129
    %p132 = scmp.ne.s32.totalorder %s115, %s131
    %p133 = scmp.eq.s32.totalorder %s15, 0
    %p134 = por %p132, %p133
    %p135 = scmp.le.s32.totalorder 1, %s9
    %p136 = scmp.lt.s32.totalorder %s9, 3
    %p137 = pnand %p135, %p136
    %p138 = pneg %p137
    // Predicated region
    $region9: #{magic_point_forward.28} parent=5 // pred_check
      _
    $region10: #{magic_point_forward.28} parent=5 // pred_check_branch
      %140 = sbr.rel (%p137) target = $region12
    $region11: #{magic_point_forward.28} parent=5 // pred_region
      %s141 = ssub.s32 %s9, 1
      // Predicated region
      $region13: #{magic_point_forward.28} parent=11 // pred_check
        %p142 = pneg %p73
      $region14: #{magic_point_forward.28} parent=11 // pred_check_branch
        %144 = sbr.rel (%p142) target = $region16
      $region15: #{magic_point_forward.28} parent=11 // pred_region
        %p145 = scmp.lt.s32.totalorder %s19, 0
        %s146 = scalar_select %p145, %s19, 0
        %s147 = smul.addr %s146, 4
        %s148 = scalar_lea.vmem %s1, %s147
      $region16: #{magic_point_forward.28} parent=11 // pred_fallthru
        _
      // Predicated region
      $region17: #{magic_point_forward.28} parent=11 // pred_check
        %p149 = pneg %p99
      $region18: #{magic_point_forward.28} parent=11 // pred_check_branch
        %151 = sbr.rel (%p149) target = $region20
      $region19: #{magic_point_forward.28} parent=11 // pred_region
        %p152 = scmp.lt.s32.totalorder %s19, 0
        %s153 = scalar_select %p152, %s19, 0
        %s154 = scalar_lea.vmem %s2, %s153
      $region20: #{magic_point_forward.28} parent=11 // pred_fallthru
        _
    $region12: #{magic_point_forward.28} parent=5 // pred_fallthru
      _
    %p155 = scmp.lt.s32.totalorder %s9, 2
    // Predicated region
    $region21: #{magic_point_forward.28} parent=5 // pred_check
      %p156 = pneg %p155
    $region22: #{magic_point_forward.28} parent=5 // pred_check_branch
      %158 = sbr.rel (%p156) target = $region24
    $region23: #{magic_point_forward.28} parent=5 // pred_region
      // Predicated region
      $region25: #{magic_point_forward.28} parent=23 // pred_check
        %p159 = pneg %p41
      $region26: #{magic_point_forward.28} parent=23 // pred_check_branch
        %161 = sbr.rel (%p159) target = $region28
      $region27: #{magic_point_forward.28} parent=23 // pred_region
        %s162 = smul.u32 2, %s16
        %p163 = scmp.lt.s32.totalorder %s162, 3
        %s164 = scalar_select %p163, %s162, 3
        %s165 = smul.addr %s164, 4
        %s166 = scalar_lea.vmem %s0, %s165
        %s167 = smul.u32 2, %s16
      $region28: #{magic_point_forward.28} parent=23 // pred_fallthru
        _
    $region24: #{magic_point_forward.28} parent=5 // pred_fallthru
      _
    %p168 = scmp.le.s32.totalorder 1, %s9
    %p169 = scmp.lt.s32.totalorder %s9, 3
    %p170 = pnand %p168, %p169
    %p171 = pneg %p170
    // Predicated region
    $region29: #{magic_point_forward.28} parent=5 // pred_check
      _
    $region30: #{magic_point_forward.28} parent=5 // pred_check_branch
      %173 = sbr.rel (%p170) target = $region32
    $region31: #{magic_point_forward.28} parent=5 // pred_region
      %s174 = ssub.s32 %s9, 1
      %s175 = smul.u32 2, %s18
      %p176 = scmp.lt.s32.totalorder %s175, 3
      %s177 = scalar_select %p176, %s175, 3
      %s178 = smul.addr %s177, 4
      %s179 = scalar_lea.vmem %s0, %s178
      %p180 = pneg %p47
      %p181 = pneg %p44
      %p182 = scmp.lt.s32.totalorder %s19, 0
      %s183 = scalar_select %p182, %s19, 0
      %s184 = smul.addr %s183, 4
      %s185 = scalar_lea.vmem %s1, %s184
      %p186 = pneg %p73
      %p187 = pneg %p70
      %p188 = scmp.lt.s32.totalorder %s19, 0
      %s189 = scalar_select %p188, %s19, 0
      %s190 = scalar_lea.vmem %s2, %s189
      %p191 = pneg %p99
      %p192 = pneg %p96
      %p193 = pneg %p127
      %p194 = pneg %p124
      %s195 = smul.u32 2, %s18
      %p196 = scmp.lt.s32.totalorder %s195, 3
      %s197 = scalar_select %p196, %s195, 3
      %p198 = scmp.lt.s32.totalorder %s19, 0
      %s199 = scalar_select %p198, %s19, 0
      %s200 = sadd.s32 %s199, %s197
      %s201 = smul.addr %s200, 4
      %s202 = scalar_lea.vmem %s3, %s201
      %s203 = smul.u32 2, %s18
      %p204 = scmp.lt.s32.totalorder %s203, 3
      %s205 = scalar_select %p204, %s203, 3
      %s206 = smul.addr %s205, 4
      %s207 = scalar_lea.vmem %s0, %s206
      %s208 = smul.u32 2, %s18
      %p209 = scmp.lt.s32.totalorder %s19, 0
      %s210 = scalar_select %p209, %s19, 0
      %s211 = smul.addr %s210, 4
      %s212 = scalar_lea.vmem %s1, %s211
      %p213 = scmp.lt.s32.totalorder %s19, 0
      %s214 = scalar_select %p213, %s19, 0
      %s215 = scalar_lea.vmem %s2, %s214
      %s216 = smul.u32 2, %s18
      %p217 = scmp.lt.s32.totalorder %s216, 3
      %s218 = scalar_select %p217, %s216, 3
      %p219 = scmp.lt.s32.totalorder %s19, 0
      %s220 = scalar_select %p219, %s19, 0
      %s221 = sadd.s32 %s220, %s218
      %s222 = smul.addr %s221, 4
      %s223 = scalar_lea.vmem %s3, %s222
      %s224 = smul.u32 2, %s18
      %v226 = vld [vmem:[%s207] sm:$0xf]
      %v227 = vld [vmem:[%s207 + $0x4] sm:$0xf]
      %v228 = vld [vmem:[%s212] sm:$0xf]
      %v229 = vld [vmem:[%s212 + $0x4] sm:$0xf]
      %v230 = vld [vmem:[%s212 + $0x8] sm:$0xf]
      %v231 = vld [vmem:[%s212 + $0xc] sm:$0xf]
      %v232 = vld [vmem:[%s212 + $0x10] sm:$0xf]
      %v233 = vld [vmem:[%s212 + $0x14] sm:$0xf]
      %v234 = vld [vmem:[%s212 + $0x18] sm:$0xf]
      %v235 = vld [vmem:[%s212 + $0x1c] sm:$0xf]
      %v236 = vld [vmem:[%s212 + $0x20] sm:$0xf]
      %v237 = vld [vmem:[%s212 + $0x24] sm:$0xf]
      %v238 = vld [vmem:[%s212 + $0x28] sm:$0xf]
      %v239 = vld [vmem:[%s212 + $0x2c] sm:$0xf]
      %v240 = vld [vmem:[%s215] sm:$0x1]
      %v242 = vlaneseq
      %v243 = vshrl.u32 %v242, 7
      %v244 = vsub.s32 0, %v243
      %v245 = vrot.slane %v240, %v244
      %v249 = vunpack.c.l.b16 %v226
      %v250 = vunpack.c.l.b16 %v227
      %v251 = vpack.c.b16 %v250, %v249
      %v264 = vunpack.c.l.b16 %v228
      %v265 = vunpack.c.l.b16 %v229
      %v266 = vunpack.c.l.b16 %v230
      %v267 = vunpack.c.l.b16 %v231
      %v268 = vunpack.c.l.b16 %v232
      %v269 = vunpack.c.l.b16 %v233
      %v270 = vunpack.c.l.b16 %v234
      %v271 = vunpack.c.l.b16 %v235
      %v272 = vunpack.c.l.b16 %v236
      %v273 = vunpack.c.l.b16 %v237
      %v274 = vunpack.c.l.b16 %v238
      %v275 = vunpack.c.l.b16 %v239
      %v276 = vpack.c.b16 %v265, %v264
      %v277 = vpack.c.b16 %v267, %v266
      %v278 = vpack.c.b16 %v269, %v268
      %v279 = vpack.c.b16 %v271, %v270
      %v280 = vpack.c.b16 %v273, %v272
      %v281 = vpack.c.b16 %v275, %v274
      %vm288 = vcmask 785408
      %v290 = vsel %vm288, %v251, 0
      %292 = vmatprep.subr.bf16.mxu0 0
      %293 = vmatpush1.bf16.msra.mxu0 0
      %294 = vmatprep.subr.bf16.mxu0 0
      %295 = vmatpush1.bf16.msra.mxu0 0
      %296 = vmatprep.subr.bf16.mxu0 0
      %297 = vmatpush1.bf16.msra.mxu0 %v281
      %298 = vmatprep.subr.bf16.mxu0 0
      %299 = vmatpush1.bf16.msra.mxu0 %v280
      %300 = vmatprep.subr.bf16.mxu0 0
      %301 = vmatpush1.bf16.msra.mxu0 %v279
      %302 = vmatprep.subr.bf16.mxu0 0
      %303 = vmatpush1.bf16.msra.mxu0 %v278
      %304 = vmatprep.subr.bf16.mxu0 0
      %305 = vmatpush1.bf16.msra.mxu0 %v277
      %306 = vmatprep.subr.bf16.mxu0 0
      %307 = vmatpush1.bf16.msra.mxu0 %v276
      %308 = vmatprep.subr.bf16.mxu0 0
      %309 = vmatpush2.bf16.msra.mxu0 0
      %310 = vmatprep.subr.bf16.mxu0 0
      %311 = vmatpush2.bf16.msra.mxu0 0
      %312 = vmatprep.subr.bf16.mxu0 0
      %313 = vmatpush2.bf16.msra.mxu0 0
      %314 = vmatprep.subr.bf16.mxu0 0
      %315 = vmatpush2.bf16.msra.mxu0 0
      %316 = vmatprep.subr.bf16.mxu0 0
      %317 = vmatpush2.bf16.msra.mxu0 0
      %318 = vmatprep.subr.bf16.mxu0 0
      %319 = vmatpush2.bf16.msra.mxu0 0
      %320 = vmatprep.subr.bf16.mxu0 0
      %321 = vmatpush2.bf16.msra.mxu0 0
      %322 = vmatprep.subr.bf16.mxu0 0
      %323 = vmatpush2.bf16.msra.mxu0 0
      %324 = vmatprep.mubr.bf16.mxu0 0
      %325 = vmatmul.mubr.bf16.gmra.mxu0 %v290
      %v326 = vpop.f32.mrf.mxu0
      %v327 = vadd.f32 %v245, %v326
      %v328 = vpop.f32.mrf.mxu0
      %v329 = vpop.f32.mrf.mxu0
      %v330 = vadd.f32 %v245, %v329
      %v331 = vpop.f32.mrf.mxu0
      %332 = vdwg.mxu0
      %v333 = vpack.c.bf16 %v330, %v327
      %v335 = vunpack.c.l.b16 %v333
      %v336 = vunpack.c.h.b16 %v333
      %v337 = vpack.c.b16 %v335, %v335
      %v338 = vpack.c.b16 %v336, %v336
      %341 = vst [vmem:[%s223] sm:$0xf] %v337
      %342 = vst [vmem:[%s223 + $0x4] sm:$0xf] %v338
      %s343 = smul.u32 2, %s18
      %p344 = scmp.lt.s32.totalorder %s343, 3
      %s345 = scalar_select %p344, %s343, 3
      %p346 = scmp.lt.s32.totalorder %s19, 0
      %s347 = scalar_select %p346, %s19, 0
      %s348 = sadd.s32 %s347, %s345
      %s349 = smul.addr %s348, 4
      %s350 = scalar_lea.vmem %s3, %s349
      // Predicated region
      $region33: #{magic_point_forward.28} parent=31 // pred_check
        %p351 = pneg %p124
      $region34: #{magic_point_forward.28} parent=31 // pred_check_branch
        %353 = sbr.rel (%p351) target = $region36
      $region35: #{magic_point_forward.28} parent=31 // pred_region
        %s354 = smul.u32 2, %s18
      $region36: #{magic_point_forward.28} parent=31 // pred_fallthru
        _
    $region32: #{magic_point_forward.28} parent=5 // pred_fallthru
      _
    %p355 = scmp.le.s32.totalorder 2, %s9
    // Predicated region
    $region37: #{magic_point_forward.28} parent=5 // pred_check
      %p356 = pneg %p355
    $region38: #{magic_point_forward.28} parent=5 // pred_check_branch
      %358 = sbr.rel (%p356) target = $region40
    $region39: #{magic_point_forward.28} parent=5 // pred_region
      %s359 = ssub.s32 %s9, 2
      // Predicated region
      $region41: #{magic_point_forward.28} parent=39 // pred_check
        %p360 = pneg %p130
      $region42: #{magic_point_forward.28} parent=39 // pred_check_branch
        %362 = sbr.rel (%p360) target = $region44
      $region43: #{magic_point_forward.28} parent=39 // pred_region
        %s363 = smul.u32 2, %s20
        %p364 = scmp.lt.s32.totalorder %s363, 3
        %s365 = scalar_select %p364, %s363, 3
        %p366 = scmp.lt.s32.totalorder %s21, 0
        %s367 = scalar_select %p366, %s21, 0
        %s368 = sadd.s32 %s367, %s365
        %s369 = smul.addr %s368, 4
        %s370 = scalar_lea.vmem %s3, %s369
      $region44: #{magic_point_forward.28} parent=39 // pred_fallthru
        _
    $region40: #{magic_point_forward.28} parent=5 // pred_fallthru
      _
  $region6: #{magic_point_forward.28} parent=0 // loop_footer
    %s13 = sadd.s32 1, %s9
  $region7: #{magic_point_forward.28} parent=0 // loop_footer_branch
    %8 = sbr.rel target = $region3
  $region8: #{magic_point_forward.28} parent=0 // loop_exit
    _

// kernel: magic_point_forward.29
$region0: #{magic_point_forward.29}
  #allocation0 [shape = 'u32[]', space=smem, size = 0x4, offset = 0x4, fixed_abs, tag = 'smem constant byte address 0x4 - core index']
  #allocation1 [shape = 'u32[144,128]{1,0:T(1,128)}', space=vmem, size = 0x12000, scoped, tag = 'internal scratch']
  %s0 = inlined_call_operand.vmem [shape: bf16[2,38,48], index: 0, kind: input, shape index: {}]
  %s1 = inlined_call_operand.vmem [shape: bf16[9,48,192], index: 1, kind: input, shape index: {}]
  %s2 = inlined_call_operand.vmem [shape: f32[1,192], index: 2, kind: input, shape index: {}]
  %s3 = inlined_call_operand.vmem [shape: bf16[2,24,192], index: 3, kind: output, shape index: {}]
  %s4 = sld [smem:[#allocation0]]
  $region45: #{magic_point_forward.29} parent=0
    _
  %s6 = ssub.s32 1, %s4
  %s7 = scalar_select 0, %s6, %s4
  loop: start=0, step=1, limit=4
  $region2: #{magic_point_forward.29} parent=0 // loop_pre_header
    _
  $region3: #{magic_point_forward.29} parent=0 // loop_header
    %s9 = sphi 0, %s13
    %p10 = scmp.ge.s32.totalorder %s9, 4
    %s19 = sphi 0, %s21
    %s22 = sphi 0, %s19
    %s23 = sphi 0, %s22
    %s39 = sphi 0, %s23
    %s43 = sphi 0, %s43
    %s45 = sphi 0, %s43
    %s46 = sphi 0, %s45
    %s60 = sphi 0, %s46
    %s64 = sphi 0, %s64
    %s66 = sphi 0, %s64
    %s67 = sphi 0, %s66
    %s81 = sphi 0, %s67
    %s87 = sphi 0, %s89
    %s90 = sphi 0, %s87
    %s91 = sphi 0, %s90
    %s107 = sphi 0, %s91
  $region4: #{magic_point_forward.29} parent=0 // loop_header_branch
    %12 = sbr.rel (%p10) target = $region8
  $region5: #{magic_point_forward.29} parent=0 // loop_body
    %s14 = ssub.s32 %s9, 1
    %s15 = ssub.s32 %s9, 2
    %s16 = sadd.s32 %s9, 1
    %s17 = ssub.s32 %s9, %s16
    %p18 = scmp.eq.s32.totalorder %s17, 0
    %s20 = sadd.s32 %s19, 1
    %s21 = scalar_select %p18, %s19, %s20
    %p24 = pneg %p18
    %p25 = scmp.eq.s32.totalorder %s9, 1
    %p26 = por %p24, %p25
    %p27 = scmp.ne.s32.totalorder %s19, %s22
    %p28 = scmp.eq.s32.totalorder %s9, 0
    %p29 = por %p27, %p28
    %p30 = scmp.ne.s32.totalorder %s19, %s22
    %p31 = scmp.eq.s32.totalorder %s14, 1
    %p32 = por %p30, %p31
    %p33 = scmp.ne.s32.totalorder %s22, %s23
    %p34 = scmp.eq.s32.totalorder %s14, 0
    %p35 = por %p33, %p34
    %p36 = scmp.ne.s32.totalorder %s22, %s23
    %p37 = scmp.eq.s32.totalorder %s15, 1
    %p38 = por %p36, %p37
    %p40 = scmp.ne.s32.totalorder %s23, %s39
    %p41 = scmp.eq.s32.totalorder %s15, 0
    %p42 = por %p40, %p41
    %s44 = sadd.s32 %s43, 1
    %p47 = scmp.eq.s32.totalorder %s9, 1
    %p48 = scmp.ne.s32.totalorder %s43, %s45
    %p49 = scmp.eq.s32.totalorder %s9, 0
    %p50 = por %p48, %p49
    %p51 = scmp.ne.s32.totalorder %s43, %s45
    %p52 = scmp.eq.s32.totalorder %s14, 1
    %p53 = por %p51, %p52
    %p54 = scmp.ne.s32.totalorder %s45, %s46
    %p55 = scmp.eq.s32.totalorder %s14, 0
    %p56 = por %p54, %p55
    %p57 = scmp.ne.s32.totalorder %s45, %s46
    %p58 = scmp.eq.s32.totalorder %s15, 1
    %p59 = por %p57, %p58
    %p61 = scmp.ne.s32.totalorder %s46, %s60
    %p62 = scmp.eq.s32.totalorder %s15, 0
    %p63 = por %p61, %p62
    %s65 = sadd.s32 %s64, 1
    %p68 = scmp.eq.s32.totalorder %s9, 1
    %p69 = scmp.ne.s32.totalorder %s64, %s66
    %p70 = scmp.eq.s32.totalorder %s9, 0
    %p71 = por %p69, %p70
    %p72 = scmp.ne.s32.totalorder %s64, %s66
    %p73 = scmp.eq.s32.totalorder %s14, 1
    %p74 = por %p72, %p73
    %p75 = scmp.ne.s32.totalorder %s66, %s67
    %p76 = scmp.eq.s32.totalorder %s14, 0
    %p77 = por %p75, %p76
    %p78 = scmp.ne.s32.totalorder %s66, %s67
    %p79 = scmp.eq.s32.totalorder %s15, 1
    %p80 = por %p78, %p79
    %p82 = scmp.ne.s32.totalorder %s67, %s81
    %p83 = scmp.eq.s32.totalorder %s15, 0
    %p84 = por %p82, %p83
    %s85 = ssub.s32 %s9, %s16
    %p86 = scmp.eq.s32.totalorder %s85, 0
    %s88 = sadd.s32 %s87, 1
    %s89 = scalar_select %p86, %s87, %s88
    %p92 = pneg %p86
    %p93 = scmp.eq.s32.totalorder %s9, 1
    %p94 = por %p92, %p93
    %p95 = scmp.ne.s32.totalorder %s87, %s90
    %p96 = scmp.eq.s32.totalorder %s9, 0
    %p97 = por %p95, %p96
    %p98 = scmp.ne.s32.totalorder %s87, %s90
    %p99 = scmp.eq.s32.totalorder %s14, 1
    %p100 = por %p98, %p99
    %p101 = scmp.ne.s32.totalorder %s90, %s91
    %p102 = scmp.eq.s32.totalorder %s14, 0
    %p103 = por %p101, %p102
    %p104 = scmp.ne.s32.totalorder %s90, %s91
    %p105 = scmp.eq.s32.totalorder %s15, 1
    %p106 = por %p104, %p105
    %p108 = scmp.ne.s32.totalorder %s91, %s107
    %p109 = scmp.eq.s32.totalorder %s15, 0
    %p110 = por %p108, %p109
    %p111 = scmp.le.s32.totalorder 1, %s9
    %p112 = scmp.lt.s32.totalorder %s9, 3
    %p113 = pnand %p111, %p112
    %p114 = pneg %p113
    // Predicated region
    $region9: #{magic_point_forward.29} parent=5 // pred_check
      _
    $region10: #{magic_point_forward.29} parent=5 // pred_check_branch
      %116 = sbr.rel (%p113) target = $region12
    $region11: #{magic_point_forward.29} parent=5 // pred_region
      %s117 = ssub.s32 %s9, 1
      // Predicated region
      $region13: #{magic_point_forward.29} parent=11 // pred_check
        %p118 = pneg %p56
      $region14: #{magic_point_forward.29} parent=11 // pred_check_branch
        %120 = sbr.rel (%p118) target = $region16
      $region15: #{magic_point_forward.29} parent=11 // pred_region
        _
      $region16: #{magic_point_forward.29} parent=11 // pred_fallthru
        _
      // Predicated region
      $region17: #{magic_point_forward.29} parent=11 // pred_check
        %p121 = pneg %p77
      $region18: #{magic_point_forward.29} parent=11 // pred_check_branch
        %123 = sbr.rel (%p121) target = $region20
      $region19: #{magic_point_forward.29} parent=11 // pred_region
        _
      $region20: #{magic_point_forward.29} parent=11 // pred_fallthru
        _
    $region12: #{magic_point_forward.29} parent=5 // pred_fallthru
      _
    %p124 = scmp.lt.s32.totalorder %s9, 2
    // Predicated region
    $region21: #{magic_point_forward.29} parent=5 // pred_check
      %p125 = pneg %p124
    $region22: #{magic_point_forward.29} parent=5 // pred_check_branch
      %127 = sbr.rel (%p125) target = $region24
    $region23: #{magic_point_forward.29} parent=5 // pred_region
      // Predicated region
      $region25: #{magic_point_forward.29} parent=23 // pred_check
        %p128 = pneg %p29
      $region26: #{magic_point_forward.29} parent=23 // pred_check_branch
        %130 = sbr.rel (%p128) target = $region28
      $region27: #{magic_point_forward.29} parent=23 // pred_region
        %p131 = scmp.lt.s32.totalorder %s9, 1
        %s132 = scalar_select %p131, %s9, 1
        %s133 = smul.addr %s132, 5
        %s134 = smul.addr %s133, 4
        %s135 = scalar_lea.vmem %s0, %s134
      $region28: #{magic_point_forward.29} parent=23 // pred_fallthru
        _
    $region24: #{magic_point_forward.29} parent=5 // pred_fallthru
      _
    %p136 = scmp.le.s32.totalorder 1, %s9
    %p137 = scmp.lt.s32.totalorder %s9, 3
    %p138 = pnand %p136, %p137
    %p139 = pneg %p138
    // Predicated region
    $region29: #{magic_point_forward.29} parent=5 // pred_check
      _
    $region30: #{magic_point_forward.29} parent=5 // pred_check_branch
      %141 = sbr.rel (%p138) target = $region32
    $region31: #{magic_point_forward.29} parent=5 // pred_region
      %s142 = ssub.s32 %s9, 1
      %p143 = scmp.lt.s32.totalorder %s14, 1
      %s144 = scalar_select %p143, %s14, 1
      %s145 = smul.addr %s144, 5
      %s146 = smul.addr %s145, 4
      %s147 = scalar_lea.vmem %s0, %s146
      %p148 = pneg %p35
      %p149 = pneg %p32
      %p150 = pneg %p56
      %p151 = pneg %p53
      %p152 = pneg %p77
      %p153 = pneg %p74
      %p154 = pneg %p103
      %p155 = pneg %p100
      %p156 = scmp.lt.s32.totalorder %s14, 1
      %s157 = scalar_select %p156, %s14, 1
      %s158 = smul.addr %s157, 6
      %s159 = smul.addr %s158, 4
      %s160 = scalar_lea.vmem %s3, %s159
      %p161 = scmp.lt.s32.totalorder %s14, 1
      %s162 = scalar_select %p161, %s14, 1
      %s163 = smul.addr %s162, 5
      %s164 = smul.addr %s163, 4
      %s165 = scalar_lea.vmem %s0, %s164
      %p166 = scmp.lt.s32.totalorder %s14, 1
      %s167 = scalar_select %p166, %s14, 1
      %s168 = smul.addr %s167, 6
      %s169 = smul.addr %s168, 4
      %s170 = scalar_lea.vmem %s3, %s169
      %v172 = vld [vmem:[%s165] sm:$0xf]
      %v173 = vld [vmem:[%s165 + $0x4] sm:$0xf]
      %v174 = vld [vmem:[%s165 + $0x8] sm:$0xf]
      %v175 = vld [vmem:[%s165 + $0xc] sm:$0xf]
      %v176 = vld [vmem:[%s165 + $0x10] sm:$0x7]
      %v177 = vld [vmem:[%s1] sm:$0xff]
      %v178 = vld [vmem:[%s1 + $0x8] sm:$0xff]
      %v179 = vld [vmem:[%s1 + $0x10] sm:$0xff]
      %v180 = vld [vmem:[%s1 + $0x18] sm:$0xff]
      %v181 = vld [vmem:[%s1 + $0x20] sm:$0xff]
      %v182 = vld [vmem:[%s1 + $0x28] sm:$0xff]
      %s183 = scalar_lea.vmem %s1, 48
      %v184 = vld [vmem:[%s183] sm:$0xff]
      %v185 = vld [vmem:[%s183 + $0x8] sm:$0xff]
      %v186 = vld [vmem:[%s183 + $0x10] sm:$0xff]
      %v187 = vld [vmem:[%s183 + $0x18] sm:$0xff]
      %v188 = vld [vmem:[%s183 + $0x20] sm:$0xff]
      %v189 = vld [vmem:[%s183 + $0x28] sm:$0xff]
      %v194 = vunpack.c.l.b16 %v172
      %v195 = vunpack.c.l.b16 %v173
      %v196 = vunpack.c.l.b16 %v174
      %v197 = vunpack.c.l.b16 %v175
      %v198 = vpack.c.b16 %v195, %v194
      %v199 = vpack.c.b16 %v197, %v196
      %vm200 = vsmask.f32 7424
      %v202 = vshrl.u32 %v198, 16
      %v204 = vshll.u32 %v198, 16
      %v206 = vrot.slane %v204, 1
      %v207 = vor.u32 %v202, %v206
      %v209 = vshll.u32 %v199, 16
      %v211 = vrot.slane %v209, 1
      %v212 = vsel %vm200, %v207, %v211
      %v213 = vshrl.u32 %v199, 16
      %v215 = vor.u32 %v213, %v211
      %v222 = vunpack.c.l.b16 %v184
      %v223 = vunpack.c.h.b16 %v184
      %v224 = vunpack.c.l.b16 %v185
      %v225 = vunpack.c.h.b16 %v185
      %v226 = vunpack.c.l.b16 %v186
      %v227 = vunpack.c.h.b16 %v186
      %v228 = vunpack.c.l.b16 %v187
      %v229 = vunpack.c.h.b16 %v187
      %v230 = vunpack.c.l.b16 %v188
      %v231 = vunpack.c.h.b16 %v188
      %v232 = vunpack.c.l.b16 %v189
      %v233 = vunpack.c.h.b16 %v189
      %v234 = vpack.c.b16 %v224, %v222
      %v235 = vpack.c.b16 %v225, %v223
      %v236 = vpack.c.b16 %v228, %v226
      %v237 = vpack.c.b16 %v229, %v227
      %v238 = vpack.c.b16 %v232, %v230
      %v239 = vpack.c.b16 %v233, %v231
      %vm246 = vcmask 392192
      %v248 = vsel %vm246, %v212, 0
      %v251 = vsel %vm246, %v215, 0
      %253 = vmatprep.subr.bf16.mxu0 0
      %254 = vmatpush1.bf16.msra.mxu0 0
      %255 = vmatprep.subr.bf16.mxu0 0
      %256 = vmatpush1.bf16.msra.mxu0 0
      %257 = vmatprep.subr.bf16.mxu0 0
      %258 = vmatpush1.bf16.msra.mxu0 0
      %259 = vmatprep.subr.bf16.mxu0 0
      %260 = vmatpush1.bf16.msra.mxu0 0
      %261 = vmatprep.subr.bf16.mxu0 0
      %262 = vmatpush1.bf16.msra.mxu0 0
      %263 = vmatprep.subr.bf16.mxu0 %v239
      %264 = vmatpush1.bf16.msra.mxu0 %v238
      %265 = vmatprep.subr.bf16.mxu0 %v237
      %266 = vmatpush1.bf16.msra.mxu0 %v236
      %267 = vmatprep.subr.bf16.mxu0 %v235
      %268 = vmatpush1.bf16.msra.mxu0 %v234
      %269 = vmatprep.subr.bf16.mxu0 0
      %270 = vmatpush2.bf16.msra.mxu0 0
      %271 = vmatprep.subr.bf16.mxu0 0
      %272 = vmatpush2.bf16.msra.mxu0 0
      %273 = vmatprep.subr.bf16.mxu0 0
      %274 = vmatpush2.bf16.msra.mxu0 0
      %275 = vmatprep.subr.bf16.mxu0 0
      %276 = vmatpush2.bf16.msra.mxu0 0
      %277 = vmatprep.subr.bf16.mxu0 0
      %278 = vmatpush2.bf16.msra.mxu0 0
      %279 = vmatprep.subr.bf16.mxu0 0
      %280 = vmatpush2.bf16.msra.mxu0 0
      %281 = vmatprep.subr.bf16.mxu0 0
      %282 = vmatpush2.bf16.msra.mxu0 0
      %283 = vmatprep.subr.bf16.mxu0 0
      %284 = vmatpush2.bf16.msra.mxu0 0
      %285 = vmatprep.mubr.bf16.mxu0 0
      %286 = vmatmul.mubr.bf16.gmra.mxu0 %v248
      %v287 = vpop.f32.mrf.mxu0
      %v288 = vadd.f32 0.0, %v287
      %v289 = vpop.f32.mrf.mxu0
      %v290 = vadd.f32 0.0, %v289
      %v291 = vpop.f32.mrf.mxu0
      %v292 = vadd.f32 0.0, %v291
      %v293 = vpop.f32.mrf.mxu0
      %v294 = vadd.f32 0.0, %v293
      %295 = vmatprep.mubr.bf16.mxu0 0
      %296 = vmatmul.mubr.bf16.gmra.mxu0 %v251
      %v297 = vpop.f32.mrf.mxu0
      %v298 = vadd.f32 0.0, %v297
      %v299 = vpop.f32.mrf.mxu0
      %v300 = vadd.f32 0.0, %v299
      %v301 = vpop.f32.mrf.mxu0
      %v302 = vpop.f32.mrf.mxu0
      %303 = vdwg.mxu0
      %v304 = vpack.c.b16 %v196, %v196
      %v311 = vunpack.c.l.b16 %v177
      %v312 = vunpack.c.h.b16 %v177
      %v313 = vunpack.c.l.b16 %v178
      %v314 = vunpack.c.h.b16 %v178
      %v315 = vunpack.c.l.b16 %v179
      %v316 = vunpack.c.h.b16 %v179
      %v317 = vunpack.c.l.b16 %v180
      %v318 = vunpack.c.h.b16 %v180
      %v319 = vunpack.c.l.b16 %v181
      %v320 = vunpack.c.h.b16 %v181
      %v321 = vunpack.c.l.b16 %v182
      %v322 = vunpack.c.h.b16 %v182
      %v323 = vpack.c.b16 %v313, %v311
      %v324 = vpack.c.b16 %v314, %v312
      %v325 = vpack.c.b16 %v317, %v315
      %v326 = vpack.c.b16 %v318, %v316
      %v327 = vpack.c.b16 %v321, %v319
      %v328 = vpack.c.b16 %v322, %v320
      %v335 = vsel %vm246, %v198, 0
      %v338 = vsel %vm246, %v304, 0
      %340 = vmatprep.subr.bf16.mxu0 0
      %341 = vmatpush1.bf16.msra.mxu0 0
      %342 = vmatprep.subr.bf16.mxu0 0
      %343 = vmatpush1.bf16.msra.mxu0 0
      %344 = vmatprep.subr.bf16.mxu0 0
      %345 = vmatpush1.bf16.msra.mxu0 0
      %346 = vmatprep.subr.bf16.mxu0 0
      %347 = vmatpush1.bf16.msra.mxu0 0
      %348 = vmatprep.subr.bf16.mxu0 0
      %349 = vmatpush1.bf16.msra.mxu0 0
      %350 = vmatprep.subr.bf16.mxu0 %v328
      %351 = vmatpush1.bf16.msra.mxu0 %v327
      %352 = vmatprep.subr.bf16.mxu0 %v326
      %353 = vmatpush1.bf16.msra.mxu0 %v325
      %354 = vmatprep.subr.bf16.mxu0 %v324
      %355 = vmatpush1.bf16.msra.mxu0 %v323
      %356 = vmatprep.subr.bf16.mxu0 0
      %357 = vmatpush2.bf16.msra.mxu0 0
      %358 = vmatprep.subr.bf16.mxu0 0
      %359 = vmatpush2.bf16.msra.mxu0 0
      %360 = vmatprep.subr.bf16.mxu0 0
      %361 = vmatpush2.bf16.msra.mxu0 0
      %362 = vmatprep.subr.bf16.mxu0 0
      %363 = vmatpush2.bf16.msra.mxu0 0
      %364 = vmatprep.subr.bf16.mxu0 0
      %365 = vmatpush2.bf16.msra.mxu0 0
      %366 = vmatprep.subr.bf16.mxu0 0
      %367 = vmatpush2.bf16.msra.mxu0 0
      %368 = vmatprep.subr.bf16.mxu0 0
      %369 = vmatpush2.bf16.msra.mxu0 0
      %370 = vmatprep.subr.bf16.mxu0 0
      %371 = vmatpush2.bf16.msra.mxu0 0
      %372 = vmatprep.mubr.bf16.mxu0 0
      %373 = vmatmul.mubr.bf16.gmra.mxu0 %v335
      %v374 = vpop.f32.mrf.mxu0
      %v375 = vadd.f32 %v288, %v374
      %v376 = vpop.f32.mrf.mxu0
      %v377 = vadd.f32 %v290, %v376
      %v378 = vpop.f32.mrf.mxu0
      %v379 = vadd.f32 %v292, %v378
      %v380 = vpop.f32.mrf.mxu0
      %v381 = vadd.f32 %v294, %v380
      %382 = vmatprep.mubr.bf16.mxu0 0
      %383 = vmatmul.mubr.bf16.gmra.mxu0 %v338
      %v384 = vpop.f32.mrf.mxu0
      %v385 = vadd.f32 %v298, %v384
      %v386 = vpop.f32.mrf.mxu0
      %v387 = vadd.f32 %v300, %v386
      %v388 = vpop.f32.mrf.mxu0
      %v389 = vpop.f32.mrf.mxu0
      %390 = vdwg.mxu0
      %s391 = scalar_lea.vmem %s1, 96
      %v392 = vld [vmem:[%s391] sm:$0xff]
      %v393 = vld [vmem:[%s391 + $0x8] sm:$0xff]
      %v394 = vld [vmem:[%s391 + $0x10] sm:$0xff]
      %v395 = vld [vmem:[%s391 + $0x18] sm:$0xff]
      %v396 = vld [vmem:[%s391 + $0x20] sm:$0xff]
      %v397 = vld [vmem:[%s391 + $0x28] sm:$0xff]
      %vm398 = vcmask 1046528
      %v399 = vrot.slane %v198, 1
      %v400 = vrot.slane %v199, 1
      %v401 = vsel %vm398, %v399, %v400
      %v408 = vunpack.c.l.b16 %v392
      %v409 = vunpack.c.h.b16 %v392
      %v410 = vunpack.c.l.b16 %v393
      %v411 = vunpack.c.h.b16 %v393
      %v412 = vunpack.c.l.b16 %v394
      %v413 = vunpack.c.h.b16 %v394
      %v414 = vunpack.c.l.b16 %v395
      %v415 = vunpack.c.h.b16 %v395
      %v416 = vunpack.c.l.b16 %v396
      %v417 = vunpack.c.h.b16 %v396
      %v418 = vunpack.c.l.b16 %v397
      %v419 = vunpack.c.h.b16 %v397
      %v420 = vpack.c.b16 %v410, %v408
      %v421 = vpack.c.b16 %v411, %v409
      %v422 = vpack.c.b16 %v414, %v412
      %v423 = vpack.c.b16 %v415, %v413
      %v424 = vpack.c.b16 %v418, %v416
      %v425 = vpack.c.b16 %v419, %v417
      %v433 = vsel %vm246, %v401, 0
      %v436 = vsel %vm246, %v400, 0
      %438 = vmatprep.subr.bf16.mxu0 0
      %439 = vmatpush1.bf16.msra.mxu0 0
      %440 = vmatprep.subr.bf16.mxu0 0
      %441 = vmatpush1.bf16.msra.mxu0 0
      %442 = vmatprep.subr.bf16.mxu0 0
      %443 = vmatpush1.bf16.msra.mxu0 0
      %444 = vmatprep.subr.bf16.mxu0 0
      %445 = vmatpush1.bf16.msra.mxu0 0
      %446 = vmatprep.subr.bf16.mxu0 0
      %447 = vmatpush1.bf16.msra.mxu0 0
      %448 = vmatprep.subr.bf16.mxu0 %v425
      %449 = vmatpush1.bf16.msra.mxu0 %v424
      %450 = vmatprep.subr.bf16.mxu0 %v423
      %451 = vmatpush1.bf16.msra.mxu0 %v422
      %452 = vmatprep.subr.bf16.mxu0 %v421
      %453 = vmatpush1.bf16.msra.mxu0 %v420
      %454 = vmatprep.subr.bf16.mxu0 0
      %455 = vmatpush2.bf16.msra.mxu0 0
      %456 = vmatprep.subr.bf16.mxu0 0
      %457 = vmatpush2.bf16.msra.mxu0 0
      %458 = vmatprep.subr.bf16.mxu0 0
      %459 = vmatpush2.bf16.msra.mxu0 0
      %460 = vmatprep.subr.bf16.mxu0 0
      %461 = vmatpush2.bf16.msra.mxu0 0
      %462 = vmatprep.subr.bf16.mxu0 0
      %463 = vmatpush2.bf16.msra.mxu0 0
      %464 = vmatprep.subr.bf16.mxu0 0
      %465 = vmatpush2.bf16.msra.mxu0 0
      %466 = vmatprep.subr.bf16.mxu0 0
      %467 = vmatpush2.bf16.msra.mxu0 0
      %468 = vmatprep.subr.bf16.mxu0 0
      %469 = vmatpush2.bf16.msra.mxu0 0
      %470 = vmatprep.mubr.bf16.mxu0 0
      %471 = vmatmul.mubr.bf16.gmra.mxu0 %v433
      %v472 = vpop.f32.mrf.mxu0
      %v473 = vadd.f32 0.0, %v472
      %v474 = vpop.f32.mrf.mxu0
      %v475 = vadd.f32 0.0, %v474
      %v476 = vpop.f32.mrf.mxu0
      %v477 = vadd.f32 0.0, %v476
      %v478 = vpop.f32.mrf.mxu0
      %v479 = vadd.f32 0.0, %v478
      %480 = vmatprep.mubr.bf16.mxu0 0
      %481 = vmatmul.mubr.bf16.gmra.mxu0 %v436
      %v482 = vpop.f32.mrf.mxu0
      %v483 = vadd.f32 0.0, %v482
      %v484 = vpop.f32.mrf.mxu0
      %v485 = vadd.f32 0.0, %v484
      %v486 = vpop.f32.mrf.mxu0
      %v487 = vpop.f32.mrf.mxu0
      %488 = vdwg.mxu0
      %v489 = vadd.f32 %v375, %v473
      %v490 = vadd.f32 %v377, %v475
      %v491 = vadd.f32 %v379, %v477
      %v492 = vadd.f32 %v381, %v479
      %v493 = vadd.f32 %v385, %v483
      %v494 = vadd.f32 %v387, %v485
      %s495 = scalar_lea.vmem %s1, 144
      %v496 = vld [vmem:[%s495] sm:$0xff]
      %v497 = vld [vmem:[%s495 + $0x8] sm:$0xff]
      %v498 = vld [vmem:[%s495 + $0x10] sm:$0xff]
      %v499 = vld [vmem:[%s495 + $0x18] sm:$0xff]
      %v500 = vld [vmem:[%s495 + $0x20] sm:$0xff]
      %v501 = vld [vmem:[%s495 + $0x28] sm:$0xff]
      %vm502 = vcmask 1044480
      %v503 = vrot.slane %v198, 3
      %v504 = vrot.slane %v199, 3
      %v505 = vsel %vm502, %v503, %v504
      %v512 = vunpack.c.l.b16 %v496
      %v513 = vunpack.c.h.b16 %v496
      %v514 = vunpack.c.l.b16 %v497
      %v515 = vunpack.c.h.b16 %v497
      %v516 = vunpack.c.l.b16 %v498
      %v517 = vunpack.c.h.b16 %v498
      %v518 = vunpack.c.l.b16 %v499
      %v519 = vunpack.c.h.b16 %v499
      %v520 = vunpack.c.l.b16 %v500
      %v521 = vunpack.c.h.b16 %v500
      %v522 = vunpack.c.l.b16 %v501
      %v523 = vunpack.c.h.b16 %v501
      %v524 = vpack.c.b16 %v514, %v512
      %v525 = vpack.c.b16 %v515, %v513
      %v526 = vpack.c.b16 %v518, %v516
      %v527 = vpack.c.b16 %v519, %v517
      %v528 = vpack.c.b16 %v522, %v520
      %v529 = vpack.c.b16 %v523, %v521
      %v537 = vsel %vm246, %v505, 0
      %v540 = vsel %vm246, %v504, 0
      %542 = vmatprep.subr.bf16.mxu0 0
      %543 = vmatpush1.bf16.msra.mxu0 0
      %544 = vmatprep.subr.bf16.mxu0 0
      %545 = vmatpush1.bf16.msra.mxu0 0
      %546 = vmatprep.subr.bf16.mxu0 0
      %547 = vmatpush1.bf16.msra.mxu0 0
      %548 = vmatprep.subr.bf16.mxu0 0
      %549 = vmatpush1.bf16.msra.mxu0 0
      %550 = vmatprep.subr.bf16.mxu0 0
      %551 = vmatpush1.bf16.msra.mxu0 0
      %552 = vmatprep.subr.bf16.mxu0 %v529
      %553 = vmatpush1.bf16.msra.mxu0 %v528
      %554 = vmatprep.subr.bf16.mxu0 %v527
      %555 = vmatpush1.bf16.msra.mxu0 %v526
      %556 = vmatprep.subr.bf16.mxu0 %v525
      %557 = vmatpush1.bf16.msra.mxu0 %v524
      %558 = vmatprep.subr.bf16.mxu0 0
      %559 = vmatpush2.bf16.msra.mxu0 0
      %560 = vmatprep.subr.bf16.mxu0 0
      %561 = vmatpush2.bf16.msra.mxu0 0
      %562 = vmatprep.subr.bf16.mxu0 0
      %563 = vmatpush2.bf16.msra.mxu0 0
      %564 = vmatprep.subr.bf16.mxu0 0
      %565 = vmatpush2.bf16.msra.mxu0 0
      %566 = vmatprep.subr.bf16.mxu0 0
      %567 = vmatpush2.bf16.msra.mxu0 0
      %568 = vmatprep.subr.bf16.mxu0 0
      %569 = vmatpush2.bf16.msra.mxu0 0
      %570 = vmatprep.subr.bf16.mxu0 0
      %571 = vmatpush2.bf16.msra.mxu0 0
      %572 = vmatprep.subr.bf16.mxu0 0
      %573 = vmatpush2.bf16.msra.mxu0 0
      %574 = vmatprep.mubr.bf16.mxu0 0
      %575 = vmatmul.mubr.bf16.gmra.mxu0 %v537
      %v576 = vpop.f32.mrf.mxu0
      %v577 = vadd.f32 0.0, %v576
      %v578 = vpop.f32.mrf.mxu0
      %v579 = vadd.f32 0.0, %v578
      %v580 = vpop.f32.mrf.mxu0
      %v581 = vadd.f32 0.0, %v580
      %v582 = vpop.f32.mrf.mxu0
      %v583 = vadd.f32 0.0, %v582
      %584 = vmatprep.mubr.bf16.mxu0 0
      %585 = vmatmul.mubr.bf16.gmra.mxu0 %v540
      %v586 = vpop.f32.mrf.mxu0
      %v587 = vadd.f32 0.0, %v586
      %v588 = vpop.f32.mrf.mxu0
      %v589 = vadd.f32 0.0, %v588
      %v590 = vpop.f32.mrf.mxu0
      %v591 = vpop.f32.mrf.mxu0
      %592 = vdwg.mxu0
      %v593 = vadd.f32 %v489, %v577
      %v594 = vadd.f32 %v490, %v579
      %v595 = vadd.f32 %v491, %v581
      %v596 = vadd.f32 %v492, %v583
      %v597 = vadd.f32 %v493, %v587
      %v598 = vadd.f32 %v494, %v589
      %s599 = scalar_lea.vmem %s1, 192
      %v600 = vld [vmem:[%s599] sm:$0xff]
      %v601 = vld [vmem:[%s599 + $0x8] sm:$0xff]
      %v602 = vld [vmem:[%s599 + $0x10] sm:$0xff]
      %v603 = vld [vmem:[%s599 + $0x18] sm:$0xff]
      %v604 = vld [vmem:[%s599 + $0x20] sm:$0xff]
      %v605 = vld [vmem:[%s599 + $0x28] sm:$0xff]
      %vm606 = vsmask.f32 4352
      %v607 = vrot.slane %v202, 3
      %v608 = vrot.slane %v204, 4
      %v609 = vor.u32 %v607, %v608
      %v610 = vrot.slane %v213, 3
      %v611 = vrot.slane %v209, 4
      %v612 = vor.u32 %v610, %v611
      %v613 = vsel %vm606, %v609, %v612
      %v620 = vunpack.c.l.b16 %v600
      %v621 = vunpack.c.h.b16 %v600
      %v622 = vunpack.c.l.b16 %v601
      %v623 = vunpack.c.h.b16 %v601
      %v624 = vunpack.c.l.b16 %v602
      %v625 = vunpack.c.h.b16 %v602
      %v626 = vunpack.c.l.b16 %v603
      %v627 = vunpack.c.h.b16 %v603
      %v628 = vunpack.c.l.b16 %v604
      %v629 = vunpack.c.h.b16 %v604
      %v630 = vunpack.c.l.b16 %v605
      %v631 = vunpack.c.h.b16 %v605
      %v632 = vpack.c.b16 %v622, %v620
      %v633 = vpack.c.b16 %v623, %v621
      %v634 = vpack.c.b16 %v626, %v624
      %v635 = vpack.c.b16 %v627, %v625
      %v636 = vpack.c.b16 %v630, %v628
      %v637 = vpack.c.b16 %v631, %v629
      %v645 = vsel %vm246, %v613, 0
      %v648 = vsel %vm246, %v612, 0
      %650 = vmatprep.subr.bf16.mxu0 0
      %651 = vmatpush1.bf16.msra.mxu0 0
      %652 = vmatprep.subr.bf16.mxu0 0
      %653 = vmatpush1.bf16.msra.mxu0 0
      %654 = vmatprep.subr.bf16.mxu0 0
      %655 = vmatpush1.bf16.msra.mxu0 0
      %656 = vmatprep.subr.bf16.mxu0 0
      %657 = vmatpush1.bf16.msra.mxu0 0
      %658 = vmatprep.subr.bf16.mxu0 0
      %659 = vmatpush1.bf16.msra.mxu0 0
      %660 = vmatprep.subr.bf16.mxu0 %v637
      %661 = vmatpush1.bf16.msra.mxu0 %v636
      %662 = vmatprep.subr.bf16.mxu0 %v635
      %663 = vmatpush1.bf16.msra.mxu0 %v634
      %664 = vmatprep.subr.bf16.mxu0 %v633
      %665 = vmatpush1.bf16.msra.mxu0 %v632
      %666 = vmatprep.subr.bf16.mxu0 0
      %667 = vmatpush2.bf16.msra.mxu0 0
      %668 = vmatprep.subr.bf16.mxu0 0
      %669 = vmatpush2.bf16.msra.mxu0 0
      %670 = vmatprep.subr.bf16.mxu0 0
      %671 = vmatpush2.bf16.msra.mxu0 0
      %672 = vmatprep.subr.bf16.mxu0 0
      %673 = vmatpush2.bf16.msra.mxu0 0
      %674 = vmatprep.subr.bf16.mxu0 0
      %675 = vmatpush2.bf16.msra.mxu0 0
      %676 = vmatprep.subr.bf16.mxu0 0
      %677 = vmatpush2.bf16.msra.mxu0 0
      %678 = vmatprep.subr.bf16.mxu0 0
      %679 = vmatpush2.bf16.msra.mxu0 0
      %680 = vmatprep.subr.bf16.mxu0 0
      %681 = vmatpush2.bf16.msra.mxu0 0
      %682 = vmatprep.mubr.bf16.mxu0 0
      %683 = vmatmul.mubr.bf16.gmra.mxu0 %v645
      %v684 = vpop.f32.mrf.mxu0
      %v685 = vadd.f32 0.0, %v684
      %v686 = vpop.f32.mrf.mxu0
      %v687 = vadd.f32 0.0, %v686
      %v688 = vpop.f32.mrf.mxu0
      %v689 = vadd.f32 0.0, %v688
      %v690 = vpop.f32.mrf.mxu0
      %v691 = vadd.f32 0.0, %v690
      %692 = vmatprep.mubr.bf16.mxu0 0
      %693 = vmatmul.mubr.bf16.gmra.mxu0 %v648
      %v694 = vpop.f32.mrf.mxu0
      %v695 = vadd.f32 0.0, %v694
      %v696 = vpop.f32.mrf.mxu0
      %v697 = vadd.f32 0.0, %v696
      %v698 = vpop.f32.mrf.mxu0
      %v699 = vpop.f32.mrf.mxu0
      %700 = vdwg.mxu0
      %v701 = vadd.f32 %v593, %v685
      %v702 = vadd.f32 %v594, %v687
      %v703 = vadd.f32 %v595, %v689
      %v704 = vadd.f32 %v596, %v691
      %v705 = vadd.f32 %v597, %v695
      %v706 = vadd.f32 %v598, %v697
      %s707 = scalar_lea.vmem %s1, 240
      %v708 = vld [vmem:[%s707] sm:$0xff]
      %v709 = vld [vmem:[%s707 + $0x8] sm:$0xff]
      %v710 = vld [vmem:[%s707 + $0x10] sm:$0xff]
      %v711 = vld [vmem:[%s707 + $0x18] sm:$0xff]
      %v712 = vld [vmem:[%s707 + $0x20] sm:$0xff]
      %v713 = vld [vmem:[%s707 + $0x28] sm:$0xff]
      %v714 = vpack.c.b16 %v196, %v195
      %v715 = vpack.c.b16 %v197, %v197
      %v722 = vunpack.c.l.b16 %v708
      %v723 = vunpack.c.h.b16 %v708
      %v724 = vunpack.c.l.b16 %v709
      %v725 = vunpack.c.h.b16 %v709
      %v726 = vunpack.c.l.b16 %v710
      %v727 = vunpack.c.h.b16 %v710
      %v728 = vunpack.c.l.b16 %v711
      %v729 = vunpack.c.h.b16 %v711
      %v730 = vunpack.c.l.b16 %v712
      %v731 = vunpack.c.h.b16 %v712
      %v732 = vunpack.c.l.b16 %v713
      %v733 = vunpack.c.h.b16 %v713
      %v734 = vpack.c.b16 %v724, %v722
      %v735 = vpack.c.b16 %v725, %v723
      %v736 = vpack.c.b16 %v728, %v726
      %v737 = vpack.c.b16 %v729, %v727
      %v738 = vpack.c.b16 %v732, %v730
      %v739 = vpack.c.b16 %v733, %v731
      %v747 = vsel %vm246, %v714, 0
      %v750 = vsel %vm246, %v715, 0
      %752 = vmatprep.subr.bf16.mxu0 0
      %753 = vmatpush1.bf16.msra.mxu0 0
      %754 = vmatprep.subr.bf16.mxu0 0
      %755 = vmatpush1.bf16.msra.mxu0 0
      %756 = vmatprep.subr.bf16.mxu0 0
      %757 = vmatpush1.bf16.msra.mxu0 0
      %758 = vmatprep.subr.bf16.mxu0 0
      %759 = vmatpush1.bf16.msra.mxu0 0
      %760 = vmatprep.subr.bf16.mxu0 0
      %761 = vmatpush1.bf16.msra.mxu0 0
      %762 = vmatprep.subr.bf16.mxu0 %v739
      %763 = vmatpush1.bf16.msra.mxu0 %v738
      %764 = vmatprep.subr.bf16.mxu0 %v737
      %765 = vmatpush1.bf16.msra.mxu0 %v736
      %766 = vmatprep.subr.bf16.mxu0 %v735
      %767 = vmatpush1.bf16.msra.mxu0 %v734
      %768 = vmatprep.subr.bf16.mxu0 0
      %769 = vmatpush2.bf16.msra.mxu0 0
      %770 = vmatprep.subr.bf16.mxu0 0
      %771 = vmatpush2.bf16.msra.mxu0 0
      %772 = vmatprep.subr.bf16.mxu0 0
      %773 = vmatpush2.bf16.msra.mxu0 0
      %774 = vmatprep.subr.bf16.mxu0 0
      %775 = vmatpush2.bf16.msra.mxu0 0
      %776 = vmatprep.subr.bf16.mxu0 0
      %777 = vmatpush2.bf16.msra.mxu0 0
      %778 = vmatprep.subr.bf16.mxu0 0
      %779 = vmatpush2.bf16.msra.mxu0 0
      %780 = vmatprep.subr.bf16.mxu0 0
      %781 = vmatpush2.bf16.msra.mxu0 0
      %782 = vmatprep.subr.bf16.mxu0 0
      %783 = vmatpush2.bf16.msra.mxu0 0
      %784 = vmatprep.mubr.bf16.mxu0 0
      %785 = vmatmul.mubr.bf16.gmra.mxu0 %v747
      %v786 = vpop.f32.mrf.mxu0
      %v787 = vadd.f32 0.0, %v786
      %v788 = vpop.f32.mrf.mxu0
      %v789 = vadd.f32 0.0, %v788
      %v790 = vpop.f32.mrf.mxu0
      %v791 = vadd.f32 0.0, %v790
      %v792 = vpop.f32.mrf.mxu0
      %v793 = vadd.f32 0.0, %v792
      %794 = vmatprep.mubr.bf16.mxu0 0
      %795 = vmatmul.mubr.bf16.gmra.mxu0 %v750
      %v796 = vpop.f32.mrf.mxu0
      %v797 = vadd.f32 0.0, %v796
      %v798 = vpop.f32.mrf.mxu0
      %v799 = vadd.f32 0.0, %v798
      %v800 = vpop.f32.mrf.mxu0
      %v801 = vpop.f32.mrf.mxu0
      %802 = vdwg.mxu0
      %v803 = vadd.f32 %v701, %v787
      %v804 = vadd.f32 %v702, %v789
      %v805 = vadd.f32 %v703, %v791
      %v806 = vadd.f32 %v704, %v793
      %v807 = vadd.f32 %v705, %v797
      %v808 = vadd.f32 %v706, %v799
      %s809 = scalar_lea.vmem %s1, 288
      %v810 = vld [vmem:[%s809] sm:$0xff]
      %v811 = vld [vmem:[%s809 + $0x8] sm:$0xff]
      %v812 = vld [vmem:[%s809 + $0x10] sm:$0xff]
      %v813 = vld [vmem:[%s809 + $0x18] sm:$0xff]
      %v814 = vld [vmem:[%s809 + $0x20] sm:$0xff]
      %v815 = vld [vmem:[%s809 + $0x28] sm:$0xff]
      %v817 = vunpack.c.l.b16 %v176
      %v818 = vpack.c.b16 %v817, %v197
      %vm819 = vcmask 1045504
      %v820 = vrot.slane %v714, 2
      %v821 = vrot.slane %v818, 2
      %v822 = vsel %vm819, %v820, %v821
      %v829 = vunpack.c.l.b16 %v810
      %v830 = vunpack.c.h.b16 %v810
      %v831 = vunpack.c.l.b16 %v811
      %v832 = vunpack.c.h.b16 %v811
      %v833 = vunpack.c.l.b16 %v812
      %v834 = vunpack.c.h.b16 %v812
      %v835 = vunpack.c.l.b16 %v813
      %v836 = vunpack.c.h.b16 %v813
      %v837 = vunpack.c.l.b16 %v814
      %v838 = vunpack.c.h.b16 %v814
      %v839 = vunpack.c.l.b16 %v815
      %v840 = vunpack.c.h.b16 %v815
      %v841 = vpack.c.b16 %v831, %v829
      %v842 = vpack.c.b16 %v832, %v830
      %v843 = vpack.c.b16 %v835, %v833
      %v844 = vpack.c.b16 %v836, %v834
      %v845 = vpack.c.b16 %v839, %v837
      %v846 = vpack.c.b16 %v840, %v838
      %v854 = vsel %vm246, %v822, 0
      %v857 = vsel %vm246, %v821, 0
      %859 = vmatprep.subr.bf16.mxu0 0
      %860 = vmatpush1.bf16.msra.mxu0 0
      %861 = vmatprep.subr.bf16.mxu0 0
      %862 = vmatpush1.bf16.msra.mxu0 0
      %863 = vmatprep.subr.bf16.mxu0 0
      %864 = vmatpush1.bf16.msra.mxu0 0
      %865 = vmatprep.subr.bf16.mxu0 0
      %866 = vmatpush1.bf16.msra.mxu0 0
      %867 = vmatprep.subr.bf16.mxu0 0
      %868 = vmatpush1.bf16.msra.mxu0 0
      %869 = vmatprep.subr.bf16.mxu0 %v846
      %870 = vmatpush1.bf16.msra.mxu0 %v845
      %871 = vmatprep.subr.bf16.mxu0 %v844
      %872 = vmatpush1.bf16.msra.mxu0 %v843
      %873 = vmatprep.subr.bf16.mxu0 %v842
      %874 = vmatpush1.bf16.msra.mxu0 %v841
      %875 = vmatprep.subr.bf16.mxu0 0
      %876 = vmatpush2.bf16.msra.mxu0 0
      %877 = vmatprep.subr.bf16.mxu0 0
      %878 = vmatpush2.bf16.msra.mxu0 0
      %879 = vmatprep.subr.bf16.mxu0 0
      %880 = vmatpush2.bf16.msra.mxu0 0
      %881 = vmatprep.subr.bf16.mxu0 0
      %882 = vmatpush2.bf16.msra.mxu0 0
      %883 = vmatprep.subr.bf16.mxu0 0
      %884 = vmatpush2.bf16.msra.mxu0 0
      %885 = vmatprep.subr.bf16.mxu0 0
      %886 = vmatpush2.bf16.msra.mxu0 0
      %887 = vmatprep.subr.bf16.mxu0 0
      %888 = vmatpush2.bf16.msra.mxu0 0
      %889 = vmatprep.subr.bf16.mxu0 0
      %890 = vmatpush2.bf16.msra.mxu0 0
      %891 = vmatprep.mubr.bf16.mxu0 0
      %892 = vmatmul.mubr.bf16.gmra.mxu0 %v854
      %v893 = vpop.f32.mrf.mxu0
      %v894 = vadd.f32 0.0, %v893
      %v895 = vpop.f32.mrf.mxu0
      %v896 = vadd.f32 0.0, %v895
      %v897 = vpop.f32.mrf.mxu0
      %v898 = vadd.f32 0.0, %v897
      %v899 = vpop.f32.mrf.mxu0
      %v900 = vadd.f32 0.0, %v899
      %901 = vmatprep.mubr.bf16.mxu0 0
      %902 = vmatmul.mubr.bf16.gmra.mxu0 %v857
      %v903 = vpop.f32.mrf.mxu0
      %v904 = vadd.f32 0.0, %v903
      %v905 = vpop.f32.mrf.mxu0
      %v906 = vadd.f32 0.0, %v905
      %v907 = vpop.f32.mrf.mxu0
      %v908 = vpop.f32.mrf.mxu0
      %909 = vdwg.mxu0
      %v910 = vadd.f32 %v803, %v894
      %v911 = vadd.f32 %v804, %v896
      %v912 = vadd.f32 %v805, %v898
      %v913 = vadd.f32 %v806, %v900
      %v914 = vadd.f32 %v807, %v904
      %v915 = vadd.f32 %v808, %v906
      %s916 = scalar_lea.vmem %s1, 336
      %v917 = vld [vmem:[%s916] sm:$0xff]
      %v918 = vld [vmem:[%s916 + $0x8] sm:$0xff]
      %v919 = vld [vmem:[%s916 + $0x10] sm:$0xff]
      %v920 = vld [vmem:[%s916 + $0x18] sm:$0xff]
      %v921 = vld [vmem:[%s916 + $0x20] sm:$0xff]
      %v922 = vld [vmem:[%s916 + $0x28] sm:$0xff]
      %vm923 = vsmask.f32 5376
      %v924 = vshrl.u32 %v714, 16
      %v926 = vrot.slane %v924, 2
      %v927 = vshll.u32 %v714, 16
      %v929 = vrot.slane %v927, 3
      %v930 = vor.u32 %v926, %v929
      %v932 = vshrl.u32 %v818, 16
      %v934 = vrot.slane %v932, 2
      %v935 = vshll.u32 %v818, 16
      %v937 = vrot.slane %v935, 3
      %v938 = vor.u32 %v934, %v937
      %v939 = vsel %vm923, %v930, %v938
      %v946 = vunpack.c.l.b16 %v917
      %v947 = vunpack.c.h.b16 %v917
      %v948 = vunpack.c.l.b16 %v918
      %v949 = vunpack.c.h.b16 %v918
      %v950 = vunpack.c.l.b16 %v919
      %v951 = vunpack.c.h.b16 %v919
      %v952 = vunpack.c.l.b16 %v920
      %v953 = vunpack.c.h.b16 %v920
      %v954 = vunpack.c.l.b16 %v921
      %v955 = vunpack.c.h.b16 %v921
      %v956 = vunpack.c.l.b16 %v922
      %v957 = vunpack.c.h.b16 %v922
      %v958 = vpack.c.b16 %v948, %v946
      %v959 = vpack.c.b16 %v949, %v947
      %v960 = vpack.c.b16 %v952, %v950
      %v961 = vpack.c.b16 %v953, %v951
      %v962 = vpack.c.b16 %v956, %v954
      %v963 = vpack.c.b16 %v957, %v955
      %v971 = vsel %vm246, %v939, 0
      %v974 = vsel %vm246, %v938, 0
      %976 = vmatprep.subr.bf16.mxu0 0
      %977 = vmatpush1.bf16.msra.mxu0 0
      %978 = vmatprep.subr.bf16.mxu0 0
      %979 = vmatpush1.bf16.msra.mxu0 0
      %980 = vmatprep.subr.bf16.mxu0 0
      %981 = vmatpush1.bf16.msra.mxu0 0
      %982 = vmatprep.subr.bf16.mxu0 0
      %983 = vmatpush1.bf16.msra.mxu0 0
      %984 = vmatprep.subr.bf16.mxu0 0
      %985 = vmatpush1.bf16.msra.mxu0 0
      %986 = vmatprep.subr.bf16.mxu0 %v963
      %987 = vmatpush1.bf16.msra.mxu0 %v962
      %988 = vmatprep.subr.bf16.mxu0 %v961
      %989 = vmatpush1.bf16.msra.mxu0 %v960
      %990 = vmatprep.subr.bf16.mxu0 %v959
      %991 = vmatpush1.bf16.msra.mxu0 %v958
      %992 = vmatprep.subr.bf16.mxu0 0
      %993 = vmatpush2.bf16.msra.mxu0 0
      %994 = vmatprep.subr.bf16.mxu0 0
      %995 = vmatpush2.bf16.msra.mxu0 0
      %996 = vmatprep.subr.bf16.mxu0 0
      %997 = vmatpush2.bf16.msra.mxu0 0
      %998 = vmatprep.subr.bf16.mxu0 0
      %999 = vmatpush2.bf16.msra.mxu0 0
      %1000 = vmatprep.subr.bf16.mxu0 0
      %1001 = vmatpush2.bf16.msra.mxu0 0
      %1002 = vmatprep.subr.bf16.mxu0 0
      %1003 = vmatpush2.bf16.msra.mxu0 0
      %1004 = vmatprep.subr.bf16.mxu0 0
      %1005 = vmatpush2.bf16.msra.mxu0 0
      %1006 = vmatprep.subr.bf16.mxu0 0
      %1007 = vmatpush2.bf16.msra.mxu0 0
      %1008 = vmatprep.mubr.bf16.mxu0 0
      %1009 = vmatmul.mubr.bf16.gmra.mxu0 %v971
      %v1010 = vpop.f32.mrf.mxu0
      %v1011 = vadd.f32 0.0, %v1010
      %v1012 = vpop.f32.mrf.mxu0
      %v1013 = vadd.f32 0.0, %v1012
      %v1014 = vpop.f32.mrf.mxu0
      %v1015 = vadd.f32 0.0, %v1014
      %v1016 = vpop.f32.mrf.mxu0
      %v1017 = vadd.f32 0.0, %v1016
      %1018 = vmatprep.mubr.bf16.mxu0 0
      %1019 = vmatmul.mubr.bf16.gmra.mxu0 %v974
      %v1020 = vpop.f32.mrf.mxu0
      %v1021 = vadd.f32 0.0, %v1020
      %v1022 = vpop.f32.mrf.mxu0
      %v1023 = vadd.f32 0.0, %v1022
      %v1024 = vpop.f32.mrf.mxu0
      %v1025 = vpop.f32.mrf.mxu0
      %1026 = vdwg.mxu0
      %v1027 = vadd.f32 %v910, %v1011
      %v1028 = vadd.f32 %v911, %v1013
      %v1029 = vadd.f32 %v912, %v1015
      %v1030 = vadd.f32 %v913, %v1017
      %v1031 = vadd.f32 %v914, %v1021
      %v1032 = vadd.f32 %v915, %v1023
      %s1033 = scalar_lea.vmem %s1, 384
      %v1034 = vld [vmem:[%s1033] sm:$0xff]
      %v1035 = vld [vmem:[%s1033 + $0x8] sm:$0xff]
      %v1036 = vld [vmem:[%s1033 + $0x10] sm:$0xff]
      %v1037 = vld [vmem:[%s1033 + $0x18] sm:$0xff]
      %v1038 = vld [vmem:[%s1033 + $0x20] sm:$0xff]
      %v1039 = vld [vmem:[%s1033 + $0x28] sm:$0xff]
      %v1040 = vrot.slane %v714, 3
      %v1041 = vrot.slane %v818, 3
      %v1042 = vsel %vm502, %v1040, %v1041
      %v1049 = vunpack.c.l.b16 %v1034
      %v1050 = vunpack.c.h.b16 %v1034
      %v1051 = vunpack.c.l.b16 %v1035
      %v1052 = vunpack.c.h.b16 %v1035
      %v1053 = vunpack.c.l.b16 %v1036
      %v1054 = vunpack.c.h.b16 %v1036
      %v1055 = vunpack.c.l.b16 %v1037
      %v1056 = vunpack.c.h.b16 %v1037
      %v1057 = vunpack.c.l.b16 %v1038
      %v1058 = vunpack.c.h.b16 %v1038
      %v1059 = vunpack.c.l.b16 %v1039
      %v1060 = vunpack.c.h.b16 %v1039
      %v1061 = vpack.c.b16 %v1051, %v1049
      %v1062 = vpack.c.b16 %v1052, %v1050
      %v1063 = vpack.c.b16 %v1055, %v1053
      %v1064 = vpack.c.b16 %v1056, %v1054
      %v1065 = vpack.c.b16 %v1059, %v1057
      %v1066 = vpack.c.b16 %v1060, %v1058
      %v1074 = vsel %vm246, %v1042, 0
      %v1077 = vsel %vm246, %v1041, 0
      %1079 = vmatprep.subr.bf16.mxu0 0
      %1080 = vmatpush1.bf16.msra.mxu0 0
      %1081 = vmatprep.subr.bf16.mxu0 0
      %1082 = vmatpush1.bf16.msra.mxu0 0
      %1083 = vmatprep.subr.bf16.mxu0 0
      %1084 = vmatpush1.bf16.msra.mxu0 0
      %1085 = vmatprep.subr.bf16.mxu0 0
      %1086 = vmatpush1.bf16.msra.mxu0 0
      %1087 = vmatprep.subr.bf16.mxu0 0
      %1088 = vmatpush1.bf16.msra.mxu0 0
      %1089 = vmatprep.subr.bf16.mxu0 %v1066
      %1090 = vmatpush1.bf16.msra.mxu0 %v1065
      %1091 = vmatprep.subr.bf16.mxu0 %v1064
      %1092 = vmatpush1.bf16.msra.mxu0 %v1063
      %1093 = vmatprep.subr.bf16.mxu0 %v1062
      %1094 = vmatpush1.bf16.msra.mxu0 %v1061
      %1095 = vmatprep.subr.bf16.mxu0 0
      %1096 = vmatpush2.bf16.msra.mxu0 0
      %1097 = vmatprep.subr.bf16.mxu0 0
      %1098 = vmatpush2.bf16.msra.mxu0 0
      %1099 = vmatprep.subr.bf16.mxu0 0
      %1100 = vmatpush2.bf16.msra.mxu0 0
      %1101 = vmatprep.subr.bf16.mxu0 0
      %1102 = vmatpush2.bf16.msra.mxu0 0
      %1103 = vmatprep.subr.bf16.mxu0 0
      %1104 = vmatpush2.bf16.msra.mxu0 0
      %1105 = vmatprep.subr.bf16.mxu0 0
      %1106 = vmatpush2.bf16.msra.mxu0 0
      %1107 = vmatprep.subr.bf16.mxu0 0
      %1108 = vmatpush2.bf16.msra.mxu0 0
      %1109 = vmatprep.subr.bf16.mxu0 0
      %1110 = vmatpush2.bf16.msra.mxu0 0
      %1111 = vmatprep.mubr.bf16.mxu0 0
      %1112 = vmatmul.mubr.bf16.gmra.mxu0 %v1074
      %v1113 = vpop.f32.mrf.mxu0
      %v1114 = vadd.f32 0.0, %v1113
      %v1115 = vpop.f32.mrf.mxu0
      %v1116 = vadd.f32 0.0, %v1115
      %v1117 = vpop.f32.mrf.mxu0
      %v1118 = vadd.f32 0.0, %v1117
      %v1119 = vpop.f32.mrf.mxu0
      %v1120 = vadd.f32 0.0, %v1119
      %1121 = vmatprep.mubr.bf16.mxu0 0
      %1122 = vmatmul.mubr.bf16.gmra.mxu0 %v1077
      %v1123 = vpop.f32.mrf.mxu0
      %v1124 = vadd.f32 0.0, %v1123
      %v1125 = vpop.f32.mrf.mxu0
      %v1126 = vadd.f32 0.0, %v1125
      %v1127 = vpop.f32.mrf.mxu0
      %v1128 = vpop.f32.mrf.mxu0
      %1129 = vdwg.mxu0
      %v1130 = vadd.f32 %v1027, %v1114
      %v1131 = vadd.f32 %v1028, %v1116
      %v1132 = vadd.f32 %v1029, %v1118
      %v1133 = vadd.f32 %v1030, %v1120
      %v1134 = vadd.f32 %v1031, %v1124
      %v1135 = vadd.f32 %v1032, %v1126
      %v1136 = vld [vmem:[%s2] sm:$0x3]
      %v1138 = vlaneseq
      %v1139 = vshrl.u32 %v1138, 7
      %v1140 = vsub.s32 0, %v1139
      %v1141 = vrot.slane %v1136, %v1140
      %v1142 = vlaneseq
      %v1143 = vshrl.u32 %v1142, 7
      %v1144 = vsub.s32 1, %v1143
      %v1145 = vrot.slane %v1136, %v1144
      %v1148 = vadd.f32 %v1130, %v1141
      %v1149 = vadd.f32 %v1131, %v1145
      %v1150 = vadd.f32 %v1132, %v1141
      %v1151 = vadd.f32 %v1133, %v1145
      %v1152 = vadd.f32 %v1134, %v1141
      %v1153 = vadd.f32 %v1135, %v1145
      %v1154 = vand.u32 2147483647, %v1148
      %v1155 = vand.u32 2147483647, %v1149
      %v1156 = vand.u32 2147483647, %v1150
      %v1157 = vand.u32 2147483647, %v1151
      %v1158 = vand.u32 2147483647, %v1152
      %v1159 = vand.u32 2147483647, %v1153
      %v1160 = vsub.f32 0.0, %v1154
      %v1161 = vsub.f32 0.0, %v1155
      %v1162 = vsub.f32 0.0, %v1156
      %v1163 = vsub.f32 0.0, %v1157
      %v1164 = vsub.f32 0.0, %v1158
      %v1165 = vsub.f32 0.0, %v1159
      %v1166 = vmul.f32 %v1160, 1.442695
      %v1167 = vpow.pop %v1166
      %v1168 = vmul.f32 %v1161, 1.442695
      %v1169 = vpow.pop %v1168
      %v1170 = vmul.f32 %v1162, 1.442695
      %v1171 = vpow.pop %v1170
      %v1172 = vmul.f32 %v1163, 1.442695
      %v1173 = vpow.pop %v1172
      %v1174 = vmul.f32 %v1164, 1.442695
      %v1175 = vpow.pop %v1174
      %v1176 = vmul.f32 %v1165, 1.442695
      %v1177 = vpow.pop %v1176
      %v1178 = vadd.f32 %v1167, 1.0
      %v1179 = vadd.f32 %v1169, 1.0
      %v1180 = vadd.f32 %v1171, 1.0
      %v1181 = vadd.f32 %v1173, 1.0
      %v1182 = vadd.f32 %v1175, 1.0
      %v1183 = vadd.f32 %v1177, 1.0
      %v1184 = vrcp.pop %v1178
      %v1185 = vrcp.pop %v1179
      %v1186 = vrcp.pop %v1180
      %v1187 = vrcp.pop %v1181
      %v1188 = vrcp.pop %v1182
      %v1189 = vrcp.pop %v1183
      %vm1190 = vcmp.ge.f32.partialorder %v1148, 0.0
      %vm1191 = vcmp.ge.f32.partialorder %v1149, 0.0
      %vm1192 = vcmp.ge.f32.partialorder %v1150, 0.0
      %vm1193 = vcmp.ge.f32.partialorder %v1151, 0.0
      %vm1194 = vcmp.ge.f32.partialorder %v1152, 0.0
      %vm1195 = vcmp.ge.f32.partialorder %v1153, 0.0
      %v1196 = vmul.f32 %v1167, %v1184
      %v1197 = vmul.f32 %v1169, %v1185
      %v1198 = vmul.f32 %v1171, %v1186
      %v1199 = vmul.f32 %v1173, %v1187
      %v1200 = vmul.f32 %v1175, %v1188
      %v1201 = vmul.f32 %v1177, %v1189
      %v1202 = vsel %vm1190, %v1184, %v1196
      %v1203 = vsel %vm1191, %v1185, %v1197
      %v1204 = vsel %vm1192, %v1186, %v1198
      %v1205 = vsel %vm1193, %v1187, %v1199
      %v1206 = vsel %vm1194, %v1188, %v1200
      %v1207 = vsel %vm1195, %v1189, %v1201
      %v1208 = vmul.f32 %v1148, %v1202
      %v1209 = vmul.f32 %v1149, %v1203
      %v1210 = vmul.f32 %v1150, %v1204
      %v1211 = vmul.f32 %v1151, %v1205
      %v1212 = vmul.f32 %v1152, %v1206
      %v1213 = vmul.f32 %v1153, %v1207
      %v1214 = vpack.c.bf16 %v1210, %v1208
      %v1215 = vpack.c.bf16 %v1211, %v1209
      %v1216 = vpack.c.bf16 %v1212, %v1212
      %v1217 = vpack.c.bf16 %v1213, %v1213
      %v1222 = vunpack.c.l.b16 %v1214
      %v1223 = vunpack.c.l.b16 %v1215
      %v1224 = vunpack.c.h.b16 %v1214
      %v1225 = vunpack.c.h.b16 %v1215
      %v1226 = vunpack.c.l.b16 %v1216
      %v1227 = vunpack.c.l.b16 %v1217
      %v1228 = vpack.c.b16 %v1223, %v1222
      %v1229 = vpack.c.b16 %v1225, %v1224
      %v1230 = vpack.c.b16 %v1227, %v1226
      %vm1234 = vcmask 1043456
      %vm1235 = vcmask 523268
      %vm1236 = vmor %vm1235, %vm1234
      %1237 = vst.msk [vmem:[%s170] sm:$0xff] %vm1236, %v1228
      %1238 = vst.msk [vmem:[%s170 + $0x8] sm:$0xff] %vm1236, %v1229
      %1239 = vst.msk [vmem:[%s170 + $0x10] sm:$0xff] %vm1236, %v1230
      %p1240 = scmp.lt.s32.totalorder %s14, 1
      %s1241 = scalar_select %p1240, %s14, 1
      %s1242 = smul.addr %s1241, 6
      %s1243 = smul.addr %s1242, 4
      %s1244 = scalar_lea.vmem %s3, %s1243
      // Predicated region
      $region33: #{magic_point_forward.29} parent=31 // pred_check
        %p1245 = pneg %p100
      $region34: #{magic_point_forward.29} parent=31 // pred_check_branch
        %1247 = sbr.rel (%p1245) target = $region36
      $region35: #{magic_point_forward.29} parent=31 // pred_region
        _
      $region36: #{magic_point_forward.29} parent=31 // pred_fallthru
        _
    $region32: #{magic_point_forward.29} parent=5 // pred_fallthru
      _
    %p1248 = scmp.le.s32.totalorder 2, %s9
    // Predicated region
    $region37: #{magic_point_forward.29} parent=5 // pred_check
      %p1249 = pneg %p1248
    $region38: #{magic_point_forward.29} parent=5 // pred_check_branch
      %1251 = sbr.rel (%p1249) target = $region40
    $region39: #{magic_point_forward.29} parent=5 // pred_region
      %s1252 = ssub.s32 %s9, 2
      // Predicated region
      $region41: #{magic_point_forward.29} parent=39 // pred_check
        %p1253 = pneg %p106
      $region42: #{magic_point_forward.29} parent=39 // pred_check_branch
        %1255 = sbr.rel (%p1253) target = $region44
      $region43: #{magic_point_forward.29} parent=39 // pred_region
        %p1256 = scmp.lt.s32.totalorder %s15, 1
        %s1257 = scalar_select %p1256, %s15, 1
        %s1258 = smul.addr %s1257, 6
        %s1259 = smul.addr %s1258, 4
        %s1260 = scalar_lea.vmem %s3, %s1259
      $region44: #{magic_point_forward.29} parent=39 // pred_fallthru
        _
    $region40: #{magic_point_forward.29} parent=5 // pred_fallthru
      _
  $region6: #{magic_point_forward.29} parent=0 // loop_footer
    %s13 = sadd.s32 1, %s9
  $region7: #{magic_point_forward.29} parent=0 // loop_footer_branch
    %8 = sbr.rel target = $region3
  $region8: #{magic_point_forward.29} parent=0 // loop_exit
    _

// kernel: magic_point_forward.30
$region0: #{magic_point_forward.30}
  #allocation0 [shape = 'u32[]', space=smem, size = 0x4, offset = 0x4, fixed_abs, tag = 'smem constant byte address 0x4 - core index']
  #allocation1 [shape = 'u32[144,128]{1,0:T(1,128)}', space=vmem, size = 0x12000, scoped, tag = 'internal scratch']
  %s0 = inlined_call_operand.vmem [shape: bf16[32,192], index: 0, kind: input, shape index: {}]
  %s1 = inlined_call_operand.vmem [shape: bf16[192,128], index: 1, kind: input, shape index: {}]
  %s2 = inlined_call_operand.vmem [shape: f32[1,128], index: 2, kind: input, shape index: {}]
  %s3 = inlined_call_operand.vmem [shape: bf16[32,128], index: 3, kind: output, shape index: {}]
  %s4 = sld [smem:[#allocation0]]
  $region45: #{magic_point_forward.30} parent=0
    _
  %s6 = ssub.s32 1, %s4
  %s7 = scalar_select 0, %s6, %s4
  loop: start=0, step=1, limit=4
  $region2: #{magic_point_forward.30} parent=0 // loop_pre_header
    _
  $region3: #{magic_point_forward.30} parent=0 // loop_header
    %s9 = sphi 0, %s13
    %p10 = scmp.ge.s32.totalorder %s9, 4
    %s16 = sphi 0, %s28
    %s17 = sphi 0, %s24
    %s18 = sphi 0, %s16
    %s19 = sphi 0, %s17
    %s20 = sphi 0, %s18
    %s21 = sphi 0, %s19
    %s31 = sphi 0, %s33
    %s34 = sphi 0, %s31
    %s35 = sphi 0, %s34
    %s51 = sphi 0, %s35
    %s57 = sphi 0, %s59
    %s60 = sphi 0, %s57
    %s61 = sphi 0, %s60
    %s77 = sphi 0, %s61
    %s83 = sphi 0, %s85
    %s86 = sphi 0, %s83
    %s87 = sphi 0, %s86
    %s103 = sphi 0, %s87
    %s111 = sphi 0, %s113
    %s114 = sphi 0, %s111
    %s115 = sphi 0, %s114
    %s131 = sphi 0, %s115
  $region4: #{magic_point_forward.30} parent=0 // loop_header_branch
    %12 = sbr.rel (%p10) target = $region8
  $region5: #{magic_point_forward.30} parent=0 // loop_body
    %s14 = ssub.s32 %s9, 1
    %s15 = ssub.s32 %s9, 2
    %s22 = sadd.s32 1, %s17
    %p23 = scmp.ge.s32.totalorder %s22, 1
    %s24 = scalar_select %p23, 0, %s22
    %s25 = sadd.s32 1, %s16
    %s26 = scalar_select %p23, %s25, %s16
    %p27 = scmp.ge.s32.totalorder %s26, 2
    %s28 = scalar_select %p27, 0, %s26
    %s29 = ssub.s32 %s16, %s28
    %p30 = scmp.eq.s32.totalorder %s29, 0
    %s32 = sadd.s32 %s31, 1
    %s33 = scalar_select %p30, %s31, %s32
    %p36 = pneg %p30
    %p37 = scmp.eq.s32.totalorder %s9, 1
    %p38 = por %p36, %p37
    %p39 = scmp.ne.s32.totalorder %s31, %s34
    %p40 = scmp.eq.s32.totalorder %s9, 0
    %p41 = por %p39, %p40
    %p42 = scmp.ne.s32.totalorder %s31, %s34
    %p43 = scmp.eq.s32.totalorder %s14, 1
    %p44 = por %p42, %p43
    %p45 = scmp.ne.s32.totalorder %s34, %s35
    %p46 = scmp.eq.s32.totalorder %s14, 0
    %p47 = por %p45, %p46
    %p48 = scmp.ne.s32.totalorder %s34, %s35
    %p49 = scmp.eq.s32.totalorder %s15, 1
    %p50 = por %p48, %p49
    %p52 = scmp.ne.s32.totalorder %s35, %s51
    %p53 = scmp.eq.s32.totalorder %s15, 0
    %p54 = por %p52, %p53
    %s55 = ssub.s32 %s17, %s24
    %p56 = scmp.eq.s32.totalorder %s55, 0
    %s58 = sadd.s32 %s57, 1
    %s59 = scalar_select %p56, %s57, %s58
    %p62 = pneg %p56
    %p63 = scmp.eq.s32.totalorder %s9, 1
    %p64 = por %p62, %p63
    %p65 = scmp.ne.s32.totalorder %s57, %s60
    %p66 = scmp.eq.s32.totalorder %s9, 0
    %p67 = por %p65, %p66
    %p68 = scmp.ne.s32.totalorder %s57, %s60
    %p69 = scmp.eq.s32.totalorder %s14, 1
    %p70 = por %p68, %p69
    %p71 = scmp.ne.s32.totalorder %s60, %s61
    %p72 = scmp.eq.s32.totalorder %s14, 0
    %p73 = por %p71, %p72
    %p74 = scmp.ne.s32.totalorder %s60, %s61
    %p75 = scmp.eq.s32.totalorder %s15, 1
    %p76 = por %p74, %p75
    %p78 = scmp.ne.s32.totalorder %s61, %s77
    %p79 = scmp.eq.s32.totalorder %s15, 0
    %p80 = por %p78, %p79
    %s81 = ssub.s32 %s17, %s24
    %p82 = scmp.eq.s32.totalorder %s81, 0
    %s84 = sadd.s32 %s83, 1
    %s85 = scalar_select %p82, %s83, %s84
    %p88 = pneg %p82
    %p89 = scmp.eq.s32.totalorder %s9, 1
    %p90 = por %p88, %p89
    %p91 = scmp.ne.s32.totalorder %s83, %s86
    %p92 = scmp.eq.s32.totalorder %s9, 0
    %p93 = por %p91, %p92
    %p94 = scmp.ne.s32.totalorder %s83, %s86
    %p95 = scmp.eq.s32.totalorder %s14, 1
    %p96 = por %p94, %p95
    %p97 = scmp.ne.s32.totalorder %s86, %s87
    %p98 = scmp.eq.s32.totalorder %s14, 0
    %p99 = por %p97, %p98
    %p100 = scmp.ne.s32.totalorder %s86, %s87
    %p101 = scmp.eq.s32.totalorder %s15, 1
    %p102 = por %p100, %p101
    %p104 = scmp.ne.s32.totalorder %s87, %s103
    %p105 = scmp.eq.s32.totalorder %s15, 0
    %p106 = por %p104, %p105
    %s107 = ssub.s32 %s16, %s28
    %s108 = ssub.s32 %s17, %s24
    %s109 = sor.u32 %s107, %s108
    %p110 = scmp.eq.s32.totalorder %s109, 0
    %s112 = sadd.s32 %s111, 1
    %s113 = scalar_select %p110, %s111, %s112
    %p116 = pneg %p110
    %p117 = scmp.eq.s32.totalorder %s9, 1
    %p118 = por %p116, %p117
    %p119 = scmp.ne.s32.totalorder %s111, %s114
    %p120 = scmp.eq.s32.totalorder %s9, 0
    %p121 = por %p119, %p120
    %p122 = scmp.ne.s32.totalorder %s111, %s114
    %p123 = scmp.eq.s32.totalorder %s14, 1
    %p124 = por %p122, %p123
    %p125 = scmp.ne.s32.totalorder %s114, %s115
    %p126 = scmp.eq.s32.totalorder %s14, 0
    %p127 = por %p125, %p126
    %p128 = scmp.ne.s32.totalorder %s114, %s115
    %p129 = scmp.eq.s32.totalorder %s15, 1
    %p130 = por %p128, %p129
    %p132 = scmp.ne.s32.totalorder %s115, %s131
    %p133 = scmp.eq.s32.totalorder %s15, 0
    %p134 = por %p132, %p133
    %p135 = scmp.le.s32.totalorder 1, %s9
    %p136 = scmp.lt.s32.totalorder %s9, 3
    %p137 = pnand %p135, %p136
    %p138 = pneg %p137
    // Predicated region
    $region9: #{magic_point_forward.30} parent=5 // pred_check
      _
    $region10: #{magic_point_forward.30} parent=5 // pred_check_branch
      %140 = sbr.rel (%p137) target = $region12
    $region11: #{magic_point_forward.30} parent=5 // pred_region
      %s141 = ssub.s32 %s9, 1
      // Predicated region
      $region13: #{magic_point_forward.30} parent=11 // pred_check
        %p142 = pneg %p73
      $region14: #{magic_point_forward.30} parent=11 // pred_check_branch
        %144 = sbr.rel (%p142) target = $region16
      $region15: #{magic_point_forward.30} parent=11 // pred_region
        %p145 = scmp.lt.s32.totalorder %s19, 0
        %s146 = scalar_select %p145, %s19, 0
        %s147 = smul.addr %s146, 4
        %s148 = scalar_lea.vmem %s1, %s147
      $region16: #{magic_point_forward.30} parent=11 // pred_fallthru
        _
      // Predicated region
      $region17: #{magic_point_forward.30} parent=11 // pred_check
        %p149 = pneg %p99
      $region18: #{magic_point_forward.30} parent=11 // pred_check_branch
        %151 = sbr.rel (%p149) target = $region20
      $region19: #{magic_point_forward.30} parent=11 // pred_region
        %p152 = scmp.lt.s32.totalorder %s19, 0
        %s153 = scalar_select %p152, %s19, 0
        %s154 = scalar_lea.vmem %s2, %s153
      $region20: #{magic_point_forward.30} parent=11 // pred_fallthru
        _
    $region12: #{magic_point_forward.30} parent=5 // pred_fallthru
      _
    %p155 = scmp.lt.s32.totalorder %s9, 2
    // Predicated region
    $region21: #{magic_point_forward.30} parent=5 // pred_check
      %p156 = pneg %p155
    $region22: #{magic_point_forward.30} parent=5 // pred_check_branch
      %158 = sbr.rel (%p156) target = $region24
    $region23: #{magic_point_forward.30} parent=5 // pred_region
      // Predicated region
      $region25: #{magic_point_forward.30} parent=23 // pred_check
        %p159 = pneg %p41
      $region26: #{magic_point_forward.30} parent=23 // pred_check_branch
        %161 = sbr.rel (%p159) target = $region28
      $region27: #{magic_point_forward.30} parent=23 // pred_region
        %s162 = smul.u32 2, %s16
        %p163 = scmp.lt.s32.totalorder %s162, 3
        %s164 = scalar_select %p163, %s162, 3
        %s165 = smul.addr %s164, 2
        %s166 = smul.addr %s165, 4
        %s167 = scalar_lea.vmem %s0, %s166
        %s168 = smul.u32 2, %s16
      $region28: #{magic_point_forward.30} parent=23 // pred_fallthru
        _
    $region24: #{magic_point_forward.30} parent=5 // pred_fallthru
      _
    %p169 = scmp.le.s32.totalorder 1, %s9
    %p170 = scmp.lt.s32.totalorder %s9, 3
    %p171 = pnand %p169, %p170
    %p172 = pneg %p171
    // Predicated region
    $region29: #{magic_point_forward.30} parent=5 // pred_check
      _
    $region30: #{magic_point_forward.30} parent=5 // pred_check_branch
      %174 = sbr.rel (%p171) target = $region32
    $region31: #{magic_point_forward.30} parent=5 // pred_region
      %s175 = ssub.s32 %s9, 1
      %s176 = smul.u32 2, %s18
      %p177 = scmp.lt.s32.totalorder %s176, 3
      %s178 = scalar_select %p177, %s176, 3
      %s179 = smul.addr %s178, 2
      %s180 = smul.addr %s179, 4
      %s181 = scalar_lea.vmem %s0, %s180
      %p182 = pneg %p47
      %p183 = pneg %p44
      %p184 = scmp.lt.s32.totalorder %s19, 0
      %s185 = scalar_select %p184, %s19, 0
      %s186 = smul.addr %s185, 4
      %s187 = scalar_lea.vmem %s1, %s186
      %p188 = pneg %p73
      %p189 = pneg %p70
      %p190 = scmp.lt.s32.totalorder %s19, 0
      %s191 = scalar_select %p190, %s19, 0
      %s192 = scalar_lea.vmem %s2, %s191
      %p193 = pneg %p99
      %p194 = pneg %p96
      %p195 = pneg %p127
      %p196 = pneg %p124
      %s197 = smul.u32 2, %s18
      %p198 = scmp.lt.s32.totalorder %s197, 3
      %s199 = scalar_select %p198, %s197, 3
      %p200 = scmp.lt.s32.totalorder %s19, 0
      %s201 = scalar_select %p200, %s19, 0
      %s202 = sadd.s32 %s201, %s199
      %s203 = smul.addr %s202, 4
      %s204 = scalar_lea.vmem %s3, %s203
      %s205 = smul.u32 2, %s18
      %p206 = scmp.lt.s32.totalorder %s205, 3
      %s207 = scalar_select %p206, %s205, 3
      %s208 = smul.addr %s207, 2
      %s209 = smul.addr %s208, 4
      %s210 = scalar_lea.vmem %s0, %s209
      %s211 = smul.u32 2, %s18
      %p212 = scmp.lt.s32.totalorder %s19, 0
      %s213 = scalar_select %p212, %s19, 0
      %s214 = smul.addr %s213, 4
      %s215 = scalar_lea.vmem %s1, %s214
      %p216 = scmp.lt.s32.totalorder %s19, 0
      %s217 = scalar_select %p216, %s19, 0
      %s218 = scalar_lea.vmem %s2, %s217
      %s219 = smul.u32 2, %s18
      %p220 = scmp.lt.s32.totalorder %s219, 3
      %s221 = scalar_select %p220, %s219, 3
      %p222 = scmp.lt.s32.totalorder %s19, 0
      %s223 = scalar_select %p222, %s19, 0
      %s224 = sadd.s32 %s223, %s221
      %s225 = smul.addr %s224, 4
      %s226 = scalar_lea.vmem %s3, %s225
      %s227 = smul.u32 2, %s18
      %v229 = vld [vmem:[%s210] sm:$0xff]
      %v230 = vld [vmem:[%s210 + $0x8] sm:$0xff]
      %v231 = vld [vmem:[%s215] sm:$0xf]
      %v232 = vld [vmem:[%s215 + $0x4] sm:$0xf]
      %v233 = vld [vmem:[%s215 + $0x8] sm:$0xf]
      %v234 = vld [vmem:[%s215 + $0xc] sm:$0xf]
      %v235 = vld [vmem:[%s215 + $0x10] sm:$0xf]
      %v236 = vld [vmem:[%s215 + $0x14] sm:$0xf]
      %v237 = vld [vmem:[%s215 + $0x18] sm:$0xf]
      %v238 = vld [vmem:[%s215 + $0x1c] sm:$0xf]
      %v239 = vld [vmem:[%s215 + $0x20] sm:$0xf]
      %v240 = vld [vmem:[%s215 + $0x24] sm:$0xf]
      %v241 = vld [vmem:[%s215 + $0x28] sm:$0xf]
      %v242 = vld [vmem:[%s215 + $0x2c] sm:$0xf]
      %v243 = vld [vmem:[%s215 + $0x30] sm:$0xf]
      %v244 = vld [vmem:[%s215 + $0x34] sm:$0xf]
      %v245 = vld [vmem:[%s215 + $0x38] sm:$0xf]
      %v246 = vld [vmem:[%s215 + $0x3c] sm:$0xf]
      %v247 = vld [vmem:[%s215 + $0x40] sm:$0xf]
      %v248 = vld [vmem:[%s215 + $0x44] sm:$0xf]
      %v249 = vld [vmem:[%s215 + $0x48] sm:$0xf]
      %v250 = vld [vmem:[%s215 + $0x4c] sm:$0xf]
      %v251 = vld [vmem:[%s215 + $0x50] sm:$0xf]
      %v252 = vld [vmem:[%s215 + $0x54] sm:$0xf]
      %v253 = vld [vmem:[%s215 + $0x58] sm:$0xf]
      %v254 = vld [vmem:[%s215 + $0x5c] sm:$0xf]
      %v255 = vld [vmem:[%s218] sm:$0x1]
      %v257 = vlaneseq
      %v258 = vshrl.u32 %v257, 7
      %v259 = vsub.s32 0, %v258
      %v260 = vrot.slane %v255, %v259
      %v264 = vunpack.c.l.b16 %v229
      %v265 = vunpack.c.h.b16 %v229
      %v266 = vunpack.c.l.b16 %v230
      %v267 = vunpack.c.h.b16 %v230
      %v268 = vpack.c.b16 %v266, %v264
      %v269 = vpack.c.b16 %v267, %v265
      %v295 = vunpack.c.l.b16 %v231
      %v296 = vunpack.c.l.b16 %v232
      %v297 = vunpack.c.l.b16 %v233
      %v298 = vunpack.c.l.b16 %v234
      %v299 = vunpack.c.l.b16 %v235
      %v300 = vunpack.c.l.b16 %v236
      %v301 = vunpack.c.l.b16 %v237
      %v302 = vunpack.c.l.b16 %v238
      %v303 = vunpack.c.l.b16 %v239
      %v304 = vunpack.c.l.b16 %v240
      %v305 = vunpack.c.l.b16 %v241
      %v306 = vunpack.c.l.b16 %v242
      %v307 = vunpack.c.l.b16 %v243
      %v308 = vunpack.c.l.b16 %v244
      %v309 = vunpack.c.l.b16 %v245
      %v310 = vunpack.c.l.b16 %v246
      %v311 = vunpack.c.l.b16 %v247
      %v312 = vunpack.c.l.b16 %v248
      %v313 = vunpack.c.l.b16 %v249
      %v314 = vunpack.c.l.b16 %v250
      %v315 = vunpack.c.l.b16 %v251
      %v316 = vunpack.c.l.b16 %v252
      %v317 = vunpack.c.l.b16 %v253
      %v318 = vunpack.c.l.b16 %v254
      %v319 = vpack.c.b16 %v296, %v295
      %v320 = vpack.c.b16 %v298, %v297
      %v321 = vpack.c.b16 %v300, %v299
      %v322 = vpack.c.b16 %v302, %v301
      %v323 = vpack.c.b16 %v304, %v303
      %v324 = vpack.c.b16 %v306, %v305
      %v325 = vpack.c.b16 %v308, %v307
      %v326 = vpack.c.b16 %v310, %v309
      %v327 = vpack.c.b16 %v312, %v311
      %v328 = vpack.c.b16 %v314, %v313
      %v329 = vpack.c.b16 %v316, %v315
      %v330 = vpack.c.b16 %v318, %v317
      %vm343 = vcmask 523264
      %v345 = vsel %vm343, %v269, 0
      %347 = vmatprep.subr.bf16.mxu0 0
      %348 = vmatpush1.bf16.msra.mxu0 %v326
      %349 = vmatprep.subr.bf16.mxu0 0
      %350 = vmatpush1.bf16.msra.mxu0 %v325
      %351 = vmatprep.subr.bf16.mxu0 0
      %352 = vmatpush1.bf16.msra.mxu0 %v324
      %353 = vmatprep.subr.bf16.mxu0 0
      %354 = vmatpush1.bf16.msra.mxu0 %v323
      %355 = vmatprep.subr.bf16.mxu0 0
      %356 = vmatpush1.bf16.msra.mxu0 %v322
      %357 = vmatprep.subr.bf16.mxu0 0
      %358 = vmatpush1.bf16.msra.mxu0 %v321
      %359 = vmatprep.subr.bf16.mxu0 0
      %360 = vmatpush1.bf16.msra.mxu0 %v320
      %361 = vmatprep.subr.bf16.mxu0 0
      %362 = vmatpush1.bf16.msra.mxu0 %v319
      %363 = vmatprep.subr.bf16.mxu0 0
      %364 = vmatpush2.bf16.msra.mxu0 0
      %365 = vmatprep.subr.bf16.mxu0 0
      %366 = vmatpush2.bf16.msra.mxu0 0
      %367 = vmatprep.subr.bf16.mxu0 0
      %368 = vmatpush2.bf16.msra.mxu0 0
      %369 = vmatprep.subr.bf16.mxu0 0
      %370 = vmatpush2.bf16.msra.mxu0 0
      %371 = vmatprep.subr.bf16.mxu0 0
      %372 = vmatpush2.bf16.msra.mxu0 %v330
      %373 = vmatprep.subr.bf16.mxu0 0
      %374 = vmatpush2.bf16.msra.mxu0 %v329
      %375 = vmatprep.subr.bf16.mxu0 0
      %376 = vmatpush2.bf16.msra.mxu0 %v328
      %377 = vmatprep.subr.bf16.mxu0 0
      %378 = vmatpush2.bf16.msra.mxu0 %v327
      %379 = vmatprep.mubr.bf16.mxu0 %v345
      %380 = vmatmul.mubr.bf16.gmra.mxu0 %v268
      %v381 = vpop.f32.mrf.mxu0
      %v382 = vadd.f32 %v260, %v381
      %v383 = vpop.f32.mrf.mxu0
      %v384 = vpop.f32.mrf.mxu0
      %v385 = vadd.f32 %v260, %v384
      %v386 = vpop.f32.mrf.mxu0
      %387 = vdwg.mxu0
      %v388 = vpack.c.bf16 %v385, %v382
      %v390 = vunpack.c.l.b16 %v388
      %v391 = vunpack.c.h.b16 %v388
      %v392 = vpack.c.b16 %v390, %v390
      %v393 = vpack.c.b16 %v391, %v391
      %396 = vst [vmem:[%s226] sm:$0xf] %v392
      %397 = vst [vmem:[%s226 + $0x4] sm:$0xf] %v393
      %s398 = smul.u32 2, %s18
      %p399 = scmp.lt.s32.totalorder %s398, 3
      %s400 = scalar_select %p399, %s398, 3
      %p401 = scmp.lt.s32.totalorder %s19, 0
      %s402 = scalar_select %p401, %s19, 0
      %s403 = sadd.s32 %s402, %s400
      %s404 = smul.addr %s403, 4
      %s405 = scalar_lea.vmem %s3, %s404
      // Predicated region
      $region33: #{magic_point_forward.30} parent=31 // pred_check
        %p406 = pneg %p124
      $region34: #{magic_point_forward.30} parent=31 // pred_check_branch
        %408 = sbr.rel (%p406) target = $region36
      $region35: #{magic_point_forward.30} parent=31 // pred_region
        %s409 = smul.u32 2, %s18
      $region36: #{magic_point_forward.30} parent=31 // pred_fallthru
        _
    $region32: #{magic_point_forward.30} parent=5 // pred_fallthru
      _
    %p410 = scmp.le.s32.totalorder 2, %s9
    // Predicated region
    $region37: #{magic_point_forward.30} parent=5 // pred_check
      %p411 = pneg %p410
    $region38: #{magic_point_forward.30} parent=5 // pred_check_branch
      %413 = sbr.rel (%p411) target = $region40
    $region39: #{magic_point_forward.30} parent=5 // pred_region
      %s414 = ssub.s32 %s9, 2
      // Predicated region
      $region41: #{magic_point_forward.30} parent=39 // pred_check
        %p415 = pneg %p130
      $region42: #{magic_point_forward.30} parent=39 // pred_check_branch
        %417 = sbr.rel (%p415) target = $region44
      $region43: #{magic_point_forward.30} parent=39 // pred_region
        %s418 = smul.u32 2, %s20
        %p419 = scmp.lt.s32.totalorder %s418, 3
        %s420 = scalar_select %p419, %s418, 3
        %p421 = scmp.lt.s32.totalorder %s21, 0
        %s422 = scalar_select %p421, %s21, 0
        %s423 = sadd.s32 %s422, %s420
        %s424 = smul.addr %s423, 4
        %s425 = scalar_lea.vmem %s3, %s424
      $region44: #{magic_point_forward.30} parent=39 // pred_fallthru
        _
    $region40: #{magic_point_forward.30} parent=5 // pred_fallthru
      _
  $region6: #{magic_point_forward.30} parent=0 // loop_footer
    %s13 = sadd.s32 1, %s9
  $region7: #{magic_point_forward.30} parent=0 // loop_footer_branch
    %8 = sbr.rel target = $region3
  $region8: #{magic_point_forward.30} parent=0 // loop_exit
    _

// kernel: magic_point_forward.35
$region0: #{magic_point_forward.35}
  #allocation0 [shape = 'u32[]', space=smem, size = 0x4, offset = 0x4, fixed_abs, tag = 'smem constant byte address 0x4 - core index']
  #allocation1 [shape = 'u32[144,128]{1,0:T(1,128)}', space=vmem, size = 0x12000, scoped, tag = 'internal scratch']
  %s0 = inlined_call_operand.vmem [shape: bf16[16,432], index: 0, kind: input, shape index: {}]
  %s1 = inlined_call_operand.vmem [shape: bf16[432,256], index: 1, kind: input, shape index: {}]
  %s2 = inlined_call_operand.vmem [shape: f32[1,256], index: 2, kind: input, shape index: {}]
  %s3 = inlined_call_operand.vmem [shape: bf16[16,256], index: 3, kind: output, shape index: {}]
  %s4 = sld [smem:[#allocation0]]
  $region22: #{magic_point_forward.35} parent=0
    _
  %s6 = ssub.s32 1, %s4
  %s7 = scalar_select 0, %s6, %s4
  // Predicated region
  $region2: #{magic_point_forward.35} parent=0 // pred_check
    _
  $region3: #{magic_point_forward.35} parent=0 // pred_check_branch
    %9 = sbr.rel (0) target = $region5
  $region4: #{magic_point_forward.35} parent=0 // pred_region
    _
  $region5: #{magic_point_forward.35} parent=0 // pred_fallthru
    _
  // Predicated region
  $region6: #{magic_point_forward.35} parent=0 // pred_check
    _
  $region7: #{magic_point_forward.35} parent=0 // pred_check_branch
    %11 = sbr.rel (0) target = $region9
  $region8: #{magic_point_forward.35} parent=0 // pred_region
    _
  $region9: #{magic_point_forward.35} parent=0 // pred_fallthru
    _
  // Predicated region
  $region10: #{magic_point_forward.35} parent=0 // pred_check
    _
  $region11: #{magic_point_forward.35} parent=0 // pred_check_branch
    %13 = sbr.rel (0) target = $region13
  $region12: #{magic_point_forward.35} parent=0 // pred_region
    _
  $region13: #{magic_point_forward.35} parent=0 // pred_fallthru
    _
  %v15 = vld [vmem:[%s0] sm:$0xff]
  %v16 = vld [vmem:[%s0 + $0x8] sm:$0xff]
  %v17 = vld [vmem:[%s0 + $0x10] sm:$0xff]
  %v18 = vld [vmem:[%s0 + $0x18] sm:$0xff]
  %v19 = vld [vmem:[%s1] sm:$0xff]
  %v20 = vld [vmem:[%s1 + $0x8] sm:$0xff]
  %v21 = vld [vmem:[%s1 + $0x10] sm:$0xff]
  %v22 = vld [vmem:[%s1 + $0x18] sm:$0xff]
  %v23 = vld [vmem:[%s1 + $0x20] sm:$0xff]
  %v24 = vld [vmem:[%s1 + $0x28] sm:$0xff]
  %v25 = vld [vmem:[%s1 + $0x30] sm:$0xff]
  %v26 = vld [vmem:[%s1 + $0x38] sm:$0xff]
  %v27 = vld [vmem:[%s1 + $0x40] sm:$0xff]
  %v28 = vld [vmem:[%s1 + $0x48] sm:$0xff]
  %v29 = vld [vmem:[%s1 + $0x50] sm:$0xff]
  %v30 = vld [vmem:[%s1 + $0x58] sm:$0xff]
  %v31 = vld [vmem:[%s1 + $0x60] sm:$0xff]
  %v32 = vld [vmem:[%s1 + $0x68] sm:$0xff]
  %v33 = vld [vmem:[%s1 + $0x70] sm:$0xff]
  %v34 = vld [vmem:[%s1 + $0x78] sm:$0xff]
  %v35 = vld [vmem:[%s1 + $0x80] sm:$0xff]
  %v36 = vld [vmem:[%s1 + $0x88] sm:$0xff]
  %v37 = vld [vmem:[%s1 + $0x90] sm:$0xff]
  %v38 = vld [vmem:[%s1 + $0x98] sm:$0xff]
  %v39 = vld [vmem:[%s1 + $0xa0] sm:$0xff]
  %v40 = vld [vmem:[%s1 + $0xa8] sm:$0xff]
  %v41 = vld [vmem:[%s1 + $0xb0] sm:$0xff]
  %v42 = vld [vmem:[%s1 + $0xb8] sm:$0xff]
  %v43 = vld [vmem:[%s1 + $0xc0] sm:$0xff]
  %v44 = vld [vmem:[%s1 + $0xc8] sm:$0xff]
  %v45 = vld [vmem:[%s1 + $0xd0] sm:$0xff]
  %v46 = vld [vmem:[%s1 + $0xd8] sm:$0xff]
  %v47 = vld [vmem:[%s1 + $0xe0] sm:$0xff]
  %v48 = vld [vmem:[%s1 + $0xe8] sm:$0xff]
  %v49 = vld [vmem:[%s1 + $0xf0] sm:$0xff]
  %v50 = vld [vmem:[%s1 + $0xf8] sm:$0xff]
  %v51 = vld [vmem:[%s1 + $0x100] sm:$0xff]
  %v52 = vld [vmem:[%s1 + $0x108] sm:$0xff]
  %v53 = vld [vmem:[%s1 + $0x110] sm:$0xff]
  %v54 = vld [vmem:[%s1 + $0x118] sm:$0xff]
  %v55 = vld [vmem:[%s1 + $0x120] sm:$0xff]
  %v56 = vld [vmem:[%s1 + $0x128] sm:$0xff]
  %v57 = vld [vmem:[%s1 + $0x130] sm:$0xff]
  %v58 = vld [vmem:[%s1 + $0x138] sm:$0xff]
  %v59 = vld [vmem:[%s1 + $0x140] sm:$0xff]
  %v60 = vld [vmem:[%s1 + $0x148] sm:$0xff]
  %v61 = vld [vmem:[%s1 + $0x150] sm:$0xff]
  %v62 = vld [vmem:[%s1 + $0x158] sm:$0xff]
  %v63 = vld [vmem:[%s1 + $0x160] sm:$0xff]
  %v64 = vld [vmem:[%s1 + $0x168] sm:$0xff]
  %v65 = vld [vmem:[%s1 + $0x170] sm:$0xff]
  %v66 = vld [vmem:[%s1 + $0x178] sm:$0xff]
  %v67 = vld [vmem:[%s1 + $0x180] sm:$0xff]
  %v68 = vld [vmem:[%s1 + $0x188] sm:$0xff]
  %v69 = vld [vmem:[%s1 + $0x190] sm:$0xff]
  %v70 = vld [vmem:[%s1 + $0x198] sm:$0xff]
  %v71 = vld [vmem:[%s1 + $0x1a0] sm:$0xff]
  %v72 = vld [vmem:[%s1 + $0x1a8] sm:$0xff]
  %v73 = vld [vmem:[%s2] sm:$0x3]
  %v75 = vlaneseq
  %v76 = vshrl.u32 %v75, 7
  %v77 = vsub.s32 0, %v76
  %v78 = vrot.slane %v73, %v77
  %v79 = vlaneseq
  %v80 = vshrl.u32 %v79, 7
  %v81 = vsub.s32 1, %v80
  %v82 = vrot.slane %v73, %v81
  %v89 = vunpack.c.l.b16 %v15
  %v90 = vunpack.c.h.b16 %v15
  %v91 = vunpack.c.l.b16 %v16
  %v92 = vunpack.c.h.b16 %v16
  %v93 = vunpack.c.l.b16 %v17
  %v94 = vunpack.c.h.b16 %v17
  %v95 = vunpack.c.l.b16 %v18
  %v96 = vunpack.c.h.b16 %v18
  %v97 = vpack.c.b16 %v93, %v89
  %v98 = vpack.c.b16 %v94, %v90
  %v99 = vpack.c.b16 %v95, %v91
  %v100 = vpack.c.b16 %v96, %v92
  %v158 = vunpack.c.l.b16 %v19
  %v159 = vunpack.c.h.b16 %v19
  %v160 = vunpack.c.l.b16 %v20
  %v161 = vunpack.c.h.b16 %v20
  %v162 = vunpack.c.l.b16 %v21
  %v163 = vunpack.c.h.b16 %v21
  %v164 = vunpack.c.l.b16 %v22
  %v165 = vunpack.c.h.b16 %v22
  %v166 = vunpack.c.l.b16 %v23
  %v167 = vunpack.c.h.b16 %v23
  %v168 = vunpack.c.l.b16 %v24
  %v169 = vunpack.c.h.b16 %v24
  %v170 = vunpack.c.l.b16 %v25
  %v171 = vunpack.c.h.b16 %v25
  %v172 = vunpack.c.l.b16 %v26
  %v173 = vunpack.c.h.b16 %v26
  %v174 = vunpack.c.l.b16 %v27
  %v175 = vunpack.c.h.b16 %v27
  %v176 = vunpack.c.l.b16 %v28
  %v177 = vunpack.c.h.b16 %v28
  %v178 = vunpack.c.l.b16 %v29
  %v179 = vunpack.c.h.b16 %v29
  %v180 = vunpack.c.l.b16 %v30
  %v181 = vunpack.c.h.b16 %v30
  %v182 = vunpack.c.l.b16 %v31
  %v183 = vunpack.c.h.b16 %v31
  %v184 = vunpack.c.l.b16 %v32
  %v185 = vunpack.c.h.b16 %v32
  %v186 = vunpack.c.l.b16 %v33
  %v187 = vunpack.c.h.b16 %v33
  %v188 = vunpack.c.l.b16 %v34
  %v189 = vunpack.c.h.b16 %v34
  %v190 = vunpack.c.l.b16 %v35
  %v191 = vunpack.c.h.b16 %v35
  %v192 = vunpack.c.l.b16 %v36
  %v193 = vunpack.c.h.b16 %v36
  %v194 = vunpack.c.l.b16 %v37
  %v195 = vunpack.c.h.b16 %v37
  %v196 = vunpack.c.l.b16 %v38
  %v197 = vunpack.c.h.b16 %v38
  %v198 = vunpack.c.l.b16 %v39
  %v199 = vunpack.c.h.b16 %v39
  %v200 = vunpack.c.l.b16 %v40
  %v201 = vunpack.c.h.b16 %v40
  %v202 = vunpack.c.l.b16 %v41
  %v203 = vunpack.c.h.b16 %v41
  %v204 = vunpack.c.l.b16 %v42
  %v205 = vunpack.c.h.b16 %v42
  %v206 = vunpack.c.l.b16 %v43
  %v207 = vunpack.c.h.b16 %v43
  %v208 = vunpack.c.l.b16 %v44
  %v209 = vunpack.c.h.b16 %v44
  %v210 = vunpack.c.l.b16 %v45
  %v211 = vunpack.c.h.b16 %v45
  %v212 = vunpack.c.l.b16 %v46
  %v213 = vunpack.c.h.b16 %v46
  %v214 = vunpack.c.l.b16 %v47
  %v215 = vunpack.c.h.b16 %v47
  %v216 = vunpack.c.l.b16 %v48
  %v217 = vunpack.c.h.b16 %v48
  %v218 = vunpack.c.l.b16 %v49
  %v219 = vunpack.c.h.b16 %v49
  %v220 = vunpack.c.l.b16 %v50
  %v221 = vunpack.c.h.b16 %v50
  %v222 = vunpack.c.l.b16 %v51
  %v223 = vunpack.c.h.b16 %v51
  %v224 = vunpack.c.l.b16 %v52
  %v225 = vunpack.c.h.b16 %v52
  %v226 = vunpack.c.l.b16 %v53
  %v227 = vunpack.c.h.b16 %v53
  %v228 = vunpack.c.l.b16 %v54
  %v229 = vunpack.c.h.b16 %v54
  %v230 = vunpack.c.l.b16 %v55
  %v231 = vunpack.c.h.b16 %v55
  %v232 = vunpack.c.l.b16 %v56
  %v233 = vunpack.c.h.b16 %v56
  %v234 = vunpack.c.l.b16 %v57
  %v235 = vunpack.c.h.b16 %v57
  %v236 = vunpack.c.l.b16 %v58
  %v237 = vunpack.c.h.b16 %v58
  %v238 = vunpack.c.l.b16 %v59
  %v239 = vunpack.c.h.b16 %v59
  %v240 = vunpack.c.l.b16 %v60
  %v241 = vunpack.c.h.b16 %v60
  %v242 = vunpack.c.l.b16 %v61
  %v243 = vunpack.c.h.b16 %v61
  %v244 = vunpack.c.l.b16 %v62
  %v245 = vunpack.c.h.b16 %v62
  %v246 = vunpack.c.l.b16 %v63
  %v247 = vunpack.c.h.b16 %v63
  %v248 = vunpack.c.l.b16 %v64
  %v249 = vunpack.c.h.b16 %v64
  %v250 = vunpack.c.l.b16 %v65
  %v251 = vunpack.c.h.b16 %v65
  %v252 = vunpack.c.l.b16 %v66
  %v253 = vunpack.c.h.b16 %v66
  %v254 = vunpack.c.l.b16 %v67
  %v255 = vunpack.c.h.b16 %v67
  %v256 = vunpack.c.l.b16 %v68
  %v257 = vunpack.c.h.b16 %v68
  %v258 = vunpack.c.l.b16 %v69
  %v259 = vunpack.c.h.b16 %v69
  %v260 = vunpack.c.l.b16 %v70
  %v261 = vunpack.c.h.b16 %v70
  %v262 = vunpack.c.l.b16 %v71
  %v263 = vunpack.c.h.b16 %v71
  %v264 = vunpack.c.l.b16 %v72
  %v265 = vunpack.c.h.b16 %v72
  %v266 = vpack.c.b16 %v160, %v158
  %v267 = vpack.c.b16 %v161, %v159
  %v268 = vpack.c.b16 %v164, %v162
  %v269 = vpack.c.b16 %v165, %v163
  %v270 = vpack.c.b16 %v168, %v166
  %v271 = vpack.c.b16 %v169, %v167
  %v272 = vpack.c.b16 %v172, %v170
  %v273 = vpack.c.b16 %v173, %v171
  %v274 = vpack.c.b16 %v176, %v174
  %v275 = vpack.c.b16 %v177, %v175
  %v276 = vpack.c.b16 %v180, %v178
  %v277 = vpack.c.b16 %v181, %v179
  %v278 = vpack.c.b16 %v184, %v182
  %v279 = vpack.c.b16 %v185, %v183
  %v280 = vpack.c.b16 %v188, %v186
  %v281 = vpack.c.b16 %v189, %v187
  %v282 = vpack.c.b16 %v192, %v190
  %v283 = vpack.c.b16 %v193, %v191
  %v284 = vpack.c.b16 %v196, %v194
  %v285 = vpack.c.b16 %v197, %v195
  %v286 = vpack.c.b16 %v200, %v198
  %v287 = vpack.c.b16 %v201, %v199
  %v288 = vpack.c.b16 %v204, %v202
  %v289 = vpack.c.b16 %v205, %v203
  %v290 = vpack.c.b16 %v208, %v206
  %v291 = vpack.c.b16 %v209, %v207
  %v292 = vpack.c.b16 %v212, %v210
  %v293 = vpack.c.b16 %v213, %v211
  %v294 = vpack.c.b16 %v216, %v214
  %v295 = vpack.c.b16 %v217, %v215
  %v296 = vpack.c.b16 %v220, %v218
  %v297 = vpack.c.b16 %v221, %v219
  %v298 = vpack.c.b16 %v224, %v222
  %v299 = vpack.c.b16 %v225, %v223
  %v300 = vpack.c.b16 %v228, %v226
  %v301 = vpack.c.b16 %v229, %v227
  %v302 = vpack.c.b16 %v232, %v230
  %v303 = vpack.c.b16 %v233, %v231
  %v304 = vpack.c.b16 %v236, %v234
  %v305 = vpack.c.b16 %v237, %v235
  %v306 = vpack.c.b16 %v240, %v238
  %v307 = vpack.c.b16 %v241, %v239
  %v308 = vpack.c.b16 %v244, %v242
  %v309 = vpack.c.b16 %v245, %v243
  %v310 = vpack.c.b16 %v248, %v246
  %v311 = vpack.c.b16 %v249, %v247
  %v312 = vpack.c.b16 %v252, %v250
  %v313 = vpack.c.b16 %v253, %v251
  %v314 = vpack.c.b16 %v256, %v254
  %v315 = vpack.c.b16 %v257, %v255
  %v316 = vpack.c.b16 %v260, %v258
  %v317 = vpack.c.b16 %v261, %v259
  %v318 = vpack.c.b16 %v264, %v262
  %v319 = vpack.c.b16 %v265, %v263
  %vm374 = vcmask 392192
  %v376 = vsel %vm374, %v100, 0
  %378 = vmatprep.subr.bf16.mxu0 %v281
  %379 = vmatpush1.bf16.msra.mxu0 %v280
  %380 = vmatprep.subr.bf16.mxu0 %v279
  %381 = vmatpush1.bf16.msra.mxu0 %v278
  %382 = vmatprep.subr.bf16.mxu0 %v277
  %383 = vmatpush1.bf16.msra.mxu0 %v276
  %384 = vmatprep.subr.bf16.mxu0 %v275
  %385 = vmatpush1.bf16.msra.mxu0 %v274
  %386 = vmatprep.subr.bf16.mxu0 %v273
  %387 = vmatpush1.bf16.msra.mxu0 %v272
  %388 = vmatprep.subr.bf16.mxu0 %v271
  %389 = vmatpush1.bf16.msra.mxu0 %v270
  %390 = vmatprep.subr.bf16.mxu0 %v269
  %391 = vmatpush1.bf16.msra.mxu0 %v268
  %392 = vmatprep.subr.bf16.mxu0 %v267
  %393 = vmatpush1.bf16.msra.mxu0 %v266
  %394 = vmatprep.subr.bf16.mxu0 %v297
  %395 = vmatpush2.bf16.msra.mxu0 %v296
  %396 = vmatprep.subr.bf16.mxu0 %v295
  %397 = vmatpush2.bf16.msra.mxu0 %v294
  %398 = vmatprep.subr.bf16.mxu0 %v293
  %399 = vmatpush2.bf16.msra.mxu0 %v292
  %400 = vmatprep.subr.bf16.mxu0 %v291
  %401 = vmatpush2.bf16.msra.mxu0 %v290
  %402 = vmatprep.subr.bf16.mxu0 %v289
  %403 = vmatpush2.bf16.msra.mxu0 %v288
  %404 = vmatprep.subr.bf16.mxu0 %v287
  %405 = vmatpush2.bf16.msra.mxu0 %v286
  %406 = vmatprep.subr.bf16.mxu0 %v285
  %407 = vmatpush2.bf16.msra.mxu0 %v284
  %408 = vmatprep.subr.bf16.mxu0 %v283
  %409 = vmatpush2.bf16.msra.mxu0 %v282
  %410 = vmatprep.mubr.bf16.mxu0 %v98
  %411 = vmatmul.mubr.bf16.gmra.mxu0 %v97
  %v412 = vpop.f32.mrf.mxu0
  %v413 = vadd.f32 %v78, %v412
  %v414 = vpop.f32.mrf.mxu0
  %v415 = vadd.f32 %v82, %v414
  %v416 = vpop.f32.mrf.mxu0
  %v417 = vadd.f32 %v78, %v416
  %v418 = vpop.f32.mrf.mxu0
  %v419 = vadd.f32 %v82, %v418
  %420 = vdwg.mxu0
  %421 = vmatprep.subr.bf16.mxu0 %v313
  %422 = vmatpush1.bf16.msra.mxu0 %v312
  %423 = vmatprep.subr.bf16.mxu0 %v311
  %424 = vmatpush1.bf16.msra.mxu0 %v310
  %425 = vmatprep.subr.bf16.mxu0 %v309
  %426 = vmatpush1.bf16.msra.mxu0 %v308
  %427 = vmatprep.subr.bf16.mxu0 %v307
  %428 = vmatpush1.bf16.msra.mxu0 %v306
  %429 = vmatprep.subr.bf16.mxu0 %v305
  %430 = vmatpush1.bf16.msra.mxu0 %v304
  %431 = vmatprep.subr.bf16.mxu0 %v303
  %432 = vmatpush1.bf16.msra.mxu0 %v302
  %433 = vmatprep.subr.bf16.mxu0 %v301
  %434 = vmatpush1.bf16.msra.mxu0 %v300
  %435 = vmatprep.subr.bf16.mxu0 %v299
  %436 = vmatpush1.bf16.msra.mxu0 %v298
  %437 = vmatprep.subr.bf16.mxu0 0
  %438 = vmatpush2.bf16.msra.mxu0 0
  %439 = vmatprep.subr.bf16.mxu0 0
  %440 = vmatpush2.bf16.msra.mxu0 0
  %441 = vmatprep.subr.bf16.mxu0 0
  %442 = vmatpush2.bf16.msra.mxu0 0
  %443 = vmatprep.subr.bf16.mxu0 0
  %444 = vmatpush2.bf16.msra.mxu0 0
  %445 = vmatprep.subr.bf16.mxu0 0
  %446 = vmatpush2.bf16.msra.mxu0 0
  %447 = vmatprep.subr.bf16.mxu0 %v319
  %448 = vmatpush2.bf16.msra.mxu0 %v318
  %449 = vmatprep.subr.bf16.mxu0 %v317
  %450 = vmatpush2.bf16.msra.mxu0 %v316
  %451 = vmatprep.subr.bf16.mxu0 %v315
  %452 = vmatpush2.bf16.msra.mxu0 %v314
  %453 = vmatprep.mubr.bf16.mxu0 %v376
  %454 = vmatmul.mubr.bf16.gmra.mxu0 %v99
  %v455 = vpop.f32.mrf.mxu0
  %v456 = vadd.f32 %v413, %v455
  %v457 = vpop.f32.mrf.mxu0
  %v458 = vadd.f32 %v415, %v457
  %v459 = vpop.f32.mrf.mxu0
  %v460 = vadd.f32 %v417, %v459
  %v461 = vpop.f32.mrf.mxu0
  %v462 = vadd.f32 %v419, %v461
  %463 = vdwg.mxu0
  %v464 = vand.u32 2147483647, %v456
  %v465 = vand.u32 2147483647, %v458
  %v466 = vand.u32 2147483647, %v460
  %v467 = vand.u32 2147483647, %v462
  %v468 = vsub.f32 0.0, %v464
  %v469 = vsub.f32 0.0, %v465
  %v470 = vsub.f32 0.0, %v466
  %v471 = vsub.f32 0.0, %v467
  %v472 = vmul.f32 %v468, 1.442695
  %v473 = vpow.pop %v472
  %v474 = vmul.f32 %v469, 1.442695
  %v475 = vpow.pop %v474
  %v476 = vmul.f32 %v470, 1.442695
  %v477 = vpow.pop %v476
  %v478 = vmul.f32 %v471, 1.442695
  %v479 = vpow.pop %v478
  %v480 = vadd.f32 %v473, 1.0
  %v481 = vadd.f32 %v475, 1.0
  %v482 = vadd.f32 %v477, 1.0
  %v483 = vadd.f32 %v479, 1.0
  %v484 = vrcp.pop %v480
  %v485 = vrcp.pop %v481
  %v486 = vrcp.pop %v482
  %v487 = vrcp.pop %v483
  %vm488 = vcmp.ge.f32.partialorder %v456, 0.0
  %vm489 = vcmp.ge.f32.partialorder %v458, 0.0
  %vm490 = vcmp.ge.f32.partialorder %v460, 0.0
  %vm491 = vcmp.ge.f32.partialorder %v462, 0.0
  %v492 = vmul.f32 %v473, %v484
  %v493 = vmul.f32 %v475, %v485
  %v494 = vmul.f32 %v477, %v486
  %v495 = vmul.f32 %v479, %v487
  %v496 = vsel %vm488, %v484, %v492
  %v497 = vsel %vm489, %v485, %v493
  %v498 = vsel %vm490, %v486, %v494
  %v499 = vsel %vm491, %v487, %v495
  %v500 = vmul.f32 %v456, %v496
  %v501 = vmul.f32 %v458, %v497
  %v502 = vmul.f32 %v460, %v498
  %v503 = vmul.f32 %v462, %v499
  %v504 = vpack.c.bf16 %v502, %v500
  %v505 = vpack.c.bf16 %v503, %v501
  %v508 = vunpack.c.l.b16 %v504
  %v509 = vunpack.c.l.b16 %v505
  %v510 = vunpack.c.h.b16 %v504
  %v511 = vunpack.c.h.b16 %v505
  %v512 = vpack.c.b16 %v509, %v508
  %v513 = vpack.c.b16 %v511, %v510
  %516 = vst [vmem:[%s3] sm:$0xff] %v512
  %517 = vst [vmem:[%s3 + $0x8] sm:$0xff] %v513
  // Predicated region
  $region14: #{magic_point_forward.35} parent=0 // pred_check
    _
  $region15: #{magic_point_forward.35} parent=0 // pred_check_branch
    %519 = sbr.rel (0) target = $region17
  $region16: #{magic_point_forward.35} parent=0 // pred_region
    _
  $region17: #{magic_point_forward.35} parent=0 // pred_fallthru
    _
  // Predicated region
  $region18: #{magic_point_forward.35} parent=0 // pred_check
    _
  $region19: #{magic_point_forward.35} parent=0 // pred_check_branch
    %521 = sbr.rel (0) target = $region21
  $region20: #{magic_point_forward.35} parent=0 // pred_region
    _
  $region21: #{magic_point_forward.35} parent=0 // pred_fallthru
    _

// kernel: magic_point_forward.36
$region0: #{magic_point_forward.36}
  #allocation0 [shape = 'u32[]', space=smem, size = 0x4, offset = 0x4, fixed_abs, tag = 'smem constant byte address 0x4 - core index']
  #allocation1 [shape = 'u32[144,128]{1,0:T(1,128)}', space=vmem, size = 0x12000, scoped, tag = 'internal scratch']
  %s0 = inlined_call_operand.vmem [shape: bf16[16,192], index: 0, kind: input, shape index: {}]
  %s1 = inlined_call_operand.vmem [shape: bf16[192,128], index: 1, kind: input, shape index: {}]
  %s2 = inlined_call_operand.vmem [shape: f32[1,128], index: 2, kind: input, shape index: {}]
  %s3 = inlined_call_operand.vmem [shape: bf16[16,128], index: 3, kind: output, shape index: {}]
  %s4 = sld [smem:[#allocation0]]
  $region22: #{magic_point_forward.36} parent=0
    _
  %s6 = ssub.s32 1, %s4
  %s7 = scalar_select 0, %s6, %s4
  // Predicated region
  $region2: #{magic_point_forward.36} parent=0 // pred_check
    _
  $region3: #{magic_point_forward.36} parent=0 // pred_check_branch
    %9 = sbr.rel (0) target = $region5
  $region4: #{magic_point_forward.36} parent=0 // pred_region
    _
  $region5: #{magic_point_forward.36} parent=0 // pred_fallthru
    _
  // Predicated region
  $region6: #{magic_point_forward.36} parent=0 // pred_check
    _
  $region7: #{magic_point_forward.36} parent=0 // pred_check_branch
    %11 = sbr.rel (0) target = $region9
  $region8: #{magic_point_forward.36} parent=0 // pred_region
    _
  $region9: #{magic_point_forward.36} parent=0 // pred_fallthru
    _
  // Predicated region
  $region10: #{magic_point_forward.36} parent=0 // pred_check
    _
  $region11: #{magic_point_forward.36} parent=0 // pred_check_branch
    %13 = sbr.rel (0) target = $region13
  $region12: #{magic_point_forward.36} parent=0 // pred_region
    _
  $region13: #{magic_point_forward.36} parent=0 // pred_fallthru
    _
  %v15 = vld [vmem:[%s0] sm:$0xff]
  %v16 = vld [vmem:[%s0 + $0x8] sm:$0xff]
  %v17 = vld [vmem:[%s1] sm:$0xf]
  %v18 = vld [vmem:[%s1 + $0x4] sm:$0xf]
  %v19 = vld [vmem:[%s1 + $0x8] sm:$0xf]
  %v20 = vld [vmem:[%s1 + $0xc] sm:$0xf]
  %v21 = vld [vmem:[%s1 + $0x10] sm:$0xf]
  %v22 = vld [vmem:[%s1 + $0x14] sm:$0xf]
  %v23 = vld [vmem:[%s1 + $0x18] sm:$0xf]
  %v24 = vld [vmem:[%s1 + $0x1c] sm:$0xf]
  %v25 = vld [vmem:[%s1 + $0x20] sm:$0xf]
  %v26 = vld [vmem:[%s1 + $0x24] sm:$0xf]
  %v27 = vld [vmem:[%s1 + $0x28] sm:$0xf]
  %v28 = vld [vmem:[%s1 + $0x2c] sm:$0xf]
  %v29 = vld [vmem:[%s1 + $0x30] sm:$0xf]
  %v30 = vld [vmem:[%s1 + $0x34] sm:$0xf]
  %v31 = vld [vmem:[%s1 + $0x38] sm:$0xf]
  %v32 = vld [vmem:[%s1 + $0x3c] sm:$0xf]
  %v33 = vld [vmem:[%s1 + $0x40] sm:$0xf]
  %v34 = vld [vmem:[%s1 + $0x44] sm:$0xf]
  %v35 = vld [vmem:[%s1 + $0x48] sm:$0xf]
  %v36 = vld [vmem:[%s1 + $0x4c] sm:$0xf]
  %v37 = vld [vmem:[%s1 + $0x50] sm:$0xf]
  %v38 = vld [vmem:[%s1 + $0x54] sm:$0xf]
  %v39 = vld [vmem:[%s1 + $0x58] sm:$0xf]
  %v40 = vld [vmem:[%s1 + $0x5c] sm:$0xf]
  %v41 = vld [vmem:[%s2] sm:$0x1]
  %v43 = vlaneseq
  %v44 = vshrl.u32 %v43, 7
  %v45 = vsub.s32 0, %v44
  %v46 = vrot.slane %v41, %v45
  %v50 = vunpack.c.l.b16 %v15
  %v51 = vunpack.c.h.b16 %v15
  %v52 = vunpack.c.l.b16 %v16
  %v53 = vunpack.c.h.b16 %v16
  %v54 = vpack.c.b16 %v52, %v50
  %v55 = vpack.c.b16 %v53, %v51
  %v81 = vunpack.c.l.b16 %v17
  %v82 = vunpack.c.l.b16 %v18
  %v83 = vunpack.c.l.b16 %v19
  %v84 = vunpack.c.l.b16 %v20
  %v85 = vunpack.c.l.b16 %v21
  %v86 = vunpack.c.l.b16 %v22
  %v87 = vunpack.c.l.b16 %v23
  %v88 = vunpack.c.l.b16 %v24
  %v89 = vunpack.c.l.b16 %v25
  %v90 = vunpack.c.l.b16 %v26
  %v91 = vunpack.c.l.b16 %v27
  %v92 = vunpack.c.l.b16 %v28
  %v93 = vunpack.c.l.b16 %v29
  %v94 = vunpack.c.l.b16 %v30
  %v95 = vunpack.c.l.b16 %v31
  %v96 = vunpack.c.l.b16 %v32
  %v97 = vunpack.c.l.b16 %v33
  %v98 = vunpack.c.l.b16 %v34
  %v99 = vunpack.c.l.b16 %v35
  %v100 = vunpack.c.l.b16 %v36
  %v101 = vunpack.c.l.b16 %v37
  %v102 = vunpack.c.l.b16 %v38
  %v103 = vunpack.c.l.b16 %v39
  %v104 = vunpack.c.l.b16 %v40
  %v105 = vpack.c.b16 %v82, %v81
  %v106 = vpack.c.b16 %v84, %v83
  %v107 = vpack.c.b16 %v86, %v85
  %v108 = vpack.c.b16 %v88, %v87
  %v109 = vpack.c.b16 %v90, %v89
  %v110 = vpack.c.b16 %v92, %v91
  %v111 = vpack.c.b16 %v94, %v93
  %v112 = vpack.c.b16 %v96, %v95
  %v113 = vpack.c.b16 %v98, %v97
  %v114 = vpack.c.b16 %v100, %v99
  %v115 = vpack.c.b16 %v102, %v101
  %v116 = vpack.c.b16 %v104, %v103
  %vm129 = vcmask 523264
  %v131 = vsel %vm129, %v55, 0
  %133 = vmatprep.subr.bf16.mxu0 0
  %134 = vmatpush1.bf16.msra.mxu0 %v112
  %135 = vmatprep.subr.bf16.mxu0 0
  %136 = vmatpush1.bf16.msra.mxu0 %v111
  %137 = vmatprep.subr.bf16.mxu0 0
  %138 = vmatpush1.bf16.msra.mxu0 %v110
  %139 = vmatprep.subr.bf16.mxu0 0
  %140 = vmatpush1.bf16.msra.mxu0 %v109
  %141 = vmatprep.subr.bf16.mxu0 0
  %142 = vmatpush1.bf16.msra.mxu0 %v108
  %143 = vmatprep.subr.bf16.mxu0 0
  %144 = vmatpush1.bf16.msra.mxu0 %v107
  %145 = vmatprep.subr.bf16.mxu0 0
  %146 = vmatpush1.bf16.msra.mxu0 %v106
  %147 = vmatprep.subr.bf16.mxu0 0
  %148 = vmatpush1.bf16.msra.mxu0 %v105
  %149 = vmatprep.subr.bf16.mxu0 0
  %150 = vmatpush2.bf16.msra.mxu0 0
  %151 = vmatprep.subr.bf16.mxu0 0
  %152 = vmatpush2.bf16.msra.mxu0 0
  %153 = vmatprep.subr.bf16.mxu0 0
  %154 = vmatpush2.bf16.msra.mxu0 0
  %155 = vmatprep.subr.bf16.mxu0 0
  %156 = vmatpush2.bf16.msra.mxu0 0
  %157 = vmatprep.subr.bf16.mxu0 0
  %158 = vmatpush2.bf16.msra.mxu0 %v116
  %159 = vmatprep.subr.bf16.mxu0 0
  %160 = vmatpush2.bf16.msra.mxu0 %v115
  %161 = vmatprep.subr.bf16.mxu0 0
  %162 = vmatpush2.bf16.msra.mxu0 %v114
  %163 = vmatprep.subr.bf16.mxu0 0
  %164 = vmatpush2.bf16.msra.mxu0 %v113
  %165 = vmatprep.mubr.bf16.mxu0 %v131
  %166 = vmatmul.mubr.bf16.gmra.mxu0 %v54
  %v167 = vpop.f32.mrf.mxu0
  %v168 = vadd.f32 %v46, %v167
  %v169 = vpop.f32.mrf.mxu0
  %v170 = vpop.f32.mrf.mxu0
  %v171 = vadd.f32 %v46, %v170
  %v172 = vpop.f32.mrf.mxu0
  %173 = vdwg.mxu0
  %v174 = vpack.c.bf16 %v171, %v168
  %v176 = vunpack.c.l.b16 %v174
  %v177 = vunpack.c.h.b16 %v174
  %v178 = vpack.c.b16 %v176, %v176
  %v179 = vpack.c.b16 %v177, %v177
  %182 = vst [vmem:[%s3] sm:$0xf] %v178
  %183 = vst [vmem:[%s3 + $0x4] sm:$0xf] %v179
  // Predicated region
  $region14: #{magic_point_forward.36} parent=0 // pred_check
    _
  $region15: #{magic_point_forward.36} parent=0 // pred_check_branch
    %185 = sbr.rel (0) target = $region17
  $region16: #{magic_point_forward.36} parent=0 // pred_region
    _
  $region17: #{magic_point_forward.36} parent=0 // pred_fallthru
    _
  // Predicated region
  $region18: #{magic_point_forward.36} parent=0 // pred_check
    _
  $region19: #{magic_point_forward.36} parent=0 // pred_check_branch
    %187 = sbr.rel (0) target = $region21
  $region20: #{magic_point_forward.36} parent=0 // pred_region
    _
  $region21: #{magic_point_forward.36} parent=0 // pred_fallthru
    _

// kernel: magic_point_forward.37
$region0: #{magic_point_forward.37}
  #allocation0 [shape = 'u32[]', space=smem, size = 0x4, offset = 0x4, fixed_abs, tag = 'smem constant byte address 0x4 - core index']
  #allocation1 [shape = 'u32[144,128]{1,0:T(1,128)}', space=vmem, size = 0x12000, scoped, tag = 'internal scratch']
  %s0 = inlined_call_operand.vmem [shape: bf16[2,18,64], index: 0, kind: input, shape index: {}]
  %s1 = inlined_call_operand.vmem [shape: bf16[9,64,256], index: 1, kind: input, shape index: {}]
  %s2 = inlined_call_operand.vmem [shape: f32[1,256], index: 2, kind: input, shape index: {}]
  %s3 = inlined_call_operand.vmem [shape: bf16[2,8,256], index: 3, kind: output, shape index: {}]
  %s4 = sld [smem:[#allocation0]]
  $region45: #{magic_point_forward.37} parent=0
    _
  %s6 = ssub.s32 1, %s4
  %s7 = scalar_select 0, %s6, %s4
  loop: start=0, step=1, limit=4
  $region2: #{magic_point_forward.37} parent=0 // loop_pre_header
    _
  $region3: #{magic_point_forward.37} parent=0 // loop_header
    %s9 = sphi 0, %s13
    %p10 = scmp.ge.s32.totalorder %s9, 4
    %s19 = sphi 0, %s21
    %s22 = sphi 0, %s19
    %s23 = sphi 0, %s22
    %s39 = sphi 0, %s23
    %s43 = sphi 0, %s43
    %s45 = sphi 0, %s43
    %s46 = sphi 0, %s45
    %s60 = sphi 0, %s46
    %s64 = sphi 0, %s64
    %s66 = sphi 0, %s64
    %s67 = sphi 0, %s66
    %s81 = sphi 0, %s67
    %s87 = sphi 0, %s89
    %s90 = sphi 0, %s87
    %s91 = sphi 0, %s90
    %s107 = sphi 0, %s91
  $region4: #{magic_point_forward.37} parent=0 // loop_header_branch
    %12 = sbr.rel (%p10) target = $region8
  $region5: #{magic_point_forward.37} parent=0 // loop_body
    %s14 = ssub.s32 %s9, 1
    %s15 = ssub.s32 %s9, 2
    %s16 = sadd.s32 %s9, 1
    %s17 = ssub.s32 %s9, %s16
    %p18 = scmp.eq.s32.totalorder %s17, 0
    %s20 = sadd.s32 %s19, 1
    %s21 = scalar_select %p18, %s19, %s20
    %p24 = pneg %p18
    %p25 = scmp.eq.s32.totalorder %s9, 1
    %p26 = por %p24, %p25
    %p27 = scmp.ne.s32.totalorder %s19, %s22
    %p28 = scmp.eq.s32.totalorder %s9, 0
    %p29 = por %p27, %p28
    %p30 = scmp.ne.s32.totalorder %s19, %s22
    %p31 = scmp.eq.s32.totalorder %s14, 1
    %p32 = por %p30, %p31
    %p33 = scmp.ne.s32.totalorder %s22, %s23
    %p34 = scmp.eq.s32.totalorder %s14, 0
    %p35 = por %p33, %p34
    %p36 = scmp.ne.s32.totalorder %s22, %s23
    %p37 = scmp.eq.s32.totalorder %s15, 1
    %p38 = por %p36, %p37
    %p40 = scmp.ne.s32.totalorder %s23, %s39
    %p41 = scmp.eq.s32.totalorder %s15, 0
    %p42 = por %p40, %p41
    %s44 = sadd.s32 %s43, 1
    %p47 = scmp.eq.s32.totalorder %s9, 1
    %p48 = scmp.ne.s32.totalorder %s43, %s45
    %p49 = scmp.eq.s32.totalorder %s9, 0
    %p50 = por %p48, %p49
    %p51 = scmp.ne.s32.totalorder %s43, %s45
    %p52 = scmp.eq.s32.totalorder %s14, 1
    %p53 = por %p51, %p52
    %p54 = scmp.ne.s32.totalorder %s45, %s46
    %p55 = scmp.eq.s32.totalorder %s14, 0
    %p56 = por %p54, %p55
    %p57 = scmp.ne.s32.totalorder %s45, %s46
    %p58 = scmp.eq.s32.totalorder %s15, 1
    %p59 = por %p57, %p58
    %p61 = scmp.ne.s32.totalorder %s46, %s60
    %p62 = scmp.eq.s32.totalorder %s15, 0
    %p63 = por %p61, %p62
    %s65 = sadd.s32 %s64, 1
    %p68 = scmp.eq.s32.totalorder %s9, 1
    %p69 = scmp.ne.s32.totalorder %s64, %s66
    %p70 = scmp.eq.s32.totalorder %s9, 0
    %p71 = por %p69, %p70
    %p72 = scmp.ne.s32.totalorder %s64, %s66
    %p73 = scmp.eq.s32.totalorder %s14, 1
    %p74 = por %p72, %p73
    %p75 = scmp.ne.s32.totalorder %s66, %s67
    %p76 = scmp.eq.s32.totalorder %s14, 0
    %p77 = por %p75, %p76
    %p78 = scmp.ne.s32.totalorder %s66, %s67
    %p79 = scmp.eq.s32.totalorder %s15, 1
    %p80 = por %p78, %p79
    %p82 = scmp.ne.s32.totalorder %s67, %s81
    %p83 = scmp.eq.s32.totalorder %s15, 0
    %p84 = por %p82, %p83
    %s85 = ssub.s32 %s9, %s16
    %p86 = scmp.eq.s32.totalorder %s85, 0
    %s88 = sadd.s32 %s87, 1
    %s89 = scalar_select %p86, %s87, %s88
    %p92 = pneg %p86
    %p93 = scmp.eq.s32.totalorder %s9, 1
    %p94 = por %p92, %p93
    %p95 = scmp.ne.s32.totalorder %s87, %s90
    %p96 = scmp.eq.s32.totalorder %s9, 0
    %p97 = por %p95, %p96
    %p98 = scmp.ne.s32.totalorder %s87, %s90
    %p99 = scmp.eq.s32.totalorder %s14, 1
    %p100 = por %p98, %p99
    %p101 = scmp.ne.s32.totalorder %s90, %s91
    %p102 = scmp.eq.s32.totalorder %s14, 0
    %p103 = por %p101, %p102
    %p104 = scmp.ne.s32.totalorder %s90, %s91
    %p105 = scmp.eq.s32.totalorder %s15, 1
    %p106 = por %p104, %p105
    %p108 = scmp.ne.s32.totalorder %s91, %s107
    %p109 = scmp.eq.s32.totalorder %s15, 0
    %p110 = por %p108, %p109
    %p111 = scmp.le.s32.totalorder 1, %s9
    %p112 = scmp.lt.s32.totalorder %s9, 3
    %p113 = pnand %p111, %p112
    %p114 = pneg %p113
    // Predicated region
    $region9: #{magic_point_forward.37} parent=5 // pred_check
      _
    $region10: #{magic_point_forward.37} parent=5 // pred_check_branch
      %116 = sbr.rel (%p113) target = $region12
    $region11: #{magic_point_forward.37} parent=5 // pred_region
      %s117 = ssub.s32 %s9, 1
      // Predicated region
      $region13: #{magic_point_forward.37} parent=11 // pred_check
        %p118 = pneg %p56
      $region14: #{magic_point_forward.37} parent=11 // pred_check_branch
        %120 = sbr.rel (%p118) target = $region16
      $region15: #{magic_point_forward.37} parent=11 // pred_region
        _
      $region16: #{magic_point_forward.37} parent=11 // pred_fallthru
        _
      // Predicated region
      $region17: #{magic_point_forward.37} parent=11 // pred_check
        %p121 = pneg %p77
      $region18: #{magic_point_forward.37} parent=11 // pred_check_branch
        %123 = sbr.rel (%p121) target = $region20
      $region19: #{magic_point_forward.37} parent=11 // pred_region
        _
      $region20: #{magic_point_forward.37} parent=11 // pred_fallthru
        _
    $region12: #{magic_point_forward.37} parent=5 // pred_fallthru
      _
    %p124 = scmp.lt.s32.totalorder %s9, 2
    // Predicated region
    $region21: #{magic_point_forward.37} parent=5 // pred_check
      %p125 = pneg %p124
    $region22: #{magic_point_forward.37} parent=5 // pred_check_branch
      %127 = sbr.rel (%p125) target = $region24
    $region23: #{magic_point_forward.37} parent=5 // pred_region
      // Predicated region
      $region25: #{magic_point_forward.37} parent=23 // pred_check
        %p128 = pneg %p29
      $region26: #{magic_point_forward.37} parent=23 // pred_check_branch
        %130 = sbr.rel (%p128) target = $region28
      $region27: #{magic_point_forward.37} parent=23 // pred_region
        %p131 = scmp.lt.s32.totalorder %s9, 1
        %s132 = scalar_select %p131, %s9, 1
        %s133 = smul.addr %s132, 3
        %s134 = smul.addr %s133, 4
        %s135 = scalar_lea.vmem %s0, %s134
      $region28: #{magic_point_forward.37} parent=23 // pred_fallthru
        _
    $region24: #{magic_point_forward.37} parent=5 // pred_fallthru
      _
    %p136 = scmp.le.s32.totalorder 1, %s9
    %p137 = scmp.lt.s32.totalorder %s9, 3
    %p138 = pnand %p136, %p137
    %p139 = pneg %p138
    // Predicated region
    $region29: #{magic_point_forward.37} parent=5 // pred_check
      _
    $region30: #{magic_point_forward.37} parent=5 // pred_check_branch
      %141 = sbr.rel (%p138) target = $region32
    $region31: #{magic_point_forward.37} parent=5 // pred_region
      %s142 = ssub.s32 %s9, 1
      %p143 = scmp.lt.s32.totalorder %s14, 1
      %s144 = scalar_select %p143, %s14, 1
      %s145 = smul.addr %s144, 3
      %s146 = smul.addr %s145, 4
      %s147 = scalar_lea.vmem %s0, %s146
      %p148 = pneg %p35
      %p149 = pneg %p32
      %p150 = pneg %p56
      %p151 = pneg %p53
      %p152 = pneg %p77
      %p153 = pneg %p74
      %p154 = pneg %p103
      %p155 = pneg %p100
      %p156 = scmp.lt.s32.totalorder %s14, 1
      %s157 = scalar_select %p156, %s14, 1
      %s158 = smul.addr %s157, 2
      %s159 = smul.addr %s158, 4
      %s160 = scalar_lea.vmem %s3, %s159
      %p161 = scmp.lt.s32.totalorder %s14, 1
      %s162 = scalar_select %p161, %s14, 1
      %s163 = smul.addr %s162, 3
      %s164 = smul.addr %s163, 4
      %s165 = scalar_lea.vmem %s0, %s164
      %p166 = scmp.lt.s32.totalorder %s14, 1
      %s167 = scalar_select %p166, %s14, 1
      %s168 = smul.addr %s167, 2
      %s169 = smul.addr %s168, 4
      %s170 = scalar_lea.vmem %s3, %s169
      %v172 = vld [vmem:[%s165] sm:$0xf]
      %v173 = vld [vmem:[%s165 + $0x4] sm:$0xf]
      %v174 = vld [vmem:[%s165 + $0x8] sm:$0x1]
      %v175 = vld [vmem:[%s1] sm:$0xff]
      %v176 = vld [vmem:[%s1 + $0x8] sm:$0xff]
      %v177 = vld [vmem:[%s1 + $0x10] sm:$0xff]
      %v178 = vld [vmem:[%s1 + $0x18] sm:$0xff]
      %v179 = vld [vmem:[%s1 + $0x20] sm:$0xff]
      %v180 = vld [vmem:[%s1 + $0x28] sm:$0xff]
      %v181 = vld [vmem:[%s1 + $0x30] sm:$0xff]
      %v182 = vld [vmem:[%s1 + $0x38] sm:$0xff]
      %s183 = scalar_lea.vmem %s1, 64
      %v184 = vld [vmem:[%s183] sm:$0xff]
      %v185 = vld [vmem:[%s183 + $0x8] sm:$0xff]
      %v186 = vld [vmem:[%s183 + $0x10] sm:$0xff]
      %v187 = vld [vmem:[%s183 + $0x18] sm:$0xff]
      %v188 = vld [vmem:[%s183 + $0x20] sm:$0xff]
      %v189 = vld [vmem:[%s183 + $0x28] sm:$0xff]
      %v190 = vld [vmem:[%s183 + $0x30] sm:$0xff]
      %v191 = vld [vmem:[%s183 + $0x38] sm:$0xff]
      %v194 = vunpack.c.l.b16 %v172
      %v195 = vunpack.c.l.b16 %v173
      %v196 = vpack.c.b16 %v195, %v194
      %v198 = vshrl.u32 %v196, 16
      %v200 = vshll.u32 %v196, 16
      %v202 = vrot.slane %v200, 1
      %v203 = vor.u32 %v198, %v202
      %v212 = vunpack.c.l.b16 %v184
      %v213 = vunpack.c.h.b16 %v184
      %v214 = vunpack.c.l.b16 %v185
      %v215 = vunpack.c.h.b16 %v185
      %v216 = vunpack.c.l.b16 %v186
      %v217 = vunpack.c.h.b16 %v186
      %v218 = vunpack.c.l.b16 %v187
      %v219 = vunpack.c.h.b16 %v187
      %v220 = vunpack.c.l.b16 %v188
      %v221 = vunpack.c.h.b16 %v188
      %v222 = vunpack.c.l.b16 %v189
      %v223 = vunpack.c.h.b16 %v189
      %v224 = vunpack.c.l.b16 %v190
      %v225 = vunpack.c.h.b16 %v190
      %v226 = vunpack.c.l.b16 %v191
      %v227 = vunpack.c.h.b16 %v191
      %v228 = vpack.c.b16 %v214, %v212
      %v229 = vpack.c.b16 %v215, %v213
      %v230 = vpack.c.b16 %v218, %v216
      %v231 = vpack.c.b16 %v219, %v217
      %v232 = vpack.c.b16 %v222, %v220
      %v233 = vpack.c.b16 %v223, %v221
      %v234 = vpack.c.b16 %v226, %v224
      %v235 = vpack.c.b16 %v227, %v225
      %vm244 = vcmask 523264
      %v246 = vsel %vm244, %v203, 0
      %248 = vmatprep.subr.bf16.mxu0 0
      %249 = vmatpush1.bf16.msra.mxu0 0
      %250 = vmatprep.subr.bf16.mxu0 0
      %251 = vmatpush1.bf16.msra.mxu0 0
      %252 = vmatprep.subr.bf16.mxu0 0
      %253 = vmatpush1.bf16.msra.mxu0 0
      %254 = vmatprep.subr.bf16.mxu0 0
      %255 = vmatpush1.bf16.msra.mxu0 0
      %256 = vmatprep.subr.bf16.mxu0 %v235
      %257 = vmatpush1.bf16.msra.mxu0 %v234
      %258 = vmatprep.subr.bf16.mxu0 %v233
      %259 = vmatpush1.bf16.msra.mxu0 %v232
      %260 = vmatprep.subr.bf16.mxu0 %v231
      %261 = vmatpush1.bf16.msra.mxu0 %v230
      %262 = vmatprep.subr.bf16.mxu0 %v229
      %263 = vmatpush1.bf16.msra.mxu0 %v228
      %264 = vmatprep.subr.bf16.mxu0 0
      %265 = vmatpush2.bf16.msra.mxu0 0
      %266 = vmatprep.subr.bf16.mxu0 0
      %267 = vmatpush2.bf16.msra.mxu0 0
      %268 = vmatprep.subr.bf16.mxu0 0
      %269 = vmatpush2.bf16.msra.mxu0 0
      %270 = vmatprep.subr.bf16.mxu0 0
      %271 = vmatpush2.bf16.msra.mxu0 0
      %272 = vmatprep.subr.bf16.mxu0 0
      %273 = vmatpush2.bf16.msra.mxu0 0
      %274 = vmatprep.subr.bf16.mxu0 0
      %275 = vmatpush2.bf16.msra.mxu0 0
      %276 = vmatprep.subr.bf16.mxu0 0
      %277 = vmatpush2.bf16.msra.mxu0 0
      %278 = vmatprep.subr.bf16.mxu0 0
      %279 = vmatpush2.bf16.msra.mxu0 0
      %280 = vmatprep.mubr.bf16.mxu0 0
      %281 = vmatmul.mubr.bf16.gmra.mxu0 %v246
      %v282 = vpop.f32.mrf.mxu0
      %v283 = vadd.f32 0.0, %v282
      %v284 = vpop.f32.mrf.mxu0
      %v285 = vadd.f32 0.0, %v284
      %v286 = vpop.f32.mrf.mxu0
      %v287 = vpop.f32.mrf.mxu0
      %288 = vdwg.mxu0
      %v297 = vunpack.c.l.b16 %v175
      %v298 = vunpack.c.h.b16 %v175
      %v299 = vunpack.c.l.b16 %v176
      %v300 = vunpack.c.h.b16 %v176
      %v301 = vunpack.c.l.b16 %v177
      %v302 = vunpack.c.h.b16 %v177
      %v303 = vunpack.c.l.b16 %v178
      %v304 = vunpack.c.h.b16 %v178
      %v305 = vunpack.c.l.b16 %v179
      %v306 = vunpack.c.h.b16 %v179
      %v307 = vunpack.c.l.b16 %v180
      %v308 = vunpack.c.h.b16 %v180
      %v309 = vunpack.c.l.b16 %v181
      %v310 = vunpack.c.h.b16 %v181
      %v311 = vunpack.c.l.b16 %v182
      %v312 = vunpack.c.h.b16 %v182
      %v313 = vpack.c.b16 %v299, %v297
      %v314 = vpack.c.b16 %v300, %v298
      %v315 = vpack.c.b16 %v303, %v301
      %v316 = vpack.c.b16 %v304, %v302
      %v317 = vpack.c.b16 %v307, %v305
      %v318 = vpack.c.b16 %v308, %v306
      %v319 = vpack.c.b16 %v311, %v309
      %v320 = vpack.c.b16 %v312, %v310
      %v330 = vsel %vm244, %v172, 0
      %332 = vmatprep.subr.bf16.mxu0 0
      %333 = vmatpush1.bf16.msra.mxu0 0
      %334 = vmatprep.subr.bf16.mxu0 0
      %335 = vmatpush1.bf16.msra.mxu0 0
      %336 = vmatprep.subr.bf16.mxu0 0
      %337 = vmatpush1.bf16.msra.mxu0 0
      %338 = vmatprep.subr.bf16.mxu0 0
      %339 = vmatpush1.bf16.msra.mxu0 0
      %340 = vmatprep.subr.bf16.mxu0 %v320
      %341 = vmatpush1.bf16.msra.mxu0 %v319
      %342 = vmatprep.subr.bf16.mxu0 %v318
      %343 = vmatpush1.bf16.msra.mxu0 %v317
      %344 = vmatprep.subr.bf16.mxu0 %v316
      %345 = vmatpush1.bf16.msra.mxu0 %v315
      %346 = vmatprep.subr.bf16.mxu0 %v314
      %347 = vmatpush1.bf16.msra.mxu0 %v313
      %348 = vmatprep.subr.bf16.mxu0 0
      %349 = vmatpush2.bf16.msra.mxu0 0
      %350 = vmatprep.subr.bf16.mxu0 0
      %351 = vmatpush2.bf16.msra.mxu0 0
      %352 = vmatprep.subr.bf16.mxu0 0
      %353 = vmatpush2.bf16.msra.mxu0 0
      %354 = vmatprep.subr.bf16.mxu0 0
      %355 = vmatpush2.bf16.msra.mxu0 0
      %356 = vmatprep.subr.bf16.mxu0 0
      %357 = vmatpush2.bf16.msra.mxu0 0
      %358 = vmatprep.subr.bf16.mxu0 0
      %359 = vmatpush2.bf16.msra.mxu0 0
      %360 = vmatprep.subr.bf16.mxu0 0
      %361 = vmatpush2.bf16.msra.mxu0 0
      %362 = vmatprep.subr.bf16.mxu0 0
      %363 = vmatpush2.bf16.msra.mxu0 0
      %364 = vmatprep.mubr.bf16.mxu0 0
      %365 = vmatmul.mubr.bf16.gmra.mxu0 %v330
      %v366 = vpop.f32.mrf.mxu0
      %v367 = vadd.f32 %v283, %v366
      %v368 = vpop.f32.mrf.mxu0
      %v369 = vadd.f32 %v285, %v368
      %v370 = vpop.f32.mrf.mxu0
      %v371 = vpop.f32.mrf.mxu0
      %372 = vdwg.mxu0
      %s373 = scalar_lea.vmem %s1, 128
      %v374 = vld [vmem:[%s373] sm:$0xff]
      %v375 = vld [vmem:[%s373 + $0x8] sm:$0xff]
      %v376 = vld [vmem:[%s373 + $0x10] sm:$0xff]
      %v377 = vld [vmem:[%s373 + $0x18] sm:$0xff]
      %v378 = vld [vmem:[%s373 + $0x20] sm:$0xff]
      %v379 = vld [vmem:[%s373 + $0x28] sm:$0xff]
      %v380 = vld [vmem:[%s373 + $0x30] sm:$0xff]
      %v381 = vld [vmem:[%s373 + $0x38] sm:$0xff]
      %v382 = vrot.slane %v196, 1
      %v391 = vunpack.c.l.b16 %v374
      %v392 = vunpack.c.h.b16 %v374
      %v393 = vunpack.c.l.b16 %v375
      %v394 = vunpack.c.h.b16 %v375
      %v395 = vunpack.c.l.b16 %v376
      %v396 = vunpack.c.h.b16 %v376
      %v397 = vunpack.c.l.b16 %v377
      %v398 = vunpack.c.h.b16 %v377
      %v399 = vunpack.c.l.b16 %v378
      %v400 = vunpack.c.h.b16 %v378
      %v401 = vunpack.c.l.b16 %v379
      %v402 = vunpack.c.h.b16 %v379
      %v403 = vunpack.c.l.b16 %v380
      %v404 = vunpack.c.h.b16 %v380
      %v405 = vunpack.c.l.b16 %v381
      %v406 = vunpack.c.h.b16 %v381
      %v407 = vpack.c.b16 %v393, %v391
      %v408 = vpack.c.b16 %v394, %v392
      %v409 = vpack.c.b16 %v397, %v395
      %v410 = vpack.c.b16 %v398, %v396
      %v411 = vpack.c.b16 %v401, %v399
      %v412 = vpack.c.b16 %v402, %v400
      %v413 = vpack.c.b16 %v405, %v403
      %v414 = vpack.c.b16 %v406, %v404
      %v424 = vsel %vm244, %v382, 0
      %426 = vmatprep.subr.bf16.mxu0 0
      %427 = vmatpush1.bf16.msra.mxu0 0
      %428 = vmatprep.subr.bf16.mxu0 0
      %429 = vmatpush1.bf16.msra.mxu0 0
      %430 = vmatprep.subr.bf16.mxu0 0
      %431 = vmatpush1.bf16.msra.mxu0 0
      %432 = vmatprep.subr.bf16.mxu0 0
      %433 = vmatpush1.bf16.msra.mxu0 0
      %434 = vmatprep.subr.bf16.mxu0 %v414
      %435 = vmatpush1.bf16.msra.mxu0 %v413
      %436 = vmatprep.subr.bf16.mxu0 %v412
      %437 = vmatpush1.bf16.msra.mxu0 %v411
      %438 = vmatprep.subr.bf16.mxu0 %v410
      %439 = vmatpush1.bf16.msra.mxu0 %v409
      %440 = vmatprep.subr.bf16.mxu0 %v408
      %441 = vmatpush1.bf16.msra.mxu0 %v407
      %442 = vmatprep.subr.bf16.mxu0 0
      %443 = vmatpush2.bf16.msra.mxu0 0
      %444 = vmatprep.subr.bf16.mxu0 0
      %445 = vmatpush2.bf16.msra.mxu0 0
      %446 = vmatprep.subr.bf16.mxu0 0
      %447 = vmatpush2.bf16.msra.mxu0 0
      %448 = vmatprep.subr.bf16.mxu0 0
      %449 = vmatpush2.bf16.msra.mxu0 0
      %450 = vmatprep.subr.bf16.mxu0 0
      %451 = vmatpush2.bf16.msra.mxu0 0
      %452 = vmatprep.subr.bf16.mxu0 0
      %453 = vmatpush2.bf16.msra.mxu0 0
      %454 = vmatprep.subr.bf16.mxu0 0
      %455 = vmatpush2.bf16.msra.mxu0 0
      %456 = vmatprep.subr.bf16.mxu0 0
      %457 = vmatpush2.bf16.msra.mxu0 0
      %458 = vmatprep.mubr.bf16.mxu0 0
      %459 = vmatmul.mubr.bf16.gmra.mxu0 %v424
      %v460 = vpop.f32.mrf.mxu0
      %v461 = vadd.f32 0.0, %v460
      %v462 = vpop.f32.mrf.mxu0
      %v463 = vadd.f32 0.0, %v462
      %v464 = vpop.f32.mrf.mxu0
      %v465 = vpop.f32.mrf.mxu0
      %466 = vdwg.mxu0
      %v467 = vadd.f32 %v367, %v461
      %v468 = vadd.f32 %v369, %v463
      %s469 = scalar_lea.vmem %s1, 192
      %v470 = vld [vmem:[%s469] sm:$0xff]
      %v471 = vld [vmem:[%s469 + $0x8] sm:$0xff]
      %v472 = vld [vmem:[%s469 + $0x10] sm:$0xff]
      %v473 = vld [vmem:[%s469 + $0x18] sm:$0xff]
      %v474 = vld [vmem:[%s469 + $0x20] sm:$0xff]
      %v475 = vld [vmem:[%s469 + $0x28] sm:$0xff]
      %v476 = vld [vmem:[%s469 + $0x30] sm:$0xff]
      %v477 = vld [vmem:[%s469 + $0x38] sm:$0xff]
      %v478 = vrot.slane %v196, 2
      %v487 = vunpack.c.l.b16 %v470
      %v488 = vunpack.c.h.b16 %v470
      %v489 = vunpack.c.l.b16 %v471
      %v490 = vunpack.c.h.b16 %v471
      %v491 = vunpack.c.l.b16 %v472
      %v492 = vunpack.c.h.b16 %v472
      %v493 = vunpack.c.l.b16 %v473
      %v494 = vunpack.c.h.b16 %v473
      %v495 = vunpack.c.l.b16 %v474
      %v496 = vunpack.c.h.b16 %v474
      %v497 = vunpack.c.l.b16 %v475
      %v498 = vunpack.c.h.b16 %v475
      %v499 = vunpack.c.l.b16 %v476
      %v500 = vunpack.c.h.b16 %v476
      %v501 = vunpack.c.l.b16 %v477
      %v502 = vunpack.c.h.b16 %v477
      %v503 = vpack.c.b16 %v489, %v487
      %v504 = vpack.c.b16 %v490, %v488
      %v505 = vpack.c.b16 %v493, %v491
      %v506 = vpack.c.b16 %v494, %v492
      %v507 = vpack.c.b16 %v497, %v495
      %v508 = vpack.c.b16 %v498, %v496
      %v509 = vpack.c.b16 %v501, %v499
      %v510 = vpack.c.b16 %v502, %v500
      %v520 = vsel %vm244, %v478, 0
      %522 = vmatprep.subr.bf16.mxu0 0
      %523 = vmatpush1.bf16.msra.mxu0 0
      %524 = vmatprep.subr.bf16.mxu0 0
      %525 = vmatpush1.bf16.msra.mxu0 0
      %526 = vmatprep.subr.bf16.mxu0 0
      %527 = vmatpush1.bf16.msra.mxu0 0
      %528 = vmatprep.subr.bf16.mxu0 0
      %529 = vmatpush1.bf16.msra.mxu0 0
      %530 = vmatprep.subr.bf16.mxu0 %v510
      %531 = vmatpush1.bf16.msra.mxu0 %v509
      %532 = vmatprep.subr.bf16.mxu0 %v508
      %533 = vmatpush1.bf16.msra.mxu0 %v507
      %534 = vmatprep.subr.bf16.mxu0 %v506
      %535 = vmatpush1.bf16.msra.mxu0 %v505
      %536 = vmatprep.subr.bf16.mxu0 %v504
      %537 = vmatpush1.bf16.msra.mxu0 %v503
      %538 = vmatprep.subr.bf16.mxu0 0
      %539 = vmatpush2.bf16.msra.mxu0 0
      %540 = vmatprep.subr.bf16.mxu0 0
      %541 = vmatpush2.bf16.msra.mxu0 0
      %542 = vmatprep.subr.bf16.mxu0 0
      %543 = vmatpush2.bf16.msra.mxu0 0
      %544 = vmatprep.subr.bf16.mxu0 0
      %545 = vmatpush2.bf16.msra.mxu0 0
      %546 = vmatprep.subr.bf16.mxu0 0
      %547 = vmatpush2.bf16.msra.mxu0 0
      %548 = vmatprep.subr.bf16.mxu0 0
      %549 = vmatpush2.bf16.msra.mxu0 0
      %550 = vmatprep.subr.bf16.mxu0 0
      %551 = vmatpush2.bf16.msra.mxu0 0
      %552 = vmatprep.subr.bf16.mxu0 0
      %553 = vmatpush2.bf16.msra.mxu0 0
      %554 = vmatprep.mubr.bf16.mxu0 0
      %555 = vmatmul.mubr.bf16.gmra.mxu0 %v520
      %v556 = vpop.f32.mrf.mxu0
      %v557 = vadd.f32 0.0, %v556
      %v558 = vpop.f32.mrf.mxu0
      %v559 = vadd.f32 0.0, %v558
      %v560 = vpop.f32.mrf.mxu0
      %v561 = vpop.f32.mrf.mxu0
      %562 = vdwg.mxu0
      %v563 = vadd.f32 %v467, %v557
      %v564 = vadd.f32 %v468, %v559
      %s565 = scalar_lea.vmem %s1, 256
      %v566 = vld [vmem:[%s565] sm:$0xff]
      %v567 = vld [vmem:[%s565 + $0x8] sm:$0xff]
      %v568 = vld [vmem:[%s565 + $0x10] sm:$0xff]
      %v569 = vld [vmem:[%s565 + $0x18] sm:$0xff]
      %v570 = vld [vmem:[%s565 + $0x20] sm:$0xff]
      %v571 = vld [vmem:[%s565 + $0x28] sm:$0xff]
      %v572 = vld [vmem:[%s565 + $0x30] sm:$0xff]
      %v573 = vld [vmem:[%s565 + $0x38] sm:$0xff]
      %v574 = vrot.slane %v198, 2
      %v575 = vrot.slane %v200, 3
      %v576 = vor.u32 %v574, %v575
      %v585 = vunpack.c.l.b16 %v566
      %v586 = vunpack.c.h.b16 %v566
      %v587 = vunpack.c.l.b16 %v567
      %v588 = vunpack.c.h.b16 %v567
      %v589 = vunpack.c.l.b16 %v568
      %v590 = vunpack.c.h.b16 %v568
      %v591 = vunpack.c.l.b16 %v569
      %v592 = vunpack.c.h.b16 %v569
      %v593 = vunpack.c.l.b16 %v570
      %v594 = vunpack.c.h.b16 %v570
      %v595 = vunpack.c.l.b16 %v571
      %v596 = vunpack.c.h.b16 %v571
      %v597 = vunpack.c.l.b16 %v572
      %v598 = vunpack.c.h.b16 %v572
      %v599 = vunpack.c.l.b16 %v573
      %v600 = vunpack.c.h.b16 %v573
      %v601 = vpack.c.b16 %v587, %v585
      %v602 = vpack.c.b16 %v588, %v586
      %v603 = vpack.c.b16 %v591, %v589
      %v604 = vpack.c.b16 %v592, %v590
      %v605 = vpack.c.b16 %v595, %v593
      %v606 = vpack.c.b16 %v596, %v594
      %v607 = vpack.c.b16 %v599, %v597
      %v608 = vpack.c.b16 %v600, %v598
      %v618 = vsel %vm244, %v576, 0
      %620 = vmatprep.subr.bf16.mxu0 0
      %621 = vmatpush1.bf16.msra.mxu0 0
      %622 = vmatprep.subr.bf16.mxu0 0
      %623 = vmatpush1.bf16.msra.mxu0 0
      %624 = vmatprep.subr.bf16.mxu0 0
      %625 = vmatpush1.bf16.msra.mxu0 0
      %626 = vmatprep.subr.bf16.mxu0 0
      %627 = vmatpush1.bf16.msra.mxu0 0
      %628 = vmatprep.subr.bf16.mxu0 %v608
      %629 = vmatpush1.bf16.msra.mxu0 %v607
      %630 = vmatprep.subr.bf16.mxu0 %v606
      %631 = vmatpush1.bf16.msra.mxu0 %v605
      %632 = vmatprep.subr.bf16.mxu0 %v604
      %633 = vmatpush1.bf16.msra.mxu0 %v603
      %634 = vmatprep.subr.bf16.mxu0 %v602
      %635 = vmatpush1.bf16.msra.mxu0 %v601
      %636 = vmatprep.subr.bf16.mxu0 0
      %637 = vmatpush2.bf16.msra.mxu0 0
      %638 = vmatprep.subr.bf16.mxu0 0
      %639 = vmatpush2.bf16.msra.mxu0 0
      %640 = vmatprep.subr.bf16.mxu0 0
      %641 = vmatpush2.bf16.msra.mxu0 0
      %642 = vmatprep.subr.bf16.mxu0 0
      %643 = vmatpush2.bf16.msra.mxu0 0
      %644 = vmatprep.subr.bf16.mxu0 0
      %645 = vmatpush2.bf16.msra.mxu0 0
      %646 = vmatprep.subr.bf16.mxu0 0
      %647 = vmatpush2.bf16.msra.mxu0 0
      %648 = vmatprep.subr.bf16.mxu0 0
      %649 = vmatpush2.bf16.msra.mxu0 0
      %650 = vmatprep.subr.bf16.mxu0 0
      %651 = vmatpush2.bf16.msra.mxu0 0
      %652 = vmatprep.mubr.bf16.mxu0 0
      %653 = vmatmul.mubr.bf16.gmra.mxu0 %v618
      %v654 = vpop.f32.mrf.mxu0
      %v655 = vadd.f32 0.0, %v654
      %v656 = vpop.f32.mrf.mxu0
      %v657 = vadd.f32 0.0, %v656
      %v658 = vpop.f32.mrf.mxu0
      %v659 = vpop.f32.mrf.mxu0
      %660 = vdwg.mxu0
      %v661 = vadd.f32 %v563, %v655
      %v662 = vadd.f32 %v564, %v657
      %s663 = scalar_lea.vmem %s1, 320
      %v664 = vld [vmem:[%s663] sm:$0xff]
      %v665 = vld [vmem:[%s663 + $0x8] sm:$0xff]
      %v666 = vld [vmem:[%s663 + $0x10] sm:$0xff]
      %v667 = vld [vmem:[%s663 + $0x18] sm:$0xff]
      %v668 = vld [vmem:[%s663 + $0x20] sm:$0xff]
      %v669 = vld [vmem:[%s663 + $0x28] sm:$0xff]
      %v670 = vld [vmem:[%s663 + $0x30] sm:$0xff]
      %v671 = vld [vmem:[%s663 + $0x38] sm:$0xff]
      %v672 = vrot.slane %v196, 3
      %v681 = vunpack.c.l.b16 %v664
      %v682 = vunpack.c.h.b16 %v664
      %v683 = vunpack.c.l.b16 %v665
      %v684 = vunpack.c.h.b16 %v665
      %v685 = vunpack.c.l.b16 %v666
      %v686 = vunpack.c.h.b16 %v666
      %v687 = vunpack.c.l.b16 %v667
      %v688 = vunpack.c.h.b16 %v667
      %v689 = vunpack.c.l.b16 %v668
      %v690 = vunpack.c.h.b16 %v668
      %v691 = vunpack.c.l.b16 %v669
      %v692 = vunpack.c.h.b16 %v669
      %v693 = vunpack.c.l.b16 %v670
      %v694 = vunpack.c.h.b16 %v670
      %v695 = vunpack.c.l.b16 %v671
      %v696 = vunpack.c.h.b16 %v671
      %v697 = vpack.c.b16 %v683, %v681
      %v698 = vpack.c.b16 %v684, %v682
      %v699 = vpack.c.b16 %v687, %v685
      %v700 = vpack.c.b16 %v688, %v686
      %v701 = vpack.c.b16 %v691, %v689
      %v702 = vpack.c.b16 %v692, %v690
      %v703 = vpack.c.b16 %v695, %v693
      %v704 = vpack.c.b16 %v696, %v694
      %v714 = vsel %vm244, %v672, 0
      %716 = vmatprep.subr.bf16.mxu0 0
      %717 = vmatpush1.bf16.msra.mxu0 0
      %718 = vmatprep.subr.bf16.mxu0 0
      %719 = vmatpush1.bf16.msra.mxu0 0
      %720 = vmatprep.subr.bf16.mxu0 0
      %721 = vmatpush1.bf16.msra.mxu0 0
      %722 = vmatprep.subr.bf16.mxu0 0
      %723 = vmatpush1.bf16.msra.mxu0 0
      %724 = vmatprep.subr.bf16.mxu0 %v704
      %725 = vmatpush1.bf16.msra.mxu0 %v703
      %726 = vmatprep.subr.bf16.mxu0 %v702
      %727 = vmatpush1.bf16.msra.mxu0 %v701
      %728 = vmatprep.subr.bf16.mxu0 %v700
      %729 = vmatpush1.bf16.msra.mxu0 %v699
      %730 = vmatprep.subr.bf16.mxu0 %v698
      %731 = vmatpush1.bf16.msra.mxu0 %v697
      %732 = vmatprep.subr.bf16.mxu0 0
      %733 = vmatpush2.bf16.msra.mxu0 0
      %734 = vmatprep.subr.bf16.mxu0 0
      %735 = vmatpush2.bf16.msra.mxu0 0
      %736 = vmatprep.subr.bf16.mxu0 0
      %737 = vmatpush2.bf16.msra.mxu0 0
      %738 = vmatprep.subr.bf16.mxu0 0
      %739 = vmatpush2.bf16.msra.mxu0 0
      %740 = vmatprep.subr.bf16.mxu0 0
      %741 = vmatpush2.bf16.msra.mxu0 0
      %742 = vmatprep.subr.bf16.mxu0 0
      %743 = vmatpush2.bf16.msra.mxu0 0
      %744 = vmatprep.subr.bf16.mxu0 0
      %745 = vmatpush2.bf16.msra.mxu0 0
      %746 = vmatprep.subr.bf16.mxu0 0
      %747 = vmatpush2.bf16.msra.mxu0 0
      %748 = vmatprep.mubr.bf16.mxu0 0
      %749 = vmatmul.mubr.bf16.gmra.mxu0 %v714
      %v750 = vpop.f32.mrf.mxu0
      %v751 = vadd.f32 0.0, %v750
      %v752 = vpop.f32.mrf.mxu0
      %v753 = vadd.f32 0.0, %v752
      %v754 = vpop.f32.mrf.mxu0
      %v755 = vpop.f32.mrf.mxu0
      %756 = vdwg.mxu0
      %v757 = vadd.f32 %v661, %v751
      %v758 = vadd.f32 %v662, %v753
      %s759 = scalar_lea.vmem %s1, 384
      %v760 = vld [vmem:[%s759] sm:$0xff]
      %v761 = vld [vmem:[%s759 + $0x8] sm:$0xff]
      %v762 = vld [vmem:[%s759 + $0x10] sm:$0xff]
      %v763 = vld [vmem:[%s759 + $0x18] sm:$0xff]
      %v764 = vld [vmem:[%s759 + $0x20] sm:$0xff]
      %v765 = vld [vmem:[%s759 + $0x28] sm:$0xff]
      %v766 = vld [vmem:[%s759 + $0x30] sm:$0xff]
      %v767 = vld [vmem:[%s759 + $0x38] sm:$0xff]
      %v776 = vunpack.c.l.b16 %v760
      %v777 = vunpack.c.h.b16 %v760
      %v778 = vunpack.c.l.b16 %v761
      %v779 = vunpack.c.h.b16 %v761
      %v780 = vunpack.c.l.b16 %v762
      %v781 = vunpack.c.h.b16 %v762
      %v782 = vunpack.c.l.b16 %v763
      %v783 = vunpack.c.h.b16 %v763
      %v784 = vunpack.c.l.b16 %v764
      %v785 = vunpack.c.h.b16 %v764
      %v786 = vunpack.c.l.b16 %v765
      %v787 = vunpack.c.h.b16 %v765
      %v788 = vunpack.c.l.b16 %v766
      %v789 = vunpack.c.h.b16 %v766
      %v790 = vunpack.c.l.b16 %v767
      %v791 = vunpack.c.h.b16 %v767
      %v792 = vpack.c.b16 %v778, %v776
      %v793 = vpack.c.b16 %v779, %v777
      %v794 = vpack.c.b16 %v782, %v780
      %v795 = vpack.c.b16 %v783, %v781
      %v796 = vpack.c.b16 %v786, %v784
      %v797 = vpack.c.b16 %v787, %v785
      %v798 = vpack.c.b16 %v790, %v788
      %v799 = vpack.c.b16 %v791, %v789
      %v809 = vsel %vm244, %v173, 0
      %811 = vmatprep.subr.bf16.mxu0 0
      %812 = vmatpush1.bf16.msra.mxu0 0
      %813 = vmatprep.subr.bf16.mxu0 0
      %814 = vmatpush1.bf16.msra.mxu0 0
      %815 = vmatprep.subr.bf16.mxu0 0
      %816 = vmatpush1.bf16.msra.mxu0 0
      %817 = vmatprep.subr.bf16.mxu0 0
      %818 = vmatpush1.bf16.msra.mxu0 0
      %819 = vmatprep.subr.bf16.mxu0 %v799
      %820 = vmatpush1.bf16.msra.mxu0 %v798
      %821 = vmatprep.subr.bf16.mxu0 %v797
      %822 = vmatpush1.bf16.msra.mxu0 %v796
      %823 = vmatprep.subr.bf16.mxu0 %v795
      %824 = vmatpush1.bf16.msra.mxu0 %v794
      %825 = vmatprep.subr.bf16.mxu0 %v793
      %826 = vmatpush1.bf16.msra.mxu0 %v792
      %827 = vmatprep.subr.bf16.mxu0 0
      %828 = vmatpush2.bf16.msra.mxu0 0
      %829 = vmatprep.subr.bf16.mxu0 0
      %830 = vmatpush2.bf16.msra.mxu0 0
      %831 = vmatprep.subr.bf16.mxu0 0
      %832 = vmatpush2.bf16.msra.mxu0 0
      %833 = vmatprep.subr.bf16.mxu0 0
      %834 = vmatpush2.bf16.msra.mxu0 0
      %835 = vmatprep.subr.bf16.mxu0 0
      %836 = vmatpush2.bf16.msra.mxu0 0
      %837 = vmatprep.subr.bf16.mxu0 0
      %838 = vmatpush2.bf16.msra.mxu0 0
      %839 = vmatprep.subr.bf16.mxu0 0
      %840 = vmatpush2.bf16.msra.mxu0 0
      %841 = vmatprep.subr.bf16.mxu0 0
      %842 = vmatpush2.bf16.msra.mxu0 0
      %843 = vmatprep.mubr.bf16.mxu0 0
      %844 = vmatmul.mubr.bf16.gmra.mxu0 %v809
      %v845 = vpop.f32.mrf.mxu0
      %v846 = vadd.f32 0.0, %v845
      %v847 = vpop.f32.mrf.mxu0
      %v848 = vadd.f32 0.0, %v847
      %v849 = vpop.f32.mrf.mxu0
      %v850 = vpop.f32.mrf.mxu0
      %851 = vdwg.mxu0
      %v852 = vadd.f32 %v757, %v846
      %v853 = vadd.f32 %v758, %v848
      %s854 = scalar_lea.vmem %s1, 448
      %v855 = vld [vmem:[%s854] sm:$0xff]
      %v856 = vld [vmem:[%s854 + $0x8] sm:$0xff]
      %v857 = vld [vmem:[%s854 + $0x10] sm:$0xff]
      %v858 = vld [vmem:[%s854 + $0x18] sm:$0xff]
      %v859 = vld [vmem:[%s854 + $0x20] sm:$0xff]
      %v860 = vld [vmem:[%s854 + $0x28] sm:$0xff]
      %v861 = vld [vmem:[%s854 + $0x30] sm:$0xff]
      %v862 = vld [vmem:[%s854 + $0x38] sm:$0xff]
      %v864 = vunpack.c.l.b16 %v174
      %v865 = vpack.c.b16 %v864, %v195
      %v867 = vshrl.u32 %v865, 16
      %v869 = vshll.u32 %v865, 16
      %v871 = vrot.slane %v869, 1
      %v872 = vor.u32 %v867, %v871
      %v881 = vunpack.c.l.b16 %v855
      %v882 = vunpack.c.h.b16 %v855
      %v883 = vunpack.c.l.b16 %v856
      %v884 = vunpack.c.h.b16 %v856
      %v885 = vunpack.c.l.b16 %v857
      %v886 = vunpack.c.h.b16 %v857
      %v887 = vunpack.c.l.b16 %v858
      %v888 = vunpack.c.h.b16 %v858
      %v889 = vunpack.c.l.b16 %v859
      %v890 = vunpack.c.h.b16 %v859
      %v891 = vunpack.c.l.b16 %v860
      %v892 = vunpack.c.h.b16 %v860
      %v893 = vunpack.c.l.b16 %v861
      %v894 = vunpack.c.h.b16 %v861
      %v895 = vunpack.c.l.b16 %v862
      %v896 = vunpack.c.h.b16 %v862
      %v897 = vpack.c.b16 %v883, %v881
      %v898 = vpack.c.b16 %v884, %v882
      %v899 = vpack.c.b16 %v887, %v885
      %v900 = vpack.c.b16 %v888, %v886
      %v901 = vpack.c.b16 %v891, %v889
      %v902 = vpack.c.b16 %v892, %v890
      %v903 = vpack.c.b16 %v895, %v893
      %v904 = vpack.c.b16 %v896, %v894
      %v914 = vsel %vm244, %v872, 0
      %916 = vmatprep.subr.bf16.mxu0 0
      %917 = vmatpush1.bf16.msra.mxu0 0
      %918 = vmatprep.subr.bf16.mxu0 0
      %919 = vmatpush1.bf16.msra.mxu0 0
      %920 = vmatprep.subr.bf16.mxu0 0
      %921 = vmatpush1.bf16.msra.mxu0 0
      %922 = vmatprep.subr.bf16.mxu0 0
      %923 = vmatpush1.bf16.msra.mxu0 0
      %924 = vmatprep.subr.bf16.mxu0 %v904
      %925 = vmatpush1.bf16.msra.mxu0 %v903
      %926 = vmatprep.subr.bf16.mxu0 %v902
      %927 = vmatpush1.bf16.msra.mxu0 %v901
      %928 = vmatprep.subr.bf16.mxu0 %v900
      %929 = vmatpush1.bf16.msra.mxu0 %v899
      %930 = vmatprep.subr.bf16.mxu0 %v898
      %931 = vmatpush1.bf16.msra.mxu0 %v897
      %932 = vmatprep.subr.bf16.mxu0 0
      %933 = vmatpush2.bf16.msra.mxu0 0
      %934 = vmatprep.subr.bf16.mxu0 0
      %935 = vmatpush2.bf16.msra.mxu0 0
      %936 = vmatprep.subr.bf16.mxu0 0
      %937 = vmatpush2.bf16.msra.mxu0 0
      %938 = vmatprep.subr.bf16.mxu0 0
      %939 = vmatpush2.bf16.msra.mxu0 0
      %940 = vmatprep.subr.bf16.mxu0 0
      %941 = vmatpush2.bf16.msra.mxu0 0
      %942 = vmatprep.subr.bf16.mxu0 0
      %943 = vmatpush2.bf16.msra.mxu0 0
      %944 = vmatprep.subr.bf16.mxu0 0
      %945 = vmatpush2.bf16.msra.mxu0 0
      %946 = vmatprep.subr.bf16.mxu0 0
      %947 = vmatpush2.bf16.msra.mxu0 0
      %948 = vmatprep.mubr.bf16.mxu0 0
      %949 = vmatmul.mubr.bf16.gmra.mxu0 %v914
      %v950 = vpop.f32.mrf.mxu0
      %v951 = vadd.f32 0.0, %v950
      %v952 = vpop.f32.mrf.mxu0
      %v953 = vadd.f32 0.0, %v952
      %v954 = vpop.f32.mrf.mxu0
      %v955 = vpop.f32.mrf.mxu0
      %956 = vdwg.mxu0
      %v957 = vadd.f32 %v852, %v951
      %v958 = vadd.f32 %v853, %v953
      %s959 = scalar_lea.vmem %s1, 512
      %v960 = vld [vmem:[%s959] sm:$0xff]
      %v961 = vld [vmem:[%s959 + $0x8] sm:$0xff]
      %v962 = vld [vmem:[%s959 + $0x10] sm:$0xff]
      %v963 = vld [vmem:[%s959 + $0x18] sm:$0xff]
      %v964 = vld [vmem:[%s959 + $0x20] sm:$0xff]
      %v965 = vld [vmem:[%s959 + $0x28] sm:$0xff]
      %v966 = vld [vmem:[%s959 + $0x30] sm:$0xff]
      %v967 = vld [vmem:[%s959 + $0x38] sm:$0xff]
      %v968 = vrot.slane %v865, 1
      %v977 = vunpack.c.l.b16 %v960
      %v978 = vunpack.c.h.b16 %v960
      %v979 = vunpack.c.l.b16 %v961
      %v980 = vunpack.c.h.b16 %v961
      %v981 = vunpack.c.l.b16 %v962
      %v982 = vunpack.c.h.b16 %v962
      %v983 = vunpack.c.l.b16 %v963
      %v984 = vunpack.c.h.b16 %v963
      %v985 = vunpack.c.l.b16 %v964
      %v986 = vunpack.c.h.b16 %v964
      %v987 = vunpack.c.l.b16 %v965
      %v988 = vunpack.c.h.b16 %v965
      %v989 = vunpack.c.l.b16 %v966
      %v990 = vunpack.c.h.b16 %v966
      %v991 = vunpack.c.l.b16 %v967
      %v992 = vunpack.c.h.b16 %v967
      %v993 = vpack.c.b16 %v979, %v977
      %v994 = vpack.c.b16 %v980, %v978
      %v995 = vpack.c.b16 %v983, %v981
      %v996 = vpack.c.b16 %v984, %v982
      %v997 = vpack.c.b16 %v987, %v985
      %v998 = vpack.c.b16 %v988, %v986
      %v999 = vpack.c.b16 %v991, %v989
      %v1000 = vpack.c.b16 %v992, %v990
      %v1010 = vsel %vm244, %v968, 0
      %1012 = vmatprep.subr.bf16.mxu0 0
      %1013 = vmatpush1.bf16.msra.mxu0 0
      %1014 = vmatprep.subr.bf16.mxu0 0
      %1015 = vmatpush1.bf16.msra.mxu0 0
      %1016 = vmatprep.subr.bf16.mxu0 0
      %1017 = vmatpush1.bf16.msra.mxu0 0
      %1018 = vmatprep.subr.bf16.mxu0 0
      %1019 = vmatpush1.bf16.msra.mxu0 0
      %1020 = vmatprep.subr.bf16.mxu0 %v1000
      %1021 = vmatpush1.bf16.msra.mxu0 %v999
      %1022 = vmatprep.subr.bf16.mxu0 %v998
      %1023 = vmatpush1.bf16.msra.mxu0 %v997
      %1024 = vmatprep.subr.bf16.mxu0 %v996
      %1025 = vmatpush1.bf16.msra.mxu0 %v995
      %1026 = vmatprep.subr.bf16.mxu0 %v994
      %1027 = vmatpush1.bf16.msra.mxu0 %v993
      %1028 = vmatprep.subr.bf16.mxu0 0
      %1029 = vmatpush2.bf16.msra.mxu0 0
      %1030 = vmatprep.subr.bf16.mxu0 0
      %1031 = vmatpush2.bf16.msra.mxu0 0
      %1032 = vmatprep.subr.bf16.mxu0 0
      %1033 = vmatpush2.bf16.msra.mxu0 0
      %1034 = vmatprep.subr.bf16.mxu0 0
      %1035 = vmatpush2.bf16.msra.mxu0 0
      %1036 = vmatprep.subr.bf16.mxu0 0
      %1037 = vmatpush2.bf16.msra.mxu0 0
      %1038 = vmatprep.subr.bf16.mxu0 0
      %1039 = vmatpush2.bf16.msra.mxu0 0
      %1040 = vmatprep.subr.bf16.mxu0 0
      %1041 = vmatpush2.bf16.msra.mxu0 0
      %1042 = vmatprep.subr.bf16.mxu0 0
      %1043 = vmatpush2.bf16.msra.mxu0 0
      %1044 = vmatprep.mubr.bf16.mxu0 0
      %1045 = vmatmul.mubr.bf16.gmra.mxu0 %v1010
      %v1046 = vpop.f32.mrf.mxu0
      %v1047 = vadd.f32 0.0, %v1046
      %v1048 = vpop.f32.mrf.mxu0
      %v1049 = vadd.f32 0.0, %v1048
      %v1050 = vpop.f32.mrf.mxu0
      %v1051 = vpop.f32.mrf.mxu0
      %1052 = vdwg.mxu0
      %v1053 = vadd.f32 %v957, %v1047
      %v1054 = vadd.f32 %v958, %v1049
      %v1055 = vld [vmem:[%s2] sm:$0x3]
      %v1057 = vlaneseq
      %v1058 = vshrl.u32 %v1057, 7
      %v1059 = vsub.s32 0, %v1058
      %v1060 = vrot.slane %v1055, %v1059
      %v1061 = vlaneseq
      %v1062 = vshrl.u32 %v1061, 7
      %v1063 = vsub.s32 1, %v1062
      %v1064 = vrot.slane %v1055, %v1063
      %v1067 = vadd.f32 %v1053, %v1060
      %v1068 = vadd.f32 %v1054, %v1064
      %v1069 = vand.u32 2147483647, %v1067
      %v1070 = vand.u32 2147483647, %v1068
      %v1071 = vsub.f32 0.0, %v1069
      %v1072 = vsub.f32 0.0, %v1070
      %v1073 = vmul.f32 %v1071, 1.442695
      %v1074 = vpow.pop %v1073
      %v1075 = vmul.f32 %v1072, 1.442695
      %v1076 = vpow.pop %v1075
      %v1077 = vadd.f32 %v1074, 1.0
      %v1078 = vadd.f32 %v1076, 1.0
      %v1079 = vrcp.pop %v1077
      %v1080 = vrcp.pop %v1078
      %vm1081 = vcmp.ge.f32.partialorder %v1067, 0.0
      %vm1082 = vcmp.ge.f32.partialorder %v1068, 0.0
      %v1083 = vmul.f32 %v1074, %v1079
      %v1084 = vmul.f32 %v1076, %v1080
      %v1085 = vsel %vm1081, %v1079, %v1083
      %v1086 = vsel %vm1082, %v1080, %v1084
      %v1087 = vmul.f32 %v1067, %v1085
      %v1088 = vmul.f32 %v1068, %v1086
      %v1089 = vpack.c.bf16 %v1087, %v1087
      %v1090 = vpack.c.bf16 %v1088, %v1088
      %v1093 = vunpack.c.l.b16 %v1089
      %v1094 = vunpack.c.l.b16 %v1090
      %v1095 = vpack.c.b16 %v1094, %v1093
      %1097 = vst [vmem:[%s170] sm:$0xff] %v1095
      %p1098 = scmp.lt.s32.totalorder %s14, 1
      %s1099 = scalar_select %p1098, %s14, 1
      %s1100 = smul.addr %s1099, 2
      %s1101 = smul.addr %s1100, 4
      %s1102 = scalar_lea.vmem %s3, %s1101
      // Predicated region
      $region33: #{magic_point_forward.37} parent=31 // pred_check
        %p1103 = pneg %p100
      $region34: #{magic_point_forward.37} parent=31 // pred_check_branch
        %1105 = sbr.rel (%p1103) target = $region36
      $region35: #{magic_point_forward.37} parent=31 // pred_region
        _
      $region36: #{magic_point_forward.37} parent=31 // pred_fallthru
        _
    $region32: #{magic_point_forward.37} parent=5 // pred_fallthru
      _
    %p1106 = scmp.le.s32.totalorder 2, %s9
    // Predicated region
    $region37: #{magic_point_forward.37} parent=5 // pred_check
      %p1107 = pneg %p1106
    $region38: #{magic_point_forward.37} parent=5 // pred_check_branch
      %1109 = sbr.rel (%p1107) target = $region40
    $region39: #{magic_point_forward.37} parent=5 // pred_region
      %s1110 = ssub.s32 %s9, 2
      // Predicated region
      $region41: #{magic_point_forward.37} parent=39 // pred_check
        %p1111 = pneg %p106
      $region42: #{magic_point_forward.37} parent=39 // pred_check_branch
        %1113 = sbr.rel (%p1111) target = $region44
      $region43: #{magic_point_forward.37} parent=39 // pred_region
        %p1114 = scmp.lt.s32.totalorder %s15, 1
        %s1115 = scalar_select %p1114, %s15, 1
        %s1116 = smul.addr %s1115, 2
        %s1117 = smul.addr %s1116, 4
        %s1118 = scalar_lea.vmem %s3, %s1117
      $region44: #{magic_point_forward.37} parent=39 // pred_fallthru
        _
    $region40: #{magic_point_forward.37} parent=5 // pred_fallthru
      _
  $region6: #{magic_point_forward.37} parent=0 // loop_footer
    %s13 = sadd.s32 1, %s9
  $region7: #{magic_point_forward.37} parent=0 // loop_footer_branch
    %8 = sbr.rel target = $region3
  $region8: #{magic_point_forward.37} parent=0 // loop_exit
    _

// kernel: magic_point_forward.38
$region0: #{magic_point_forward.38}
  #allocation0 [shape = 'u32[]', space=smem, size = 0x4, offset = 0x4, fixed_abs, tag = 'smem constant byte address 0x4 - core index']
  #allocation1 [shape = 'u32[144,128]{1,0:T(1,128)}', space=vmem, size = 0x12000, scoped, tag = 'internal scratch']
  %s0 = inlined_call_operand.vmem [shape: bf16[16,256], index: 0, kind: input, shape index: {}]
  %s1 = inlined_call_operand.vmem [shape: bf16[256,128], index: 1, kind: input, shape index: {}]
  %s2 = inlined_call_operand.vmem [shape: f32[1,128], index: 2, kind: input, shape index: {}]
  %s3 = inlined_call_operand.vmem [shape: bf16[16,128], index: 3, kind: output, shape index: {}]
  %s4 = sld [smem:[#allocation0]]
  $region22: #{magic_point_forward.38} parent=0
    _
  %s6 = ssub.s32 1, %s4
  %s7 = scalar_select 0, %s6, %s4
  // Predicated region
  $region2: #{magic_point_forward.38} parent=0 // pred_check
    _
  $region3: #{magic_point_forward.38} parent=0 // pred_check_branch
    %9 = sbr.rel (0) target = $region5
  $region4: #{magic_point_forward.38} parent=0 // pred_region
    _
  $region5: #{magic_point_forward.38} parent=0 // pred_fallthru
    _
  // Predicated region
  $region6: #{magic_point_forward.38} parent=0 // pred_check
    _
  $region7: #{magic_point_forward.38} parent=0 // pred_check_branch
    %11 = sbr.rel (0) target = $region9
  $region8: #{magic_point_forward.38} parent=0 // pred_region
    _
  $region9: #{magic_point_forward.38} parent=0 // pred_fallthru
    _
  // Predicated region
  $region10: #{magic_point_forward.38} parent=0 // pred_check
    _
  $region11: #{magic_point_forward.38} parent=0 // pred_check_branch
    %13 = sbr.rel (0) target = $region13
  $region12: #{magic_point_forward.38} parent=0 // pred_region
    _
  $region13: #{magic_point_forward.38} parent=0 // pred_fallthru
    _
  %v15 = vld [vmem:[%s0] sm:$0xff]
  %v16 = vld [vmem:[%s0 + $0x8] sm:$0xff]
  %v17 = vld [vmem:[%s1] sm:$0xf]
  %v18 = vld [vmem:[%s1 + $0x4] sm:$0xf]
  %v19 = vld [vmem:[%s1 + $0x8] sm:$0xf]
  %v20 = vld [vmem:[%s1 + $0xc] sm:$0xf]
  %v21 = vld [vmem:[%s1 + $0x10] sm:$0xf]
  %v22 = vld [vmem:[%s1 + $0x14] sm:$0xf]
  %v23 = vld [vmem:[%s1 + $0x18] sm:$0xf]
  %v24 = vld [vmem:[%s1 + $0x1c] sm:$0xf]
  %v25 = vld [vmem:[%s1 + $0x20] sm:$0xf]
  %v26 = vld [vmem:[%s1 + $0x24] sm:$0xf]
  %v27 = vld [vmem:[%s1 + $0x28] sm:$0xf]
  %v28 = vld [vmem:[%s1 + $0x2c] sm:$0xf]
  %v29 = vld [vmem:[%s1 + $0x30] sm:$0xf]
  %v30 = vld [vmem:[%s1 + $0x34] sm:$0xf]
  %v31 = vld [vmem:[%s1 + $0x38] sm:$0xf]
  %v32 = vld [vmem:[%s1 + $0x3c] sm:$0xf]
  %v33 = vld [vmem:[%s1 + $0x40] sm:$0xf]
  %v34 = vld [vmem:[%s1 + $0x44] sm:$0xf]
  %v35 = vld [vmem:[%s1 + $0x48] sm:$0xf]
  %v36 = vld [vmem:[%s1 + $0x4c] sm:$0xf]
  %v37 = vld [vmem:[%s1 + $0x50] sm:$0xf]
  %v38 = vld [vmem:[%s1 + $0x54] sm:$0xf]
  %v39 = vld [vmem:[%s1 + $0x58] sm:$0xf]
  %v40 = vld [vmem:[%s1 + $0x5c] sm:$0xf]
  %v41 = vld [vmem:[%s1 + $0x60] sm:$0xf]
  %v42 = vld [vmem:[%s1 + $0x64] sm:$0xf]
  %v43 = vld [vmem:[%s1 + $0x68] sm:$0xf]
  %v44 = vld [vmem:[%s1 + $0x6c] sm:$0xf]
  %v45 = vld [vmem:[%s1 + $0x70] sm:$0xf]
  %v46 = vld [vmem:[%s1 + $0x74] sm:$0xf]
  %v47 = vld [vmem:[%s1 + $0x78] sm:$0xf]
  %v48 = vld [vmem:[%s1 + $0x7c] sm:$0xf]
  %v49 = vld [vmem:[%s2] sm:$0x1]
  %v51 = vlaneseq
  %v52 = vshrl.u32 %v51, 7
  %v53 = vsub.s32 0, %v52
  %v54 = vrot.slane %v49, %v53
  %v58 = vunpack.c.l.b16 %v15
  %v59 = vunpack.c.h.b16 %v15
  %v60 = vunpack.c.l.b16 %v16
  %v61 = vunpack.c.h.b16 %v16
  %v62 = vpack.c.b16 %v60, %v58
  %v63 = vpack.c.b16 %v61, %v59
  %v98 = vunpack.c.l.b16 %v17
  %v99 = vunpack.c.l.b16 %v18
  %v100 = vunpack.c.l.b16 %v19
  %v101 = vunpack.c.l.b16 %v20
  %v102 = vunpack.c.l.b16 %v21
  %v103 = vunpack.c.l.b16 %v22
  %v104 = vunpack.c.l.b16 %v23
  %v105 = vunpack.c.l.b16 %v24
  %v106 = vunpack.c.l.b16 %v25
  %v107 = vunpack.c.l.b16 %v26
  %v108 = vunpack.c.l.b16 %v27
  %v109 = vunpack.c.l.b16 %v28
  %v110 = vunpack.c.l.b16 %v29
  %v111 = vunpack.c.l.b16 %v30
  %v112 = vunpack.c.l.b16 %v31
  %v113 = vunpack.c.l.b16 %v32
  %v114 = vunpack.c.l.b16 %v33
  %v115 = vunpack.c.l.b16 %v34
  %v116 = vunpack.c.l.b16 %v35
  %v117 = vunpack.c.l.b16 %v36
  %v118 = vunpack.c.l.b16 %v37
  %v119 = vunpack.c.l.b16 %v38
  %v120 = vunpack.c.l.b16 %v39
  %v121 = vunpack.c.l.b16 %v40
  %v122 = vunpack.c.l.b16 %v41
  %v123 = vunpack.c.l.b16 %v42
  %v124 = vunpack.c.l.b16 %v43
  %v125 = vunpack.c.l.b16 %v44
  %v126 = vunpack.c.l.b16 %v45
  %v127 = vunpack.c.l.b16 %v46
  %v128 = vunpack.c.l.b16 %v47
  %v129 = vunpack.c.l.b16 %v48
  %v130 = vpack.c.b16 %v99, %v98
  %v131 = vpack.c.b16 %v101, %v100
  %v132 = vpack.c.b16 %v103, %v102
  %v133 = vpack.c.b16 %v105, %v104
  %v134 = vpack.c.b16 %v107, %v106
  %v135 = vpack.c.b16 %v109, %v108
  %v136 = vpack.c.b16 %v111, %v110
  %v137 = vpack.c.b16 %v113, %v112
  %v138 = vpack.c.b16 %v115, %v114
  %v139 = vpack.c.b16 %v117, %v116
  %v140 = vpack.c.b16 %v119, %v118
  %v141 = vpack.c.b16 %v121, %v120
  %v142 = vpack.c.b16 %v123, %v122
  %v143 = vpack.c.b16 %v125, %v124
  %v144 = vpack.c.b16 %v127, %v126
  %v145 = vpack.c.b16 %v129, %v128
  %162 = vmatprep.subr.bf16.mxu0 0
  %163 = vmatpush1.bf16.msra.mxu0 %v137
  %164 = vmatprep.subr.bf16.mxu0 0
  %165 = vmatpush1.bf16.msra.mxu0 %v136
  %166 = vmatprep.subr.bf16.mxu0 0
  %167 = vmatpush1.bf16.msra.mxu0 %v135
  %168 = vmatprep.subr.bf16.mxu0 0
  %169 = vmatpush1.bf16.msra.mxu0 %v134
  %170 = vmatprep.subr.bf16.mxu0 0
  %171 = vmatpush1.bf16.msra.mxu0 %v133
  %172 = vmatprep.subr.bf16.mxu0 0
  %173 = vmatpush1.bf16.msra.mxu0 %v132
  %174 = vmatprep.subr.bf16.mxu0 0
  %175 = vmatpush1.bf16.msra.mxu0 %v131
  %176 = vmatprep.subr.bf16.mxu0 0
  %177 = vmatpush1.bf16.msra.mxu0 %v130
  %178 = vmatprep.subr.bf16.mxu0 0
  %179 = vmatpush2.bf16.msra.mxu0 %v145
  %180 = vmatprep.subr.bf16.mxu0 0
  %181 = vmatpush2.bf16.msra.mxu0 %v144
  %182 = vmatprep.subr.bf16.mxu0 0
  %183 = vmatpush2.bf16.msra.mxu0 %v143
  %184 = vmatprep.subr.bf16.mxu0 0
  %185 = vmatpush2.bf16.msra.mxu0 %v142
  %186 = vmatprep.subr.bf16.mxu0 0
  %187 = vmatpush2.bf16.msra.mxu0 %v141
  %188 = vmatprep.subr.bf16.mxu0 0
  %189 = vmatpush2.bf16.msra.mxu0 %v140
  %190 = vmatprep.subr.bf16.mxu0 0
  %191 = vmatpush2.bf16.msra.mxu0 %v139
  %192 = vmatprep.subr.bf16.mxu0 0
  %193 = vmatpush2.bf16.msra.mxu0 %v138
  %194 = vmatprep.mubr.bf16.mxu0 %v63
  %195 = vmatmul.mubr.bf16.gmra.mxu0 %v62
  %v196 = vpop.f32.mrf.mxu0
  %v197 = vadd.f32 %v54, %v196
  %v198 = vpop.f32.mrf.mxu0
  %v199 = vpop.f32.mrf.mxu0
  %v200 = vadd.f32 %v54, %v199
  %v201 = vpop.f32.mrf.mxu0
  %202 = vdwg.mxu0
  %v203 = vpack.c.bf16 %v200, %v197
  %v205 = vunpack.c.l.b16 %v203
  %v206 = vunpack.c.h.b16 %v203
  %v207 = vpack.c.b16 %v205, %v205
  %v208 = vpack.c.b16 %v206, %v206
  %211 = vst [vmem:[%s3] sm:$0xf] %v207
  %212 = vst [vmem:[%s3 + $0x4] sm:$0xf] %v208
  // Predicated region
  $region14: #{magic_point_forward.38} parent=0 // pred_check
    _
  $region15: #{magic_point_forward.38} parent=0 // pred_check_branch
    %214 = sbr.rel (0) target = $region17
  $region16: #{magic_point_forward.38} parent=0 // pred_region
    _
  $region17: #{magic_point_forward.38} parent=0 // pred_fallthru
    _
  // Predicated region
  $region18: #{magic_point_forward.38} parent=0 // pred_check
    _
  $region19: #{magic_point_forward.38} parent=0 // pred_check_branch
    %216 = sbr.rel (0) target = $region21
  $region20: #{magic_point_forward.38} parent=0 // pred_region
    _
  $region21: #{magic_point_forward.38} parent=0 // pred_fallthru
    _

// kernel: magic_point_forward.43
$region0: #{magic_point_forward.43}
  #allocation0 [shape = 'u32[]', space=smem, size = 0x4, offset = 0x4, fixed_abs, tag = 'smem constant byte address 0x4 - core index']
  #allocation1 [shape = 'u32[144,128]{1,0:T(1,128)}', space=vmem, size = 0x12000, scoped, tag = 'internal scratch']
  %s0 = inlined_call_operand.vmem [shape: bf16[2,18,64], index: 0, kind: input, shape index: {}]
  %s1 = inlined_call_operand.vmem [shape: bf16[9,64,256], index: 1, kind: input, shape index: {}]
  %s2 = inlined_call_operand.vmem [shape: f32[1,256], index: 2, kind: input, shape index: {}]
  %s3 = inlined_call_operand.vmem [shape: f32[1,256], index: 3, kind: input, shape index: {}]
  %s4 = inlined_call_operand.vmem [shape: f32[1,256], index: 4, kind: input, shape index: {}]
  %s5 = inlined_call_operand.vmem [shape: bf16[2,8,256], index: 5, kind: output, shape index: {}]
  %s6 = sld [smem:[#allocation0]]
  $region53: #{magic_point_forward.43} parent=0
    _
  %s8 = ssub.s32 1, %s6
  %s9 = scalar_select 0, %s8, %s6
  loop: start=0, step=1, limit=4
  $region2: #{magic_point_forward.43} parent=0 // loop_pre_header
    _
  $region3: #{magic_point_forward.43} parent=0 // loop_header
    %s11 = sphi 0, %s15
    %p12 = scmp.ge.s32.totalorder %s11, 4
    %s21 = sphi 0, %s23
    %s24 = sphi 0, %s21
    %s25 = sphi 0, %s24
    %s41 = sphi 0, %s25
    %s45 = sphi 0, %s45
    %s47 = sphi 0, %s45
    %s48 = sphi 0, %s47
    %s62 = sphi 0, %s48
    %s66 = sphi 0, %s66
    %s68 = sphi 0, %s66
    %s69 = sphi 0, %s68
    %s83 = sphi 0, %s69
    %s87 = sphi 0, %s87
    %s89 = sphi 0, %s87
    %s90 = sphi 0, %s89
    %s104 = sphi 0, %s90
    %s108 = sphi 0, %s108
    %s110 = sphi 0, %s108
    %s111 = sphi 0, %s110
    %s125 = sphi 0, %s111
    %s131 = sphi 0, %s133
    %s134 = sphi 0, %s131
    %s135 = sphi 0, %s134
    %s151 = sphi 0, %s135
  $region4: #{magic_point_forward.43} parent=0 // loop_header_branch
    %14 = sbr.rel (%p12) target = $region8
  $region5: #{magic_point_forward.43} parent=0 // loop_body
    %s16 = ssub.s32 %s11, 1
    %s17 = ssub.s32 %s11, 2
    %s18 = sadd.s32 %s11, 1
    %s19 = ssub.s32 %s11, %s18
    %p20 = scmp.eq.s32.totalorder %s19, 0
    %s22 = sadd.s32 %s21, 1
    %s23 = scalar_select %p20, %s21, %s22
    %p26 = pneg %p20
    %p27 = scmp.eq.s32.totalorder %s11, 1
    %p28 = por %p26, %p27
    %p29 = scmp.ne.s32.totalorder %s21, %s24
    %p30 = scmp.eq.s32.totalorder %s11, 0
    %p31 = por %p29, %p30
    %p32 = scmp.ne.s32.totalorder %s21, %s24
    %p33 = scmp.eq.s32.totalorder %s16, 1
    %p34 = por %p32, %p33
    %p35 = scmp.ne.s32.totalorder %s24, %s25
    %p36 = scmp.eq.s32.totalorder %s16, 0
    %p37 = por %p35, %p36
    %p38 = scmp.ne.s32.totalorder %s24, %s25
    %p39 = scmp.eq.s32.totalorder %s17, 1
    %p40 = por %p38, %p39
    %p42 = scmp.ne.s32.totalorder %s25, %s41
    %p43 = scmp.eq.s32.totalorder %s17, 0
    %p44 = por %p42, %p43
    %s46 = sadd.s32 %s45, 1
    %p49 = scmp.eq.s32.totalorder %s11, 1
    %p50 = scmp.ne.s32.totalorder %s45, %s47
    %p51 = scmp.eq.s32.totalorder %s11, 0
    %p52 = por %p50, %p51
    %p53 = scmp.ne.s32.totalorder %s45, %s47
    %p54 = scmp.eq.s32.totalorder %s16, 1
    %p55 = por %p53, %p54
    %p56 = scmp.ne.s32.totalorder %s47, %s48
    %p57 = scmp.eq.s32.totalorder %s16, 0
    %p58 = por %p56, %p57
    %p59 = scmp.ne.s32.totalorder %s47, %s48
    %p60 = scmp.eq.s32.totalorder %s17, 1
    %p61 = por %p59, %p60
    %p63 = scmp.ne.s32.totalorder %s48, %s62
    %p64 = scmp.eq.s32.totalorder %s17, 0
    %p65 = por %p63, %p64
    %s67 = sadd.s32 %s66, 1
    %p70 = scmp.eq.s32.totalorder %s11, 1
    %p71 = scmp.ne.s32.totalorder %s66, %s68
    %p72 = scmp.eq.s32.totalorder %s11, 0
    %p73 = por %p71, %p72
    %p74 = scmp.ne.s32.totalorder %s66, %s68
    %p75 = scmp.eq.s32.totalorder %s16, 1
    %p76 = por %p74, %p75
    %p77 = scmp.ne.s32.totalorder %s68, %s69
    %p78 = scmp.eq.s32.totalorder %s16, 0
    %p79 = por %p77, %p78
    %p80 = scmp.ne.s32.totalorder %s68, %s69
    %p81 = scmp.eq.s32.totalorder %s17, 1
    %p82 = por %p80, %p81
    %p84 = scmp.ne.s32.totalorder %s69, %s83
    %p85 = scmp.eq.s32.totalorder %s17, 0
    %p86 = por %p84, %p85
    %s88 = sadd.s32 %s87, 1
    %p91 = scmp.eq.s32.totalorder %s11, 1
    %p92 = scmp.ne.s32.totalorder %s87, %s89
    %p93 = scmp.eq.s32.totalorder %s11, 0
    %p94 = por %p92, %p93
    %p95 = scmp.ne.s32.totalorder %s87, %s89
    %p96 = scmp.eq.s32.totalorder %s16, 1
    %p97 = por %p95, %p96
    %p98 = scmp.ne.s32.totalorder %s89, %s90
    %p99 = scmp.eq.s32.totalorder %s16, 0
    %p100 = por %p98, %p99
    %p101 = scmp.ne.s32.totalorder %s89, %s90
    %p102 = scmp.eq.s32.totalorder %s17, 1
    %p103 = por %p101, %p102
    %p105 = scmp.ne.s32.totalorder %s90, %s104
    %p106 = scmp.eq.s32.totalorder %s17, 0
    %p107 = por %p105, %p106
    %s109 = sadd.s32 %s108, 1
    %p112 = scmp.eq.s32.totalorder %s11, 1
    %p113 = scmp.ne.s32.totalorder %s108, %s110
    %p114 = scmp.eq.s32.totalorder %s11, 0
    %p115 = por %p113, %p114
    %p116 = scmp.ne.s32.totalorder %s108, %s110
    %p117 = scmp.eq.s32.totalorder %s16, 1
    %p118 = por %p116, %p117
    %p119 = scmp.ne.s32.totalorder %s110, %s111
    %p120 = scmp.eq.s32.totalorder %s16, 0
    %p121 = por %p119, %p120
    %p122 = scmp.ne.s32.totalorder %s110, %s111
    %p123 = scmp.eq.s32.totalorder %s17, 1
    %p124 = por %p122, %p123
    %p126 = scmp.ne.s32.totalorder %s111, %s125
    %p127 = scmp.eq.s32.totalorder %s17, 0
    %p128 = por %p126, %p127
    %s129 = ssub.s32 %s11, %s18
    %p130 = scmp.eq.s32.totalorder %s129, 0
    %s132 = sadd.s32 %s131, 1
    %s133 = scalar_select %p130, %s131, %s132
    %p136 = pneg %p130
    %p137 = scmp.eq.s32.totalorder %s11, 1
    %p138 = por %p136, %p137
    %p139 = scmp.ne.s32.totalorder %s131, %s134
    %p140 = scmp.eq.s32.totalorder %s11, 0
    %p141 = por %p139, %p140
    %p142 = scmp.ne.s32.totalorder %s131, %s134
    %p143 = scmp.eq.s32.totalorder %s16, 1
    %p144 = por %p142, %p143
    %p145 = scmp.ne.s32.totalorder %s134, %s135
    %p146 = scmp.eq.s32.totalorder %s16, 0
    %p147 = por %p145, %p146
    %p148 = scmp.ne.s32.totalorder %s134, %s135
    %p149 = scmp.eq.s32.totalorder %s17, 1
    %p150 = por %p148, %p149
    %p152 = scmp.ne.s32.totalorder %s135, %s151
    %p153 = scmp.eq.s32.totalorder %s17, 0
    %p154 = por %p152, %p153
    %p155 = scmp.le.s32.totalorder 1, %s11
    %p156 = scmp.lt.s32.totalorder %s11, 3
    %p157 = pnand %p155, %p156
    %p158 = pneg %p157
    // Predicated region
    $region9: #{magic_point_forward.43} parent=5 // pred_check
      _
    $region10: #{magic_point_forward.43} parent=5 // pred_check_branch
      %160 = sbr.rel (%p157) target = $region12
    $region11: #{magic_point_forward.43} parent=5 // pred_region
      %s161 = ssub.s32 %s11, 1
      // Predicated region
      $region13: #{magic_point_forward.43} parent=11 // pred_check
        %p162 = pneg %p58
      $region14: #{magic_point_forward.43} parent=11 // pred_check_branch
        %164 = sbr.rel (%p162) target = $region16
      $region15: #{magic_point_forward.43} parent=11 // pred_region
        _
      $region16: #{magic_point_forward.43} parent=11 // pred_fallthru
        _
      // Predicated region
      $region17: #{magic_point_forward.43} parent=11 // pred_check
        %p165 = pneg %p79
      $region18: #{magic_point_forward.43} parent=11 // pred_check_branch
        %167 = sbr.rel (%p165) target = $region20
      $region19: #{magic_point_forward.43} parent=11 // pred_region
        _
      $region20: #{magic_point_forward.43} parent=11 // pred_fallthru
        _
      // Predicated region
      $region21: #{magic_point_forward.43} parent=11 // pred_check
        %p168 = pneg %p100
      $region22: #{magic_point_forward.43} parent=11 // pred_check_branch
        %170 = sbr.rel (%p168) target = $region24
      $region23: #{magic_point_forward.43} parent=11 // pred_region
        _
      $region24: #{magic_point_forward.43} parent=11 // pred_fallthru
        _
      // Predicated region
      $region25: #{magic_point_forward.43} parent=11 // pred_check
        %p171 = pneg %p121
      $region26: #{magic_point_forward.43} parent=11 // pred_check_branch
        %173 = sbr.rel (%p171) target = $region28
      $region27: #{magic_point_forward.43} parent=11 // pred_region
        _
      $region28: #{magic_point_forward.43} parent=11 // pred_fallthru
        _
    $region12: #{magic_point_forward.43} parent=5 // pred_fallthru
      _
    %p174 = scmp.lt.s32.totalorder %s11, 2
    // Predicated region
    $region29: #{magic_point_forward.43} parent=5 // pred_check
      %p175 = pneg %p174
    $region30: #{magic_point_forward.43} parent=5 // pred_check_branch
      %177 = sbr.rel (%p175) target = $region32
    $region31: #{magic_point_forward.43} parent=5 // pred_region
      // Predicated region
      $region33: #{magic_point_forward.43} parent=31 // pred_check
        %p178 = pneg %p31
      $region34: #{magic_point_forward.43} parent=31 // pred_check_branch
        %180 = sbr.rel (%p178) target = $region36
      $region35: #{magic_point_forward.43} parent=31 // pred_region
        %p181 = scmp.lt.s32.totalorder %s11, 1
        %s182 = scalar_select %p181, %s11, 1
        %s183 = smul.addr %s182, 3
        %s184 = smul.addr %s183, 4
        %s185 = scalar_lea.vmem %s0, %s184
      $region36: #{magic_point_forward.43} parent=31 // pred_fallthru
        _
    $region32: #{magic_point_forward.43} parent=5 // pred_fallthru
      _
    %p186 = scmp.le.s32.totalorder 1, %s11
    %p187 = scmp.lt.s32.totalorder %s11, 3
    %p188 = pnand %p186, %p187
    %p189 = pneg %p188
    // Predicated region
    $region37: #{magic_point_forward.43} parent=5 // pred_check
      _
    $region38: #{magic_point_forward.43} parent=5 // pred_check_branch
      %191 = sbr.rel (%p188) target = $region40
    $region39: #{magic_point_forward.43} parent=5 // pred_region
      %s192 = ssub.s32 %s11, 1
      %p193 = scmp.lt.s32.totalorder %s16, 1
      %s194 = scalar_select %p193, %s16, 1
      %s195 = smul.addr %s194, 3
      %s196 = smul.addr %s195, 4
      %s197 = scalar_lea.vmem %s0, %s196
      %p198 = pneg %p37
      %p199 = pneg %p34
      %p200 = pneg %p58
      %p201 = pneg %p55
      %p202 = pneg %p79
      %p203 = pneg %p76
      %p204 = pneg %p100
      %p205 = pneg %p97
      %p206 = pneg %p121
      %p207 = pneg %p118
      %p208 = pneg %p147
      %p209 = pneg %p144
      %p210 = scmp.lt.s32.totalorder %s16, 1
      %s211 = scalar_select %p210, %s16, 1
      %s212 = smul.addr %s211, 2
      %s213 = smul.addr %s212, 4
      %s214 = scalar_lea.vmem %s5, %s213
      %p215 = scmp.lt.s32.totalorder %s16, 1
      %s216 = scalar_select %p215, %s16, 1
      %s217 = smul.addr %s216, 3
      %s218 = smul.addr %s217, 4
      %s219 = scalar_lea.vmem %s0, %s218
      %p220 = scmp.lt.s32.totalorder %s16, 1
      %s221 = scalar_select %p220, %s16, 1
      %s222 = smul.addr %s221, 2
      %s223 = smul.addr %s222, 4
      %s224 = scalar_lea.vmem %s5, %s223
      %v226 = vld [vmem:[%s219] sm:$0xf]
      %v227 = vld [vmem:[%s219 + $0x4] sm:$0xf]
      %v228 = vld [vmem:[%s219 + $0x8] sm:$0x1]
      %v229 = vld [vmem:[%s1] sm:$0xff]
      %v230 = vld [vmem:[%s1 + $0x8] sm:$0xff]
      %v231 = vld [vmem:[%s1 + $0x10] sm:$0xff]
      %v232 = vld [vmem:[%s1 + $0x18] sm:$0xff]
      %v233 = vld [vmem:[%s1 + $0x20] sm:$0xff]
      %v234 = vld [vmem:[%s1 + $0x28] sm:$0xff]
      %v235 = vld [vmem:[%s1 + $0x30] sm:$0xff]
      %v236 = vld [vmem:[%s1 + $0x38] sm:$0xff]
      %s237 = scalar_lea.vmem %s1, 64
      %v238 = vld [vmem:[%s237] sm:$0xff]
      %v239 = vld [vmem:[%s237 + $0x8] sm:$0xff]
      %v240 = vld [vmem:[%s237 + $0x10] sm:$0xff]
      %v241 = vld [vmem:[%s237 + $0x18] sm:$0xff]
      %v242 = vld [vmem:[%s237 + $0x20] sm:$0xff]
      %v243 = vld [vmem:[%s237 + $0x28] sm:$0xff]
      %v244 = vld [vmem:[%s237 + $0x30] sm:$0xff]
      %v245 = vld [vmem:[%s237 + $0x38] sm:$0xff]
      %v248 = vunpack.c.l.b16 %v226
      %v249 = vunpack.c.l.b16 %v227
      %v250 = vpack.c.b16 %v249, %v248
      %v252 = vshrl.u32 %v250, 16
      %v254 = vshll.u32 %v250, 16
      %v256 = vrot.slane %v254, 1
      %v257 = vor.u32 %v252, %v256
      %v266 = vunpack.c.l.b16 %v238
      %v267 = vunpack.c.h.b16 %v238
      %v268 = vunpack.c.l.b16 %v239
      %v269 = vunpack.c.h.b16 %v239
      %v270 = vunpack.c.l.b16 %v240
      %v271 = vunpack.c.h.b16 %v240
      %v272 = vunpack.c.l.b16 %v241
      %v273 = vunpack.c.h.b16 %v241
      %v274 = vunpack.c.l.b16 %v242
      %v275 = vunpack.c.h.b16 %v242
      %v276 = vunpack.c.l.b16 %v243
      %v277 = vunpack.c.h.b16 %v243
      %v278 = vunpack.c.l.b16 %v244
      %v279 = vunpack.c.h.b16 %v244
      %v280 = vunpack.c.l.b16 %v245
      %v281 = vunpack.c.h.b16 %v245
      %v282 = vpack.c.b16 %v268, %v266
      %v283 = vpack.c.b16 %v269, %v267
      %v284 = vpack.c.b16 %v272, %v270
      %v285 = vpack.c.b16 %v273, %v271
      %v286 = vpack.c.b16 %v276, %v274
      %v287 = vpack.c.b16 %v277, %v275
      %v288 = vpack.c.b16 %v280, %v278
      %v289 = vpack.c.b16 %v281, %v279
      %vm298 = vcmask 523264
      %v300 = vsel %vm298, %v257, 0
      %302 = vmatprep.subr.bf16.mxu0 0
      %303 = vmatpush1.bf16.msra.mxu0 0
      %304 = vmatprep.subr.bf16.mxu0 0
      %305 = vmatpush1.bf16.msra.mxu0 0
      %306 = vmatprep.subr.bf16.mxu0 0
      %307 = vmatpush1.bf16.msra.mxu0 0
      %308 = vmatprep.subr.bf16.mxu0 0
      %309 = vmatpush1.bf16.msra.mxu0 0
      %310 = vmatprep.subr.bf16.mxu0 %v289
      %311 = vmatpush1.bf16.msra.mxu0 %v288
      %312 = vmatprep.subr.bf16.mxu0 %v287
      %313 = vmatpush1.bf16.msra.mxu0 %v286
      %314 = vmatprep.subr.bf16.mxu0 %v285
      %315 = vmatpush1.bf16.msra.mxu0 %v284
      %316 = vmatprep.subr.bf16.mxu0 %v283
      %317 = vmatpush1.bf16.msra.mxu0 %v282
      %318 = vmatprep.subr.bf16.mxu0 0
      %319 = vmatpush2.bf16.msra.mxu0 0
      %320 = vmatprep.subr.bf16.mxu0 0
      %321 = vmatpush2.bf16.msra.mxu0 0
      %322 = vmatprep.subr.bf16.mxu0 0
      %323 = vmatpush2.bf16.msra.mxu0 0
      %324 = vmatprep.subr.bf16.mxu0 0
      %325 = vmatpush2.bf16.msra.mxu0 0
      %326 = vmatprep.subr.bf16.mxu0 0
      %327 = vmatpush2.bf16.msra.mxu0 0
      %328 = vmatprep.subr.bf16.mxu0 0
      %329 = vmatpush2.bf16.msra.mxu0 0
      %330 = vmatprep.subr.bf16.mxu0 0
      %331 = vmatpush2.bf16.msra.mxu0 0
      %332 = vmatprep.subr.bf16.mxu0 0
      %333 = vmatpush2.bf16.msra.mxu0 0
      %334 = vmatprep.mubr.bf16.mxu0 0
      %335 = vmatmul.mubr.bf16.gmra.mxu0 %v300
      %v336 = vpop.f32.mrf.mxu0
      %v337 = vadd.f32 0.0, %v336
      %v338 = vpop.f32.mrf.mxu0
      %v339 = vadd.f32 0.0, %v338
      %v340 = vpop.f32.mrf.mxu0
      %v341 = vpop.f32.mrf.mxu0
      %342 = vdwg.mxu0
      %v351 = vunpack.c.l.b16 %v229
      %v352 = vunpack.c.h.b16 %v229
      %v353 = vunpack.c.l.b16 %v230
      %v354 = vunpack.c.h.b16 %v230
      %v355 = vunpack.c.l.b16 %v231
      %v356 = vunpack.c.h.b16 %v231
      %v357 = vunpack.c.l.b16 %v232
      %v358 = vunpack.c.h.b16 %v232
      %v359 = vunpack.c.l.b16 %v233
      %v360 = vunpack.c.h.b16 %v233
      %v361 = vunpack.c.l.b16 %v234
      %v362 = vunpack.c.h.b16 %v234
      %v363 = vunpack.c.l.b16 %v235
      %v364 = vunpack.c.h.b16 %v235
      %v365 = vunpack.c.l.b16 %v236
      %v366 = vunpack.c.h.b16 %v236
      %v367 = vpack.c.b16 %v353, %v351
      %v368 = vpack.c.b16 %v354, %v352
      %v369 = vpack.c.b16 %v357, %v355
      %v370 = vpack.c.b16 %v358, %v356
      %v371 = vpack.c.b16 %v361, %v359
      %v372 = vpack.c.b16 %v362, %v360
      %v373 = vpack.c.b16 %v365, %v363
      %v374 = vpack.c.b16 %v366, %v364
      %v384 = vsel %vm298, %v226, 0
      %386 = vmatprep.subr.bf16.mxu0 0
      %387 = vmatpush1.bf16.msra.mxu0 0
      %388 = vmatprep.subr.bf16.mxu0 0
      %389 = vmatpush1.bf16.msra.mxu0 0
      %390 = vmatprep.subr.bf16.mxu0 0
      %391 = vmatpush1.bf16.msra.mxu0 0
      %392 = vmatprep.subr.bf16.mxu0 0
      %393 = vmatpush1.bf16.msra.mxu0 0
      %394 = vmatprep.subr.bf16.mxu0 %v374
      %395 = vmatpush1.bf16.msra.mxu0 %v373
      %396 = vmatprep.subr.bf16.mxu0 %v372
      %397 = vmatpush1.bf16.msra.mxu0 %v371
      %398 = vmatprep.subr.bf16.mxu0 %v370
      %399 = vmatpush1.bf16.msra.mxu0 %v369
      %400 = vmatprep.subr.bf16.mxu0 %v368
      %401 = vmatpush1.bf16.msra.mxu0 %v367
      %402 = vmatprep.subr.bf16.mxu0 0
      %403 = vmatpush2.bf16.msra.mxu0 0
      %404 = vmatprep.subr.bf16.mxu0 0
      %405 = vmatpush2.bf16.msra.mxu0 0
      %406 = vmatprep.subr.bf16.mxu0 0
      %407 = vmatpush2.bf16.msra.mxu0 0
      %408 = vmatprep.subr.bf16.mxu0 0
      %409 = vmatpush2.bf16.msra.mxu0 0
      %410 = vmatprep.subr.bf16.mxu0 0
      %411 = vmatpush2.bf16.msra.mxu0 0
      %412 = vmatprep.subr.bf16.mxu0 0
      %413 = vmatpush2.bf16.msra.mxu0 0
      %414 = vmatprep.subr.bf16.mxu0 0
      %415 = vmatpush2.bf16.msra.mxu0 0
      %416 = vmatprep.subr.bf16.mxu0 0
      %417 = vmatpush2.bf16.msra.mxu0 0
      %418 = vmatprep.mubr.bf16.mxu0 0
      %419 = vmatmul.mubr.bf16.gmra.mxu0 %v384
      %v420 = vpop.f32.mrf.mxu0
      %v421 = vadd.f32 %v337, %v420
      %v422 = vpop.f32.mrf.mxu0
      %v423 = vadd.f32 %v339, %v422
      %v424 = vpop.f32.mrf.mxu0
      %v425 = vpop.f32.mrf.mxu0
      %426 = vdwg.mxu0
      %s427 = scalar_lea.vmem %s1, 128
      %v428 = vld [vmem:[%s427] sm:$0xff]
      %v429 = vld [vmem:[%s427 + $0x8] sm:$0xff]
      %v430 = vld [vmem:[%s427 + $0x10] sm:$0xff]
      %v431 = vld [vmem:[%s427 + $0x18] sm:$0xff]
      %v432 = vld [vmem:[%s427 + $0x20] sm:$0xff]
      %v433 = vld [vmem:[%s427 + $0x28] sm:$0xff]
      %v434 = vld [vmem:[%s427 + $0x30] sm:$0xff]
      %v435 = vld [vmem:[%s427 + $0x38] sm:$0xff]
      %v436 = vrot.slane %v250, 1
      %v445 = vunpack.c.l.b16 %v428
      %v446 = vunpack.c.h.b16 %v428
      %v447 = vunpack.c.l.b16 %v429
      %v448 = vunpack.c.h.b16 %v429
      %v449 = vunpack.c.l.b16 %v430
      %v450 = vunpack.c.h.b16 %v430
      %v451 = vunpack.c.l.b16 %v431
      %v452 = vunpack.c.h.b16 %v431
      %v453 = vunpack.c.l.b16 %v432
      %v454 = vunpack.c.h.b16 %v432
      %v455 = vunpack.c.l.b16 %v433
      %v456 = vunpack.c.h.b16 %v433
      %v457 = vunpack.c.l.b16 %v434
      %v458 = vunpack.c.h.b16 %v434
      %v459 = vunpack.c.l.b16 %v435
      %v460 = vunpack.c.h.b16 %v435
      %v461 = vpack.c.b16 %v447, %v445
      %v462 = vpack.c.b16 %v448, %v446
      %v463 = vpack.c.b16 %v451, %v449
      %v464 = vpack.c.b16 %v452, %v450
      %v465 = vpack.c.b16 %v455, %v453
      %v466 = vpack.c.b16 %v456, %v454
      %v467 = vpack.c.b16 %v459, %v457
      %v468 = vpack.c.b16 %v460, %v458
      %v478 = vsel %vm298, %v436, 0
      %480 = vmatprep.subr.bf16.mxu0 0
      %481 = vmatpush1.bf16.msra.mxu0 0
      %482 = vmatprep.subr.bf16.mxu0 0
      %483 = vmatpush1.bf16.msra.mxu0 0
      %484 = vmatprep.subr.bf16.mxu0 0
      %485 = vmatpush1.bf16.msra.mxu0 0
      %486 = vmatprep.subr.bf16.mxu0 0
      %487 = vmatpush1.bf16.msra.mxu0 0
      %488 = vmatprep.subr.bf16.mxu0 %v468
      %489 = vmatpush1.bf16.msra.mxu0 %v467
      %490 = vmatprep.subr.bf16.mxu0 %v466
      %491 = vmatpush1.bf16.msra.mxu0 %v465
      %492 = vmatprep.subr.bf16.mxu0 %v464
      %493 = vmatpush1.bf16.msra.mxu0 %v463
      %494 = vmatprep.subr.bf16.mxu0 %v462
      %495 = vmatpush1.bf16.msra.mxu0 %v461
      %496 = vmatprep.subr.bf16.mxu0 0
      %497 = vmatpush2.bf16.msra.mxu0 0
      %498 = vmatprep.subr.bf16.mxu0 0
      %499 = vmatpush2.bf16.msra.mxu0 0
      %500 = vmatprep.subr.bf16.mxu0 0
      %501 = vmatpush2.bf16.msra.mxu0 0
      %502 = vmatprep.subr.bf16.mxu0 0
      %503 = vmatpush2.bf16.msra.mxu0 0
      %504 = vmatprep.subr.bf16.mxu0 0
      %505 = vmatpush2.bf16.msra.mxu0 0
      %506 = vmatprep.subr.bf16.mxu0 0
      %507 = vmatpush2.bf16.msra.mxu0 0
      %508 = vmatprep.subr.bf16.mxu0 0
      %509 = vmatpush2.bf16.msra.mxu0 0
      %510 = vmatprep.subr.bf16.mxu0 0
      %511 = vmatpush2.bf16.msra.mxu0 0
      %512 = vmatprep.mubr.bf16.mxu0 0
      %513 = vmatmul.mubr.bf16.gmra.mxu0 %v478
      %v514 = vpop.f32.mrf.mxu0
      %v515 = vadd.f32 0.0, %v514
      %v516 = vpop.f32.mrf.mxu0
      %v517 = vadd.f32 0.0, %v516
      %v518 = vpop.f32.mrf.mxu0
      %v519 = vpop.f32.mrf.mxu0
      %520 = vdwg.mxu0
      %v521 = vadd.f32 %v421, %v515
      %v522 = vadd.f32 %v423, %v517
      %s523 = scalar_lea.vmem %s1, 192
      %v524 = vld [vmem:[%s523] sm:$0xff]
      %v525 = vld [vmem:[%s523 + $0x8] sm:$0xff]
      %v526 = vld [vmem:[%s523 + $0x10] sm:$0xff]
      %v527 = vld [vmem:[%s523 + $0x18] sm:$0xff]
      %v528 = vld [vmem:[%s523 + $0x20] sm:$0xff]
      %v529 = vld [vmem:[%s523 + $0x28] sm:$0xff]
      %v530 = vld [vmem:[%s523 + $0x30] sm:$0xff]
      %v531 = vld [vmem:[%s523 + $0x38] sm:$0xff]
      %v532 = vrot.slane %v250, 2
      %v541 = vunpack.c.l.b16 %v524
      %v542 = vunpack.c.h.b16 %v524
      %v543 = vunpack.c.l.b16 %v525
      %v544 = vunpack.c.h.b16 %v525
      %v545 = vunpack.c.l.b16 %v526
      %v546 = vunpack.c.h.b16 %v526
      %v547 = vunpack.c.l.b16 %v527
      %v548 = vunpack.c.h.b16 %v527
      %v549 = vunpack.c.l.b16 %v528
      %v550 = vunpack.c.h.b16 %v528
      %v551 = vunpack.c.l.b16 %v529
      %v552 = vunpack.c.h.b16 %v529
      %v553 = vunpack.c.l.b16 %v530
      %v554 = vunpack.c.h.b16 %v530
      %v555 = vunpack.c.l.b16 %v531
      %v556 = vunpack.c.h.b16 %v531
      %v557 = vpack.c.b16 %v543, %v541
      %v558 = vpack.c.b16 %v544, %v542
      %v559 = vpack.c.b16 %v547, %v545
      %v560 = vpack.c.b16 %v548, %v546
      %v561 = vpack.c.b16 %v551, %v549
      %v562 = vpack.c.b16 %v552, %v550
      %v563 = vpack.c.b16 %v555, %v553
      %v564 = vpack.c.b16 %v556, %v554
      %v574 = vsel %vm298, %v532, 0
      %576 = vmatprep.subr.bf16.mxu0 0
      %577 = vmatpush1.bf16.msra.mxu0 0
      %578 = vmatprep.subr.bf16.mxu0 0
      %579 = vmatpush1.bf16.msra.mxu0 0
      %580 = vmatprep.subr.bf16.mxu0 0
      %581 = vmatpush1.bf16.msra.mxu0 0
      %582 = vmatprep.subr.bf16.mxu0 0
      %583 = vmatpush1.bf16.msra.mxu0 0
      %584 = vmatprep.subr.bf16.mxu0 %v564
      %585 = vmatpush1.bf16.msra.mxu0 %v563
      %586 = vmatprep.subr.bf16.mxu0 %v562
      %587 = vmatpush1.bf16.msra.mxu0 %v561
      %588 = vmatprep.subr.bf16.mxu0 %v560
      %589 = vmatpush1.bf16.msra.mxu0 %v559
      %590 = vmatprep.subr.bf16.mxu0 %v558
      %591 = vmatpush1.bf16.msra.mxu0 %v557
      %592 = vmatprep.subr.bf16.mxu0 0
      %593 = vmatpush2.bf16.msra.mxu0 0
      %594 = vmatprep.subr.bf16.mxu0 0
      %595 = vmatpush2.bf16.msra.mxu0 0
      %596 = vmatprep.subr.bf16.mxu0 0
      %597 = vmatpush2.bf16.msra.mxu0 0
      %598 = vmatprep.subr.bf16.mxu0 0
      %599 = vmatpush2.bf16.msra.mxu0 0
      %600 = vmatprep.subr.bf16.mxu0 0
      %601 = vmatpush2.bf16.msra.mxu0 0
      %602 = vmatprep.subr.bf16.mxu0 0
      %603 = vmatpush2.bf16.msra.mxu0 0
      %604 = vmatprep.subr.bf16.mxu0 0
      %605 = vmatpush2.bf16.msra.mxu0 0
      %606 = vmatprep.subr.bf16.mxu0 0
      %607 = vmatpush2.bf16.msra.mxu0 0
      %608 = vmatprep.mubr.bf16.mxu0 0
      %609 = vmatmul.mubr.bf16.gmra.mxu0 %v574
      %v610 = vpop.f32.mrf.mxu0
      %v611 = vadd.f32 0.0, %v610
      %v612 = vpop.f32.mrf.mxu0
      %v613 = vadd.f32 0.0, %v612
      %v614 = vpop.f32.mrf.mxu0
      %v615 = vpop.f32.mrf.mxu0
      %616 = vdwg.mxu0
      %v617 = vadd.f32 %v521, %v611
      %v618 = vadd.f32 %v522, %v613
      %s619 = scalar_lea.vmem %s1, 256
      %v620 = vld [vmem:[%s619] sm:$0xff]
      %v621 = vld [vmem:[%s619 + $0x8] sm:$0xff]
      %v622 = vld [vmem:[%s619 + $0x10] sm:$0xff]
      %v623 = vld [vmem:[%s619 + $0x18] sm:$0xff]
      %v624 = vld [vmem:[%s619 + $0x20] sm:$0xff]
      %v625 = vld [vmem:[%s619 + $0x28] sm:$0xff]
      %v626 = vld [vmem:[%s619 + $0x30] sm:$0xff]
      %v627 = vld [vmem:[%s619 + $0x38] sm:$0xff]
      %v628 = vrot.slane %v252, 2
      %v629 = vrot.slane %v254, 3
      %v630 = vor.u32 %v628, %v629
      %v639 = vunpack.c.l.b16 %v620
      %v640 = vunpack.c.h.b16 %v620
      %v641 = vunpack.c.l.b16 %v621
      %v642 = vunpack.c.h.b16 %v621
      %v643 = vunpack.c.l.b16 %v622
      %v644 = vunpack.c.h.b16 %v622
      %v645 = vunpack.c.l.b16 %v623
      %v646 = vunpack.c.h.b16 %v623
      %v647 = vunpack.c.l.b16 %v624
      %v648 = vunpack.c.h.b16 %v624
      %v649 = vunpack.c.l.b16 %v625
      %v650 = vunpack.c.h.b16 %v625
      %v651 = vunpack.c.l.b16 %v626
      %v652 = vunpack.c.h.b16 %v626
      %v653 = vunpack.c.l.b16 %v627
      %v654 = vunpack.c.h.b16 %v627
      %v655 = vpack.c.b16 %v641, %v639
      %v656 = vpack.c.b16 %v642, %v640
      %v657 = vpack.c.b16 %v645, %v643
      %v658 = vpack.c.b16 %v646, %v644
      %v659 = vpack.c.b16 %v649, %v647
      %v660 = vpack.c.b16 %v650, %v648
      %v661 = vpack.c.b16 %v653, %v651
      %v662 = vpack.c.b16 %v654, %v652
      %v672 = vsel %vm298, %v630, 0
      %674 = vmatprep.subr.bf16.mxu0 0
      %675 = vmatpush1.bf16.msra.mxu0 0
      %676 = vmatprep.subr.bf16.mxu0 0
      %677 = vmatpush1.bf16.msra.mxu0 0
      %678 = vmatprep.subr.bf16.mxu0 0
      %679 = vmatpush1.bf16.msra.mxu0 0
      %680 = vmatprep.subr.bf16.mxu0 0
      %681 = vmatpush1.bf16.msra.mxu0 0
      %682 = vmatprep.subr.bf16.mxu0 %v662
      %683 = vmatpush1.bf16.msra.mxu0 %v661
      %684 = vmatprep.subr.bf16.mxu0 %v660
      %685 = vmatpush1.bf16.msra.mxu0 %v659
      %686 = vmatprep.subr.bf16.mxu0 %v658
      %687 = vmatpush1.bf16.msra.mxu0 %v657
      %688 = vmatprep.subr.bf16.mxu0 %v656
      %689 = vmatpush1.bf16.msra.mxu0 %v655
      %690 = vmatprep.subr.bf16.mxu0 0
      %691 = vmatpush2.bf16.msra.mxu0 0
      %692 = vmatprep.subr.bf16.mxu0 0
      %693 = vmatpush2.bf16.msra.mxu0 0
      %694 = vmatprep.subr.bf16.mxu0 0
      %695 = vmatpush2.bf16.msra.mxu0 0
      %696 = vmatprep.subr.bf16.mxu0 0
      %697 = vmatpush2.bf16.msra.mxu0 0
      %698 = vmatprep.subr.bf16.mxu0 0
      %699 = vmatpush2.bf16.msra.mxu0 0
      %700 = vmatprep.subr.bf16.mxu0 0
      %701 = vmatpush2.bf16.msra.mxu0 0
      %702 = vmatprep.subr.bf16.mxu0 0
      %703 = vmatpush2.bf16.msra.mxu0 0
      %704 = vmatprep.subr.bf16.mxu0 0
      %705 = vmatpush2.bf16.msra.mxu0 0
      %706 = vmatprep.mubr.bf16.mxu0 0
      %707 = vmatmul.mubr.bf16.gmra.mxu0 %v672
      %v708 = vpop.f32.mrf.mxu0
      %v709 = vadd.f32 0.0, %v708
      %v710 = vpop.f32.mrf.mxu0
      %v711 = vadd.f32 0.0, %v710
      %v712 = vpop.f32.mrf.mxu0
      %v713 = vpop.f32.mrf.mxu0
      %714 = vdwg.mxu0
      %v715 = vadd.f32 %v617, %v709
      %v716 = vadd.f32 %v618, %v711
      %s717 = scalar_lea.vmem %s1, 320
      %v718 = vld [vmem:[%s717] sm:$0xff]
      %v719 = vld [vmem:[%s717 + $0x8] sm:$0xff]
      %v720 = vld [vmem:[%s717 + $0x10] sm:$0xff]
      %v721 = vld [vmem:[%s717 + $0x18] sm:$0xff]
      %v722 = vld [vmem:[%s717 + $0x20] sm:$0xff]
      %v723 = vld [vmem:[%s717 + $0x28] sm:$0xff]
      %v724 = vld [vmem:[%s717 + $0x30] sm:$0xff]
      %v725 = vld [vmem:[%s717 + $0x38] sm:$0xff]
      %v726 = vrot.slane %v250, 3
      %v735 = vunpack.c.l.b16 %v718
      %v736 = vunpack.c.h.b16 %v718
      %v737 = vunpack.c.l.b16 %v719
      %v738 = vunpack.c.h.b16 %v719
      %v739 = vunpack.c.l.b16 %v720
      %v740 = vunpack.c.h.b16 %v720
      %v741 = vunpack.c.l.b16 %v721
      %v742 = vunpack.c.h.b16 %v721
      %v743 = vunpack.c.l.b16 %v722
      %v744 = vunpack.c.h.b16 %v722
      %v745 = vunpack.c.l.b16 %v723
      %v746 = vunpack.c.h.b16 %v723
      %v747 = vunpack.c.l.b16 %v724
      %v748 = vunpack.c.h.b16 %v724
      %v749 = vunpack.c.l.b16 %v725
      %v750 = vunpack.c.h.b16 %v725
      %v751 = vpack.c.b16 %v737, %v735
      %v752 = vpack.c.b16 %v738, %v736
      %v753 = vpack.c.b16 %v741, %v739
      %v754 = vpack.c.b16 %v742, %v740
      %v755 = vpack.c.b16 %v745, %v743
      %v756 = vpack.c.b16 %v746, %v744
      %v757 = vpack.c.b16 %v749, %v747
      %v758 = vpack.c.b16 %v750, %v748
      %v768 = vsel %vm298, %v726, 0
      %770 = vmatprep.subr.bf16.mxu0 0
      %771 = vmatpush1.bf16.msra.mxu0 0
      %772 = vmatprep.subr.bf16.mxu0 0
      %773 = vmatpush1.bf16.msra.mxu0 0
      %774 = vmatprep.subr.bf16.mxu0 0
      %775 = vmatpush1.bf16.msra.mxu0 0
      %776 = vmatprep.subr.bf16.mxu0 0
      %777 = vmatpush1.bf16.msra.mxu0 0
      %778 = vmatprep.subr.bf16.mxu0 %v758
      %779 = vmatpush1.bf16.msra.mxu0 %v757
      %780 = vmatprep.subr.bf16.mxu0 %v756
      %781 = vmatpush1.bf16.msra.mxu0 %v755
      %782 = vmatprep.subr.bf16.mxu0 %v754
      %783 = vmatpush1.bf16.msra.mxu0 %v753
      %784 = vmatprep.subr.bf16.mxu0 %v752
      %785 = vmatpush1.bf16.msra.mxu0 %v751
      %786 = vmatprep.subr.bf16.mxu0 0
      %787 = vmatpush2.bf16.msra.mxu0 0
      %788 = vmatprep.subr.bf16.mxu0 0
      %789 = vmatpush2.bf16.msra.mxu0 0
      %790 = vmatprep.subr.bf16.mxu0 0
      %791 = vmatpush2.bf16.msra.mxu0 0
      %792 = vmatprep.subr.bf16.mxu0 0
      %793 = vmatpush2.bf16.msra.mxu0 0
      %794 = vmatprep.subr.bf16.mxu0 0
      %795 = vmatpush2.bf16.msra.mxu0 0
      %796 = vmatprep.subr.bf16.mxu0 0
      %797 = vmatpush2.bf16.msra.mxu0 0
      %798 = vmatprep.subr.bf16.mxu0 0
      %799 = vmatpush2.bf16.msra.mxu0 0
      %800 = vmatprep.subr.bf16.mxu0 0
      %801 = vmatpush2.bf16.msra.mxu0 0
      %802 = vmatprep.mubr.bf16.mxu0 0
      %803 = vmatmul.mubr.bf16.gmra.mxu0 %v768
      %v804 = vpop.f32.mrf.mxu0
      %v805 = vadd.f32 0.0, %v804
      %v806 = vpop.f32.mrf.mxu0
      %v807 = vadd.f32 0.0, %v806
      %v808 = vpop.f32.mrf.mxu0
      %v809 = vpop.f32.mrf.mxu0
      %810 = vdwg.mxu0
      %v811 = vadd.f32 %v715, %v805
      %v812 = vadd.f32 %v716, %v807
      %s813 = scalar_lea.vmem %s1, 384
      %v814 = vld [vmem:[%s813] sm:$0xff]
      %v815 = vld [vmem:[%s813 + $0x8] sm:$0xff]
      %v816 = vld [vmem:[%s813 + $0x10] sm:$0xff]
      %v817 = vld [vmem:[%s813 + $0x18] sm:$0xff]
      %v818 = vld [vmem:[%s813 + $0x20] sm:$0xff]
      %v819 = vld [vmem:[%s813 + $0x28] sm:$0xff]
      %v820 = vld [vmem:[%s813 + $0x30] sm:$0xff]
      %v821 = vld [vmem:[%s813 + $0x38] sm:$0xff]
      %v830 = vunpack.c.l.b16 %v814
      %v831 = vunpack.c.h.b16 %v814
      %v832 = vunpack.c.l.b16 %v815
      %v833 = vunpack.c.h.b16 %v815
      %v834 = vunpack.c.l.b16 %v816
      %v835 = vunpack.c.h.b16 %v816
      %v836 = vunpack.c.l.b16 %v817
      %v837 = vunpack.c.h.b16 %v817
      %v838 = vunpack.c.l.b16 %v818
      %v839 = vunpack.c.h.b16 %v818
      %v840 = vunpack.c.l.b16 %v819
      %v841 = vunpack.c.h.b16 %v819
      %v842 = vunpack.c.l.b16 %v820
      %v843 = vunpack.c.h.b16 %v820
      %v844 = vunpack.c.l.b16 %v821
      %v845 = vunpack.c.h.b16 %v821
      %v846 = vpack.c.b16 %v832, %v830
      %v847 = vpack.c.b16 %v833, %v831
      %v848 = vpack.c.b16 %v836, %v834
      %v849 = vpack.c.b16 %v837, %v835
      %v850 = vpack.c.b16 %v840, %v838
      %v851 = vpack.c.b16 %v841, %v839
      %v852 = vpack.c.b16 %v844, %v842
      %v853 = vpack.c.b16 %v845, %v843
      %v863 = vsel %vm298, %v227, 0
      %865 = vmatprep.subr.bf16.mxu0 0
      %866 = vmatpush1.bf16.msra.mxu0 0
      %867 = vmatprep.subr.bf16.mxu0 0
      %868 = vmatpush1.bf16.msra.mxu0 0
      %869 = vmatprep.subr.bf16.mxu0 0
      %870 = vmatpush1.bf16.msra.mxu0 0
      %871 = vmatprep.subr.bf16.mxu0 0
      %872 = vmatpush1.bf16.msra.mxu0 0
      %873 = vmatprep.subr.bf16.mxu0 %v853
      %874 = vmatpush1.bf16.msra.mxu0 %v852
      %875 = vmatprep.subr.bf16.mxu0 %v851
      %876 = vmatpush1.bf16.msra.mxu0 %v850
      %877 = vmatprep.subr.bf16.mxu0 %v849
      %878 = vmatpush1.bf16.msra.mxu0 %v848
      %879 = vmatprep.subr.bf16.mxu0 %v847
      %880 = vmatpush1.bf16.msra.mxu0 %v846
      %881 = vmatprep.subr.bf16.mxu0 0
      %882 = vmatpush2.bf16.msra.mxu0 0
      %883 = vmatprep.subr.bf16.mxu0 0
      %884 = vmatpush2.bf16.msra.mxu0 0
      %885 = vmatprep.subr.bf16.mxu0 0
      %886 = vmatpush2.bf16.msra.mxu0 0
      %887 = vmatprep.subr.bf16.mxu0 0
      %888 = vmatpush2.bf16.msra.mxu0 0
      %889 = vmatprep.subr.bf16.mxu0 0
      %890 = vmatpush2.bf16.msra.mxu0 0
      %891 = vmatprep.subr.bf16.mxu0 0
      %892 = vmatpush2.bf16.msra.mxu0 0
      %893 = vmatprep.subr.bf16.mxu0 0
      %894 = vmatpush2.bf16.msra.mxu0 0
      %895 = vmatprep.subr.bf16.mxu0 0
      %896 = vmatpush2.bf16.msra.mxu0 0
      %897 = vmatprep.mubr.bf16.mxu0 0
      %898 = vmatmul.mubr.bf16.gmra.mxu0 %v863
      %v899 = vpop.f32.mrf.mxu0
      %v900 = vadd.f32 0.0, %v899
      %v901 = vpop.f32.mrf.mxu0
      %v902 = vadd.f32 0.0, %v901
      %v903 = vpop.f32.mrf.mxu0
      %v904 = vpop.f32.mrf.mxu0
      %905 = vdwg.mxu0
      %v906 = vadd.f32 %v811, %v900
      %v907 = vadd.f32 %v812, %v902
      %s908 = scalar_lea.vmem %s1, 448
      %v909 = vld [vmem:[%s908] sm:$0xff]
      %v910 = vld [vmem:[%s908 + $0x8] sm:$0xff]
      %v911 = vld [vmem:[%s908 + $0x10] sm:$0xff]
      %v912 = vld [vmem:[%s908 + $0x18] sm:$0xff]
      %v913 = vld [vmem:[%s908 + $0x20] sm:$0xff]
      %v914 = vld [vmem:[%s908 + $0x28] sm:$0xff]
      %v915 = vld [vmem:[%s908 + $0x30] sm:$0xff]
      %v916 = vld [vmem:[%s908 + $0x38] sm:$0xff]
      %v918 = vunpack.c.l.b16 %v228
      %v919 = vpack.c.b16 %v918, %v249
      %v921 = vshrl.u32 %v919, 16
      %v923 = vshll.u32 %v919, 16
      %v925 = vrot.slane %v923, 1
      %v926 = vor.u32 %v921, %v925
      %v935 = vunpack.c.l.b16 %v909
      %v936 = vunpack.c.h.b16 %v909
      %v937 = vunpack.c.l.b16 %v910
      %v938 = vunpack.c.h.b16 %v910
      %v939 = vunpack.c.l.b16 %v911
      %v940 = vunpack.c.h.b16 %v911
      %v941 = vunpack.c.l.b16 %v912
      %v942 = vunpack.c.h.b16 %v912
      %v943 = vunpack.c.l.b16 %v913
      %v944 = vunpack.c.h.b16 %v913
      %v945 = vunpack.c.l.b16 %v914
      %v946 = vunpack.c.h.b16 %v914
      %v947 = vunpack.c.l.b16 %v915
      %v948 = vunpack.c.h.b16 %v915
      %v949 = vunpack.c.l.b16 %v916
      %v950 = vunpack.c.h.b16 %v916
      %v951 = vpack.c.b16 %v937, %v935
      %v952 = vpack.c.b16 %v938, %v936
      %v953 = vpack.c.b16 %v941, %v939
      %v954 = vpack.c.b16 %v942, %v940
      %v955 = vpack.c.b16 %v945, %v943
      %v956 = vpack.c.b16 %v946, %v944
      %v957 = vpack.c.b16 %v949, %v947
      %v958 = vpack.c.b16 %v950, %v948
      %v968 = vsel %vm298, %v926, 0
      %970 = vmatprep.subr.bf16.mxu0 0
      %971 = vmatpush1.bf16.msra.mxu0 0
      %972 = vmatprep.subr.bf16.mxu0 0
      %973 = vmatpush1.bf16.msra.mxu0 0
      %974 = vmatprep.subr.bf16.mxu0 0
      %975 = vmatpush1.bf16.msra.mxu0 0
      %976 = vmatprep.subr.bf16.mxu0 0
      %977 = vmatpush1.bf16.msra.mxu0 0
      %978 = vmatprep.subr.bf16.mxu0 %v958
      %979 = vmatpush1.bf16.msra.mxu0 %v957
      %980 = vmatprep.subr.bf16.mxu0 %v956
      %981 = vmatpush1.bf16.msra.mxu0 %v955
      %982 = vmatprep.subr.bf16.mxu0 %v954
      %983 = vmatpush1.bf16.msra.mxu0 %v953
      %984 = vmatprep.subr.bf16.mxu0 %v952
      %985 = vmatpush1.bf16.msra.mxu0 %v951
      %986 = vmatprep.subr.bf16.mxu0 0
      %987 = vmatpush2.bf16.msra.mxu0 0
      %988 = vmatprep.subr.bf16.mxu0 0
      %989 = vmatpush2.bf16.msra.mxu0 0
      %990 = vmatprep.subr.bf16.mxu0 0
      %991 = vmatpush2.bf16.msra.mxu0 0
      %992 = vmatprep.subr.bf16.mxu0 0
      %993 = vmatpush2.bf16.msra.mxu0 0
      %994 = vmatprep.subr.bf16.mxu0 0
      %995 = vmatpush2.bf16.msra.mxu0 0
      %996 = vmatprep.subr.bf16.mxu0 0
      %997 = vmatpush2.bf16.msra.mxu0 0
      %998 = vmatprep.subr.bf16.mxu0 0
      %999 = vmatpush2.bf16.msra.mxu0 0
      %1000 = vmatprep.subr.bf16.mxu0 0
      %1001 = vmatpush2.bf16.msra.mxu0 0
      %1002 = vmatprep.mubr.bf16.mxu0 0
      %1003 = vmatmul.mubr.bf16.gmra.mxu0 %v968
      %v1004 = vpop.f32.mrf.mxu0
      %v1005 = vadd.f32 0.0, %v1004
      %v1006 = vpop.f32.mrf.mxu0
      %v1007 = vadd.f32 0.0, %v1006
      %v1008 = vpop.f32.mrf.mxu0
      %v1009 = vpop.f32.mrf.mxu0
      %1010 = vdwg.mxu0
      %v1011 = vadd.f32 %v906, %v1005
      %v1012 = vadd.f32 %v907, %v1007
      %s1013 = scalar_lea.vmem %s1, 512
      %v1014 = vld [vmem:[%s1013] sm:$0xff]
      %v1015 = vld [vmem:[%s1013 + $0x8] sm:$0xff]
      %v1016 = vld [vmem:[%s1013 + $0x10] sm:$0xff]
      %v1017 = vld [vmem:[%s1013 + $0x18] sm:$0xff]
      %v1018 = vld [vmem:[%s1013 + $0x20] sm:$0xff]
      %v1019 = vld [vmem:[%s1013 + $0x28] sm:$0xff]
      %v1020 = vld [vmem:[%s1013 + $0x30] sm:$0xff]
      %v1021 = vld [vmem:[%s1013 + $0x38] sm:$0xff]
      %v1022 = vrot.slane %v919, 1
      %v1031 = vunpack.c.l.b16 %v1014
      %v1032 = vunpack.c.h.b16 %v1014
      %v1033 = vunpack.c.l.b16 %v1015
      %v1034 = vunpack.c.h.b16 %v1015
      %v1035 = vunpack.c.l.b16 %v1016
      %v1036 = vunpack.c.h.b16 %v1016
      %v1037 = vunpack.c.l.b16 %v1017
      %v1038 = vunpack.c.h.b16 %v1017
      %v1039 = vunpack.c.l.b16 %v1018
      %v1040 = vunpack.c.h.b16 %v1018
      %v1041 = vunpack.c.l.b16 %v1019
      %v1042 = vunpack.c.h.b16 %v1019
      %v1043 = vunpack.c.l.b16 %v1020
      %v1044 = vunpack.c.h.b16 %v1020
      %v1045 = vunpack.c.l.b16 %v1021
      %v1046 = vunpack.c.h.b16 %v1021
      %v1047 = vpack.c.b16 %v1033, %v1031
      %v1048 = vpack.c.b16 %v1034, %v1032
      %v1049 = vpack.c.b16 %v1037, %v1035
      %v1050 = vpack.c.b16 %v1038, %v1036
      %v1051 = vpack.c.b16 %v1041, %v1039
      %v1052 = vpack.c.b16 %v1042, %v1040
      %v1053 = vpack.c.b16 %v1045, %v1043
      %v1054 = vpack.c.b16 %v1046, %v1044
      %v1064 = vsel %vm298, %v1022, 0
      %1066 = vmatprep.subr.bf16.mxu0 0
      %1067 = vmatpush1.bf16.msra.mxu0 0
      %1068 = vmatprep.subr.bf16.mxu0 0
      %1069 = vmatpush1.bf16.msra.mxu0 0
      %1070 = vmatprep.subr.bf16.mxu0 0
      %1071 = vmatpush1.bf16.msra.mxu0 0
      %1072 = vmatprep.subr.bf16.mxu0 0
      %1073 = vmatpush1.bf16.msra.mxu0 0
      %1074 = vmatprep.subr.bf16.mxu0 %v1054
      %1075 = vmatpush1.bf16.msra.mxu0 %v1053
      %1076 = vmatprep.subr.bf16.mxu0 %v1052
      %1077 = vmatpush1.bf16.msra.mxu0 %v1051
      %1078 = vmatprep.subr.bf16.mxu0 %v1050
      %1079 = vmatpush1.bf16.msra.mxu0 %v1049
      %1080 = vmatprep.subr.bf16.mxu0 %v1048
      %1081 = vmatpush1.bf16.msra.mxu0 %v1047
      %1082 = vmatprep.subr.bf16.mxu0 0
      %1083 = vmatpush2.bf16.msra.mxu0 0
      %1084 = vmatprep.subr.bf16.mxu0 0
      %1085 = vmatpush2.bf16.msra.mxu0 0
      %1086 = vmatprep.subr.bf16.mxu0 0
      %1087 = vmatpush2.bf16.msra.mxu0 0
      %1088 = vmatprep.subr.bf16.mxu0 0
      %1089 = vmatpush2.bf16.msra.mxu0 0
      %1090 = vmatprep.subr.bf16.mxu0 0
      %1091 = vmatpush2.bf16.msra.mxu0 0
      %1092 = vmatprep.subr.bf16.mxu0 0
      %1093 = vmatpush2.bf16.msra.mxu0 0
      %1094 = vmatprep.subr.bf16.mxu0 0
      %1095 = vmatpush2.bf16.msra.mxu0 0
      %1096 = vmatprep.subr.bf16.mxu0 0
      %1097 = vmatpush2.bf16.msra.mxu0 0
      %1098 = vmatprep.mubr.bf16.mxu0 0
      %1099 = vmatmul.mubr.bf16.gmra.mxu0 %v1064
      %v1100 = vpop.f32.mrf.mxu0
      %v1101 = vadd.f32 0.0, %v1100
      %v1102 = vpop.f32.mrf.mxu0
      %v1103 = vadd.f32 0.0, %v1102
      %v1104 = vpop.f32.mrf.mxu0
      %v1105 = vpop.f32.mrf.mxu0
      %1106 = vdwg.mxu0
      %v1107 = vadd.f32 %v1011, %v1101
      %v1108 = vadd.f32 %v1012, %v1103
      %v1109 = vld [vmem:[%s2] sm:$0x3]
      %v1111 = vlaneseq
      %v1112 = vshrl.u32 %v1111, 7
      %v1113 = vsub.s32 0, %v1112
      %v1114 = vrot.slane %v1109, %v1113
      %v1115 = vlaneseq
      %v1116 = vshrl.u32 %v1115, 7
      %v1117 = vsub.s32 1, %v1116
      %v1118 = vrot.slane %v1109, %v1117
      %v1121 = vadd.f32 %v1107, %v1114
      %v1122 = vadd.f32 %v1108, %v1118
      %v1123 = vmax.f32 %v1121, 0.0
      %v1124 = vmax.f32 %v1122, 0.0
      %v1125 = vld [vmem:[%s3] sm:$0x3]
      %v1127 = vlaneseq
      %v1128 = vshrl.u32 %v1127, 7
      %v1129 = vsub.s32 0, %v1128
      %v1130 = vrot.slane %v1125, %v1129
      %v1131 = vlaneseq
      %v1132 = vshrl.u32 %v1131, 7
      %v1133 = vsub.s32 1, %v1132
      %v1134 = vrot.slane %v1125, %v1133
      %v1137 = vmul.f32 %v1123, %v1130
      %v1138 = vmul.f32 %v1124, %v1134
      %v1139 = vld [vmem:[%s4] sm:$0x3]
      %v1141 = vlaneseq
      %v1142 = vshrl.u32 %v1141, 7
      %v1143 = vsub.s32 0, %v1142
      %v1144 = vrot.slane %v1139, %v1143
      %v1145 = vlaneseq
      %v1146 = vshrl.u32 %v1145, 7
      %v1147 = vsub.s32 1, %v1146
      %v1148 = vrot.slane %v1139, %v1147
      %v1151 = vadd.f32 %v1137, %v1144
      %v1152 = vadd.f32 %v1138, %v1148
      %v1153 = vpack.c.bf16 %v1151, %v1151
      %v1154 = vpack.c.bf16 %v1152, %v1152
      %v1157 = vunpack.c.l.b16 %v1153
      %v1158 = vunpack.c.l.b16 %v1154
      %v1159 = vpack.c.b16 %v1158, %v1157
      %1161 = vst [vmem:[%s224] sm:$0xff] %v1159
      %p1162 = scmp.lt.s32.totalorder %s16, 1
      %s1163 = scalar_select %p1162, %s16, 1
      %s1164 = smul.addr %s1163, 2
      %s1165 = smul.addr %s1164, 4
      %s1166 = scalar_lea.vmem %s5, %s1165
      // Predicated region
      $region41: #{magic_point_forward.43} parent=39 // pred_check
        %p1167 = pneg %p144
      $region42: #{magic_point_forward.43} parent=39 // pred_check_branch
        %1169 = sbr.rel (%p1167) target = $region44
      $region43: #{magic_point_forward.43} parent=39 // pred_region
        _
      $region44: #{magic_point_forward.43} parent=39 // pred_fallthru
        _
    $region40: #{magic_point_forward.43} parent=5 // pred_fallthru
      _
    %p1170 = scmp.le.s32.totalorder 2, %s11
    // Predicated region
    $region45: #{magic_point_forward.43} parent=5 // pred_check
      %p1171 = pneg %p1170
    $region46: #{magic_point_forward.43} parent=5 // pred_check_branch
      %1173 = sbr.rel (%p1171) target = $region48
    $region47: #{magic_point_forward.43} parent=5 // pred_region
      %s1174 = ssub.s32 %s11, 2
      // Predicated region
      $region49: #{magic_point_forward.43} parent=47 // pred_check
        %p1175 = pneg %p150
      $region50: #{magic_point_forward.43} parent=47 // pred_check_branch
        %1177 = sbr.rel (%p1175) target = $region52
      $region51: #{magic_point_forward.43} parent=47 // pred_region
        %p1178 = scmp.lt.s32.totalorder %s17, 1
        %s1179 = scalar_select %p1178, %s17, 1
        %s1180 = smul.addr %s1179, 2
        %s1181 = smul.addr %s1180, 4
        %s1182 = scalar_lea.vmem %s5, %s1181
      $region52: #{magic_point_forward.43} parent=47 // pred_fallthru
        _
    $region48: #{magic_point_forward.43} parent=5 // pred_fallthru
      _
  $region6: #{magic_point_forward.43} parent=0 // loop_footer
    %s15 = sadd.s32 1, %s11
  $region7: #{magic_point_forward.43} parent=0 // loop_footer_branch
    %10 = sbr.rel target = $region3
  $region8: #{magic_point_forward.43} parent=0 // loop_exit
    _

// kernel: magic_point_forward.44
$region0: #{magic_point_forward.44}
  #allocation0 [shape = 'u32[]', space=smem, size = 0x4, offset = 0x4, fixed_abs, tag = 'smem constant byte address 0x4 - core index']
  #allocation1 [shape = 'u32[144,128]{1,0:T(1,128)}', space=vmem, size = 0x12000, scoped, tag = 'internal scratch']
  %s0 = inlined_call_operand.vmem [shape: bf16[16,256], index: 0, kind: input, shape index: {}]
  %s1 = inlined_call_operand.vmem [shape: bf16[256,128], index: 1, kind: input, shape index: {}]
  %s2 = inlined_call_operand.vmem [shape: f32[1,128], index: 2, kind: input, shape index: {}]
  %s3 = inlined_call_operand.vmem [shape: f32[16,128], index: 3, kind: output, shape index: {0}]
  %s4 = inlined_call_operand.vmem [shape: f32[16,128], index: 4, kind: output, shape index: {1}]
  %5 = xla_tuple %s3, %s4
  %s6 = sld [smem:[#allocation0]]
  $region30: #{magic_point_forward.44} parent=0
    _
  %s8 = ssub.s32 1, %s6
  %s9 = scalar_select 0, %s8, %s6
  // Predicated region
  $region2: #{magic_point_forward.44} parent=0 // pred_check
    _
  $region3: #{magic_point_forward.44} parent=0 // pred_check_branch
    %11 = sbr.rel (0) target = $region5
  $region4: #{magic_point_forward.44} parent=0 // pred_region
    _
  $region5: #{magic_point_forward.44} parent=0 // pred_fallthru
    _
  // Predicated region
  $region6: #{magic_point_forward.44} parent=0 // pred_check
    _
  $region7: #{magic_point_forward.44} parent=0 // pred_check_branch
    %13 = sbr.rel (0) target = $region9
  $region8: #{magic_point_forward.44} parent=0 // pred_region
    _
  $region9: #{magic_point_forward.44} parent=0 // pred_fallthru
    _
  // Predicated region
  $region10: #{magic_point_forward.44} parent=0 // pred_check
    _
  $region11: #{magic_point_forward.44} parent=0 // pred_check_branch
    %15 = sbr.rel (0) target = $region13
  $region12: #{magic_point_forward.44} parent=0 // pred_region
    _
  $region13: #{magic_point_forward.44} parent=0 // pred_fallthru
    _
  %v17 = vld [vmem:[%s0] sm:$0xff]
  %v18 = vld [vmem:[%s0 + $0x8] sm:$0xff]
  %v19 = vld [vmem:[%s1] sm:$0xf]
  %v20 = vld [vmem:[%s1 + $0x4] sm:$0xf]
  %v21 = vld [vmem:[%s1 + $0x8] sm:$0xf]
  %v22 = vld [vmem:[%s1 + $0xc] sm:$0xf]
  %v23 = vld [vmem:[%s1 + $0x10] sm:$0xf]
  %v24 = vld [vmem:[%s1 + $0x14] sm:$0xf]
  %v25 = vld [vmem:[%s1 + $0x18] sm:$0xf]
  %v26 = vld [vmem:[%s1 + $0x1c] sm:$0xf]
  %v27 = vld [vmem:[%s1 + $0x20] sm:$0xf]
  %v28 = vld [vmem:[%s1 + $0x24] sm:$0xf]
  %v29 = vld [vmem:[%s1 + $0x28] sm:$0xf]
  %v30 = vld [vmem:[%s1 + $0x2c] sm:$0xf]
  %v31 = vld [vmem:[%s1 + $0x30] sm:$0xf]
  %v32 = vld [vmem:[%s1 + $0x34] sm:$0xf]
  %v33 = vld [vmem:[%s1 + $0x38] sm:$0xf]
  %v34 = vld [vmem:[%s1 + $0x3c] sm:$0xf]
  %v35 = vld [vmem:[%s1 + $0x40] sm:$0xf]
  %v36 = vld [vmem:[%s1 + $0x44] sm:$0xf]
  %v37 = vld [vmem:[%s1 + $0x48] sm:$0xf]
  %v38 = vld [vmem:[%s1 + $0x4c] sm:$0xf]
  %v39 = vld [vmem:[%s1 + $0x50] sm:$0xf]
  %v40 = vld [vmem:[%s1 + $0x54] sm:$0xf]
  %v41 = vld [vmem:[%s1 + $0x58] sm:$0xf]
  %v42 = vld [vmem:[%s1 + $0x5c] sm:$0xf]
  %v43 = vld [vmem:[%s1 + $0x60] sm:$0xf]
  %v44 = vld [vmem:[%s1 + $0x64] sm:$0xf]
  %v45 = vld [vmem:[%s1 + $0x68] sm:$0xf]
  %v46 = vld [vmem:[%s1 + $0x6c] sm:$0xf]
  %v47 = vld [vmem:[%s1 + $0x70] sm:$0xf]
  %v48 = vld [vmem:[%s1 + $0x74] sm:$0xf]
  %v49 = vld [vmem:[%s1 + $0x78] sm:$0xf]
  %v50 = vld [vmem:[%s1 + $0x7c] sm:$0xf]
  %v51 = vld [vmem:[%s2] sm:$0x1]
  %v53 = vlaneseq
  %v54 = vshrl.u32 %v53, 7
  %v55 = vsub.s32 0, %v54
  %v56 = vrot.slane %v51, %v55
  %v60 = vunpack.c.l.b16 %v17
  %v61 = vunpack.c.h.b16 %v17
  %v62 = vunpack.c.l.b16 %v18
  %v63 = vunpack.c.h.b16 %v18
  %v64 = vpack.c.b16 %v62, %v60
  %v65 = vpack.c.b16 %v63, %v61
  %v100 = vunpack.c.l.b16 %v19
  %v101 = vunpack.c.l.b16 %v20
  %v102 = vunpack.c.l.b16 %v21
  %v103 = vunpack.c.l.b16 %v22
  %v104 = vunpack.c.l.b16 %v23
  %v105 = vunpack.c.l.b16 %v24
  %v106 = vunpack.c.l.b16 %v25
  %v107 = vunpack.c.l.b16 %v26
  %v108 = vunpack.c.l.b16 %v27
  %v109 = vunpack.c.l.b16 %v28
  %v110 = vunpack.c.l.b16 %v29
  %v111 = vunpack.c.l.b16 %v30
  %v112 = vunpack.c.l.b16 %v31
  %v113 = vunpack.c.l.b16 %v32
  %v114 = vunpack.c.l.b16 %v33
  %v115 = vunpack.c.l.b16 %v34
  %v116 = vunpack.c.l.b16 %v35
  %v117 = vunpack.c.l.b16 %v36
  %v118 = vunpack.c.l.b16 %v37
  %v119 = vunpack.c.l.b16 %v38
  %v120 = vunpack.c.l.b16 %v39
  %v121 = vunpack.c.l.b16 %v40
  %v122 = vunpack.c.l.b16 %v41
  %v123 = vunpack.c.l.b16 %v42
  %v124 = vunpack.c.l.b16 %v43
  %v125 = vunpack.c.l.b16 %v44
  %v126 = vunpack.c.l.b16 %v45
  %v127 = vunpack.c.l.b16 %v46
  %v128 = vunpack.c.l.b16 %v47
  %v129 = vunpack.c.l.b16 %v48
  %v130 = vunpack.c.l.b16 %v49
  %v131 = vunpack.c.l.b16 %v50
  %v132 = vpack.c.b16 %v101, %v100
  %v133 = vpack.c.b16 %v103, %v102
  %v134 = vpack.c.b16 %v105, %v104
  %v135 = vpack.c.b16 %v107, %v106
  %v136 = vpack.c.b16 %v109, %v108
  %v137 = vpack.c.b16 %v111, %v110
  %v138 = vpack.c.b16 %v113, %v112
  %v139 = vpack.c.b16 %v115, %v114
  %v140 = vpack.c.b16 %v117, %v116
  %v141 = vpack.c.b16 %v119, %v118
  %v142 = vpack.c.b16 %v121, %v120
  %v143 = vpack.c.b16 %v123, %v122
  %v144 = vpack.c.b16 %v125, %v124
  %v145 = vpack.c.b16 %v127, %v126
  %v146 = vpack.c.b16 %v129, %v128
  %v147 = vpack.c.b16 %v131, %v130
  %164 = vmatprep.subr.bf16.mxu0 0
  %165 = vmatpush1.bf16.msra.mxu0 %v139
  %166 = vmatprep.subr.bf16.mxu0 0
  %167 = vmatpush1.bf16.msra.mxu0 %v138
  %168 = vmatprep.subr.bf16.mxu0 0
  %169 = vmatpush1.bf16.msra.mxu0 %v137
  %170 = vmatprep.subr.bf16.mxu0 0
  %171 = vmatpush1.bf16.msra.mxu0 %v136
  %172 = vmatprep.subr.bf16.mxu0 0
  %173 = vmatpush1.bf16.msra.mxu0 %v135
  %174 = vmatprep.subr.bf16.mxu0 0
  %175 = vmatpush1.bf16.msra.mxu0 %v134
  %176 = vmatprep.subr.bf16.mxu0 0
  %177 = vmatpush1.bf16.msra.mxu0 %v133
  %178 = vmatprep.subr.bf16.mxu0 0
  %179 = vmatpush1.bf16.msra.mxu0 %v132
  %180 = vmatprep.subr.bf16.mxu0 0
  %181 = vmatpush2.bf16.msra.mxu0 %v147
  %182 = vmatprep.subr.bf16.mxu0 0
  %183 = vmatpush2.bf16.msra.mxu0 %v146
  %184 = vmatprep.subr.bf16.mxu0 0
  %185 = vmatpush2.bf16.msra.mxu0 %v145
  %186 = vmatprep.subr.bf16.mxu0 0
  %187 = vmatpush2.bf16.msra.mxu0 %v144
  %188 = vmatprep.subr.bf16.mxu0 0
  %189 = vmatpush2.bf16.msra.mxu0 %v143
  %190 = vmatprep.subr.bf16.mxu0 0
  %191 = vmatpush2.bf16.msra.mxu0 %v142
  %192 = vmatprep.subr.bf16.mxu0 0
  %193 = vmatpush2.bf16.msra.mxu0 %v141
  %194 = vmatprep.subr.bf16.mxu0 0
  %195 = vmatpush2.bf16.msra.mxu0 %v140
  %196 = vmatprep.mubr.bf16.mxu0 %v65
  %197 = vmatmul.mubr.bf16.gmra.mxu0 %v64
  %v198 = vpop.f32.mrf.mxu0
  %v199 = vadd.f32 %v56, %v198
  %v200 = vpop.f32.mrf.mxu0
  %v201 = vpop.f32.mrf.mxu0
  %v202 = vadd.f32 %v56, %v201
  %v203 = vpop.f32.mrf.mxu0
  %204 = vdwg.mxu0
  %205 = vst [vmem:[%s3] sm:$0xff] %v199
  %206 = vst [vmem:[%s3 + $0x8] sm:$0xff] %v202
  %207 = vmax.xlane.f32.xlu0 %v199
  %v208 = vpop.xlane.xlu0 %207
  %209 = vmax.xlane.f32.xlu0 %v202
  %v210 = vpop.xlane.xlu0 %209
  %v211 = vsub.f32 %v199, %v208
  %v212 = vsub.f32 %v202, %v210
  %v213 = vmul.f32 %v211, 1.442695
  %v214 = vpow.pop %v213
  %v215 = vmul.f32 %v212, 1.442695
  %v216 = vpow.pop %v215
  %217 = vadd.xlane.f32.xlu0 %v214
  %v218 = vpop.xlane.xlu0 %217
  %219 = vadd.xlane.f32.xlu0 %v216
  %v220 = vpop.xlane.xlu0 %219
  %v221 = vrcp.pop %v218
  %v222 = vrcp.pop %v220
  %v223 = vmul.f32 %v214, %v221
  %v224 = vmul.f32 %v216, %v222
  %225 = vst [vmem:[%s4] sm:$0xff] %v223
  %226 = vst [vmem:[%s4 + $0x8] sm:$0xff] %v224
  // Predicated region
  $region14: #{magic_point_forward.44} parent=0 // pred_check
    _
  $region15: #{magic_point_forward.44} parent=0 // pred_check_branch
    %228 = sbr.rel (0) target = $region17
  $region16: #{magic_point_forward.44} parent=0 // pred_region
    _
  $region17: #{magic_point_forward.44} parent=0 // pred_fallthru
    _
  // Predicated region
  $region18: #{magic_point_forward.44} parent=0 // pred_check
    _
  $region19: #{magic_point_forward.44} parent=0 // pred_check_branch
    %230 = sbr.rel (0) target = $region21
  $region20: #{magic_point_forward.44} parent=0 // pred_region
    _
  $region21: #{magic_point_forward.44} parent=0 // pred_fallthru
    _
  // Predicated region
  $region22: #{magic_point_forward.44} parent=0 // pred_check
    _
  $region23: #{magic_point_forward.44} parent=0 // pred_check_branch
    %232 = sbr.rel (0) target = $region25
  $region24: #{magic_point_forward.44} parent=0 // pred_region
    _
  $region25: #{magic_point_forward.44} parent=0 // pred_fallthru
    _
  // Predicated region
  $region26: #{magic_point_forward.44} parent=0 // pred_check
    _
  $region27: #{magic_point_forward.44} parent=0 // pred_check_branch
    %234 = sbr.rel (0) target = $region29
  $region28: #{magic_point_forward.44} parent=0 // pred_region
    _
  $region29: #{magic_point_forward.44} parent=0 // pred_fallthru
    _

// kernel: magic_point_forward.45
$region0: #{magic_point_forward.45}
  #allocation0 [shape = 'u32[]', space=smem, size = 0x4, offset = 0x4, fixed_abs, tag = 'smem constant byte address 0x4 - core index']
  #allocation1 [shape = 'u32[144,128]{1,0:T(1,128)}', space=vmem, size = 0x12000, scoped, tag = 'internal scratch']
  %s0 = inlined_call_operand.vmem [shape: f32[2,40,128], index: 0, kind: input, shape index: {}]
  %s1 = inlined_call_operand.vmem [shape: f32[2,40,128], index: 1, kind: output, shape index: {}]
  %s2 = sld [smem:[#allocation0]]
  $region37: #{magic_point_forward.45} parent=0
    _
  %s4 = ssub.s32 1, %s2
  %s5 = scalar_select 0, %s4, %s2
  loop: start=0, step=1, limit=4
  $region2: #{magic_point_forward.45} parent=0 // loop_pre_header
    _
  $region3: #{magic_point_forward.45} parent=0 // loop_header
    %s7 = sphi 0, %s11
    %p8 = scmp.ge.s32.totalorder %s7, 4
    %s17 = sphi 0, %s19
    %s20 = sphi 0, %s17
    %s21 = sphi 0, %s20
    %s37 = sphi 0, %s21
    %s43 = sphi 0, %s45
    %s46 = sphi 0, %s43
    %s47 = sphi 0, %s46
    %s63 = sphi 0, %s47
  $region4: #{magic_point_forward.45} parent=0 // loop_header_branch
    %10 = sbr.rel (%p8) target = $region8
  $region5: #{magic_point_forward.45} parent=0 // loop_body
    %s12 = ssub.s32 %s7, 1
    %s13 = ssub.s32 %s7, 2
    %s14 = sadd.s32 %s7, 1
    %s15 = ssub.s32 %s7, %s14
    %p16 = scmp.eq.s32.totalorder %s15, 0
    %s18 = sadd.s32 %s17, 1
    %s19 = scalar_select %p16, %s17, %s18
    %p22 = pneg %p16
    %p23 = scmp.eq.s32.totalorder %s7, 1
    %p24 = por %p22, %p23
    %p25 = scmp.ne.s32.totalorder %s17, %s20
    %p26 = scmp.eq.s32.totalorder %s7, 0
    %p27 = por %p25, %p26
    %p28 = scmp.ne.s32.totalorder %s17, %s20
    %p29 = scmp.eq.s32.totalorder %s12, 1
    %p30 = por %p28, %p29
    %p31 = scmp.ne.s32.totalorder %s20, %s21
    %p32 = scmp.eq.s32.totalorder %s12, 0
    %p33 = por %p31, %p32
    %p34 = scmp.ne.s32.totalorder %s20, %s21
    %p35 = scmp.eq.s32.totalorder %s13, 1
    %p36 = por %p34, %p35
    %p38 = scmp.ne.s32.totalorder %s21, %s37
    %p39 = scmp.eq.s32.totalorder %s13, 0
    %p40 = por %p38, %p39
    %s41 = ssub.s32 %s7, %s14
    %p42 = scmp.eq.s32.totalorder %s41, 0
    %s44 = sadd.s32 %s43, 1
    %s45 = scalar_select %p42, %s43, %s44
    %p48 = pneg %p42
    %p49 = scmp.eq.s32.totalorder %s7, 1
    %p50 = por %p48, %p49
    %p51 = scmp.ne.s32.totalorder %s43, %s46
    %p52 = scmp.eq.s32.totalorder %s7, 0
    %p53 = por %p51, %p52
    %p54 = scmp.ne.s32.totalorder %s43, %s46
    %p55 = scmp.eq.s32.totalorder %s12, 1
    %p56 = por %p54, %p55
    %p57 = scmp.ne.s32.totalorder %s46, %s47
    %p58 = scmp.eq.s32.totalorder %s12, 0
    %p59 = por %p57, %p58
    %p60 = scmp.ne.s32.totalorder %s46, %s47
    %p61 = scmp.eq.s32.totalorder %s13, 1
    %p62 = por %p60, %p61
    %p64 = scmp.ne.s32.totalorder %s47, %s63
    %p65 = scmp.eq.s32.totalorder %s13, 0
    %p66 = por %p64, %p65
    %p67 = scmp.le.s32.totalorder 1, %s7
    %p68 = scmp.lt.s32.totalorder %s7, 3
    %p69 = pnand %p67, %p68
    %p70 = pneg %p69
    // Predicated region
    $region9: #{magic_point_forward.45} parent=5 // pred_check
      _
    $region10: #{magic_point_forward.45} parent=5 // pred_check_branch
      %72 = sbr.rel (%p69) target = $region12
    $region11: #{magic_point_forward.45} parent=5 // pred_region
      %s73 = ssub.s32 %s7, 1
    $region12: #{magic_point_forward.45} parent=5 // pred_fallthru
      _
    %p74 = scmp.lt.s32.totalorder %s7, 2
    // Predicated region
    $region13: #{magic_point_forward.45} parent=5 // pred_check
      %p75 = pneg %p74
    $region14: #{magic_point_forward.45} parent=5 // pred_check_branch
      %77 = sbr.rel (%p75) target = $region16
    $region15: #{magic_point_forward.45} parent=5 // pred_region
      // Predicated region
      $region17: #{magic_point_forward.45} parent=15 // pred_check
        %p78 = pneg %p27
      $region18: #{magic_point_forward.45} parent=15 // pred_check_branch
        %80 = sbr.rel (%p78) target = $region20
      $region19: #{magic_point_forward.45} parent=15 // pred_region
        %p81 = scmp.lt.s32.totalorder %s7, 1
        %s82 = scalar_select %p81, %s7, 1
        %s83 = smul.addr %s82, 5
        %s84 = smul.addr %s83, 8
        %s85 = scalar_lea.vmem %s0, %s84
      $region20: #{magic_point_forward.45} parent=15 // pred_fallthru
        _
    $region16: #{magic_point_forward.45} parent=5 // pred_fallthru
      _
    %p86 = scmp.le.s32.totalorder 1, %s7
    %p87 = scmp.lt.s32.totalorder %s7, 3
    %p88 = pnand %p86, %p87
    %p89 = pneg %p88
    // Predicated region
    $region21: #{magic_point_forward.45} parent=5 // pred_check
      _
    $region22: #{magic_point_forward.45} parent=5 // pred_check_branch
      %91 = sbr.rel (%p88) target = $region24
    $region23: #{magic_point_forward.45} parent=5 // pred_region
      %s92 = ssub.s32 %s7, 1
      %p93 = scmp.lt.s32.totalorder %s12, 1
      %s94 = scalar_select %p93, %s12, 1
      %s95 = smul.addr %s94, 5
      %s96 = smul.addr %s95, 8
      %s97 = scalar_lea.vmem %s0, %s96
      %p98 = pneg %p33
      %p99 = pneg %p30
      %p100 = pneg %p59
      %p101 = pneg %p56
      %p102 = scmp.lt.s32.totalorder %s12, 1
      %s103 = scalar_select %p102, %s12, 1
      %s104 = smul.addr %s103, 5
      %s105 = smul.addr %s104, 8
      %s106 = scalar_lea.vmem %s1, %s105
      %p107 = scmp.lt.s32.totalorder %s12, 1
      %s108 = scalar_select %p107, %s12, 1
      %s109 = smul.addr %s108, 5
      %s110 = smul.addr %s109, 8
      %s111 = scalar_lea.vmem %s0, %s110
      %p112 = scmp.lt.s32.totalorder %s12, 1
      %s113 = scalar_select %p112, %s12, 1
      %s114 = smul.addr %s113, 5
      %s115 = smul.addr %s114, 8
      %s116 = scalar_lea.vmem %s1, %s115
      %v117 = vld [vmem:[%s111] sm:$0xff]
      %v118 = vld [vmem:[%s111 + $0x8] sm:$0xff]
      %v119 = vld [vmem:[%s111 + $0x10] sm:$0xff]
      %v120 = vld [vmem:[%s111 + $0x18] sm:$0xff]
      %v121 = vld [vmem:[%s111 + $0x20] sm:$0xff]
      %v122 = vrot.slane %v117, 7
      %v123 = vrot.slane %v118, 7
      %v124 = vrot.slane %v119, 7
      %v125 = vrot.slane %v120, 7
      %v126 = vrot.slane %v121, 7
      %v127 = vlaneseq
      %v128 = vshrl.u32 %v127, 7
      %vm129 = vcmp.lt.s32.totalorder %v128, 1
      %v130 = vsel %vm129, %v125, %v126
      %v131 = vsel %vm129, %v124, %v125
      %v132 = vsel %vm129, %v123, %v124
      %v133 = vsel %vm129, %v122, %v123
      %v134 = vsel %vm129, %v126, %v122
      %v135 = vmax.f32 %v117, %v134
      %v136 = vmax.f32 %v118, %v133
      %v137 = vmax.f32 %v119, %v132
      %v138 = vmax.f32 %v120, %v131
      %v139 = vmax.f32 %v121, %v130
      %v140 = vrot.slane %v117, 1
      %v141 = vrot.slane %v118, 1
      %v142 = vrot.slane %v119, 1
      %v143 = vrot.slane %v120, 1
      %v144 = vrot.slane %v121, 1
      %vm145 = vcmp.lt.s32.totalorder %v128, 7
      %v146 = vsel %vm145, %v143, %v144
      %v147 = vsel %vm145, %v142, %v143
      %v148 = vsel %vm145, %v141, %v142
      %v149 = vsel %vm145, %v140, %v141
      %v150 = vsel %vm145, %v144, %v140
      %v151 = vmax.f32 %v135, %v149
      %v152 = vmax.f32 %v136, %v148
      %v153 = vmax.f32 %v137, %v147
      %v154 = vmax.f32 %v138, %v146
      %v155 = vmax.f32 %v139, %v150
      %v156 = vrot.slane %v117, 6
      %v157 = vrot.slane %v118, 6
      %v158 = vrot.slane %v119, 6
      %v159 = vrot.slane %v120, 6
      %v160 = vrot.slane %v121, 6
      %vm161 = vcmp.lt.s32.totalorder %v128, 2
      %v162 = vsel %vm161, %v159, %v160
      %v163 = vsel %vm161, %v158, %v159
      %v164 = vsel %vm161, %v157, %v158
      %v165 = vsel %vm161, %v156, %v157
      %v166 = vsel %vm161, %v160, %v156
      %v167 = vmax.f32 %v151, %v166
      %v168 = vmax.f32 %v152, %v165
      %v169 = vmax.f32 %v153, %v164
      %v170 = vmax.f32 %v154, %v163
      %v171 = vmax.f32 %v155, %v162
      %v172 = vrot.slane %v117, 2
      %v173 = vrot.slane %v118, 2
      %v174 = vrot.slane %v119, 2
      %v175 = vrot.slane %v120, 2
      %v176 = vrot.slane %v121, 2
      %vm177 = vcmp.lt.s32.totalorder %v128, 6
      %v178 = vsel %vm177, %v175, %v176
      %v179 = vsel %vm177, %v174, %v175
      %v180 = vsel %vm177, %v173, %v174
      %v181 = vsel %vm177, %v172, %v173
      %v182 = vsel %vm177, %v176, %v172
      %v183 = vmax.f32 %v167, %v181
      %v184 = vmax.f32 %v168, %v180
      %v185 = vmax.f32 %v169, %v179
      %v186 = vmax.f32 %v170, %v178
      %v187 = vmax.f32 %v171, %v182
      %188 = vrot.lane.b32.xlu0 %v183, 1
      %v189 = vpop.permute.xlu0 %188
      %190 = vrot.lane.b32.xlu0 %v184, 1
      %v191 = vpop.permute.xlu0 %190
      %192 = vrot.lane.b32.xlu0 %v185, 1
      %v193 = vpop.permute.xlu0 %192
      %194 = vrot.lane.b32.xlu0 %v186, 1
      %v195 = vpop.permute.xlu0 %194
      %196 = vrot.lane.b32.xlu0 %v187, 1
      %v197 = vpop.permute.xlu0 %196
      %v198 = vmax.f32 %v183, %v189
      %v199 = vmax.f32 %v184, %v191
      %v200 = vmax.f32 %v185, %v193
      %v201 = vmax.f32 %v186, %v195
      %v202 = vmax.f32 %v187, %v197
      %203 = vrot.lane.b32.xlu0 %v183, 127
      %v204 = vpop.permute.xlu0 %203
      %205 = vrot.lane.b32.xlu0 %v184, 127
      %v206 = vpop.permute.xlu0 %205
      %207 = vrot.lane.b32.xlu0 %v185, 127
      %v208 = vpop.permute.xlu0 %207
      %209 = vrot.lane.b32.xlu0 %v186, 127
      %v210 = vpop.permute.xlu0 %209
      %211 = vrot.lane.b32.xlu0 %v187, 127
      %v212 = vpop.permute.xlu0 %211
      %v213 = vmax.f32 %v198, %v204
      %v214 = vmax.f32 %v199, %v206
      %v215 = vmax.f32 %v200, %v208
      %v216 = vmax.f32 %v201, %v210
      %v217 = vmax.f32 %v202, %v212
      %218 = vrot.lane.b32.xlu0 %v183, 2
      %v219 = vpop.permute.xlu0 %218
      %220 = vrot.lane.b32.xlu0 %v184, 2
      %v221 = vpop.permute.xlu0 %220
      %222 = vrot.lane.b32.xlu0 %v185, 2
      %v223 = vpop.permute.xlu0 %222
      %224 = vrot.lane.b32.xlu0 %v186, 2
      %v225 = vpop.permute.xlu0 %224
      %226 = vrot.lane.b32.xlu0 %v187, 2
      %v227 = vpop.permute.xlu0 %226
      %v228 = vmax.f32 %v213, %v219
      %v229 = vmax.f32 %v214, %v221
      %v230 = vmax.f32 %v215, %v223
      %v231 = vmax.f32 %v216, %v225
      %v232 = vmax.f32 %v217, %v227
      %233 = vrot.lane.b32.xlu0 %v183, 126
      %v234 = vpop.permute.xlu0 %233
      %235 = vrot.lane.b32.xlu0 %v184, 126
      %v236 = vpop.permute.xlu0 %235
      %237 = vrot.lane.b32.xlu0 %v185, 126
      %v238 = vpop.permute.xlu0 %237
      %239 = vrot.lane.b32.xlu0 %v186, 126
      %v240 = vpop.permute.xlu0 %239
      %241 = vrot.lane.b32.xlu0 %v187, 126
      %v242 = vpop.permute.xlu0 %241
      %v243 = vmax.f32 %v228, %v234
      %v244 = vmax.f32 %v229, %v236
      %v245 = vmax.f32 %v230, %v238
      %v246 = vmax.f32 %v231, %v240
      %v247 = vmax.f32 %v232, %v242
      %vm248 = vcmp.eq.f32.partialorder %v117, %v243
      %vm249 = vcmp.eq.f32.partialorder %v118, %v244
      %vm250 = vcmp.eq.f32.partialorder %v119, %v245
      %vm251 = vcmp.eq.f32.partialorder %v120, %v246
      %vm252 = vcmp.eq.f32.partialorder %v121, %v247
      %v253 = vsel %vm248, 1.0, 0.0
      %v254 = vsel %vm249, 1.0, 0.0
      %v255 = vsel %vm250, 1.0, 0.0
      %v256 = vsel %vm251, 1.0, 0.0
      %v257 = vsel %vm252, 1.0, 0.0
      %v258 = vrot.slane %v253, 7
      %v259 = vrot.slane %v254, 7
      %v260 = vrot.slane %v255, 7
      %v261 = vrot.slane %v256, 7
      %v262 = vrot.slane %v257, 7
      %v263 = vsel %vm129, %v261, %v262
      %v264 = vsel %vm129, %v260, %v261
      %v265 = vsel %vm129, %v259, %v260
      %v266 = vsel %vm129, %v258, %v259
      %v267 = vsel %vm129, %v262, %v258
      %v268 = vmax.f32 %v253, %v267
      %v269 = vmax.f32 %v254, %v266
      %v270 = vmax.f32 %v255, %v265
      %v271 = vmax.f32 %v256, %v264
      %v272 = vmax.f32 %v257, %v263
      %v273 = vrot.slane %v253, 1
      %v274 = vrot.slane %v254, 1
      %v275 = vrot.slane %v255, 1
      %v276 = vrot.slane %v256, 1
      %v277 = vrot.slane %v257, 1
      %v278 = vsel %vm145, %v276, %v277
      %v279 = vsel %vm145, %v275, %v276
      %v280 = vsel %vm145, %v274, %v275
      %v281 = vsel %vm145, %v273, %v274
      %v282 = vsel %vm145, %v277, %v273
      %v283 = vmax.f32 %v268, %v281
      %v284 = vmax.f32 %v269, %v280
      %v285 = vmax.f32 %v270, %v279
      %v286 = vmax.f32 %v271, %v278
      %v287 = vmax.f32 %v272, %v282
      %v288 = vrot.slane %v253, 6
      %v289 = vrot.slane %v254, 6
      %v290 = vrot.slane %v255, 6
      %v291 = vrot.slane %v256, 6
      %v292 = vrot.slane %v257, 6
      %v293 = vsel %vm161, %v291, %v292
      %v294 = vsel %vm161, %v290, %v291
      %v295 = vsel %vm161, %v289, %v290
      %v296 = vsel %vm161, %v288, %v289
      %v297 = vsel %vm161, %v292, %v288
      %v298 = vmax.f32 %v283, %v297
      %v299 = vmax.f32 %v284, %v296
      %v300 = vmax.f32 %v285, %v295
      %v301 = vmax.f32 %v286, %v294
      %v302 = vmax.f32 %v287, %v293
      %v303 = vrot.slane %v253, 2
      %v304 = vrot.slane %v254, 2
      %v305 = vrot.slane %v255, 2
      %v306 = vrot.slane %v256, 2
      %v307 = vrot.slane %v257, 2
      %v308 = vsel %vm177, %v306, %v307
      %v309 = vsel %vm177, %v305, %v306
      %v310 = vsel %vm177, %v304, %v305
      %v311 = vsel %vm177, %v303, %v304
      %v312 = vsel %vm177, %v307, %v303
      %v313 = vmax.f32 %v298, %v311
      %v314 = vmax.f32 %v299, %v310
      %v315 = vmax.f32 %v300, %v309
      %v316 = vmax.f32 %v301, %v308
      %v317 = vmax.f32 %v302, %v312
      %318 = vrot.lane.b32.xlu0 %v313, 1
      %v319 = vpop.permute.xlu0 %318
      %320 = vrot.lane.b32.xlu0 %v314, 1
      %v321 = vpop.permute.xlu0 %320
      %322 = vrot.lane.b32.xlu0 %v315, 1
      %v323 = vpop.permute.xlu0 %322
      %324 = vrot.lane.b32.xlu0 %v316, 1
      %v325 = vpop.permute.xlu0 %324
      %326 = vrot.lane.b32.xlu0 %v317, 1
      %v327 = vpop.permute.xlu0 %326
      %v328 = vmax.f32 %v313, %v319
      %v329 = vmax.f32 %v314, %v321
      %v330 = vmax.f32 %v315, %v323
      %v331 = vmax.f32 %v316, %v325
      %v332 = vmax.f32 %v317, %v327
      %333 = vrot.lane.b32.xlu0 %v313, 127
      %v334 = vpop.permute.xlu0 %333
      %335 = vrot.lane.b32.xlu0 %v314, 127
      %v336 = vpop.permute.xlu0 %335
      %337 = vrot.lane.b32.xlu0 %v315, 127
      %v338 = vpop.permute.xlu0 %337
      %339 = vrot.lane.b32.xlu0 %v316, 127
      %v340 = vpop.permute.xlu0 %339
      %341 = vrot.lane.b32.xlu0 %v317, 127
      %v342 = vpop.permute.xlu0 %341
      %v343 = vmax.f32 %v328, %v334
      %v344 = vmax.f32 %v329, %v336
      %v345 = vmax.f32 %v330, %v338
      %v346 = vmax.f32 %v331, %v340
      %v347 = vmax.f32 %v332, %v342
      %348 = vrot.lane.b32.xlu0 %v313, 2
      %v349 = vpop.permute.xlu0 %348
      %350 = vrot.lane.b32.xlu0 %v314, 2
      %v351 = vpop.permute.xlu0 %350
      %352 = vrot.lane.b32.xlu0 %v315, 2
      %v353 = vpop.permute.xlu0 %352
      %354 = vrot.lane.b32.xlu0 %v316, 2
      %v355 = vpop.permute.xlu0 %354
      %356 = vrot.lane.b32.xlu0 %v317, 2
      %v357 = vpop.permute.xlu0 %356
      %v358 = vmax.f32 %v343, %v349
      %v359 = vmax.f32 %v344, %v351
      %v360 = vmax.f32 %v345, %v353
      %v361 = vmax.f32 %v346, %v355
      %v362 = vmax.f32 %v347, %v357
      %363 = vrot.lane.b32.xlu0 %v313, 126
      %v364 = vpop.permute.xlu0 %363
      %365 = vrot.lane.b32.xlu0 %v314, 126
      %v366 = vpop.permute.xlu0 %365
      %367 = vrot.lane.b32.xlu0 %v315, 126
      %v368 = vpop.permute.xlu0 %367
      %369 = vrot.lane.b32.xlu0 %v316, 126
      %v370 = vpop.permute.xlu0 %369
      %371 = vrot.lane.b32.xlu0 %v317, 126
      %v372 = vpop.permute.xlu0 %371
      %v373 = vmax.f32 %v358, %v364
      %v374 = vmax.f32 %v359, %v366
      %v375 = vmax.f32 %v360, %v368
      %v376 = vmax.f32 %v361, %v370
      %v377 = vmax.f32 %v362, %v372
      %vm378 = vcmp.gt.f32.partialorder %v373, 0.0
      %vm379 = vcmp.gt.f32.partialorder %v374, 0.0
      %vm380 = vcmp.gt.f32.partialorder %v375, 0.0
      %vm381 = vcmp.gt.f32.partialorder %v376, 0.0
      %vm382 = vcmp.gt.f32.partialorder %v377, 0.0
      %v383 = vsel %vm378, 0.0, %v117
      %v384 = vsel %vm379, 0.0, %v118
      %v385 = vsel %vm380, 0.0, %v119
      %v386 = vsel %vm381, 0.0, %v120
      %v387 = vsel %vm382, 0.0, %v121
      %v388 = vrot.slane %v383, 7
      %v389 = vrot.slane %v384, 7
      %v390 = vrot.slane %v385, 7
      %v391 = vrot.slane %v386, 7
      %v392 = vrot.slane %v387, 7
      %v393 = vsel %vm129, %v391, %v392
      %v394 = vsel %vm129, %v390, %v391
      %v395 = vsel %vm129, %v389, %v390
      %v396 = vsel %vm129, %v388, %v389
      %v397 = vsel %vm129, %v392, %v388
      %v398 = vmax.f32 %v383, %v397
      %v399 = vmax.f32 %v384, %v396
      %v400 = vmax.f32 %v385, %v395
      %v401 = vmax.f32 %v386, %v394
      %v402 = vmax.f32 %v387, %v393
      %v403 = vrot.slane %v383, 1
      %v404 = vrot.slane %v384, 1
      %v405 = vrot.slane %v385, 1
      %v406 = vrot.slane %v386, 1
      %v407 = vrot.slane %v387, 1
      %v408 = vsel %vm145, %v406, %v407
      %v409 = vsel %vm145, %v405, %v406
      %v410 = vsel %vm145, %v404, %v405
      %v411 = vsel %vm145, %v403, %v404
      %v412 = vsel %vm145, %v407, %v403
      %v413 = vmax.f32 %v398, %v411
      %v414 = vmax.f32 %v399, %v410
      %v415 = vmax.f32 %v400, %v409
      %v416 = vmax.f32 %v401, %v408
      %v417 = vmax.f32 %v402, %v412
      %v418 = vrot.slane %v383, 6
      %v419 = vrot.slane %v384, 6
      %v420 = vrot.slane %v385, 6
      %v421 = vrot.slane %v386, 6
      %v422 = vrot.slane %v387, 6
      %v423 = vsel %vm161, %v421, %v422
      %v424 = vsel %vm161, %v420, %v421
      %v425 = vsel %vm161, %v419, %v420
      %v426 = vsel %vm161, %v418, %v419
      %v427 = vsel %vm161, %v422, %v418
      %v428 = vmax.f32 %v413, %v427
      %v429 = vmax.f32 %v414, %v426
      %v430 = vmax.f32 %v415, %v425
      %v431 = vmax.f32 %v416, %v424
      %v432 = vmax.f32 %v417, %v423
      %v433 = vrot.slane %v383, 2
      %v434 = vrot.slane %v384, 2
      %v435 = vrot.slane %v385, 2
      %v436 = vrot.slane %v386, 2
      %v437 = vrot.slane %v387, 2
      %v438 = vsel %vm177, %v436, %v437
      %v439 = vsel %vm177, %v435, %v436
      %v440 = vsel %vm177, %v434, %v435
      %v441 = vsel %vm177, %v433, %v434
      %v442 = vsel %vm177, %v437, %v433
      %v443 = vmax.f32 %v428, %v441
      %v444 = vmax.f32 %v429, %v440
      %v445 = vmax.f32 %v430, %v439
      %v446 = vmax.f32 %v431, %v438
      %v447 = vmax.f32 %v432, %v442
      %448 = vrot.lane.b32.xlu0 %v443, 1
      %v449 = vpop.permute.xlu0 %448
      %450 = vrot.lane.b32.xlu0 %v444, 1
      %v451 = vpop.permute.xlu0 %450
      %452 = vrot.lane.b32.xlu0 %v445, 1
      %v453 = vpop.permute.xlu0 %452
      %454 = vrot.lane.b32.xlu0 %v446, 1
      %v455 = vpop.permute.xlu0 %454
      %456 = vrot.lane.b32.xlu0 %v447, 1
      %v457 = vpop.permute.xlu0 %456
      %v458 = vmax.f32 %v443, %v449
      %v459 = vmax.f32 %v444, %v451
      %v460 = vmax.f32 %v445, %v453
      %v461 = vmax.f32 %v446, %v455
      %v462 = vmax.f32 %v447, %v457
      %463 = vrot.lane.b32.xlu0 %v443, 127
      %v464 = vpop.permute.xlu0 %463
      %465 = vrot.lane.b32.xlu0 %v444, 127
      %v466 = vpop.permute.xlu0 %465
      %467 = vrot.lane.b32.xlu0 %v445, 127
      %v468 = vpop.permute.xlu0 %467
      %469 = vrot.lane.b32.xlu0 %v446, 127
      %v470 = vpop.permute.xlu0 %469
      %471 = vrot.lane.b32.xlu0 %v447, 127
      %v472 = vpop.permute.xlu0 %471
      %v473 = vmax.f32 %v458, %v464
      %v474 = vmax.f32 %v459, %v466
      %v475 = vmax.f32 %v460, %v468
      %v476 = vmax.f32 %v461, %v470
      %v477 = vmax.f32 %v462, %v472
      %478 = vrot.lane.b32.xlu0 %v443, 2
      %v479 = vpop.permute.xlu0 %478
      %480 = vrot.lane.b32.xlu0 %v444, 2
      %v481 = vpop.permute.xlu0 %480
      %482 = vrot.lane.b32.xlu0 %v445, 2
      %v483 = vpop.permute.xlu0 %482
      %484 = vrot.lane.b32.xlu0 %v446, 2
      %v485 = vpop.permute.xlu0 %484
      %486 = vrot.lane.b32.xlu0 %v447, 2
      %v487 = vpop.permute.xlu0 %486
      %v488 = vmax.f32 %v473, %v479
      %v489 = vmax.f32 %v474, %v481
      %v490 = vmax.f32 %v475, %v483
      %v491 = vmax.f32 %v476, %v485
      %v492 = vmax.f32 %v477, %v487
      %493 = vrot.lane.b32.xlu0 %v443, 126
      %v494 = vpop.permute.xlu0 %493
      %495 = vrot.lane.b32.xlu0 %v444, 126
      %v496 = vpop.permute.xlu0 %495
      %497 = vrot.lane.b32.xlu0 %v445, 126
      %v498 = vpop.permute.xlu0 %497
      %499 = vrot.lane.b32.xlu0 %v446, 126
      %v500 = vpop.permute.xlu0 %499
      %501 = vrot.lane.b32.xlu0 %v447, 126
      %v502 = vpop.permute.xlu0 %501
      %v503 = vmax.f32 %v488, %v494
      %v504 = vmax.f32 %v489, %v496
      %v505 = vmax.f32 %v490, %v498
      %v506 = vmax.f32 %v491, %v500
      %v507 = vmax.f32 %v492, %v502
      %vm508 = vcmp.eq.f32.partialorder %v383, %v503
      %vm509 = vcmp.eq.f32.partialorder %v384, %v504
      %vm510 = vcmp.eq.f32.partialorder %v385, %v505
      %vm511 = vcmp.eq.f32.partialorder %v386, %v506
      %vm512 = vcmp.eq.f32.partialorder %v387, %v507
      %vm513 = vmxor %vm378, 1
      %vm514 = vmxor %vm379, 1
      %vm515 = vmxor %vm380, 1
      %vm516 = vmxor %vm381, 1
      %vm517 = vmxor %vm382, 1
      %vm518 = vmand %vm508, %vm513
      %vm519 = vmand %vm509, %vm514
      %vm520 = vmand %vm510, %vm515
      %vm521 = vmand %vm511, %vm516
      %vm522 = vmand %vm512, %vm517
      %vm523 = vmor %vm248, %vm518
      %vm524 = vmor %vm249, %vm519
      %vm525 = vmor %vm250, %vm520
      %vm526 = vmor %vm251, %vm521
      %vm527 = vmor %vm252, %vm522
      %v528 = vsel %vm523, 1.0, 0.0
      %v529 = vsel %vm524, 1.0, 0.0
      %v530 = vsel %vm525, 1.0, 0.0
      %v531 = vsel %vm526, 1.0, 0.0
      %v532 = vsel %vm527, 1.0, 0.0
      %v533 = vrot.slane %v528, 7
      %v534 = vrot.slane %v529, 7
      %v535 = vrot.slane %v530, 7
      %v536 = vrot.slane %v531, 7
      %v537 = vrot.slane %v532, 7
      %v538 = vsel %vm129, %v536, %v537
      %v539 = vsel %vm129, %v535, %v536
      %v540 = vsel %vm129, %v534, %v535
      %v541 = vsel %vm129, %v533, %v534
      %v542 = vsel %vm129, %v537, %v533
      %v543 = vmax.f32 %v528, %v542
      %v544 = vmax.f32 %v529, %v541
      %v545 = vmax.f32 %v530, %v540
      %v546 = vmax.f32 %v531, %v539
      %v547 = vmax.f32 %v532, %v538
      %v548 = vrot.slane %v528, 1
      %v549 = vrot.slane %v529, 1
      %v550 = vrot.slane %v530, 1
      %v551 = vrot.slane %v531, 1
      %v552 = vrot.slane %v532, 1
      %v553 = vsel %vm145, %v551, %v552
      %v554 = vsel %vm145, %v550, %v551
      %v555 = vsel %vm145, %v549, %v550
      %v556 = vsel %vm145, %v548, %v549
      %v557 = vsel %vm145, %v552, %v548
      %v558 = vmax.f32 %v543, %v556
      %v559 = vmax.f32 %v544, %v555
      %v560 = vmax.f32 %v545, %v554
      %v561 = vmax.f32 %v546, %v553
      %v562 = vmax.f32 %v547, %v557
      %v563 = vrot.slane %v528, 6
      %v564 = vrot.slane %v529, 6
      %v565 = vrot.slane %v530, 6
      %v566 = vrot.slane %v531, 6
      %v567 = vrot.slane %v532, 6
      %v568 = vsel %vm161, %v566, %v567
      %v569 = vsel %vm161, %v565, %v566
      %v570 = vsel %vm161, %v564, %v565
      %v571 = vsel %vm161, %v563, %v564
      %v572 = vsel %vm161, %v567, %v563
      %v573 = vmax.f32 %v558, %v572
      %v574 = vmax.f32 %v559, %v571
      %v575 = vmax.f32 %v560, %v570
      %v576 = vmax.f32 %v561, %v569
      %v577 = vmax.f32 %v562, %v568
      %v578 = vrot.slane %v528, 2
      %v579 = vrot.slane %v529, 2
      %v580 = vrot.slane %v530, 2
      %v581 = vrot.slane %v531, 2
      %v582 = vrot.slane %v532, 2
      %v583 = vsel %vm177, %v581, %v582
      %v584 = vsel %vm177, %v580, %v581
      %v585 = vsel %vm177, %v579, %v580
      %v586 = vsel %vm177, %v578, %v579
      %v587 = vsel %vm177, %v582, %v578
      %v588 = vmax.f32 %v573, %v586
      %v589 = vmax.f32 %v574, %v585
      %v590 = vmax.f32 %v575, %v584
      %v591 = vmax.f32 %v576, %v583
      %v592 = vmax.f32 %v577, %v587
      %593 = vrot.lane.b32.xlu0 %v588, 1
      %v594 = vpop.permute.xlu0 %593
      %595 = vrot.lane.b32.xlu0 %v589, 1
      %v596 = vpop.permute.xlu0 %595
      %597 = vrot.lane.b32.xlu0 %v590, 1
      %v598 = vpop.permute.xlu0 %597
      %599 = vrot.lane.b32.xlu0 %v591, 1
      %v600 = vpop.permute.xlu0 %599
      %601 = vrot.lane.b32.xlu0 %v592, 1
      %v602 = vpop.permute.xlu0 %601
      %v603 = vmax.f32 %v588, %v594
      %v604 = vmax.f32 %v589, %v596
      %v605 = vmax.f32 %v590, %v598
      %v606 = vmax.f32 %v591, %v600
      %v607 = vmax.f32 %v592, %v602
      %608 = vrot.lane.b32.xlu0 %v588, 127
      %v609 = vpop.permute.xlu0 %608
      %610 = vrot.lane.b32.xlu0 %v589, 127
      %v611 = vpop.permute.xlu0 %610
      %612 = vrot.lane.b32.xlu0 %v590, 127
      %v613 = vpop.permute.xlu0 %612
      %614 = vrot.lane.b32.xlu0 %v591, 127
      %v615 = vpop.permute.xlu0 %614
      %616 = vrot.lane.b32.xlu0 %v592, 127
      %v617 = vpop.permute.xlu0 %616
      %v618 = vmax.f32 %v603, %v609
      %v619 = vmax.f32 %v604, %v611
      %v620 = vmax.f32 %v605, %v613
      %v621 = vmax.f32 %v606, %v615
      %v622 = vmax.f32 %v607, %v617
      %623 = vrot.lane.b32.xlu0 %v588, 2
      %v624 = vpop.permute.xlu0 %623
      %625 = vrot.lane.b32.xlu0 %v589, 2
      %v626 = vpop.permute.xlu0 %625
      %627 = vrot.lane.b32.xlu0 %v590, 2
      %v628 = vpop.permute.xlu0 %627
      %629 = vrot.lane.b32.xlu0 %v591, 2
      %v630 = vpop.permute.xlu0 %629
      %631 = vrot.lane.b32.xlu0 %v592, 2
      %v632 = vpop.permute.xlu0 %631
      %v633 = vmax.f32 %v618, %v624
      %v634 = vmax.f32 %v619, %v626
      %v635 = vmax.f32 %v620, %v628
      %v636 = vmax.f32 %v621, %v630
      %v637 = vmax.f32 %v622, %v632
      %638 = vrot.lane.b32.xlu0 %v588, 126
      %v639 = vpop.permute.xlu0 %638
      %640 = vrot.lane.b32.xlu0 %v589, 126
      %v641 = vpop.permute.xlu0 %640
      %642 = vrot.lane.b32.xlu0 %v590, 126
      %v643 = vpop.permute.xlu0 %642
      %644 = vrot.lane.b32.xlu0 %v591, 126
      %v645 = vpop.permute.xlu0 %644
      %646 = vrot.lane.b32.xlu0 %v592, 126
      %v647 = vpop.permute.xlu0 %646
      %v648 = vmax.f32 %v633, %v639
      %v649 = vmax.f32 %v634, %v641
      %v650 = vmax.f32 %v635, %v643
      %v651 = vmax.f32 %v636, %v645
      %v652 = vmax.f32 %v637, %v647
      %vm653 = vcmp.gt.f32.partialorder %v648, 0.0
      %vm654 = vcmp.gt.f32.partialorder %v649, 0.0
      %vm655 = vcmp.gt.f32.partialorder %v650, 0.0
      %vm656 = vcmp.gt.f32.partialorder %v651, 0.0
      %vm657 = vcmp.gt.f32.partialorder %v652, 0.0
      %v658 = vsel %vm653, 0.0, %v117
      %v659 = vsel %vm654, 0.0, %v118
      %v660 = vsel %vm655, 0.0, %v119
      %v661 = vsel %vm656, 0.0, %v120
      %v662 = vsel %vm657, 0.0, %v121
      %v663 = vrot.slane %v658, 7
      %v664 = vrot.slane %v659, 7
      %v665 = vrot.slane %v660, 7
      %v666 = vrot.slane %v661, 7
      %v667 = vrot.slane %v662, 7
      %v668 = vsel %vm129, %v666, %v667
      %v669 = vsel %vm129, %v665, %v666
      %v670 = vsel %vm129, %v664, %v665
      %v671 = vsel %vm129, %v663, %v664
      %v672 = vsel %vm129, %v667, %v663
      %v673 = vmax.f32 %v658, %v672
      %v674 = vmax.f32 %v659, %v671
      %v675 = vmax.f32 %v660, %v670
      %v676 = vmax.f32 %v661, %v669
      %v677 = vmax.f32 %v662, %v668
      %v678 = vrot.slane %v658, 1
      %v679 = vrot.slane %v659, 1
      %v680 = vrot.slane %v660, 1
      %v681 = vrot.slane %v661, 1
      %v682 = vrot.slane %v662, 1
      %v683 = vsel %vm145, %v681, %v682
      %v684 = vsel %vm145, %v680, %v681
      %v685 = vsel %vm145, %v679, %v680
      %v686 = vsel %vm145, %v678, %v679
      %v687 = vsel %vm145, %v682, %v678
      %v688 = vmax.f32 %v673, %v686
      %v689 = vmax.f32 %v674, %v685
      %v690 = vmax.f32 %v675, %v684
      %v691 = vmax.f32 %v676, %v683
      %v692 = vmax.f32 %v677, %v687
      %v693 = vrot.slane %v658, 6
      %v694 = vrot.slane %v659, 6
      %v695 = vrot.slane %v660, 6
      %v696 = vrot.slane %v661, 6
      %v697 = vrot.slane %v662, 6
      %v698 = vsel %vm161, %v696, %v697
      %v699 = vsel %vm161, %v695, %v696
      %v700 = vsel %vm161, %v694, %v695
      %v701 = vsel %vm161, %v693, %v694
      %v702 = vsel %vm161, %v697, %v693
      %v703 = vmax.f32 %v688, %v702
      %v704 = vmax.f32 %v689, %v701
      %v705 = vmax.f32 %v690, %v700
      %v706 = vmax.f32 %v691, %v699
      %v707 = vmax.f32 %v692, %v698
      %v708 = vrot.slane %v658, 2
      %v709 = vrot.slane %v659, 2
      %v710 = vrot.slane %v660, 2
      %v711 = vrot.slane %v661, 2
      %v712 = vrot.slane %v662, 2
      %v713 = vsel %vm177, %v711, %v712
      %v714 = vsel %vm177, %v710, %v711
      %v715 = vsel %vm177, %v709, %v710
      %v716 = vsel %vm177, %v708, %v709
      %v717 = vsel %vm177, %v712, %v708
      %v718 = vmax.f32 %v703, %v716
      %v719 = vmax.f32 %v704, %v715
      %v720 = vmax.f32 %v705, %v714
      %v721 = vmax.f32 %v706, %v713
      %v722 = vmax.f32 %v707, %v717
      %723 = vrot.lane.b32.xlu0 %v718, 1
      %v724 = vpop.permute.xlu0 %723
      %725 = vrot.lane.b32.xlu0 %v719, 1
      %v726 = vpop.permute.xlu0 %725
      %727 = vrot.lane.b32.xlu0 %v720, 1
      %v728 = vpop.permute.xlu0 %727
      %729 = vrot.lane.b32.xlu0 %v721, 1
      %v730 = vpop.permute.xlu0 %729
      %731 = vrot.lane.b32.xlu0 %v722, 1
      %v732 = vpop.permute.xlu0 %731
      %v733 = vmax.f32 %v718, %v724
      %v734 = vmax.f32 %v719, %v726
      %v735 = vmax.f32 %v720, %v728
      %v736 = vmax.f32 %v721, %v730
      %v737 = vmax.f32 %v722, %v732
      %738 = vrot.lane.b32.xlu0 %v718, 127
      %v739 = vpop.permute.xlu0 %738
      %740 = vrot.lane.b32.xlu0 %v719, 127
      %v741 = vpop.permute.xlu0 %740
      %742 = vrot.lane.b32.xlu0 %v720, 127
      %v743 = vpop.permute.xlu0 %742
      %744 = vrot.lane.b32.xlu0 %v721, 127
      %v745 = vpop.permute.xlu0 %744
      %746 = vrot.lane.b32.xlu0 %v722, 127
      %v747 = vpop.permute.xlu0 %746
      %v748 = vmax.f32 %v733, %v739
      %v749 = vmax.f32 %v734, %v741
      %v750 = vmax.f32 %v735, %v743
      %v751 = vmax.f32 %v736, %v745
      %v752 = vmax.f32 %v737, %v747
      %753 = vrot.lane.b32.xlu0 %v718, 2
      %v754 = vpop.permute.xlu0 %753
      %755 = vrot.lane.b32.xlu0 %v719, 2
      %v756 = vpop.permute.xlu0 %755
      %757 = vrot.lane.b32.xlu0 %v720, 2
      %v758 = vpop.permute.xlu0 %757
      %759 = vrot.lane.b32.xlu0 %v721, 2
      %v760 = vpop.permute.xlu0 %759
      %761 = vrot.lane.b32.xlu0 %v722, 2
      %v762 = vpop.permute.xlu0 %761
      %v763 = vmax.f32 %v748, %v754
      %v764 = vmax.f32 %v749, %v756
      %v765 = vmax.f32 %v750, %v758
      %v766 = vmax.f32 %v751, %v760
      %v767 = vmax.f32 %v752, %v762
      %768 = vrot.lane.b32.xlu0 %v718, 126
      %v769 = vpop.permute.xlu0 %768
      %770 = vrot.lane.b32.xlu0 %v719, 126
      %v771 = vpop.permute.xlu0 %770
      %772 = vrot.lane.b32.xlu0 %v720, 126
      %v773 = vpop.permute.xlu0 %772
      %774 = vrot.lane.b32.xlu0 %v721, 126
      %v775 = vpop.permute.xlu0 %774
      %776 = vrot.lane.b32.xlu0 %v722, 126
      %v777 = vpop.permute.xlu0 %776
      %v778 = vmax.f32 %v763, %v769
      %v779 = vmax.f32 %v764, %v771
      %v780 = vmax.f32 %v765, %v773
      %v781 = vmax.f32 %v766, %v775
      %v782 = vmax.f32 %v767, %v777
      %vm783 = vcmp.eq.f32.partialorder %v658, %v778
      %vm784 = vcmp.eq.f32.partialorder %v659, %v779
      %vm785 = vcmp.eq.f32.partialorder %v660, %v780
      %vm786 = vcmp.eq.f32.partialorder %v661, %v781
      %vm787 = vcmp.eq.f32.partialorder %v662, %v782
      %vm788 = vmxor %vm653, 1
      %vm789 = vmxor %vm654, 1
      %vm790 = vmxor %vm655, 1
      %vm791 = vmxor %vm656, 1
      %vm792 = vmxor %vm657, 1
      %vm793 = vmand %vm783, %vm788
      %vm794 = vmand %vm784, %vm789
      %vm795 = vmand %vm785, %vm790
      %vm796 = vmand %vm786, %vm791
      %vm797 = vmand %vm787, %vm792
      %vm798 = vmor %vm523, %vm793
      %vm799 = vmor %vm524, %vm794
      %vm800 = vmor %vm525, %vm795
      %vm801 = vmor %vm526, %vm796
      %vm802 = vmor %vm527, %vm797
      %v803 = vsel %vm798, %v117, 0.0
      %v804 = vsel %vm799, %v118, 0.0
      %v805 = vsel %vm800, %v119, 0.0
      %v806 = vsel %vm801, %v120, 0.0
      %v807 = vsel %vm802, %v121, 0.0
      %808 = vst [vmem:[%s116] sm:$0xff] %v803
      %809 = vst [vmem:[%s116 + $0x8] sm:$0xff] %v804
      %810 = vst [vmem:[%s116 + $0x10] sm:$0xff] %v805
      %811 = vst [vmem:[%s116 + $0x18] sm:$0xff] %v806
      %812 = vst [vmem:[%s116 + $0x20] sm:$0xff] %v807
      %p813 = scmp.lt.s32.totalorder %s12, 1
      %s814 = scalar_select %p813, %s12, 1
      %s815 = smul.addr %s814, 5
      %s816 = smul.addr %s815, 8
      %s817 = scalar_lea.vmem %s1, %s816
      // Predicated region
      $region25: #{magic_point_forward.45} parent=23 // pred_check
        %p818 = pneg %p56
      $region26: #{magic_point_forward.45} parent=23 // pred_check_branch
        %820 = sbr.rel (%p818) target = $region28
      $region27: #{magic_point_forward.45} parent=23 // pred_region
        _
      $region28: #{magic_point_forward.45} parent=23 // pred_fallthru
        _
    $region24: #{magic_point_forward.45} parent=5 // pred_fallthru
      _
    %p821 = scmp.le.s32.totalorder 2, %s7
    // Predicated region
    $region29: #{magic_point_forward.45} parent=5 // pred_check
      %p822 = pneg %p821
    $region30: #{magic_point_forward.45} parent=5 // pred_check_branch
      %824 = sbr.rel (%p822) target = $region32
    $region31: #{magic_point_forward.45} parent=5 // pred_region
      %s825 = ssub.s32 %s7, 2
      // Predicated region
      $region33: #{magic_point_forward.45} parent=31 // pred_check
        %p826 = pneg %p62
      $region34: #{magic_point_forward.45} parent=31 // pred_check_branch
        %828 = sbr.rel (%p826) target = $region36
      $region35: #{magic_point_forward.45} parent=31 // pred_region
        %p829 = scmp.lt.s32.totalorder %s13, 1
        %s830 = scalar_select %p829, %s13, 1
        %s831 = smul.addr %s830, 5
        %s832 = smul.addr %s831, 8
        %s833 = scalar_lea.vmem %s1, %s832
      $region36: #{magic_point_forward.45} parent=31 // pred_fallthru
        _
    $region32: #{magic_point_forward.45} parent=5 // pred_fallthru
      _
  $region6: #{magic_point_forward.45} parent=0 // loop_footer
    %s11 = sadd.s32 1, %s7
  $region7: #{magic_point_forward.45} parent=0 // loop_footer_branch
    %6 = sbr.rel target = $region3
  $region8: #{magic_point_forward.45} parent=0 // loop_exit
    _

</llo_original>
